<compile_context>
chip_gen: v6e
topology: v6e:2x2x1
jax: 0.10.0
libtpu: 0.0.40
codegen_flags: <defaults>
</compile_context>

<pallas_src>
import jax
import jax.numpy as jnp
from jax.experimental import pallas as pl
from jax.experimental.pallas import tpu as pltpu

KH = KW = 5        # conv kernel size (both layers)
COUT = 20          # real output channels of both convs
C1_PAD = 32        # conv1 output channels padded 20 -> 32 (sublane multiple only)
C2_PAD = 128       # conv2 output channels padded 20 -> 128 (lane-dense output)


def fused_conv_relu_kernel(x_ref, w1_ref, b1_ref, w2_ref, b2_ref, o_ref, h1_ref):
    # Per grid step (one image):
    #   x_ref : (1, H, W, C1_PAD)        input, already lane-broadcast (Cin = 1)
    #   w1_ref: (KH*KW, C1_PAD)          conv1 weight, one row per (kh, kw) tap
    #   b1_ref: (1, C1_PAD)
    #   w2_ref: (KH*KW, C1_PAD, C2_PAD)  conv2 weight, one (Cin, Cout) slab per tap
    #   b2_ref: (1, C2_PAD)
    #   o_ref : (OH2*OW2, C2_PAD)        lane-dense output slab for this image
    #   h1_ref: (OH1, OW1, C1_PAD)       VMEM scratch for the conv1 activation
    _, H, W, C1 = x_ref.shape
    OH1, OW1, _ = h1_ref.shape
    M2, _ = o_ref.shape
    OH2, OW2 = OH1 - KH + 1, OW1 - KW + 1

    # ---- conv1 + ReLU (VPU) ------------------------------------------------
    # x is pre-broadcast to C1 lanes in the wrapper, so every tap is a dense
    # broadcast-FMA; no per-tap cross-lane broadcast in the hot loop.
    acc1 = jnp.zeros((OH1, OW1, C1), jnp.float32)
    for kh in range(KH):
        for kw in range(KW):
            tap = kh * KW + kw
            acc1 = acc1 + (x_ref[0, kh:kh + OH1, kw:kw + OW1, :]
                           * w1_ref[tap:tap + 1])          # (1, C1) broadcast
    h1_ref[...] = jnp.maximum(acc1 + b1_ref[...], 0.0)

    # ---- conv2 + ReLU (MXU) ------------------------------------------------
    # Hoist the kw window: one sublane-window load of h1 per kw; the kh slice
    # is a free outer-dim (vreg-row) slice of the loaded strip.  Each tap is a
    # (M2, 32) x (32, 128) MXU matmul accumulated in f32.
    acc2 = jnp.zeros((M2, C2_PAD), jnp.float32)
    for kw in range(KW):
        strip = h1_ref[:, kw:kw + OW2, :]                  # (OH1, OW2, C1)
        for kh in range(KH):
            tap = kh * KW + kw
            slab = strip[kh:kh + OH2].reshape(M2, C1)      # (M2, C1), no relayout
            acc2 = acc2 + jnp.dot(slab, w2_ref[tap],
                                  preferred_element_type=jnp.float32)
    o_ref[...] = jnp.maximum(acc2 + b2_ref[...], 0.0).astype(o_ref.dtype)


def pack_params(params):
    """Weight prepacking (function of the weights only): flatten the 5x5 taps,
    pad conv1/conv2-in channels to 32 (sublane multiple), conv2-out to 128."""
    w1, b1, w2, b2 = params            # HWIO: (5,5,1,20) and (5,5,20,20)
    cout1 = w1.shape[-1]
    cin2, cout2 = w2.shape[-2], w2.shape[-1]
    w1p = jnp.zeros((KH * KW, C1_PAD), jnp.float32).at[:, :cout1].set(
        w1.reshape(KH * KW, cout1))
    b1p = jnp.zeros((1, C1_PAD), jnp.float32).at[:, :cout1].set(b1)
    w2p = jnp.zeros((KH * KW, C1_PAD, C2_PAD), jnp.float32).at[:, :cin2, :cout2].set(
        w2.reshape(KH * KW, cin2, cout2))
    b2p = jnp.zeros((1, C2_PAD), jnp.float32).at[:, :cout2].set(b2)
    return w1p, b1p, w2p, b2p


def model_forward(x_nchw, packed_params):
    w1p, b1p, w2p, b2p = packed_params
    N, _, H, W = x_nchw.shape
    OH1, OW1 = H - KH + 1, W - KW + 1
    OH2, OW2 = OH1 - KH + 1, OW1 - KW + 1
    M2 = OH2 * OW2                                     # per-image output rows

    x_nhwc = jnp.transpose(x_nchw, (0, 2, 3, 1))       # (N, H, W, 1)
    # One-time lane replication of the single input channel (review item 4):
    # every conv1 tap in the kernel becomes a dense VPU madd.
    x_b = jnp.broadcast_to(x_nhwc, (N, H, W, C1_PAD))

    out2d = pl.pallas_call(
        fused_conv_relu_kernel,
        out_shape=jax.ShapeDtypeStruct((N * M2, C2_PAD), jnp.float32),
        grid=(N,),                                     # one image per grid step
        in_specs=[
            pl.BlockSpec((1, H, W, C1_PAD), lambda n: (n, 0, 0, 0)),
            pl.BlockSpec((KH * KW, C1_PAD), lambda n: (0, 0)),
            pl.BlockSpec((1, C1_PAD), lambda n: (0, 0)),
            pl.BlockSpec((KH * KW, C1_PAD, C2_PAD), lambda n: (0, 0, 0)),
            pl.BlockSpec((1, C2_PAD), lambda n: (0, 0)),
        ],
        out_specs=pl.BlockSpec((M2, C2_PAD), lambda n: (n, 0)),
        scratch_shapes=[pltpu.VMEM((OH1, OW1, C1_PAD), jnp.float32)],
        # Independent per-image work: "parallel" lets v7x shard the batch over
        # its two TensorCores; on v5e/v6e the constant-index weight blocks are
        # DMA'd only once across the (sequential) grid steps.
        compiler_params=pltpu.CompilerParams(
            dimension_semantics=("parallel",)),
    )(x_b, w1p, b1p, w2p, b2p)

    y = out2d.reshape(N, OH2, OW2, C2_PAD)[..., :COUT]
    return jnp.transpose(y, (0, 3, 1, 2))              # NHWC -> NCHW (match PyTorch)


def reference_forward(x_nchw, params):
    w1, b1, w2, b2 = params

    def conv(x, w, b):
        y = jax.lax.conv_general_dilated(
            x, w, window_strides=(1, 1), padding='VALID',
            dimension_numbers=('NCHW', 'HWIO', 'NCHW'))
        return jax.nn.relu(y + b[None, :, None, None])

    return conv(conv(x_nchw, w1, b1), w2, b2)


def init_params(key):
    # Deterministic init mirroring PyTorch Conv2d default (uniform +/-1/sqrt(fan_in)).
    k1, k2, k3, k4 = jax.random.split(key, 4)
    bound1 = 1.0 / (1 * 5 * 5) ** 0.5
    bound2 = 1.0 / (20 * 5 * 5) ** 0.5
    w1 = jax.random.uniform(k1, (5, 5, 1, 20), jnp.float32, -bound1, bound1)
    b1 = jax.random.uniform(k2, (20,), jnp.float32, -bound1, bound1)
    w2 = jax.random.uniform(k3, (5, 5, 20, 20), jnp.float32, -bound2, bound2)
    b2 = jax.random.uniform(k4, (20,), jnp.float32, -bound2, bound2)
    return w1, b1, w2, b2


if __name__ == "__main__":
    key = jax.random.PRNGKey(0)
    kx, kp = jax.random.split(key)
    params = init_params(kp)
    packed = pack_params(params)

    # Input: batch=2, 1 channel, 16x16 spatial (NCHW, as in PyTorch).
    x = jax.random.normal(kx, (2, 1, 16, 16), jnp.float32)

    out = jax.block_until_ready(model_forward(x, packed))
    ref = jax.block_until_ready(reference_forward(x, params))

    assert out.shape == (2, 20, 8, 8), out.shape
    assert out.dtype == jnp.float32
    assert jnp.allclose(out, ref, atol=1e-4, rtol=1e-4), \
        float(jnp.max(jnp.abs(out - ref)))
    print("KERNEL_OK")
</pallas_src>

<mosaic_0001>
module attributes {stable_mosaic.version = 11 : i64} {
  func.func @fused_conv_relu_kernel(%arg0: i32, %arg1: memref<1x16x16x32xf32, #tpu.memory_space<vmem>>, %arg2: memref<25x32xf32, #tpu.memory_space<vmem>>, %arg3: memref<1x32xf32, #tpu.memory_space<vmem>>, %arg4: memref<25x32x128xf32, #tpu.memory_space<vmem>>, %arg5: memref<1x128xf32, #tpu.memory_space<vmem>>, %arg6: memref<64x128xf32, #tpu.memory_space<vmem>>, %arg7: memref<12x12x32xf32, #tpu.memory_space<vmem>>) attributes {dimension_semantics = [#tpu.dimension_semantics<parallel>], iteration_bounds = array<i64: 2>, scalar_prefetch = 0 : i64, scratch_operands = 1 : i64, tpu.core_type = #tpu.core_type<tc>, window_params = [{transform_indices = @transform_0, window_bounds = array<i64: 1, 16, 16, 32>}, {pipeline_mode = #tpu.pipeline_mode<synchronous>, transform_indices = @transform_1, window_bounds = array<i64: 25, 32>}, {pipeline_mode = #tpu.pipeline_mode<synchronous>, transform_indices = @transform_2, window_bounds = array<i64: 1, 32>}, {pipeline_mode = #tpu.pipeline_mode<synchronous>, transform_indices = @transform_3, window_bounds = array<i64: 25, 32, 128>}, {pipeline_mode = #tpu.pipeline_mode<synchronous>, transform_indices = @transform_4, window_bounds = array<i64: 1, 128>}, {transform_indices = @transform_5, window_bounds = array<i64: 64, 128>}]} {
    %cst = arith.constant 0.000000e+00 : f32
    %0 = vector.broadcast %cst : f32 to vector<12x12x32xf32>
    %c0 = arith.constant 0 : index
    %c0_0 = arith.constant 0 : index
    %c0_1 = arith.constant 0 : index
    %c0_2 = arith.constant 0 : index
    %1 = vector.load %arg1[%c0, %c0_0, %c0_1, %c0_2] : memref<1x16x16x32xf32, #tpu.memory_space<vmem>>, vector<1x12x12x32xf32>
    %2 = vector.shape_cast %1 : vector<1x12x12x32xf32> to vector<12x12x32xf32>
    %c0_3 = arith.constant 0 : index
    %c0_4 = arith.constant 0 : index
    %3 = vector.load %arg2[%c0_3, %c0_4] : memref<25x32xf32, #tpu.memory_space<vmem>>, vector<1x32xf32>
    %4 = vector.shape_cast %3 : vector<1x32xf32> to vector<1x1x32xf32>
    %5 = vector.broadcast %4 : vector<1x1x32xf32> to vector<12x12x32xf32>
    %6 = arith.mulf %2, %5 : vector<12x12x32xf32>
    %7 = arith.addf %0, %6 : vector<12x12x32xf32>
    %c0_5 = arith.constant 0 : index
    %c0_6 = arith.constant 0 : index
    %c1 = arith.constant 1 : index
    %c0_7 = arith.constant 0 : index
    %8 = vector.load %arg1[%c0_5, %c0_6, %c1, %c0_7] : memref<1x16x16x32xf32, #tpu.memory_space<vmem>>, vector<1x12x12x32xf32>
    %9 = vector.shape_cast %8 : vector<1x12x12x32xf32> to vector<12x12x32xf32>
    %c1_8 = arith.constant 1 : index
    %c0_9 = arith.constant 0 : index
    %10 = vector.load %arg2[%c1_8, %c0_9] : memref<25x32xf32, #tpu.memory_space<vmem>>, vector<1x32xf32>
    %11 = vector.shape_cast %10 : vector<1x32xf32> to vector<1x1x32xf32>
    %12 = vector.broadcast %11 : vector<1x1x32xf32> to vector<12x12x32xf32>
    %13 = arith.mulf %9, %12 : vector<12x12x32xf32>
    %14 = arith.addf %7, %13 : vector<12x12x32xf32>
    %c0_10 = arith.constant 0 : index
    %c0_11 = arith.constant 0 : index
    %c2 = arith.constant 2 : index
    %c0_12 = arith.constant 0 : index
    %15 = vector.load %arg1[%c0_10, %c0_11, %c2, %c0_12] : memref<1x16x16x32xf32, #tpu.memory_space<vmem>>, vector<1x12x12x32xf32>
    %16 = vector.shape_cast %15 : vector<1x12x12x32xf32> to vector<12x12x32xf32>
    %c2_13 = arith.constant 2 : index
    %c0_14 = arith.constant 0 : index
    %17 = vector.load %arg2[%c2_13, %c0_14] : memref<25x32xf32, #tpu.memory_space<vmem>>, vector<1x32xf32>
    %18 = vector.shape_cast %17 : vector<1x32xf32> to vector<1x1x32xf32>
    %19 = vector.broadcast %18 : vector<1x1x32xf32> to vector<12x12x32xf32>
    %20 = arith.mulf %16, %19 : vector<12x12x32xf32>
    %21 = arith.addf %14, %20 : vector<12x12x32xf32>
    %c0_15 = arith.constant 0 : index
    %c0_16 = arith.constant 0 : index
    %c3 = arith.constant 3 : index
    %c0_17 = arith.constant 0 : index
    %22 = vector.load %arg1[%c0_15, %c0_16, %c3, %c0_17] : memref<1x16x16x32xf32, #tpu.memory_space<vmem>>, vector<1x12x12x32xf32>
    %23 = vector.shape_cast %22 : vector<1x12x12x32xf32> to vector<12x12x32xf32>
    %c3_18 = arith.constant 3 : index
    %c0_19 = arith.constant 0 : index
    %24 = vector.load %arg2[%c3_18, %c0_19] : memref<25x32xf32, #tpu.memory_space<vmem>>, vector<1x32xf32>
    %25 = vector.shape_cast %24 : vector<1x32xf32> to vector<1x1x32xf32>
    %26 = vector.broadcast %25 : vector<1x1x32xf32> to vector<12x12x32xf32>
    %27 = arith.mulf %23, %26 : vector<12x12x32xf32>
    %28 = arith.addf %21, %27 : vector<12x12x32xf32>
    %c0_20 = arith.constant 0 : index
    %c0_21 = arith.constant 0 : index
    %c4 = arith.constant 4 : index
    %c0_22 = arith.constant 0 : index
    %29 = vector.load %arg1[%c0_20, %c0_21, %c4, %c0_22] : memref<1x16x16x32xf32, #tpu.memory_space<vmem>>, vector<1x12x12x32xf32>
    %30 = vector.shape_cast %29 : vector<1x12x12x32xf32> to vector<12x12x32xf32>
    %c4_23 = arith.constant 4 : index
    %c0_24 = arith.constant 0 : index
    %31 = vector.load %arg2[%c4_23, %c0_24] : memref<25x32xf32, #tpu.memory_space<vmem>>, vector<1x32xf32>
    %32 = vector.shape_cast %31 : vector<1x32xf32> to vector<1x1x32xf32>
    %33 = vector.broadcast %32 : vector<1x1x32xf32> to vector<12x12x32xf32>
    %34 = arith.mulf %30, %33 : vector<12x12x32xf32>
    %35 = arith.addf %28, %34 : vector<12x12x32xf32>
    %c0_25 = arith.constant 0 : index
    %c1_26 = arith.constant 1 : index
    %c0_27 = arith.constant 0 : index
    %c0_28 = arith.constant 0 : index
    %36 = vector.load %arg1[%c0_25, %c1_26, %c0_27, %c0_28] : memref<1x16x16x32xf32, #tpu.memory_space<vmem>>, vector<1x12x12x32xf32>
    %37 = vector.shape_cast %36 : vector<1x12x12x32xf32> to vector<12x12x32xf32>
    %c5 = arith.constant 5 : index
    %c0_29 = arith.constant 0 : index
    %38 = vector.load %arg2[%c5, %c0_29] : memref<25x32xf32, #tpu.memory_space<vmem>>, vector<1x32xf32>
    %39 = vector.shape_cast %38 : vector<1x32xf32> to vector<1x1x32xf32>
    %40 = vector.broadcast %39 : vector<1x1x32xf32> to vector<12x12x32xf32>
    %41 = arith.mulf %37, %40 : vector<12x12x32xf32>
    %42 = arith.addf %35, %41 : vector<12x12x32xf32>
    %c0_30 = arith.constant 0 : index
    %c1_31 = arith.constant 1 : index
    %c1_32 = arith.constant 1 : index
    %c0_33 = arith.constant 0 : index
    %43 = vector.load %arg1[%c0_30, %c1_31, %c1_32, %c0_33] : memref<1x16x16x32xf32, #tpu.memory_space<vmem>>, vector<1x12x12x32xf32>
    %44 = vector.shape_cast %43 : vector<1x12x12x32xf32> to vector<12x12x32xf32>
    %c6 = arith.constant 6 : index
    %c0_34 = arith.constant 0 : index
    %45 = vector.load %arg2[%c6, %c0_34] : memref<25x32xf32, #tpu.memory_space<vmem>>, vector<1x32xf32>
    %46 = vector.shape_cast %45 : vector<1x32xf32> to vector<1x1x32xf32>
    %47 = vector.broadcast %46 : vector<1x1x32xf32> to vector<12x12x32xf32>
    %48 = arith.mulf %44, %47 : vector<12x12x32xf32>
    %49 = arith.addf %42, %48 : vector<12x12x32xf32>
    %c0_35 = arith.constant 0 : index
    %c1_36 = arith.constant 1 : index
    %c2_37 = arith.constant 2 : index
    %c0_38 = arith.constant 0 : index
    %50 = vector.load %arg1[%c0_35, %c1_36, %c2_37, %c0_38] : memref<1x16x16x32xf32, #tpu.memory_space<vmem>>, vector<1x12x12x32xf32>
    %51 = vector.shape_cast %50 : vector<1x12x12x32xf32> to vector<12x12x32xf32>
    %c7 = arith.constant 7 : index
    %c0_39 = arith.constant 0 : index
    %52 = vector.load %arg2[%c7, %c0_39] : memref<25x32xf32, #tpu.memory_space<vmem>>, vector<1x32xf32>
    %53 = vector.shape_cast %52 : vector<1x32xf32> to vector<1x1x32xf32>
    %54 = vector.broadcast %53 : vector<1x1x32xf32> to vector<12x12x32xf32>
    %55 = arith.mulf %51, %54 : vector<12x12x32xf32>
    %56 = arith.addf %49, %55 : vector<12x12x32xf32>
    %c0_40 = arith.constant 0 : index
    %c1_41 = arith.constant 1 : index
    %c3_42 = arith.constant 3 : index
    %c0_43 = arith.constant 0 : index
    %57 = vector.load %arg1[%c0_40, %c1_41, %c3_42, %c0_43] : memref<1x16x16x32xf32, #tpu.memory_space<vmem>>, vector<1x12x12x32xf32>
    %58 = vector.shape_cast %57 : vector<1x12x12x32xf32> to vector<12x12x32xf32>
    %c8 = arith.constant 8 : index
    %c0_44 = arith.constant 0 : index
    %59 = vector.load %arg2[%c8, %c0_44] : memref<25x32xf32, #tpu.memory_space<vmem>>, vector<1x32xf32>
    %60 = vector.shape_cast %59 : vector<1x32xf32> to vector<1x1x32xf32>
    %61 = vector.broadcast %60 : vector<1x1x32xf32> to vector<12x12x32xf32>
    %62 = arith.mulf %58, %61 : vector<12x12x32xf32>
    %63 = arith.addf %56, %62 : vector<12x12x32xf32>
    %c0_45 = arith.constant 0 : index
    %c1_46 = arith.constant 1 : index
    %c4_47 = arith.constant 4 : index
    %c0_48 = arith.constant 0 : index
    %64 = vector.load %arg1[%c0_45, %c1_46, %c4_47, %c0_48] : memref<1x16x16x32xf32, #tpu.memory_space<vmem>>, vector<1x12x12x32xf32>
    %65 = vector.shape_cast %64 : vector<1x12x12x32xf32> to vector<12x12x32xf32>
    %c9 = arith.constant 9 : index
    %c0_49 = arith.constant 0 : index
    %66 = vector.load %arg2[%c9, %c0_49] : memref<25x32xf32, #tpu.memory_space<vmem>>, vector<1x32xf32>
    %67 = vector.shape_cast %66 : vector<1x32xf32> to vector<1x1x32xf32>
    %68 = vector.broadcast %67 : vector<1x1x32xf32> to vector<12x12x32xf32>
    %69 = arith.mulf %65, %68 : vector<12x12x32xf32>
    %70 = arith.addf %63, %69 : vector<12x12x32xf32>
    %c0_50 = arith.constant 0 : index
    %c2_51 = arith.constant 2 : index
    %c0_52 = arith.constant 0 : index
    %c0_53 = arith.constant 0 : index
    %71 = vector.load %arg1[%c0_50, %c2_51, %c0_52, %c0_53] : memref<1x16x16x32xf32, #tpu.memory_space<vmem>>, vector<1x12x12x32xf32>
    %72 = vector.shape_cast %71 : vector<1x12x12x32xf32> to vector<12x12x32xf32>
    %c10 = arith.constant 10 : index
    %c0_54 = arith.constant 0 : index
    %73 = vector.load %arg2[%c10, %c0_54] : memref<25x32xf32, #tpu.memory_space<vmem>>, vector<1x32xf32>
    %74 = vector.shape_cast %73 : vector<1x32xf32> to vector<1x1x32xf32>
    %75 = vector.broadcast %74 : vector<1x1x32xf32> to vector<12x12x32xf32>
    %76 = arith.mulf %72, %75 : vector<12x12x32xf32>
    %77 = arith.addf %70, %76 : vector<12x12x32xf32>
    %c0_55 = arith.constant 0 : index
    %c2_56 = arith.constant 2 : index
    %c1_57 = arith.constant 1 : index
    %c0_58 = arith.constant 0 : index
    %78 = vector.load %arg1[%c0_55, %c2_56, %c1_57, %c0_58] : memref<1x16x16x32xf32, #tpu.memory_space<vmem>>, vector<1x12x12x32xf32>
    %79 = vector.shape_cast %78 : vector<1x12x12x32xf32> to vector<12x12x32xf32>
    %c11 = arith.constant 11 : index
    %c0_59 = arith.constant 0 : index
    %80 = vector.load %arg2[%c11, %c0_59] : memref<25x32xf32, #tpu.memory_space<vmem>>, vector<1x32xf32>
    %81 = vector.shape_cast %80 : vector<1x32xf32> to vector<1x1x32xf32>
    %82 = vector.broadcast %81 : vector<1x1x32xf32> to vector<12x12x32xf32>
    %83 = arith.mulf %79, %82 : vector<12x12x32xf32>
    %84 = arith.addf %77, %83 : vector<12x12x32xf32>
    %c0_60 = arith.constant 0 : index
    %c2_61 = arith.constant 2 : index
    %c2_62 = arith.constant 2 : index
    %c0_63 = arith.constant 0 : index
    %85 = vector.load %arg1[%c0_60, %c2_61, %c2_62, %c0_63] : memref<1x16x16x32xf32, #tpu.memory_space<vmem>>, vector<1x12x12x32xf32>
    %86 = vector.shape_cast %85 : vector<1x12x12x32xf32> to vector<12x12x32xf32>
    %c12 = arith.constant 12 : index
    %c0_64 = arith.constant 0 : index
    %87 = vector.load %arg2[%c12, %c0_64] : memref<25x32xf32, #tpu.memory_space<vmem>>, vector<1x32xf32>
    %88 = vector.shape_cast %87 : vector<1x32xf32> to vector<1x1x32xf32>
    %89 = vector.broadcast %88 : vector<1x1x32xf32> to vector<12x12x32xf32>
    %90 = arith.mulf %86, %89 : vector<12x12x32xf32>
    %91 = arith.addf %84, %90 : vector<12x12x32xf32>
    %c0_65 = arith.constant 0 : index
    %c2_66 = arith.constant 2 : index
    %c3_67 = arith.constant 3 : index
    %c0_68 = arith.constant 0 : index
    %92 = vector.load %arg1[%c0_65, %c2_66, %c3_67, %c0_68] : memref<1x16x16x32xf32, #tpu.memory_space<vmem>>, vector<1x12x12x32xf32>
    %93 = vector.shape_cast %92 : vector<1x12x12x32xf32> to vector<12x12x32xf32>
    %c13 = arith.constant 13 : index
    %c0_69 = arith.constant 0 : index
    %94 = vector.load %arg2[%c13, %c0_69] : memref<25x32xf32, #tpu.memory_space<vmem>>, vector<1x32xf32>
    %95 = vector.shape_cast %94 : vector<1x32xf32> to vector<1x1x32xf32>
    %96 = vector.broadcast %95 : vector<1x1x32xf32> to vector<12x12x32xf32>
    %97 = arith.mulf %93, %96 : vector<12x12x32xf32>
    %98 = arith.addf %91, %97 : vector<12x12x32xf32>
    %c0_70 = arith.constant 0 : index
    %c2_71 = arith.constant 2 : index
    %c4_72 = arith.constant 4 : index
    %c0_73 = arith.constant 0 : index
    %99 = vector.load %arg1[%c0_70, %c2_71, %c4_72, %c0_73] : memref<1x16x16x32xf32, #tpu.memory_space<vmem>>, vector<1x12x12x32xf32>
    %100 = vector.shape_cast %99 : vector<1x12x12x32xf32> to vector<12x12x32xf32>
    %c14 = arith.constant 14 : index
    %c0_74 = arith.constant 0 : index
    %101 = vector.load %arg2[%c14, %c0_74] : memref<25x32xf32, #tpu.memory_space<vmem>>, vector<1x32xf32>
    %102 = vector.shape_cast %101 : vector<1x32xf32> to vector<1x1x32xf32>
    %103 = vector.broadcast %102 : vector<1x1x32xf32> to vector<12x12x32xf32>
    %104 = arith.mulf %100, %103 : vector<12x12x32xf32>
    %105 = arith.addf %98, %104 : vector<12x12x32xf32>
    %c0_75 = arith.constant 0 : index
    %c3_76 = arith.constant 3 : index
    %c0_77 = arith.constant 0 : index
    %c0_78 = arith.constant 0 : index
    %106 = vector.load %arg1[%c0_75, %c3_76, %c0_77, %c0_78] : memref<1x16x16x32xf32, #tpu.memory_space<vmem>>, vector<1x12x12x32xf32>
    %107 = vector.shape_cast %106 : vector<1x12x12x32xf32> to vector<12x12x32xf32>
    %c15 = arith.constant 15 : index
    %c0_79 = arith.constant 0 : index
    %108 = vector.load %arg2[%c15, %c0_79] : memref<25x32xf32, #tpu.memory_space<vmem>>, vector<1x32xf32>
    %109 = vector.shape_cast %108 : vector<1x32xf32> to vector<1x1x32xf32>
    %110 = vector.broadcast %109 : vector<1x1x32xf32> to vector<12x12x32xf32>
    %111 = arith.mulf %107, %110 : vector<12x12x32xf32>
    %112 = arith.addf %105, %111 : vector<12x12x32xf32>
    %c0_80 = arith.constant 0 : index
    %c3_81 = arith.constant 3 : index
    %c1_82 = arith.constant 1 : index
    %c0_83 = arith.constant 0 : index
    %113 = vector.load %arg1[%c0_80, %c3_81, %c1_82, %c0_83] : memref<1x16x16x32xf32, #tpu.memory_space<vmem>>, vector<1x12x12x32xf32>
    %114 = vector.shape_cast %113 : vector<1x12x12x32xf32> to vector<12x12x32xf32>
    %c16 = arith.constant 16 : index
    %c0_84 = arith.constant 0 : index
    %115 = vector.load %arg2[%c16, %c0_84] : memref<25x32xf32, #tpu.memory_space<vmem>>, vector<1x32xf32>
    %116 = vector.shape_cast %115 : vector<1x32xf32> to vector<1x1x32xf32>
    %117 = vector.broadcast %116 : vector<1x1x32xf32> to vector<12x12x32xf32>
    %118 = arith.mulf %114, %117 : vector<12x12x32xf32>
    %119 = arith.addf %112, %118 : vector<12x12x32xf32>
    %c0_85 = arith.constant 0 : index
    %c3_86 = arith.constant 3 : index
    %c2_87 = arith.constant 2 : index
    %c0_88 = arith.constant 0 : index
    %120 = vector.load %arg1[%c0_85, %c3_86, %c2_87, %c0_88] : memref<1x16x16x32xf32, #tpu.memory_space<vmem>>, vector<1x12x12x32xf32>
    %121 = vector.shape_cast %120 : vector<1x12x12x32xf32> to vector<12x12x32xf32>
    %c17 = arith.constant 17 : index
    %c0_89 = arith.constant 0 : index
    %122 = vector.load %arg2[%c17, %c0_89] : memref<25x32xf32, #tpu.memory_space<vmem>>, vector<1x32xf32>
    %123 = vector.shape_cast %122 : vector<1x32xf32> to vector<1x1x32xf32>
    %124 = vector.broadcast %123 : vector<1x1x32xf32> to vector<12x12x32xf32>
    %125 = arith.mulf %121, %124 : vector<12x12x32xf32>
    %126 = arith.addf %119, %125 : vector<12x12x32xf32>
    %c0_90 = arith.constant 0 : index
    %c3_91 = arith.constant 3 : index
    %c3_92 = arith.constant 3 : index
    %c0_93 = arith.constant 0 : index
    %127 = vector.load %arg1[%c0_90, %c3_91, %c3_92, %c0_93] : memref<1x16x16x32xf32, #tpu.memory_space<vmem>>, vector<1x12x12x32xf32>
    %128 = vector.shape_cast %127 : vector<1x12x12x32xf32> to vector<12x12x32xf32>
    %c18 = arith.constant 18 : index
    %c0_94 = arith.constant 0 : index
    %129 = vector.load %arg2[%c18, %c0_94] : memref<25x32xf32, #tpu.memory_space<vmem>>, vector<1x32xf32>
    %130 = vector.shape_cast %129 : vector<1x32xf32> to vector<1x1x32xf32>
    %131 = vector.broadcast %130 : vector<1x1x32xf32> to vector<12x12x32xf32>
    %132 = arith.mulf %128, %131 : vector<12x12x32xf32>
    %133 = arith.addf %126, %132 : vector<12x12x32xf32>
    %c0_95 = arith.constant 0 : index
    %c3_96 = arith.constant 3 : index
    %c4_97 = arith.constant 4 : index
    %c0_98 = arith.constant 0 : index
    %134 = vector.load %arg1[%c0_95, %c3_96, %c4_97, %c0_98] : memref<1x16x16x32xf32, #tpu.memory_space<vmem>>, vector<1x12x12x32xf32>
    %135 = vector.shape_cast %134 : vector<1x12x12x32xf32> to vector<12x12x32xf32>
    %c19 = arith.constant 19 : index
    %c0_99 = arith.constant 0 : index
    %136 = vector.load %arg2[%c19, %c0_99] : memref<25x32xf32, #tpu.memory_space<vmem>>, vector<1x32xf32>
    %137 = vector.shape_cast %136 : vector<1x32xf32> to vector<1x1x32xf32>
    %138 = vector.broadcast %137 : vector<1x1x32xf32> to vector<12x12x32xf32>
    %139 = arith.mulf %135, %138 : vector<12x12x32xf32>
    %140 = arith.addf %133, %139 : vector<12x12x32xf32>
    %c0_100 = arith.constant 0 : index
    %c4_101 = arith.constant 4 : index
    %c0_102 = arith.constant 0 : index
    %c0_103 = arith.constant 0 : index
    %141 = vector.load %arg1[%c0_100, %c4_101, %c0_102, %c0_103] : memref<1x16x16x32xf32, #tpu.memory_space<vmem>>, vector<1x12x12x32xf32>
    %142 = vector.shape_cast %141 : vector<1x12x12x32xf32> to vector<12x12x32xf32>
    %c20 = arith.constant 20 : index
    %c0_104 = arith.constant 0 : index
    %143 = vector.load %arg2[%c20, %c0_104] : memref<25x32xf32, #tpu.memory_space<vmem>>, vector<1x32xf32>
    %144 = vector.shape_cast %143 : vector<1x32xf32> to vector<1x1x32xf32>
    %145 = vector.broadcast %144 : vector<1x1x32xf32> to vector<12x12x32xf32>
    %146 = arith.mulf %142, %145 : vector<12x12x32xf32>
    %147 = arith.addf %140, %146 : vector<12x12x32xf32>
    %c0_105 = arith.constant 0 : index
    %c4_106 = arith.constant 4 : index
    %c1_107 = arith.constant 1 : index
    %c0_108 = arith.constant 0 : index
    %148 = vector.load %arg1[%c0_105, %c4_106, %c1_107, %c0_108] : memref<1x16x16x32xf32, #tpu.memory_space<vmem>>, vector<1x12x12x32xf32>
    %149 = vector.shape_cast %148 : vector<1x12x12x32xf32> to vector<12x12x32xf32>
    %c21 = arith.constant 21 : index
    %c0_109 = arith.constant 0 : index
    %150 = vector.load %arg2[%c21, %c0_109] : memref<25x32xf32, #tpu.memory_space<vmem>>, vector<1x32xf32>
    %151 = vector.shape_cast %150 : vector<1x32xf32> to vector<1x1x32xf32>
    %152 = vector.broadcast %151 : vector<1x1x32xf32> to vector<12x12x32xf32>
    %153 = arith.mulf %149, %152 : vector<12x12x32xf32>
    %154 = arith.addf %147, %153 : vector<12x12x32xf32>
    %c0_110 = arith.constant 0 : index
    %c4_111 = arith.constant 4 : index
    %c2_112 = arith.constant 2 : index
    %c0_113 = arith.constant 0 : index
    %155 = vector.load %arg1[%c0_110, %c4_111, %c2_112, %c0_113] : memref<1x16x16x32xf32, #tpu.memory_space<vmem>>, vector<1x12x12x32xf32>
    %156 = vector.shape_cast %155 : vector<1x12x12x32xf32> to vector<12x12x32xf32>
    %c22 = arith.constant 22 : index
    %c0_114 = arith.constant 0 : index
    %157 = vector.load %arg2[%c22, %c0_114] : memref<25x32xf32, #tpu.memory_space<vmem>>, vector<1x32xf32>
    %158 = vector.shape_cast %157 : vector<1x32xf32> to vector<1x1x32xf32>
    %159 = vector.broadcast %158 : vector<1x1x32xf32> to vector<12x12x32xf32>
    %160 = arith.mulf %156, %159 : vector<12x12x32xf32>
    %161 = arith.addf %154, %160 : vector<12x12x32xf32>
    %c0_115 = arith.constant 0 : index
    %c4_116 = arith.constant 4 : index
    %c3_117 = arith.constant 3 : index
    %c0_118 = arith.constant 0 : index
    %162 = vector.load %arg1[%c0_115, %c4_116, %c3_117, %c0_118] : memref<1x16x16x32xf32, #tpu.memory_space<vmem>>, vector<1x12x12x32xf32>
    %163 = vector.shape_cast %162 : vector<1x12x12x32xf32> to vector<12x12x32xf32>
    %c23 = arith.constant 23 : index
    %c0_119 = arith.constant 0 : index
    %164 = vector.load %arg2[%c23, %c0_119] : memref<25x32xf32, #tpu.memory_space<vmem>>, vector<1x32xf32>
    %165 = vector.shape_cast %164 : vector<1x32xf32> to vector<1x1x32xf32>
    %166 = vector.broadcast %165 : vector<1x1x32xf32> to vector<12x12x32xf32>
    %167 = arith.mulf %163, %166 : vector<12x12x32xf32>
    %168 = arith.addf %161, %167 : vector<12x12x32xf32>
    %c0_120 = arith.constant 0 : index
    %c4_121 = arith.constant 4 : index
    %c4_122 = arith.constant 4 : index
    %c0_123 = arith.constant 0 : index
    %169 = vector.load %arg1[%c0_120, %c4_121, %c4_122, %c0_123] : memref<1x16x16x32xf32, #tpu.memory_space<vmem>>, vector<1x12x12x32xf32>
    %170 = vector.shape_cast %169 : vector<1x12x12x32xf32> to vector<12x12x32xf32>
    %c24 = arith.constant 24 : index
    %c0_124 = arith.constant 0 : index
    %171 = vector.load %arg2[%c24, %c0_124] : memref<25x32xf32, #tpu.memory_space<vmem>>, vector<1x32xf32>
    %172 = vector.shape_cast %171 : vector<1x32xf32> to vector<1x1x32xf32>
    %173 = vector.broadcast %172 : vector<1x1x32xf32> to vector<12x12x32xf32>
    %174 = arith.mulf %170, %173 : vector<12x12x32xf32>
    %175 = arith.addf %168, %174 : vector<12x12x32xf32>
    %c0_125 = arith.constant 0 : index
    %c0_126 = arith.constant 0 : index
    %176 = vector.load %arg3[%c0_125, %c0_126] : memref<1x32xf32, #tpu.memory_space<vmem>>, vector<1x32xf32>
    %177 = vector.shape_cast %176 : vector<1x32xf32> to vector<1x1x32xf32>
    %178 = vector.broadcast %177 : vector<1x1x32xf32> to vector<12x12x32xf32>
    %179 = arith.addf %175, %178 : vector<12x12x32xf32>
    %cst_127 = arith.constant 0.000000e+00 : f32
    %180 = vector.broadcast %cst_127 : f32 to vector<12x12x32xf32>
    %181 = arith.maximumf %179, %180 : vector<12x12x32xf32>
    %c0_128 = arith.constant 0 : index
    %c0_129 = arith.constant 0 : index
    %c0_130 = arith.constant 0 : index
    %182 = vector.load %arg7[%c0_128, %c0_129, %c0_130] : memref<12x12x32xf32, #tpu.memory_space<vmem>>, vector<12x12x32xf32>
    tpu.vector_store %arg7[%c0_128, %c0_129, %c0_130], %181 {strides = array<i32>} : memref<12x12x32xf32, #tpu.memory_space<vmem>>, vector<12x12x32xf32>,
    %cst_131 = arith.constant 0.000000e+00 : f32
    %183 = vector.broadcast %cst_131 : f32 to vector<64x128xf32>
    %c0_132 = arith.constant 0 : index
    %c0_133 = arith.constant 0 : index
    %c0_134 = arith.constant 0 : index
    %184 = vector.load %arg7[%c0_132, %c0_133, %c0_134] : memref<12x12x32xf32, #tpu.memory_space<vmem>>, vector<12x8x32xf32>
    %185 = vector.extract_strided_slice %184 {offsets = [0, 0, 0], sizes = [8, 8, 32], strides = [1, 1, 1]} : vector<12x8x32xf32> to vector<8x8x32xf32>
    %186 = vector.shape_cast %185 : vector<8x8x32xf32> to vector<64x32xf32>
    %c0_135 = arith.constant 0 : index
    %c0_136 = arith.constant 0 : index
    %c0_137 = arith.constant 0 : index
    %187 = vector.load %arg4[%c0_135, %c0_136, %c0_137] : memref<25x32x128xf32, #tpu.memory_space<vmem>>, vector<1x32x128xf32>
    %188 = vector.shape_cast %187 : vector<1x32x128xf32> to vector<32x128xf32>
    %cst_138 = arith.constant dense<0.000000e+00> : vector<64x128xf32>
    %189 = tpu.matmul %186, %188, %cst_138 {dimension_numbers = #tpu.dot_dimension_numbers<[1], [0], [0], [1], [0, 0, 1, 1], [], []>} : vector<64x32xf32>, vector<32x128xf32>, vector<64x128xf32> -> vector<64x128xf32>
    %190 = arith.addf %183, %189 : vector<64x128xf32>
    %191 = vector.extract_strided_slice %184 {offsets = [1, 0, 0], sizes = [8, 8, 32], strides = [1, 1, 1]} : vector<12x8x32xf32> to vector<8x8x32xf32>
    %192 = vector.shape_cast %191 : vector<8x8x32xf32> to vector<64x32xf32>
    %c5_139 = arith.constant 5 : index
    %c0_140 = arith.constant 0 : index
    %c0_141 = arith.constant 0 : index
    %193 = vector.load %arg4[%c5_139, %c0_140, %c0_141] : memref<25x32x128xf32, #tpu.memory_space<vmem>>, vector<1x32x128xf32>
    %194 = vector.shape_cast %193 : vector<1x32x128xf32> to vector<32x128xf32>
    %cst_142 = arith.constant dense<0.000000e+00> : vector<64x128xf32>
    %195 = tpu.matmul %192, %194, %cst_142 {dimension_numbers = #tpu.dot_dimension_numbers<[1], [0], [0], [1], [0, 0, 1, 1], [], []>} : vector<64x32xf32>, vector<32x128xf32>, vector<64x128xf32> -> vector<64x128xf32>
    %196 = arith.addf %190, %195 : vector<64x128xf32>
    %197 = vector.extract_strided_slice %184 {offsets = [2, 0, 0], sizes = [8, 8, 32], strides = [1, 1, 1]} : vector<12x8x32xf32> to vector<8x8x32xf32>
    %198 = vector.shape_cast %197 : vector<8x8x32xf32> to vector<64x32xf32>
    %c10_143 = arith.constant 10 : index
    %c0_144 = arith.constant 0 : index
    %c0_145 = arith.constant 0 : index
    %199 = vector.load %arg4[%c10_143, %c0_144, %c0_145] : memref<25x32x128xf32, #tpu.memory_space<vmem>>, vector<1x32x128xf32>
    %200 = vector.shape_cast %199 : vector<1x32x128xf32> to vector<32x128xf32>
    %cst_146 = arith.constant dense<0.000000e+00> : vector<64x128xf32>
    %201 = tpu.matmul %198, %200, %cst_146 {dimension_numbers = #tpu.dot_dimension_numbers<[1], [0], [0], [1], [0, 0, 1, 1], [], []>} : vector<64x32xf32>, vector<32x128xf32>, vector<64x128xf32> -> vector<64x128xf32>
    %202 = arith.addf %196, %201 : vector<64x128xf32>
    %203 = vector.extract_strided_slice %184 {offsets = [3, 0, 0], sizes = [8, 8, 32], strides = [1, 1, 1]} : vector<12x8x32xf32> to vector<8x8x32xf32>
    %204 = vector.shape_cast %203 : vector<8x8x32xf32> to vector<64x32xf32>
    %c15_147 = arith.constant 15 : index
    %c0_148 = arith.constant 0 : index
    %c0_149 = arith.constant 0 : index
    %205 = vector.load %arg4[%c15_147, %c0_148, %c0_149] : memref<25x32x128xf32, #tpu.memory_space<vmem>>, vector<1x32x128xf32>
    %206 = vector.shape_cast %205 : vector<1x32x128xf32> to vector<32x128xf32>
    %cst_150 = arith.constant dense<0.000000e+00> : vector<64x128xf32>
    %207 = tpu.matmul %204, %206, %cst_150 {dimension_numbers = #tpu.dot_dimension_numbers<[1], [0], [0], [1], [0, 0, 1, 1], [], []>} : vector<64x32xf32>, vector<32x128xf32>, vector<64x128xf32> -> vector<64x128xf32>
    %208 = arith.addf %202, %207 : vector<64x128xf32>
    %209 = vector.extract_strided_slice %184 {offsets = [4, 0, 0], sizes = [8, 8, 32], strides = [1, 1, 1]} : vector<12x8x32xf32> to vector<8x8x32xf32>
    %210 = vector.shape_cast %209 : vector<8x8x32xf32> to vector<64x32xf32>
    %c20_151 = arith.constant 20 : index
    %c0_152 = arith.constant 0 : index
    %c0_153 = arith.constant 0 : index
    %211 = vector.load %arg4[%c20_151, %c0_152, %c0_153] : memref<25x32x128xf32, #tpu.memory_space<vmem>>, vector<1x32x128xf32>
    %212 = vector.shape_cast %211 : vector<1x32x128xf32> to vector<32x128xf32>
    %cst_154 = arith.constant dense<0.000000e+00> : vector<64x128xf32>
    %213 = tpu.matmul %210, %212, %cst_154 {dimension_numbers = #tpu.dot_dimension_numbers<[1], [0], [0], [1], [0, 0, 1, 1], [], []>} : vector<64x32xf32>, vector<32x128xf32>, vector<64x128xf32> -> vector<64x128xf32>
    %214 = arith.addf %208, %213 : vector<64x128xf32>
    %c0_155 = arith.constant 0 : index
    %c1_156 = arith.constant 1 : index
    %c0_157 = arith.constant 0 : index
    %215 = vector.load %arg7[%c0_155, %c1_156, %c0_157] : memref<12x12x32xf32, #tpu.memory_space<vmem>>, vector<12x8x32xf32>
    %216 = vector.extract_strided_slice %215 {offsets = [0, 0, 0], sizes = [8, 8, 32], strides = [1, 1, 1]} : vector<12x8x32xf32> to vector<8x8x32xf32>
    %217 = vector.shape_cast %216 : vector<8x8x32xf32> to vector<64x32xf32>
    %c1_158 = arith.constant 1 : index
    %c0_159 = arith.constant 0 : index
    %c0_160 = arith.constant 0 : index
    %218 = vector.load %arg4[%c1_158, %c0_159, %c0_160] : memref<25x32x128xf32, #tpu.memory_space<vmem>>, vector<1x32x128xf32>
    %219 = vector.shape_cast %218 : vector<1x32x128xf32> to vector<32x128xf32>
    %cst_161 = arith.constant dense<0.000000e+00> : vector<64x128xf32>
    %220 = tpu.matmul %217, %219, %cst_161 {dimension_numbers = #tpu.dot_dimension_numbers<[1], [0], [0], [1], [0, 0, 1, 1], [], []>} : vector<64x32xf32>, vector<32x128xf32>, vector<64x128xf32> -> vector<64x128xf32>
    %221 = arith.addf %214, %220 : vector<64x128xf32>
    %222 = vector.extract_strided_slice %215 {offsets = [1, 0, 0], sizes = [8, 8, 32], strides = [1, 1, 1]} : vector<12x8x32xf32> to vector<8x8x32xf32>
    %223 = vector.shape_cast %222 : vector<8x8x32xf32> to vector<64x32xf32>
    %c6_162 = arith.constant 6 : index
    %c0_163 = arith.constant 0 : index
    %c0_164 = arith.constant 0 : index
    %224 = vector.load %arg4[%c6_162, %c0_163, %c0_164] : memref<25x32x128xf32, #tpu.memory_space<vmem>>, vector<1x32x128xf32>
    %225 = vector.shape_cast %224 : vector<1x32x128xf32> to vector<32x128xf32>
    %cst_165 = arith.constant dense<0.000000e+00> : vector<64x128xf32>
    %226 = tpu.matmul %223, %225, %cst_165 {dimension_numbers = #tpu.dot_dimension_numbers<[1], [0], [0], [1], [0, 0, 1, 1], [], []>} : vector<64x32xf32>, vector<32x128xf32>, vector<64x128xf32> -> vector<64x128xf32>
    %227 = arith.addf %221, %226 : vector<64x128xf32>
    %228 = vector.extract_strided_slice %215 {offsets = [2, 0, 0], sizes = [8, 8, 32], strides = [1, 1, 1]} : vector<12x8x32xf32> to vector<8x8x32xf32>
    %229 = vector.shape_cast %228 : vector<8x8x32xf32> to vector<64x32xf32>
    %c11_166 = arith.constant 11 : index
    %c0_167 = arith.constant 0 : index
    %c0_168 = arith.constant 0 : index
    %230 = vector.load %arg4[%c11_166, %c0_167, %c0_168] : memref<25x32x128xf32, #tpu.memory_space<vmem>>, vector<1x32x128xf32>
    %231 = vector.shape_cast %230 : vector<1x32x128xf32> to vector<32x128xf32>
    %cst_169 = arith.constant dense<0.000000e+00> : vector<64x128xf32>
    %232 = tpu.matmul %229, %231, %cst_169 {dimension_numbers = #tpu.dot_dimension_numbers<[1], [0], [0], [1], [0, 0, 1, 1], [], []>} : vector<64x32xf32>, vector<32x128xf32>, vector<64x128xf32> -> vector<64x128xf32>
    %233 = arith.addf %227, %232 : vector<64x128xf32>
    %234 = vector.extract_strided_slice %215 {offsets = [3, 0, 0], sizes = [8, 8, 32], strides = [1, 1, 1]} : vector<12x8x32xf32> to vector<8x8x32xf32>
    %235 = vector.shape_cast %234 : vector<8x8x32xf32> to vector<64x32xf32>
    %c16_170 = arith.constant 16 : index
    %c0_171 = arith.constant 0 : index
    %c0_172 = arith.constant 0 : index
    %236 = vector.load %arg4[%c16_170, %c0_171, %c0_172] : memref<25x32x128xf32, #tpu.memory_space<vmem>>, vector<1x32x128xf32>
    %237 = vector.shape_cast %236 : vector<1x32x128xf32> to vector<32x128xf32>
    %cst_173 = arith.constant dense<0.000000e+00> : vector<64x128xf32>
    %238 = tpu.matmul %235, %237, %cst_173 {dimension_numbers = #tpu.dot_dimension_numbers<[1], [0], [0], [1], [0, 0, 1, 1], [], []>} : vector<64x32xf32>, vector<32x128xf32>, vector<64x128xf32> -> vector<64x128xf32>
    %239 = arith.addf %233, %238 : vector<64x128xf32>
    %240 = vector.extract_strided_slice %215 {offsets = [4, 0, 0], sizes = [8, 8, 32], strides = [1, 1, 1]} : vector<12x8x32xf32> to vector<8x8x32xf32>
    %241 = vector.shape_cast %240 : vector<8x8x32xf32> to vector<64x32xf32>
    %c21_174 = arith.constant 21 : index
    %c0_175 = arith.constant 0 : index
    %c0_176 = arith.constant 0 : index
    %242 = vector.load %arg4[%c21_174, %c0_175, %c0_176] : memref<25x32x128xf32, #tpu.memory_space<vmem>>, vector<1x32x128xf32>
    %243 = vector.shape_cast %242 : vector<1x32x128xf32> to vector<32x128xf32>
    %cst_177 = arith.constant dense<0.000000e+00> : vector<64x128xf32>
    %244 = tpu.matmul %241, %243, %cst_177 {dimension_numbers = #tpu.dot_dimension_numbers<[1], [0], [0], [1], [0, 0, 1, 1], [], []>} : vector<64x32xf32>, vector<32x128xf32>, vector<64x128xf32> -> vector<64x128xf32>
    %245 = arith.addf %239, %244 : vector<64x128xf32>
    %c0_178 = arith.constant 0 : index
    %c2_179 = arith.constant 2 : index
    %c0_180 = arith.constant 0 : index
    %246 = vector.load %arg7[%c0_178, %c2_179, %c0_180] : memref<12x12x32xf32, #tpu.memory_space<vmem>>, vector<12x8x32xf32>
    %247 = vector.extract_strided_slice %246 {offsets = [0, 0, 0], sizes = [8, 8, 32], strides = [1, 1, 1]} : vector<12x8x32xf32> to vector<8x8x32xf32>
    %248 = vector.shape_cast %247 : vector<8x8x32xf32> to vector<64x32xf32>
    %c2_181 = arith.constant 2 : index
    %c0_182 = arith.constant 0 : index
    %c0_183 = arith.constant 0 : index
    %249 = vector.load %arg4[%c2_181, %c0_182, %c0_183] : memref<25x32x128xf32, #tpu.memory_space<vmem>>, vector<1x32x128xf32>
    %250 = vector.shape_cast %249 : vector<1x32x128xf32> to vector<32x128xf32>
    %cst_184 = arith.constant dense<0.000000e+00> : vector<64x128xf32>
    %251 = tpu.matmul %248, %250, %cst_184 {dimension_numbers = #tpu.dot_dimension_numbers<[1], [0], [0], [1], [0, 0, 1, 1], [], []>} : vector<64x32xf32>, vector<32x128xf32>, vector<64x128xf32> -> vector<64x128xf32>
    %252 = arith.addf %245, %251 : vector<64x128xf32>
    %253 = vector.extract_strided_slice %246 {offsets = [1, 0, 0], sizes = [8, 8, 32], strides = [1, 1, 1]} : vector<12x8x32xf32> to vector<8x8x32xf32>
    %254 = vector.shape_cast %253 : vector<8x8x32xf32> to vector<64x32xf32>
    %c7_185 = arith.constant 7 : index
    %c0_186 = arith.constant 0 : index
    %c0_187 = arith.constant 0 : index
    %255 = vector.load %arg4[%c7_185, %c0_186, %c0_187] : memref<25x32x128xf32, #tpu.memory_space<vmem>>, vector<1x32x128xf32>
    %256 = vector.shape_cast %255 : vector<1x32x128xf32> to vector<32x128xf32>
    %cst_188 = arith.constant dense<0.000000e+00> : vector<64x128xf32>
    %257 = tpu.matmul %254, %256, %cst_188 {dimension_numbers = #tpu.dot_dimension_numbers<[1], [0], [0], [1], [0, 0, 1, 1], [], []>} : vector<64x32xf32>, vector<32x128xf32>, vector<64x128xf32> -> vector<64x128xf32>
    %258 = arith.addf %252, %257 : vector<64x128xf32>
    %259 = vector.extract_strided_slice %246 {offsets = [2, 0, 0], sizes = [8, 8, 32], strides = [1, 1, 1]} : vector<12x8x32xf32> to vector<8x8x32xf32>
    %260 = vector.shape_cast %259 : vector<8x8x32xf32> to vector<64x32xf32>
    %c12_189 = arith.constant 12 : index
    %c0_190 = arith.constant 0 : index
    %c0_191 = arith.constant 0 : index
    %261 = vector.load %arg4[%c12_189, %c0_190, %c0_191] : memref<25x32x128xf32, #tpu.memory_space<vmem>>, vector<1x32x128xf32>
    %262 = vector.shape_cast %261 : vector<1x32x128xf32> to vector<32x128xf32>
    %cst_192 = arith.constant dense<0.000000e+00> : vector<64x128xf32>
    %263 = tpu.matmul %260, %262, %cst_192 {dimension_numbers = #tpu.dot_dimension_numbers<[1], [0], [0], [1], [0, 0, 1, 1], [], []>} : vector<64x32xf32>, vector<32x128xf32>, vector<64x128xf32> -> vector<64x128xf32>
    %264 = arith.addf %258, %263 : vector<64x128xf32>
    %265 = vector.extract_strided_slice %246 {offsets = [3, 0, 0], sizes = [8, 8, 32], strides = [1, 1, 1]} : vector<12x8x32xf32> to vector<8x8x32xf32>
    %266 = vector.shape_cast %265 : vector<8x8x32xf32> to vector<64x32xf32>
    %c17_193 = arith.constant 17 : index
    %c0_194 = arith.constant 0 : index
    %c0_195 = arith.constant 0 : index
    %267 = vector.load %arg4[%c17_193, %c0_194, %c0_195] : memref<25x32x128xf32, #tpu.memory_space<vmem>>, vector<1x32x128xf32>
    %268 = vector.shape_cast %267 : vector<1x32x128xf32> to vector<32x128xf32>
    %cst_196 = arith.constant dense<0.000000e+00> : vector<64x128xf32>
    %269 = tpu.matmul %266, %268, %cst_196 {dimension_numbers = #tpu.dot_dimension_numbers<[1], [0], [0], [1], [0, 0, 1, 1], [], []>} : vector<64x32xf32>, vector<32x128xf32>, vector<64x128xf32> -> vector<64x128xf32>
    %270 = arith.addf %264, %269 : vector<64x128xf32>
    %271 = vector.extract_strided_slice %246 {offsets = [4, 0, 0], sizes = [8, 8, 32], strides = [1, 1, 1]} : vector<12x8x32xf32> to vector<8x8x32xf32>
    %272 = vector.shape_cast %271 : vector<8x8x32xf32> to vector<64x32xf32>
    %c22_197 = arith.constant 22 : index
    %c0_198 = arith.constant 0 : index
    %c0_199 = arith.constant 0 : index
    %273 = vector.load %arg4[%c22_197, %c0_198, %c0_199] : memref<25x32x128xf32, #tpu.memory_space<vmem>>, vector<1x32x128xf32>
    %274 = vector.shape_cast %273 : vector<1x32x128xf32> to vector<32x128xf32>
    %cst_200 = arith.constant dense<0.000000e+00> : vector<64x128xf32>
    %275 = tpu.matmul %272, %274, %cst_200 {dimension_numbers = #tpu.dot_dimension_numbers<[1], [0], [0], [1], [0, 0, 1, 1], [], []>} : vector<64x32xf32>, vector<32x128xf32>, vector<64x128xf32> -> vector<64x128xf32>
    %276 = arith.addf %270, %275 : vector<64x128xf32>
    %c0_201 = arith.constant 0 : index
    %c3_202 = arith.constant 3 : index
    %c0_203 = arith.constant 0 : index
    %277 = vector.load %arg7[%c0_201, %c3_202, %c0_203] : memref<12x12x32xf32, #tpu.memory_space<vmem>>, vector<12x8x32xf32>
    %278 = vector.extract_strided_slice %277 {offsets = [0, 0, 0], sizes = [8, 8, 32], strides = [1, 1, 1]} : vector<12x8x32xf32> to vector<8x8x32xf32>
    %279 = vector.shape_cast %278 : vector<8x8x32xf32> to vector<64x32xf32>
    %c3_204 = arith.constant 3 : index
    %c0_205 = arith.constant 0 : index
    %c0_206 = arith.constant 0 : index
    %280 = vector.load %arg4[%c3_204, %c0_205, %c0_206] : memref<25x32x128xf32, #tpu.memory_space<vmem>>, vector<1x32x128xf32>
    %281 = vector.shape_cast %280 : vector<1x32x128xf32> to vector<32x128xf32>
    %cst_207 = arith.constant dense<0.000000e+00> : vector<64x128xf32>
    %282 = tpu.matmul %279, %281, %cst_207 {dimension_numbers = #tpu.dot_dimension_numbers<[1], [0], [0], [1], [0, 0, 1, 1], [], []>} : vector<64x32xf32>, vector<32x128xf32>, vector<64x128xf32> -> vector<64x128xf32>
    %283 = arith.addf %276, %282 : vector<64x128xf32>
    %284 = vector.extract_strided_slice %277 {offsets = [1, 0, 0], sizes = [8, 8, 32], strides = [1, 1, 1]} : vector<12x8x32xf32> to vector<8x8x32xf32>
    %285 = vector.shape_cast %284 : vector<8x8x32xf32> to vector<64x32xf32>
    %c8_208 = arith.constant 8 : index
    %c0_209 = arith.constant 0 : index
    %c0_210 = arith.constant 0 : index
    %286 = vector.load %arg4[%c8_208, %c0_209, %c0_210] : memref<25x32x128xf32, #tpu.memory_space<vmem>>, vector<1x32x128xf32>
    %287 = vector.shape_cast %286 : vector<1x32x128xf32> to vector<32x128xf32>
    %cst_211 = arith.constant dense<0.000000e+00> : vector<64x128xf32>
    %288 = tpu.matmul %285, %287, %cst_211 {dimension_numbers = #tpu.dot_dimension_numbers<[1], [0], [0], [1], [0, 0, 1, 1], [], []>} : vector<64x32xf32>, vector<32x128xf32>, vector<64x128xf32> -> vector<64x128xf32>
    %289 = arith.addf %283, %288 : vector<64x128xf32>
    %290 = vector.extract_strided_slice %277 {offsets = [2, 0, 0], sizes = [8, 8, 32], strides = [1, 1, 1]} : vector<12x8x32xf32> to vector<8x8x32xf32>
    %291 = vector.shape_cast %290 : vector<8x8x32xf32> to vector<64x32xf32>
    %c13_212 = arith.constant 13 : index
    %c0_213 = arith.constant 0 : index
    %c0_214 = arith.constant 0 : index
    %292 = vector.load %arg4[%c13_212, %c0_213, %c0_214] : memref<25x32x128xf32, #tpu.memory_space<vmem>>, vector<1x32x128xf32>
    %293 = vector.shape_cast %292 : vector<1x32x128xf32> to vector<32x128xf32>
    %cst_215 = arith.constant dense<0.000000e+00> : vector<64x128xf32>
    %294 = tpu.matmul %291, %293, %cst_215 {dimension_numbers = #tpu.dot_dimension_numbers<[1], [0], [0], [1], [0, 0, 1, 1], [], []>} : vector<64x32xf32>, vector<32x128xf32>, vector<64x128xf32> -> vector<64x128xf32>
    %295 = arith.addf %289, %294 : vector<64x128xf32>
    %296 = vector.extract_strided_slice %277 {offsets = [3, 0, 0], sizes = [8, 8, 32], strides = [1, 1, 1]} : vector<12x8x32xf32> to vector<8x8x32xf32>
    %297 = vector.shape_cast %296 : vector<8x8x32xf32> to vector<64x32xf32>
    %c18_216 = arith.constant 18 : index
    %c0_217 = arith.constant 0 : index
    %c0_218 = arith.constant 0 : index
    %298 = vector.load %arg4[%c18_216, %c0_217, %c0_218] : memref<25x32x128xf32, #tpu.memory_space<vmem>>, vector<1x32x128xf32>
    %299 = vector.shape_cast %298 : vector<1x32x128xf32> to vector<32x128xf32>
    %cst_219 = arith.constant dense<0.000000e+00> : vector<64x128xf32>
    %300 = tpu.matmul %297, %299, %cst_219 {dimension_numbers = #tpu.dot_dimension_numbers<[1], [0], [0], [1], [0, 0, 1, 1], [], []>} : vector<64x32xf32>, vector<32x128xf32>, vector<64x128xf32> -> vector<64x128xf32>
    %301 = arith.addf %295, %300 : vector<64x128xf32>
    %302 = vector.extract_strided_slice %277 {offsets = [4, 0, 0], sizes = [8, 8, 32], strides = [1, 1, 1]} : vector<12x8x32xf32> to vector<8x8x32xf32>
    %303 = vector.shape_cast %302 : vector<8x8x32xf32> to vector<64x32xf32>
    %c23_220 = arith.constant 23 : index
    %c0_221 = arith.constant 0 : index
    %c0_222 = arith.constant 0 : index
    %304 = vector.load %arg4[%c23_220, %c0_221, %c0_222] : memref<25x32x128xf32, #tpu.memory_space<vmem>>, vector<1x32x128xf32>
    %305 = vector.shape_cast %304 : vector<1x32x128xf32> to vector<32x128xf32>
    %cst_223 = arith.constant dense<0.000000e+00> : vector<64x128xf32>
    %306 = tpu.matmul %303, %305, %cst_223 {dimension_numbers = #tpu.dot_dimension_numbers<[1], [0], [0], [1], [0, 0, 1, 1], [], []>} : vector<64x32xf32>, vector<32x128xf32>, vector<64x128xf32> -> vector<64x128xf32>
    %307 = arith.addf %301, %306 : vector<64x128xf32>
    %c0_224 = arith.constant 0 : index
    %c4_225 = arith.constant 4 : index
    %c0_226 = arith.constant 0 : index
    %308 = vector.load %arg7[%c0_224, %c4_225, %c0_226] : memref<12x12x32xf32, #tpu.memory_space<vmem>>, vector<12x8x32xf32>
    %309 = vector.extract_strided_slice %308 {offsets = [0, 0, 0], sizes = [8, 8, 32], strides = [1, 1, 1]} : vector<12x8x32xf32> to vector<8x8x32xf32>
    %310 = vector.shape_cast %309 : vector<8x8x32xf32> to vector<64x32xf32>
    %c4_227 = arith.constant 4 : index
    %c0_228 = arith.constant 0 : index
    %c0_229 = arith.constant 0 : index
    %311 = vector.load %arg4[%c4_227, %c0_228, %c0_229] : memref<25x32x128xf32, #tpu.memory_space<vmem>>, vector<1x32x128xf32>
    %312 = vector.shape_cast %311 : vector<1x32x128xf32> to vector<32x128xf32>
    %cst_230 = arith.constant dense<0.000000e+00> : vector<64x128xf32>
    %313 = tpu.matmul %310, %312, %cst_230 {dimension_numbers = #tpu.dot_dimension_numbers<[1], [0], [0], [1], [0, 0, 1, 1], [], []>} : vector<64x32xf32>, vector<32x128xf32>, vector<64x128xf32> -> vector<64x128xf32>
    %314 = arith.addf %307, %313 : vector<64x128xf32>
    %315 = vector.extract_strided_slice %308 {offsets = [1, 0, 0], sizes = [8, 8, 32], strides = [1, 1, 1]} : vector<12x8x32xf32> to vector<8x8x32xf32>
    %316 = vector.shape_cast %315 : vector<8x8x32xf32> to vector<64x32xf32>
    %c9_231 = arith.constant 9 : index
    %c0_232 = arith.constant 0 : index
    %c0_233 = arith.constant 0 : index
    %317 = vector.load %arg4[%c9_231, %c0_232, %c0_233] : memref<25x32x128xf32, #tpu.memory_space<vmem>>, vector<1x32x128xf32>
    %318 = vector.shape_cast %317 : vector<1x32x128xf32> to vector<32x128xf32>
    %cst_234 = arith.constant dense<0.000000e+00> : vector<64x128xf32>
    %319 = tpu.matmul %316, %318, %cst_234 {dimension_numbers = #tpu.dot_dimension_numbers<[1], [0], [0], [1], [0, 0, 1, 1], [], []>} : vector<64x32xf32>, vector<32x128xf32>, vector<64x128xf32> -> vector<64x128xf32>
    %320 = arith.addf %314, %319 : vector<64x128xf32>
    %321 = vector.extract_strided_slice %308 {offsets = [2, 0, 0], sizes = [8, 8, 32], strides = [1, 1, 1]} : vector<12x8x32xf32> to vector<8x8x32xf32>
    %322 = vector.shape_cast %321 : vector<8x8x32xf32> to vector<64x32xf32>
    %c14_235 = arith.constant 14 : index
    %c0_236 = arith.constant 0 : index
    %c0_237 = arith.constant 0 : index
    %323 = vector.load %arg4[%c14_235, %c0_236, %c0_237] : memref<25x32x128xf32, #tpu.memory_space<vmem>>, vector<1x32x128xf32>
    %324 = vector.shape_cast %323 : vector<1x32x128xf32> to vector<32x128xf32>
    %cst_238 = arith.constant dense<0.000000e+00> : vector<64x128xf32>
    %325 = tpu.matmul %322, %324, %cst_238 {dimension_numbers = #tpu.dot_dimension_numbers<[1], [0], [0], [1], [0, 0, 1, 1], [], []>} : vector<64x32xf32>, vector<32x128xf32>, vector<64x128xf32> -> vector<64x128xf32>
    %326 = arith.addf %320, %325 : vector<64x128xf32>
    %327 = vector.extract_strided_slice %308 {offsets = [3, 0, 0], sizes = [8, 8, 32], strides = [1, 1, 1]} : vector<12x8x32xf32> to vector<8x8x32xf32>
    %328 = vector.shape_cast %327 : vector<8x8x32xf32> to vector<64x32xf32>
    %c19_239 = arith.constant 19 : index
    %c0_240 = arith.constant 0 : index
    %c0_241 = arith.constant 0 : index
    %329 = vector.load %arg4[%c19_239, %c0_240, %c0_241] : memref<25x32x128xf32, #tpu.memory_space<vmem>>, vector<1x32x128xf32>
    %330 = vector.shape_cast %329 : vector<1x32x128xf32> to vector<32x128xf32>
    %cst_242 = arith.constant dense<0.000000e+00> : vector<64x128xf32>
    %331 = tpu.matmul %328, %330, %cst_242 {dimension_numbers = #tpu.dot_dimension_numbers<[1], [0], [0], [1], [0, 0, 1, 1], [], []>} : vector<64x32xf32>, vector<32x128xf32>, vector<64x128xf32> -> vector<64x128xf32>
    %332 = arith.addf %326, %331 : vector<64x128xf32>
    %333 = vector.extract_strided_slice %308 {offsets = [4, 0, 0], sizes = [8, 8, 32], strides = [1, 1, 1]} : vector<12x8x32xf32> to vector<8x8x32xf32>
    %334 = vector.shape_cast %333 : vector<8x8x32xf32> to vector<64x32xf32>
    %c24_243 = arith.constant 24 : index
    %c0_244 = arith.constant 0 : index
    %c0_245 = arith.constant 0 : index
    %335 = vector.load %arg4[%c24_243, %c0_244, %c0_245] : memref<25x32x128xf32, #tpu.memory_space<vmem>>, vector<1x32x128xf32>
    %336 = vector.shape_cast %335 : vector<1x32x128xf32> to vector<32x128xf32>
    %cst_246 = arith.constant dense<0.000000e+00> : vector<64x128xf32>
    %337 = tpu.matmul %334, %336, %cst_246 {dimension_numbers = #tpu.dot_dimension_numbers<[1], [0], [0], [1], [0, 0, 1, 1], [], []>} : vector<64x32xf32>, vector<32x128xf32>, vector<64x128xf32> -> vector<64x128xf32>
    %338 = arith.addf %332, %337 : vector<64x128xf32>
    %c0_247 = arith.constant 0 : index
    %c0_248 = arith.constant 0 : index
    %339 = vector.load %arg5[%c0_247, %c0_248] : memref<1x128xf32, #tpu.memory_space<vmem>>, vector<1x128xf32>
    %340 = vector.broadcast %339 : vector<1x128xf32> to vector<64x128xf32>
    %341 = arith.addf %338, %340 : vector<64x128xf32>
    %cst_249 = arith.constant 0.000000e+00 : f32
    %342 = vector.broadcast %cst_249 : f32 to vector<64x128xf32>
    %343 = arith.maximumf %341, %342 : vector<64x128xf32>
    %c0_250 = arith.constant 0 : index
    %c0_251 = arith.constant 0 : index
    %344 = vector.load %arg6[%c0_250, %c0_251] : memref<64x128xf32, #tpu.memory_space<vmem>>, vector<64x128xf32>
    tpu.vector_store %arg6[%c0_250, %c0_251], %343 {strides = array<i32>} : memref<64x128xf32, #tpu.memory_space<vmem>>, vector<64x128xf32>,
    return
  }
  func.func @transform_0(%arg0: i32) -> (i32, i32, i32, i32) {
    %c0_i32 = arith.constant 0 : i32
    %c0_i32_0 = arith.constant 0 : i32
    %c0_i32_1 = arith.constant 0 : i32
    %c0_i32_2 = arith.constant 0 : i32
    return %arg0, %c0_i32, %c0_i32_0, %c0_i32_1 : i32, i32, i32, i32
  }
  func.func @transform_1(%arg0: i32) -> (i32, i32) {
    %c0_i32 = arith.constant 0 : i32
    %c0_i32_0 = arith.constant 0 : i32
    %c0_i32_1 = arith.constant 0 : i32
    return %c0_i32, %c0_i32_0 : i32, i32
  }
  func.func @transform_2(%arg0: i32) -> (i32, i32) {
    %c0_i32 = arith.constant 0 : i32
    %c0_i32_0 = arith.constant 0 : i32
    %c0_i32_1 = arith.constant 0 : i32
    return %c0_i32, %c0_i32_0 : i32, i32
  }
  func.func @transform_3(%arg0: i32) -> (i32, i32, i32) {
    %c0_i32 = arith.constant 0 : i32
    %c0_i32_0 = arith.constant 0 : i32
    %c0_i32_1 = arith.constant 0 : i32
    %c0_i32_2 = arith.constant 0 : i32
    return %c0_i32, %c0_i32_0, %c0_i32_1 : i32, i32, i32
  }
  func.func @transform_4(%arg0: i32) -> (i32, i32) {
    %c0_i32 = arith.constant 0 : i32
    %c0_i32_0 = arith.constant 0 : i32
    %c0_i32_1 = arith.constant 0 : i32
    return %c0_i32, %c0_i32_0 : i32, i32
  }
  func.func @transform_5(%arg0: i32) -> (i32, i32) {
    %c0_i32 = arith.constant 0 : i32
    %c0_i32_0 = arith.constant 0 : i32
    return %arg0, %c0_i32 : i32, i32
  }
}

</mosaic_0001>

<llo_original>
// kernel: tpu_custom_call.1
$region0: #{tpu_custom_call.1}
  #allocation0 [shape = 'u32[]', space=smem, size = 0x4, offset = 0x4, fixed_abs, tag = 'smem constant byte address 0x4 - core index']
  #allocation1 [shape = 'u32[144,128]{1,0:T(1,128)}', space=vmem, size = 0x12000, scoped, tag = 'internal scratch']
  #allocation2 [shape = 'f32[12,12,32]{2,1,0:T(8,128)}', space=vmem, size = 0x18000, scoped, tag = 'scratch operand']
  %s0 = inlined_call_operand.hbm [shape: f32[2,16,16,32], index: 0, kind: input, shape index: {}]
  %s1 = inlined_call_operand.hbm [shape: f32[25,32], index: 1, kind: input, shape index: {}]
  %s2 = inlined_call_operand.vmem [shape: f32[1,32], index: 2, kind: input, shape index: {}]
  %s3 = inlined_call_operand.hbm [shape: f32[25,32,128], index: 3, kind: input, shape index: {}]
  %s4 = inlined_call_operand.vmem [shape: f32[1,128], index: 4, kind: input, shape index: {}]
  %s5 = inlined_call_operand.hbm [shape: f32[128,128], index: 5, kind: output, shape index: {}]
  %s6 = sld [smem:[#allocation0]]
  $region65: #{tpu_custom_call.1} parent=0
    _
  %s8 = ssub.s32 1, %s6
  %s9 = scalar_select 0, %s8, %s6
  $region1: #{tpu_custom_call.1} parent=0
    #allocation3 [shape = 'u8[262144]{0}', space=vmem, size = 0x40000, scoped, tag = 'input window, operand 0']
    #allocation4 [shape = 's32[2]{0}', space=sflag, size = 0x8, scoped, tag = 'scoped memory for tpu_custom_call.1']
    #allocation5 [shape = 's32[2]{0}', space=sflag, size = 0x8, scoped, tag = 'scoped memory for tpu_custom_call.1']
    #allocation6 [shape = 'u8[16384]{0}', space=vmem, size = 0x4000, scoped, tag = 'input window, operand 1, single buffered']
    #allocation7 [shape = 's32[1]{0}', space=sflag, size = 0x4, scoped, tag = 'scoped memory for tpu_custom_call.1']
    #allocation8 [shape = 'u8[409600]{0}', space=vmem, size = 0x64000, scoped, tag = 'input window, operand 3, single buffered']
    #allocation9 [shape = 'u8[65536]{0}', space=vmem, size = 0x10000, scoped, tag = 'output window, operand 0']
    %10 = vsyncpa [#allocation4], 0
    %s11 = scalar_lea.sflag [#allocation4], 1
    %12 = vsyncpa %s11, 0
    %13 = vsyncpa [#allocation7], 0
    %14 = vsyncpa [#allocation5], 0
    %s15 = scalar_lea.sflag [#allocation5], 1
    %16 = vsyncpa %s15, 0
    loop: start=0, step=1, limit=4
    $region2: #{tpu_custom_call.1} parent=1 // loop_pre_header
      _
    $region3: #{tpu_custom_call.1} parent=1 // loop_header
      %s18 = sphi 0, %s22
      %p19 = scmp.ge.s32.totalorder %s18, 4
      %s28 = sphi 0, %s30
      %s31 = sphi 0, %s28
      %s32 = sphi 0, %s31
      %s48 = sphi 0, %s32
      %s52 = sphi 0, %s52
      %s54 = sphi 0, %s52
      %s55 = sphi 0, %s54
      %s69 = sphi 0, %s55
      %s73 = sphi 0, %s73
      %s75 = sphi 0, %s73
      %s76 = sphi 0, %s75
      %s90 = sphi 0, %s76
      %s94 = sphi 0, %s94
      %s96 = sphi 0, %s94
      %s97 = sphi 0, %s96
      %s111 = sphi 0, %s97
      %s115 = sphi 0, %s115
      %s117 = sphi 0, %s115
      %s118 = sphi 0, %s117
      %s132 = sphi 0, %s118
      %s138 = sphi 0, %s140
      %s141 = sphi 0, %s138
      %s142 = sphi 0, %s141
      %s158 = sphi 0, %s142
    $region4: #{tpu_custom_call.1} parent=1 // loop_header_branch
      %21 = sbr.rel (%p19) target = $region8
    $region5: #{tpu_custom_call.1} parent=1 // loop_body
      %s23 = ssub.s32 %s18, 1
      %s24 = ssub.s32 %s18, 2
      %s25 = sadd.s32 %s18, 1
      %s26 = ssub.s32 %s18, %s25
      %p27 = scmp.eq.s32.totalorder %s26, 0
      %s29 = sadd.s32 %s28, 1
      %s30 = scalar_select %p27, %s28, %s29
      %p33 = pneg %p27
      %p34 = scmp.eq.s32.totalorder %s18, 1
      %p35 = por %p33, %p34
      %p36 = scmp.ne.s32.totalorder %s28, %s31
      %p37 = scmp.eq.s32.totalorder %s18, 0
      %p38 = por %p36, %p37
      %p39 = scmp.ne.s32.totalorder %s28, %s31
      %p40 = scmp.eq.s32.totalorder %s23, 1
      %p41 = por %p39, %p40
      %p42 = scmp.ne.s32.totalorder %s31, %s32
      %p43 = scmp.eq.s32.totalorder %s23, 0
      %p44 = por %p42, %p43
      %p45 = scmp.ne.s32.totalorder %s31, %s32
      %p46 = scmp.eq.s32.totalorder %s24, 1
      %p47 = por %p45, %p46
      %p49 = scmp.ne.s32.totalorder %s32, %s48
      %p50 = scmp.eq.s32.totalorder %s24, 0
      %p51 = por %p49, %p50
      %s53 = sadd.s32 %s52, 1
      %p56 = scmp.eq.s32.totalorder %s18, 1
      %p57 = scmp.ne.s32.totalorder %s52, %s54
      %p58 = scmp.eq.s32.totalorder %s18, 0
      %p59 = por %p57, %p58
      %p60 = scmp.ne.s32.totalorder %s52, %s54
      %p61 = scmp.eq.s32.totalorder %s23, 1
      %p62 = por %p60, %p61
      %p63 = scmp.ne.s32.totalorder %s54, %s55
      %p64 = scmp.eq.s32.totalorder %s23, 0
      %p65 = por %p63, %p64
      %p66 = scmp.ne.s32.totalorder %s54, %s55
      %p67 = scmp.eq.s32.totalorder %s24, 1
      %p68 = por %p66, %p67
      %p70 = scmp.ne.s32.totalorder %s55, %s69
      %p71 = scmp.eq.s32.totalorder %s24, 0
      %p72 = por %p70, %p71
      %s74 = sadd.s32 %s73, 1
      %p77 = scmp.eq.s32.totalorder %s18, 1
      %p78 = scmp.ne.s32.totalorder %s73, %s75
      %p79 = scmp.eq.s32.totalorder %s18, 0
      %p80 = por %p78, %p79
      %p81 = scmp.ne.s32.totalorder %s73, %s75
      %p82 = scmp.eq.s32.totalorder %s23, 1
      %p83 = por %p81, %p82
      %p84 = scmp.ne.s32.totalorder %s75, %s76
      %p85 = scmp.eq.s32.totalorder %s23, 0
      %p86 = por %p84, %p85
      %p87 = scmp.ne.s32.totalorder %s75, %s76
      %p88 = scmp.eq.s32.totalorder %s24, 1
      %p89 = por %p87, %p88
      %p91 = scmp.ne.s32.totalorder %s76, %s90
      %p92 = scmp.eq.s32.totalorder %s24, 0
      %p93 = por %p91, %p92
      %s95 = sadd.s32 %s94, 1
      %p98 = scmp.eq.s32.totalorder %s18, 1
      %p99 = scmp.ne.s32.totalorder %s94, %s96
      %p100 = scmp.eq.s32.totalorder %s18, 0
      %p101 = por %p99, %p100
      %p102 = scmp.ne.s32.totalorder %s94, %s96
      %p103 = scmp.eq.s32.totalorder %s23, 1
      %p104 = por %p102, %p103
      %p105 = scmp.ne.s32.totalorder %s96, %s97
      %p106 = scmp.eq.s32.totalorder %s23, 0
      %p107 = por %p105, %p106
      %p108 = scmp.ne.s32.totalorder %s96, %s97
      %p109 = scmp.eq.s32.totalorder %s24, 1
      %p110 = por %p108, %p109
      %p112 = scmp.ne.s32.totalorder %s97, %s111
      %p113 = scmp.eq.s32.totalorder %s24, 0
      %p114 = por %p112, %p113
      %s116 = sadd.s32 %s115, 1
      %p119 = scmp.eq.s32.totalorder %s18, 1
      %p120 = scmp.ne.s32.totalorder %s115, %s117
      %p121 = scmp.eq.s32.totalorder %s18, 0
      %p122 = por %p120, %p121
      %p123 = scmp.ne.s32.totalorder %s115, %s117
      %p124 = scmp.eq.s32.totalorder %s23, 1
      %p125 = por %p123, %p124
      %p126 = scmp.ne.s32.totalorder %s117, %s118
      %p127 = scmp.eq.s32.totalorder %s23, 0
      %p128 = por %p126, %p127
      %p129 = scmp.ne.s32.totalorder %s117, %s118
      %p130 = scmp.eq.s32.totalorder %s24, 1
      %p131 = por %p129, %p130
      %p133 = scmp.ne.s32.totalorder %s118, %s132
      %p134 = scmp.eq.s32.totalorder %s24, 0
      %p135 = por %p133, %p134
      %s136 = ssub.s32 %s18, %s25
      %p137 = scmp.eq.s32.totalorder %s136, 0
      %s139 = sadd.s32 %s138, 1
      %s140 = scalar_select %p137, %s138, %s139
      %p143 = pneg %p137
      %p144 = scmp.eq.s32.totalorder %s18, 1
      %p145 = por %p143, %p144
      %p146 = scmp.ne.s32.totalorder %s138, %s141
      %p147 = scmp.eq.s32.totalorder %s18, 0
      %p148 = por %p146, %p147
      %p149 = scmp.ne.s32.totalorder %s138, %s141
      %p150 = scmp.eq.s32.totalorder %s23, 1
      %p151 = por %p149, %p150
      %p152 = scmp.ne.s32.totalorder %s141, %s142
      %p153 = scmp.eq.s32.totalorder %s23, 0
      %p154 = por %p152, %p153
      %p155 = scmp.ne.s32.totalorder %s141, %s142
      %p156 = scmp.eq.s32.totalorder %s24, 1
      %p157 = por %p155, %p156
      %p159 = scmp.ne.s32.totalorder %s142, %s158
      %p160 = scmp.eq.s32.totalorder %s24, 0
      %p161 = por %p159, %p160
      %p162 = scmp.le.s32.totalorder 1, %s18
      %p163 = scmp.lt.s32.totalorder %s18, 3
      %p164 = pnand %p162, %p163
      %p165 = pneg %p164
      // Predicated region
      $region9: #{tpu_custom_call.1} parent=5 // pred_check
        _
      $region10: #{tpu_custom_call.1} parent=5 // pred_check_branch
        %167 = sbr.rel (%p164) target = $region12
      $region11: #{tpu_custom_call.1} parent=5 // pred_region
        %s168 = ssub.s32 %s18, 1
        // Predicated region
        $region13: #{tpu_custom_call.1} parent=11 // pred_check
          %p169 = pneg %p65
        $region14: #{tpu_custom_call.1} parent=11 // pred_check_branch
          %171 = sbr.rel (%p169) target = $region16
        $region15: #{tpu_custom_call.1} parent=11 // pred_region
          %s173 = ssub.s32 512, 512
          %174 = vsyncadd [#allocation7], %s173
          %s175 = sshll.u32 [#allocation6], 4
          %s176 = int_to_ptr.vmem [resolvable:$true] %s175
          %181 = dma.hbm_to_vmem [thread:$0]  %s1, 512, %s176, [#allocation7], 128, 128, 8
        $region16: #{tpu_custom_call.1} parent=11 // pred_fallthru
          _
        // Predicated region
        $region17: #{tpu_custom_call.1} parent=11 // pred_check
          %p182 = pneg %p86
        $region18: #{tpu_custom_call.1} parent=11 // pred_check_branch
          %184 = sbr.rel (%p182) target = $region20
        $region19: #{tpu_custom_call.1} parent=11 // pred_region
          _
        $region20: #{tpu_custom_call.1} parent=11 // pred_fallthru
          _
        // Predicated region
        $region21: #{tpu_custom_call.1} parent=11 // pred_check
          %p185 = pneg %p107
        $region22: #{tpu_custom_call.1} parent=11 // pred_check_branch
          %187 = sbr.rel (%p185) target = $region24
        $region23: #{tpu_custom_call.1} parent=11 // pred_region
          %s189 = ssub.s32 12800, 12800
          %190 = vsyncadd [#allocation7], %s189
          %s191 = sshll.u32 [#allocation8], 4
          %s192 = int_to_ptr.vmem [resolvable:$true] %s191
          %197 = dma.hbm_to_vmem [thread:$0]  %s3, 12800, %s192, [#allocation7], 128, 128, 8
        $region24: #{tpu_custom_call.1} parent=11 // pred_fallthru
          _
        // Predicated region
        $region25: #{tpu_custom_call.1} parent=11 // pred_check
          %p198 = pneg %p128
        $region26: #{tpu_custom_call.1} parent=11 // pred_check_branch
          %200 = sbr.rel (%p198) target = $region28
        $region27: #{tpu_custom_call.1} parent=11 // pred_region
          _
        $region28: #{tpu_custom_call.1} parent=11 // pred_fallthru
          _
      $region12: #{tpu_custom_call.1} parent=5 // pred_fallthru
        _
      %p201 = scmp.lt.s32.totalorder %s18, 2
      // Predicated region
      $region29: #{tpu_custom_call.1} parent=5 // pred_check
        %p202 = pneg %p201
      $region30: #{tpu_custom_call.1} parent=5 // pred_check_branch
        %204 = sbr.rel (%p202) target = $region32
      $region31: #{tpu_custom_call.1} parent=5 // pred_region
        // Predicated region
        $region33: #{tpu_custom_call.1} parent=31 // pred_check
          %p205 = pneg %p38
        $region34: #{tpu_custom_call.1} parent=31 // pred_check_branch
          %207 = sbr.rel (%p205) target = $region36
        $region35: #{tpu_custom_call.1} parent=31 // pred_region
          %s208 = sand.u32 %s28, 1
          %s209 = scalar_lea.sflag [#allocation4], %s208
          %s210 = sand.u32 %s28, 1
          %s211 = smul.addr %s210, 256
          %s212 = scalar_lea.vmem [#allocation3], %s211
          %s214 = ssub.s32 4096, 4096
          %215 = vsyncadd %s209, %s214
          %s216 = smul.addr %s18, 32
          %s217 = smul.addr %s216, 128
          %s218 = scalar_lea.hbm %s0, %s217
          %s219 = sshll.u32 %s212, 4
          %s220 = int_to_ptr.vmem [resolvable:$true] %s219
          %225 = dma.hbm_to_vmem [thread:$0]  %s218, 4096, %s220, %s209, 128, 128, 8
        $region36: #{tpu_custom_call.1} parent=31 // pred_fallthru
          _
      $region32: #{tpu_custom_call.1} parent=5 // pred_fallthru
        _
      %p226 = scmp.le.s32.totalorder 1, %s18
      %p227 = scmp.lt.s32.totalorder %s18, 3
      %p228 = pnand %p226, %p227
      %p229 = pneg %p228
      // Predicated region
      $region37: #{tpu_custom_call.1} parent=5 // pred_check
        _
      $region38: #{tpu_custom_call.1} parent=5 // pred_check_branch
        %231 = sbr.rel (%p228) target = $region40
      $region39: #{tpu_custom_call.1} parent=5 // pred_region
        %s232 = ssub.s32 %s18, 1
        %s233 = sand.u32 %s31, 1
        %s234 = scalar_lea.sflag [#allocation4], %s233
        %s235 = sand.u32 %s31, 1
        %s236 = smul.addr %s235, 256
        %s237 = scalar_lea.vmem [#allocation3], %s236
        // Predicated region
        $region41: #{tpu_custom_call.1} parent=39 // pred_check
          %p238 = pneg %p44
        $region42: #{tpu_custom_call.1} parent=39 // pred_check_branch
          %240 = sbr.rel (%p238) target = $region44
        $region43: #{tpu_custom_call.1} parent=39 // pred_region
          %241 = dma.done %s234, 4096
        $region44: #{tpu_custom_call.1} parent=39 // pred_fallthru
          _
        // Predicated region
        $region45: #{tpu_custom_call.1} parent=39 // pred_check
          %p242 = pneg %p65
        $region46: #{tpu_custom_call.1} parent=39 // pred_check_branch
          %244 = sbr.rel (%p242) target = $region48
        $region47: #{tpu_custom_call.1} parent=39 // pred_region
          %245 = dma.done [#allocation7], 512
        $region48: #{tpu_custom_call.1} parent=39 // pred_fallthru
          _
        // Predicated region
        $region49: #{tpu_custom_call.1} parent=39 // pred_check
          %p246 = pneg %p107
        $region50: #{tpu_custom_call.1} parent=39 // pred_check_branch
          %248 = sbr.rel (%p246) target = $region52
        $region51: #{tpu_custom_call.1} parent=39 // pred_region
          %249 = dma.done [#allocation7], 12800
        $region52: #{tpu_custom_call.1} parent=39 // pred_fallthru
          _
        %s250 = sand.u32 %s31, 1
        %s251 = scalar_lea.sflag [#allocation4], %s250
        %s252 = sand.u32 %s31, 1
        %s253 = smul.addr %s252, 256
        %s254 = scalar_lea.vmem [#allocation3], %s253
        %p255 = pneg %p44
        %p256 = pneg %p41
        %p257 = pneg %p65
        %p258 = pneg %p62
        %p259 = pneg %p86
        %p260 = pneg %p83
        %p261 = pneg %p107
        %p262 = pneg %p104
        %p263 = pneg %p128
        %p264 = pneg %p125
        %p265 = pneg %p154
        %p266 = pneg %p151
        %s267 = sand.u32 %s141, 1
        %s268 = scalar_lea.sflag [#allocation5], %s267
        %s269 = sand.u32 %s141, 1
        %s270 = smul.addr %s269, 64
        %s271 = scalar_lea.vmem [#allocation9], %s270
        %s272 = smul.u32 8, %s23
        %v273 = vld [vmem:[%s237] sm:$0xff]
        %v274 = vld [vmem:[%s237 + $0x8] sm:$0xf]
        %v275 = vld [vmem:[%s237 + $0x10] sm:$0xff]
        %v276 = vld [vmem:[%s237 + $0x18] sm:$0xf]
        %v277 = vld [vmem:[%s237 + $0x20] sm:$0xff]
        %v278 = vld [vmem:[%s237 + $0x28] sm:$0xf]
        %v279 = vld [vmem:[%s237 + $0x30] sm:$0xff]
        %v280 = vld [vmem:[%s237 + $0x38] sm:$0xf]
        %v281 = vld [vmem:[%s237 + $0x40] sm:$0xff]
        %v282 = vld [vmem:[%s237 + $0x48] sm:$0xf]
        %v283 = vld [vmem:[%s237 + $0x50] sm:$0xff]
        %v284 = vld [vmem:[%s237 + $0x58] sm:$0xf]
        %v285 = vld [vmem:[%s237 + $0x60] sm:$0xff]
        %v286 = vld [vmem:[%s237 + $0x68] sm:$0xf]
        %v287 = vld [vmem:[%s237 + $0x70] sm:$0xff]
        %v288 = vld [vmem:[%s237 + $0x78] sm:$0xf]
        %v289 = vld [vmem:[%s237 + $0x80] sm:$0xff]
        %v290 = vld [vmem:[%s237 + $0x88] sm:$0xf]
        %v291 = vld [vmem:[%s237 + $0x90] sm:$0xff]
        %v292 = vld [vmem:[%s237 + $0x98] sm:$0xf]
        %v293 = vld [vmem:[%s237 + $0xa0] sm:$0xff]
        %v294 = vld [vmem:[%s237 + $0xa8] sm:$0xf]
        %v295 = vld [vmem:[%s237 + $0xb0] sm:$0xff]
        %v296 = vld [vmem:[%s237 + $0xb8] sm:$0xf]
        %v297 = vld [vmem:[#allocation6] sm:$0x1]
        %v298 = vlaneseq
        %v299 = vshrl.u32 %v298, 7
        %v300 = vsub.s32 0, %v299
        %v301 = vrot.slane %v297, %v300
        %v302 = vmul.f32 %v273, %v301
        %v303 = vmul.f32 %v274, %v301
        %v304 = vmul.f32 %v275, %v301
        %v305 = vmul.f32 %v276, %v301
        %v306 = vmul.f32 %v277, %v301
        %v307 = vmul.f32 %v278, %v301
        %v308 = vmul.f32 %v279, %v301
        %v309 = vmul.f32 %v280, %v301
        %v310 = vmul.f32 %v281, %v301
        %v311 = vmul.f32 %v282, %v301
        %v312 = vmul.f32 %v283, %v301
        %v313 = vmul.f32 %v284, %v301
        %v314 = vmul.f32 %v285, %v301
        %v315 = vmul.f32 %v286, %v301
        %v316 = vmul.f32 %v287, %v301
        %v317 = vmul.f32 %v288, %v301
        %v318 = vmul.f32 %v289, %v301
        %v319 = vmul.f32 %v290, %v301
        %v320 = vmul.f32 %v291, %v301
        %v321 = vmul.f32 %v292, %v301
        %v322 = vmul.f32 %v293, %v301
        %v323 = vmul.f32 %v294, %v301
        %v324 = vmul.f32 %v295, %v301
        %v325 = vmul.f32 %v296, %v301
        %v326 = vadd.f32 %v302, 0.0
        %v327 = vadd.f32 %v303, 0.0
        %v328 = vadd.f32 %v304, 0.0
        %v329 = vadd.f32 %v305, 0.0
        %v330 = vadd.f32 %v306, 0.0
        %v331 = vadd.f32 %v307, 0.0
        %v332 = vadd.f32 %v308, 0.0
        %v333 = vadd.f32 %v309, 0.0
        %v334 = vadd.f32 %v310, 0.0
        %v335 = vadd.f32 %v311, 0.0
        %v336 = vadd.f32 %v312, 0.0
        %v337 = vadd.f32 %v313, 0.0
        %v338 = vadd.f32 %v314, 0.0
        %v339 = vadd.f32 %v315, 0.0
        %v340 = vadd.f32 %v316, 0.0
        %v341 = vadd.f32 %v317, 0.0
        %v342 = vadd.f32 %v318, 0.0
        %v343 = vadd.f32 %v319, 0.0
        %v344 = vadd.f32 %v320, 0.0
        %v345 = vadd.f32 %v321, 0.0
        %v346 = vadd.f32 %v322, 0.0
        %v347 = vadd.f32 %v323, 0.0
        %v348 = vadd.f32 %v324, 0.0
        %v349 = vadd.f32 %v325, 0.0
        %v350 = vld [vmem:[%s237 + $0x1] sm:$0xff]
        %v351 = vld [vmem:[%s237 + $0x9] sm:$0xf]
        %v352 = vld [vmem:[%s237 + $0x11] sm:$0xff]
        %v353 = vld [vmem:[%s237 + $0x19] sm:$0xf]
        %v354 = vld [vmem:[%s237 + $0x21] sm:$0xff]
        %v355 = vld [vmem:[%s237 + $0x29] sm:$0xf]
        %v356 = vld [vmem:[%s237 + $0x31] sm:$0xff]
        %v357 = vld [vmem:[%s237 + $0x39] sm:$0xf]
        %v358 = vld [vmem:[%s237 + $0x41] sm:$0xff]
        %v359 = vld [vmem:[%s237 + $0x49] sm:$0xf]
        %v360 = vld [vmem:[%s237 + $0x51] sm:$0xff]
        %v361 = vld [vmem:[%s237 + $0x59] sm:$0xf]
        %v362 = vld [vmem:[%s237 + $0x61] sm:$0xff]
        %v363 = vld [vmem:[%s237 + $0x69] sm:$0xf]
        %v364 = vld [vmem:[%s237 + $0x71] sm:$0xff]
        %v365 = vld [vmem:[%s237 + $0x79] sm:$0xf]
        %v366 = vld [vmem:[%s237 + $0x81] sm:$0xff]
        %v367 = vld [vmem:[%s237 + $0x89] sm:$0xf]
        %v368 = vld [vmem:[%s237 + $0x91] sm:$0xff]
        %v369 = vld [vmem:[%s237 + $0x99] sm:$0xf]
        %v370 = vld [vmem:[%s237 + $0xa1] sm:$0xff]
        %v371 = vld [vmem:[%s237 + $0xa9] sm:$0xf]
        %v372 = vld [vmem:[%s237 + $0xb1] sm:$0xff]
        %v373 = vld [vmem:[%s237 + $0xb9] sm:$0xf]
        %v374 = vld [vmem:[#allocation6 + $0x1] sm:$0x1]
        %v375 = vlaneseq
        %v376 = vshrl.u32 %v375, 7
        %v377 = vsub.s32 0, %v376
        %v378 = vrot.slane %v374, %v377
        %v379 = vmul.f32 %v350, %v378
        %v380 = vmul.f32 %v351, %v378
        %v381 = vmul.f32 %v352, %v378
        %v382 = vmul.f32 %v353, %v378
        %v383 = vmul.f32 %v354, %v378
        %v384 = vmul.f32 %v355, %v378
        %v385 = vmul.f32 %v356, %v378
        %v386 = vmul.f32 %v357, %v378
        %v387 = vmul.f32 %v358, %v378
        %v388 = vmul.f32 %v359, %v378
        %v389 = vmul.f32 %v360, %v378
        %v390 = vmul.f32 %v361, %v378
        %v391 = vmul.f32 %v362, %v378
        %v392 = vmul.f32 %v363, %v378
        %v393 = vmul.f32 %v364, %v378
        %v394 = vmul.f32 %v365, %v378
        %v395 = vmul.f32 %v366, %v378
        %v396 = vmul.f32 %v367, %v378
        %v397 = vmul.f32 %v368, %v378
        %v398 = vmul.f32 %v369, %v378
        %v399 = vmul.f32 %v370, %v378
        %v400 = vmul.f32 %v371, %v378
        %v401 = vmul.f32 %v372, %v378
        %v402 = vmul.f32 %v373, %v378
        %v403 = vadd.f32 %v326, %v379
        %v404 = vadd.f32 %v327, %v380
        %v405 = vadd.f32 %v328, %v381
        %v406 = vadd.f32 %v329, %v382
        %v407 = vadd.f32 %v330, %v383
        %v408 = vadd.f32 %v331, %v384
        %v409 = vadd.f32 %v332, %v385
        %v410 = vadd.f32 %v333, %v386
        %v411 = vadd.f32 %v334, %v387
        %v412 = vadd.f32 %v335, %v388
        %v413 = vadd.f32 %v336, %v389
        %v414 = vadd.f32 %v337, %v390
        %v415 = vadd.f32 %v338, %v391
        %v416 = vadd.f32 %v339, %v392
        %v417 = vadd.f32 %v340, %v393
        %v418 = vadd.f32 %v341, %v394
        %v419 = vadd.f32 %v342, %v395
        %v420 = vadd.f32 %v343, %v396
        %v421 = vadd.f32 %v344, %v397
        %v422 = vadd.f32 %v345, %v398
        %v423 = vadd.f32 %v346, %v399
        %v424 = vadd.f32 %v347, %v400
        %v425 = vadd.f32 %v348, %v401
        %v426 = vadd.f32 %v349, %v402
        %v427 = vld [vmem:[%s237 + $0x2] sm:$0xff]
        %v428 = vld [vmem:[%s237 + $0xa] sm:$0xf]
        %v429 = vld [vmem:[%s237 + $0x12] sm:$0xff]
        %v430 = vld [vmem:[%s237 + $0x1a] sm:$0xf]
        %v431 = vld [vmem:[%s237 + $0x22] sm:$0xff]
        %v432 = vld [vmem:[%s237 + $0x2a] sm:$0xf]
        %v433 = vld [vmem:[%s237 + $0x32] sm:$0xff]
        %v434 = vld [vmem:[%s237 + $0x3a] sm:$0xf]
        %v435 = vld [vmem:[%s237 + $0x42] sm:$0xff]
        %v436 = vld [vmem:[%s237 + $0x4a] sm:$0xf]
        %v437 = vld [vmem:[%s237 + $0x52] sm:$0xff]
        %v438 = vld [vmem:[%s237 + $0x5a] sm:$0xf]
        %v439 = vld [vmem:[%s237 + $0x62] sm:$0xff]
        %v440 = vld [vmem:[%s237 + $0x6a] sm:$0xf]
        %v441 = vld [vmem:[%s237 + $0x72] sm:$0xff]
        %v442 = vld [vmem:[%s237 + $0x7a] sm:$0xf]
        %v443 = vld [vmem:[%s237 + $0x82] sm:$0xff]
        %v444 = vld [vmem:[%s237 + $0x8a] sm:$0xf]
        %v445 = vld [vmem:[%s237 + $0x92] sm:$0xff]
        %v446 = vld [vmem:[%s237 + $0x9a] sm:$0xf]
        %v447 = vld [vmem:[%s237 + $0xa2] sm:$0xff]
        %v448 = vld [vmem:[%s237 + $0xaa] sm:$0xf]
        %v449 = vld [vmem:[%s237 + $0xb2] sm:$0xff]
        %v450 = vld [vmem:[%s237 + $0xba] sm:$0xf]
        %v451 = vld [vmem:[#allocation6 + $0x2] sm:$0x1]
        %v452 = vlaneseq
        %v453 = vshrl.u32 %v452, 7
        %v454 = vsub.s32 0, %v453
        %v455 = vrot.slane %v451, %v454
        %v456 = vmul.f32 %v427, %v455
        %v457 = vmul.f32 %v428, %v455
        %v458 = vmul.f32 %v429, %v455
        %v459 = vmul.f32 %v430, %v455
        %v460 = vmul.f32 %v431, %v455
        %v461 = vmul.f32 %v432, %v455
        %v462 = vmul.f32 %v433, %v455
        %v463 = vmul.f32 %v434, %v455
        %v464 = vmul.f32 %v435, %v455
        %v465 = vmul.f32 %v436, %v455
        %v466 = vmul.f32 %v437, %v455
        %v467 = vmul.f32 %v438, %v455
        %v468 = vmul.f32 %v439, %v455
        %v469 = vmul.f32 %v440, %v455
        %v470 = vmul.f32 %v441, %v455
        %v471 = vmul.f32 %v442, %v455
        %v472 = vmul.f32 %v443, %v455
        %v473 = vmul.f32 %v444, %v455
        %v474 = vmul.f32 %v445, %v455
        %v475 = vmul.f32 %v446, %v455
        %v476 = vmul.f32 %v447, %v455
        %v477 = vmul.f32 %v448, %v455
        %v478 = vmul.f32 %v449, %v455
        %v479 = vmul.f32 %v450, %v455
        %v480 = vadd.f32 %v403, %v456
        %v481 = vadd.f32 %v404, %v457
        %v482 = vadd.f32 %v405, %v458
        %v483 = vadd.f32 %v406, %v459
        %v484 = vadd.f32 %v407, %v460
        %v485 = vadd.f32 %v408, %v461
        %v486 = vadd.f32 %v409, %v462
        %v487 = vadd.f32 %v410, %v463
        %v488 = vadd.f32 %v411, %v464
        %v489 = vadd.f32 %v412, %v465
        %v490 = vadd.f32 %v413, %v466
        %v491 = vadd.f32 %v414, %v467
        %v492 = vadd.f32 %v415, %v468
        %v493 = vadd.f32 %v416, %v469
        %v494 = vadd.f32 %v417, %v470
        %v495 = vadd.f32 %v418, %v471
        %v496 = vadd.f32 %v419, %v472
        %v497 = vadd.f32 %v420, %v473
        %v498 = vadd.f32 %v421, %v474
        %v499 = vadd.f32 %v422, %v475
        %v500 = vadd.f32 %v423, %v476
        %v501 = vadd.f32 %v424, %v477
        %v502 = vadd.f32 %v425, %v478
        %v503 = vadd.f32 %v426, %v479
        %v504 = vld [vmem:[%s237 + $0x3] sm:$0xff]
        %v505 = vld [vmem:[%s237 + $0xb] sm:$0xf]
        %v506 = vld [vmem:[%s237 + $0x13] sm:$0xff]
        %v507 = vld [vmem:[%s237 + $0x1b] sm:$0xf]
        %v508 = vld [vmem:[%s237 + $0x23] sm:$0xff]
        %v509 = vld [vmem:[%s237 + $0x2b] sm:$0xf]
        %v510 = vld [vmem:[%s237 + $0x33] sm:$0xff]
        %v511 = vld [vmem:[%s237 + $0x3b] sm:$0xf]
        %v512 = vld [vmem:[%s237 + $0x43] sm:$0xff]
        %v513 = vld [vmem:[%s237 + $0x4b] sm:$0xf]
        %v514 = vld [vmem:[%s237 + $0x53] sm:$0xff]
        %v515 = vld [vmem:[%s237 + $0x5b] sm:$0xf]
        %v516 = vld [vmem:[%s237 + $0x63] sm:$0xff]
        %v517 = vld [vmem:[%s237 + $0x6b] sm:$0xf]
        %v518 = vld [vmem:[%s237 + $0x73] sm:$0xff]
        %v519 = vld [vmem:[%s237 + $0x7b] sm:$0xf]
        %v520 = vld [vmem:[%s237 + $0x83] sm:$0xff]
        %v521 = vld [vmem:[%s237 + $0x8b] sm:$0xf]
        %v522 = vld [vmem:[%s237 + $0x93] sm:$0xff]
        %v523 = vld [vmem:[%s237 + $0x9b] sm:$0xf]
        %v524 = vld [vmem:[%s237 + $0xa3] sm:$0xff]
        %v525 = vld [vmem:[%s237 + $0xab] sm:$0xf]
        %v526 = vld [vmem:[%s237 + $0xb3] sm:$0xff]
        %v527 = vld [vmem:[%s237 + $0xbb] sm:$0xf]
        %v528 = vld [vmem:[#allocation6 + $0x3] sm:$0x1]
        %v529 = vlaneseq
        %v530 = vshrl.u32 %v529, 7
        %v531 = vsub.s32 0, %v530
        %v532 = vrot.slane %v528, %v531
        %v533 = vmul.f32 %v504, %v532
        %v534 = vmul.f32 %v505, %v532
        %v535 = vmul.f32 %v506, %v532
        %v536 = vmul.f32 %v507, %v532
        %v537 = vmul.f32 %v508, %v532
        %v538 = vmul.f32 %v509, %v532
        %v539 = vmul.f32 %v510, %v532
        %v540 = vmul.f32 %v511, %v532
        %v541 = vmul.f32 %v512, %v532
        %v542 = vmul.f32 %v513, %v532
        %v543 = vmul.f32 %v514, %v532
        %v544 = vmul.f32 %v515, %v532
        %v545 = vmul.f32 %v516, %v532
        %v546 = vmul.f32 %v517, %v532
        %v547 = vmul.f32 %v518, %v532
        %v548 = vmul.f32 %v519, %v532
        %v549 = vmul.f32 %v520, %v532
        %v550 = vmul.f32 %v521, %v532
        %v551 = vmul.f32 %v522, %v532
        %v552 = vmul.f32 %v523, %v532
        %v553 = vmul.f32 %v524, %v532
        %v554 = vmul.f32 %v525, %v532
        %v555 = vmul.f32 %v526, %v532
        %v556 = vmul.f32 %v527, %v532
        %v557 = vadd.f32 %v480, %v533
        %v558 = vadd.f32 %v481, %v534
        %v559 = vadd.f32 %v482, %v535
        %v560 = vadd.f32 %v483, %v536
        %v561 = vadd.f32 %v484, %v537
        %v562 = vadd.f32 %v485, %v538
        %v563 = vadd.f32 %v486, %v539
        %v564 = vadd.f32 %v487, %v540
        %v565 = vadd.f32 %v488, %v541
        %v566 = vadd.f32 %v489, %v542
        %v567 = vadd.f32 %v490, %v543
        %v568 = vadd.f32 %v491, %v544
        %v569 = vadd.f32 %v492, %v545
        %v570 = vadd.f32 %v493, %v546
        %v571 = vadd.f32 %v494, %v547
        %v572 = vadd.f32 %v495, %v548
        %v573 = vadd.f32 %v496, %v549
        %v574 = vadd.f32 %v497, %v550
        %v575 = vadd.f32 %v498, %v551
        %v576 = vadd.f32 %v499, %v552
        %v577 = vadd.f32 %v500, %v553
        %v578 = vadd.f32 %v501, %v554
        %v579 = vadd.f32 %v502, %v555
        %v580 = vadd.f32 %v503, %v556
        %v581 = vld [vmem:[%s237 + $0x4] sm:$0xff]
        %v582 = vld [vmem:[%s237 + $0xc] sm:$0xf]
        %v583 = vld [vmem:[%s237 + $0x14] sm:$0xff]
        %v584 = vld [vmem:[%s237 + $0x1c] sm:$0xf]
        %v585 = vld [vmem:[%s237 + $0x24] sm:$0xff]
        %v586 = vld [vmem:[%s237 + $0x2c] sm:$0xf]
        %v587 = vld [vmem:[%s237 + $0x34] sm:$0xff]
        %v588 = vld [vmem:[%s237 + $0x3c] sm:$0xf]
        %v589 = vld [vmem:[%s237 + $0x44] sm:$0xff]
        %v590 = vld [vmem:[%s237 + $0x4c] sm:$0xf]
        %v591 = vld [vmem:[%s237 + $0x54] sm:$0xff]
        %v592 = vld [vmem:[%s237 + $0x5c] sm:$0xf]
        %v593 = vld [vmem:[%s237 + $0x64] sm:$0xff]
        %v594 = vld [vmem:[%s237 + $0x6c] sm:$0xf]
        %v595 = vld [vmem:[%s237 + $0x74] sm:$0xff]
        %v596 = vld [vmem:[%s237 + $0x7c] sm:$0xf]
        %v597 = vld [vmem:[%s237 + $0x84] sm:$0xff]
        %v598 = vld [vmem:[%s237 + $0x8c] sm:$0xf]
        %v599 = vld [vmem:[%s237 + $0x94] sm:$0xff]
        %v600 = vld [vmem:[%s237 + $0x9c] sm:$0xf]
        %v601 = vld [vmem:[%s237 + $0xa4] sm:$0xff]
        %v602 = vld [vmem:[%s237 + $0xac] sm:$0xf]
        %v603 = vld [vmem:[%s237 + $0xb4] sm:$0xff]
        %v604 = vld [vmem:[%s237 + $0xbc] sm:$0xf]
        %v605 = vld [vmem:[#allocation6 + $0x4] sm:$0x1]
        %v606 = vlaneseq
        %v607 = vshrl.u32 %v606, 7
        %v608 = vsub.s32 0, %v607
        %v609 = vrot.slane %v605, %v608
        %v610 = vmul.f32 %v581, %v609
        %v611 = vmul.f32 %v582, %v609
        %v612 = vmul.f32 %v583, %v609
        %v613 = vmul.f32 %v584, %v609
        %v614 = vmul.f32 %v585, %v609
        %v615 = vmul.f32 %v586, %v609
        %v616 = vmul.f32 %v587, %v609
        %v617 = vmul.f32 %v588, %v609
        %v618 = vmul.f32 %v589, %v609
        %v619 = vmul.f32 %v590, %v609
        %v620 = vmul.f32 %v591, %v609
        %v621 = vmul.f32 %v592, %v609
        %v622 = vmul.f32 %v593, %v609
        %v623 = vmul.f32 %v594, %v609
        %v624 = vmul.f32 %v595, %v609
        %v625 = vmul.f32 %v596, %v609
        %v626 = vmul.f32 %v597, %v609
        %v627 = vmul.f32 %v598, %v609
        %v628 = vmul.f32 %v599, %v609
        %v629 = vmul.f32 %v600, %v609
        %v630 = vmul.f32 %v601, %v609
        %v631 = vmul.f32 %v602, %v609
        %v632 = vmul.f32 %v603, %v609
        %v633 = vmul.f32 %v604, %v609
        %v634 = vadd.f32 %v557, %v610
        %v635 = vadd.f32 %v558, %v611
        %v636 = vadd.f32 %v559, %v612
        %v637 = vadd.f32 %v560, %v613
        %v638 = vadd.f32 %v561, %v614
        %v639 = vadd.f32 %v562, %v615
        %v640 = vadd.f32 %v563, %v616
        %v641 = vadd.f32 %v564, %v617
        %v642 = vadd.f32 %v565, %v618
        %v643 = vadd.f32 %v566, %v619
        %v644 = vadd.f32 %v567, %v620
        %v645 = vadd.f32 %v568, %v621
        %v646 = vadd.f32 %v569, %v622
        %v647 = vadd.f32 %v570, %v623
        %v648 = vadd.f32 %v571, %v624
        %v649 = vadd.f32 %v572, %v625
        %v650 = vadd.f32 %v573, %v626
        %v651 = vadd.f32 %v574, %v627
        %v652 = vadd.f32 %v575, %v628
        %v653 = vadd.f32 %v576, %v629
        %v654 = vadd.f32 %v577, %v630
        %v655 = vadd.f32 %v578, %v631
        %v656 = vadd.f32 %v579, %v632
        %v657 = vadd.f32 %v580, %v633
        %s658 = scalar_lea.vmem %s237, 16 [#allocation3]
        %v659 = vld [vmem:[%s658] sm:$0xff]
        %v660 = vld [vmem:[%s658 + $0x8] sm:$0xf]
        %v661 = vld [vmem:[%s658 + $0x10] sm:$0xff]
        %v662 = vld [vmem:[%s658 + $0x18] sm:$0xf]
        %v663 = vld [vmem:[%s658 + $0x20] sm:$0xff]
        %v664 = vld [vmem:[%s658 + $0x28] sm:$0xf]
        %v665 = vld [vmem:[%s658 + $0x30] sm:$0xff]
        %v666 = vld [vmem:[%s658 + $0x38] sm:$0xf]
        %v667 = vld [vmem:[%s658 + $0x40] sm:$0xff]
        %v668 = vld [vmem:[%s658 + $0x48] sm:$0xf]
        %v669 = vld [vmem:[%s658 + $0x50] sm:$0xff]
        %v670 = vld [vmem:[%s658 + $0x58] sm:$0xf]
        %v671 = vld [vmem:[%s658 + $0x60] sm:$0xff]
        %v672 = vld [vmem:[%s658 + $0x68] sm:$0xf]
        %v673 = vld [vmem:[%s658 + $0x70] sm:$0xff]
        %v674 = vld [vmem:[%s658 + $0x78] sm:$0xf]
        %v675 = vld [vmem:[%s658 + $0x80] sm:$0xff]
        %v676 = vld [vmem:[%s658 + $0x88] sm:$0xf]
        %v677 = vld [vmem:[%s658 + $0x90] sm:$0xff]
        %v678 = vld [vmem:[%s658 + $0x98] sm:$0xf]
        %v679 = vld [vmem:[%s658 + $0xa0] sm:$0xff]
        %v680 = vld [vmem:[%s658 + $0xa8] sm:$0xf]
        %v681 = vld [vmem:[%s658 + $0xb0] sm:$0xff]
        %v682 = vld [vmem:[%s658 + $0xb8] sm:$0xf]
        %v683 = vld [vmem:[#allocation6 + $0x5] sm:$0x1]
        %v684 = vlaneseq
        %v685 = vshrl.u32 %v684, 7
        %v686 = vsub.s32 0, %v685
        %v687 = vrot.slane %v683, %v686
        %v688 = vmul.f32 %v659, %v687
        %v689 = vmul.f32 %v660, %v687
        %v690 = vmul.f32 %v661, %v687
        %v691 = vmul.f32 %v662, %v687
        %v692 = vmul.f32 %v663, %v687
        %v693 = vmul.f32 %v664, %v687
        %v694 = vmul.f32 %v665, %v687
        %v695 = vmul.f32 %v666, %v687
        %v696 = vmul.f32 %v667, %v687
        %v697 = vmul.f32 %v668, %v687
        %v698 = vmul.f32 %v669, %v687
        %v699 = vmul.f32 %v670, %v687
        %v700 = vmul.f32 %v671, %v687
        %v701 = vmul.f32 %v672, %v687
        %v702 = vmul.f32 %v673, %v687
        %v703 = vmul.f32 %v674, %v687
        %v704 = vmul.f32 %v675, %v687
        %v705 = vmul.f32 %v676, %v687
        %v706 = vmul.f32 %v677, %v687
        %v707 = vmul.f32 %v678, %v687
        %v708 = vmul.f32 %v679, %v687
        %v709 = vmul.f32 %v680, %v687
        %v710 = vmul.f32 %v681, %v687
        %v711 = vmul.f32 %v682, %v687
        %v712 = vadd.f32 %v634, %v688
        %v713 = vadd.f32 %v635, %v689
        %v714 = vadd.f32 %v636, %v690
        %v715 = vadd.f32 %v637, %v691
        %v716 = vadd.f32 %v638, %v692
        %v717 = vadd.f32 %v639, %v693
        %v718 = vadd.f32 %v640, %v694
        %v719 = vadd.f32 %v641, %v695
        %v720 = vadd.f32 %v642, %v696
        %v721 = vadd.f32 %v643, %v697
        %v722 = vadd.f32 %v644, %v698
        %v723 = vadd.f32 %v645, %v699
        %v724 = vadd.f32 %v646, %v700
        %v725 = vadd.f32 %v647, %v701
        %v726 = vadd.f32 %v648, %v702
        %v727 = vadd.f32 %v649, %v703
        %v728 = vadd.f32 %v650, %v704
        %v729 = vadd.f32 %v651, %v705
        %v730 = vadd.f32 %v652, %v706
        %v731 = vadd.f32 %v653, %v707
        %v732 = vadd.f32 %v654, %v708
        %v733 = vadd.f32 %v655, %v709
        %v734 = vadd.f32 %v656, %v710
        %v735 = vadd.f32 %v657, %v711
        %v736 = vld [vmem:[%s658 + $0x1] sm:$0xff]
        %v737 = vld [vmem:[%s658 + $0x9] sm:$0xf]
        %v738 = vld [vmem:[%s658 + $0x11] sm:$0xff]
        %v739 = vld [vmem:[%s658 + $0x19] sm:$0xf]
        %v740 = vld [vmem:[%s658 + $0x21] sm:$0xff]
        %v741 = vld [vmem:[%s658 + $0x29] sm:$0xf]
        %v742 = vld [vmem:[%s658 + $0x31] sm:$0xff]
        %v743 = vld [vmem:[%s658 + $0x39] sm:$0xf]
        %v744 = vld [vmem:[%s658 + $0x41] sm:$0xff]
        %v745 = vld [vmem:[%s658 + $0x49] sm:$0xf]
        %v746 = vld [vmem:[%s658 + $0x51] sm:$0xff]
        %v747 = vld [vmem:[%s658 + $0x59] sm:$0xf]
        %v748 = vld [vmem:[%s658 + $0x61] sm:$0xff]
        %v749 = vld [vmem:[%s658 + $0x69] sm:$0xf]
        %v750 = vld [vmem:[%s658 + $0x71] sm:$0xff]
        %v751 = vld [vmem:[%s658 + $0x79] sm:$0xf]
        %v752 = vld [vmem:[%s658 + $0x81] sm:$0xff]
        %v753 = vld [vmem:[%s658 + $0x89] sm:$0xf]
        %v754 = vld [vmem:[%s658 + $0x91] sm:$0xff]
        %v755 = vld [vmem:[%s658 + $0x99] sm:$0xf]
        %v756 = vld [vmem:[%s658 + $0xa1] sm:$0xff]
        %v757 = vld [vmem:[%s658 + $0xa9] sm:$0xf]
        %v758 = vld [vmem:[%s658 + $0xb1] sm:$0xff]
        %v759 = vld [vmem:[%s658 + $0xb9] sm:$0xf]
        %v760 = vld [vmem:[#allocation6 + $0x6] sm:$0x1]
        %v761 = vlaneseq
        %v762 = vshrl.u32 %v761, 7
        %v763 = vsub.s32 0, %v762
        %v764 = vrot.slane %v760, %v763
        %v765 = vmul.f32 %v736, %v764
        %v766 = vmul.f32 %v737, %v764
        %v767 = vmul.f32 %v738, %v764
        %v768 = vmul.f32 %v739, %v764
        %v769 = vmul.f32 %v740, %v764
        %v770 = vmul.f32 %v741, %v764
        %v771 = vmul.f32 %v742, %v764
        %v772 = vmul.f32 %v743, %v764
        %v773 = vmul.f32 %v744, %v764
        %v774 = vmul.f32 %v745, %v764
        %v775 = vmul.f32 %v746, %v764
        %v776 = vmul.f32 %v747, %v764
        %v777 = vmul.f32 %v748, %v764
        %v778 = vmul.f32 %v749, %v764
        %v779 = vmul.f32 %v750, %v764
        %v780 = vmul.f32 %v751, %v764
        %v781 = vmul.f32 %v752, %v764
        %v782 = vmul.f32 %v753, %v764
        %v783 = vmul.f32 %v754, %v764
        %v784 = vmul.f32 %v755, %v764
        %v785 = vmul.f32 %v756, %v764
        %v786 = vmul.f32 %v757, %v764
        %v787 = vmul.f32 %v758, %v764
        %v788 = vmul.f32 %v759, %v764
        %v789 = vadd.f32 %v712, %v765
        %v790 = vadd.f32 %v713, %v766
        %v791 = vadd.f32 %v714, %v767
        %v792 = vadd.f32 %v715, %v768
        %v793 = vadd.f32 %v716, %v769
        %v794 = vadd.f32 %v717, %v770
        %v795 = vadd.f32 %v718, %v771
        %v796 = vadd.f32 %v719, %v772
        %v797 = vadd.f32 %v720, %v773
        %v798 = vadd.f32 %v721, %v774
        %v799 = vadd.f32 %v722, %v775
        %v800 = vadd.f32 %v723, %v776
        %v801 = vadd.f32 %v724, %v777
        %v802 = vadd.f32 %v725, %v778
        %v803 = vadd.f32 %v726, %v779
        %v804 = vadd.f32 %v727, %v780
        %v805 = vadd.f32 %v728, %v781
        %v806 = vadd.f32 %v729, %v782
        %v807 = vadd.f32 %v730, %v783
        %v808 = vadd.f32 %v731, %v784
        %v809 = vadd.f32 %v732, %v785
        %v810 = vadd.f32 %v733, %v786
        %v811 = vadd.f32 %v734, %v787
        %v812 = vadd.f32 %v735, %v788
        %v813 = vld [vmem:[%s658 + $0x2] sm:$0xff]
        %v814 = vld [vmem:[%s658 + $0xa] sm:$0xf]
        %v815 = vld [vmem:[%s658 + $0x12] sm:$0xff]
        %v816 = vld [vmem:[%s658 + $0x1a] sm:$0xf]
        %v817 = vld [vmem:[%s658 + $0x22] sm:$0xff]
        %v818 = vld [vmem:[%s658 + $0x2a] sm:$0xf]
        %v819 = vld [vmem:[%s658 + $0x32] sm:$0xff]
        %v820 = vld [vmem:[%s658 + $0x3a] sm:$0xf]
        %v821 = vld [vmem:[%s658 + $0x42] sm:$0xff]
        %v822 = vld [vmem:[%s658 + $0x4a] sm:$0xf]
        %v823 = vld [vmem:[%s658 + $0x52] sm:$0xff]
        %v824 = vld [vmem:[%s658 + $0x5a] sm:$0xf]
        %v825 = vld [vmem:[%s658 + $0x62] sm:$0xff]
        %v826 = vld [vmem:[%s658 + $0x6a] sm:$0xf]
        %v827 = vld [vmem:[%s658 + $0x72] sm:$0xff]
        %v828 = vld [vmem:[%s658 + $0x7a] sm:$0xf]
        %v829 = vld [vmem:[%s658 + $0x82] sm:$0xff]
        %v830 = vld [vmem:[%s658 + $0x8a] sm:$0xf]
        %v831 = vld [vmem:[%s658 + $0x92] sm:$0xff]
        %v832 = vld [vmem:[%s658 + $0x9a] sm:$0xf]
        %v833 = vld [vmem:[%s658 + $0xa2] sm:$0xff]
        %v834 = vld [vmem:[%s658 + $0xaa] sm:$0xf]
        %v835 = vld [vmem:[%s658 + $0xb2] sm:$0xff]
        %v836 = vld [vmem:[%s658 + $0xba] sm:$0xf]
        %v837 = vld [vmem:[#allocation6 + $0x7] sm:$0x1]
        %v838 = vlaneseq
        %v839 = vshrl.u32 %v838, 7
        %v840 = vsub.s32 0, %v839
        %v841 = vrot.slane %v837, %v840
        %v842 = vmul.f32 %v813, %v841
        %v843 = vmul.f32 %v814, %v841
        %v844 = vmul.f32 %v815, %v841
        %v845 = vmul.f32 %v816, %v841
        %v846 = vmul.f32 %v817, %v841
        %v847 = vmul.f32 %v818, %v841
        %v848 = vmul.f32 %v819, %v841
        %v849 = vmul.f32 %v820, %v841
        %v850 = vmul.f32 %v821, %v841
        %v851 = vmul.f32 %v822, %v841
        %v852 = vmul.f32 %v823, %v841
        %v853 = vmul.f32 %v824, %v841
        %v854 = vmul.f32 %v825, %v841
        %v855 = vmul.f32 %v826, %v841
        %v856 = vmul.f32 %v827, %v841
        %v857 = vmul.f32 %v828, %v841
        %v858 = vmul.f32 %v829, %v841
        %v859 = vmul.f32 %v830, %v841
        %v860 = vmul.f32 %v831, %v841
        %v861 = vmul.f32 %v832, %v841
        %v862 = vmul.f32 %v833, %v841
        %v863 = vmul.f32 %v834, %v841
        %v864 = vmul.f32 %v835, %v841
        %v865 = vmul.f32 %v836, %v841
        %v866 = vadd.f32 %v789, %v842
        %v867 = vadd.f32 %v790, %v843
        %v868 = vadd.f32 %v791, %v844
        %v869 = vadd.f32 %v792, %v845
        %v870 = vadd.f32 %v793, %v846
        %v871 = vadd.f32 %v794, %v847
        %v872 = vadd.f32 %v795, %v848
        %v873 = vadd.f32 %v796, %v849
        %v874 = vadd.f32 %v797, %v850
        %v875 = vadd.f32 %v798, %v851
        %v876 = vadd.f32 %v799, %v852
        %v877 = vadd.f32 %v800, %v853
        %v878 = vadd.f32 %v801, %v854
        %v879 = vadd.f32 %v802, %v855
        %v880 = vadd.f32 %v803, %v856
        %v881 = vadd.f32 %v804, %v857
        %v882 = vadd.f32 %v805, %v858
        %v883 = vadd.f32 %v806, %v859
        %v884 = vadd.f32 %v807, %v860
        %v885 = vadd.f32 %v808, %v861
        %v886 = vadd.f32 %v809, %v862
        %v887 = vadd.f32 %v810, %v863
        %v888 = vadd.f32 %v811, %v864
        %v889 = vadd.f32 %v812, %v865
        %v890 = vld [vmem:[%s658 + $0x3] sm:$0xff]
        %v891 = vld [vmem:[%s658 + $0xb] sm:$0xf]
        %v892 = vld [vmem:[%s658 + $0x13] sm:$0xff]
        %v893 = vld [vmem:[%s658 + $0x1b] sm:$0xf]
        %v894 = vld [vmem:[%s658 + $0x23] sm:$0xff]
        %v895 = vld [vmem:[%s658 + $0x2b] sm:$0xf]
        %v896 = vld [vmem:[%s658 + $0x33] sm:$0xff]
        %v897 = vld [vmem:[%s658 + $0x3b] sm:$0xf]
        %v898 = vld [vmem:[%s658 + $0x43] sm:$0xff]
        %v899 = vld [vmem:[%s658 + $0x4b] sm:$0xf]
        %v900 = vld [vmem:[%s658 + $0x53] sm:$0xff]
        %v901 = vld [vmem:[%s658 + $0x5b] sm:$0xf]
        %v902 = vld [vmem:[%s658 + $0x63] sm:$0xff]
        %v903 = vld [vmem:[%s658 + $0x6b] sm:$0xf]
        %v904 = vld [vmem:[%s658 + $0x73] sm:$0xff]
        %v905 = vld [vmem:[%s658 + $0x7b] sm:$0xf]
        %v906 = vld [vmem:[%s658 + $0x83] sm:$0xff]
        %v907 = vld [vmem:[%s658 + $0x8b] sm:$0xf]
        %v908 = vld [vmem:[%s658 + $0x93] sm:$0xff]
        %v909 = vld [vmem:[%s658 + $0x9b] sm:$0xf]
        %v910 = vld [vmem:[%s658 + $0xa3] sm:$0xff]
        %v911 = vld [vmem:[%s658 + $0xab] sm:$0xf]
        %v912 = vld [vmem:[%s658 + $0xb3] sm:$0xff]
        %v913 = vld [vmem:[%s658 + $0xbb] sm:$0xf]
        %v914 = vld [vmem:[#allocation6 + $0x8] sm:$0x1]
        %v915 = vlaneseq
        %v916 = vshrl.u32 %v915, 7
        %v917 = vsub.s32 0, %v916
        %v918 = vrot.slane %v914, %v917
        %v919 = vmul.f32 %v890, %v918
        %v920 = vmul.f32 %v891, %v918
        %v921 = vmul.f32 %v892, %v918
        %v922 = vmul.f32 %v893, %v918
        %v923 = vmul.f32 %v894, %v918
        %v924 = vmul.f32 %v895, %v918
        %v925 = vmul.f32 %v896, %v918
        %v926 = vmul.f32 %v897, %v918
        %v927 = vmul.f32 %v898, %v918
        %v928 = vmul.f32 %v899, %v918
        %v929 = vmul.f32 %v900, %v918
        %v930 = vmul.f32 %v901, %v918
        %v931 = vmul.f32 %v902, %v918
        %v932 = vmul.f32 %v903, %v918
        %v933 = vmul.f32 %v904, %v918
        %v934 = vmul.f32 %v905, %v918
        %v935 = vmul.f32 %v906, %v918
        %v936 = vmul.f32 %v907, %v918
        %v937 = vmul.f32 %v908, %v918
        %v938 = vmul.f32 %v909, %v918
        %v939 = vmul.f32 %v910, %v918
        %v940 = vmul.f32 %v911, %v918
        %v941 = vmul.f32 %v912, %v918
        %v942 = vmul.f32 %v913, %v918
        %v943 = vadd.f32 %v866, %v919
        %v944 = vadd.f32 %v867, %v920
        %v945 = vadd.f32 %v868, %v921
        %v946 = vadd.f32 %v869, %v922
        %v947 = vadd.f32 %v870, %v923
        %v948 = vadd.f32 %v871, %v924
        %v949 = vadd.f32 %v872, %v925
        %v950 = vadd.f32 %v873, %v926
        %v951 = vadd.f32 %v874, %v927
        %v952 = vadd.f32 %v875, %v928
        %v953 = vadd.f32 %v876, %v929
        %v954 = vadd.f32 %v877, %v930
        %v955 = vadd.f32 %v878, %v931
        %v956 = vadd.f32 %v879, %v932
        %v957 = vadd.f32 %v880, %v933
        %v958 = vadd.f32 %v881, %v934
        %v959 = vadd.f32 %v882, %v935
        %v960 = vadd.f32 %v883, %v936
        %v961 = vadd.f32 %v884, %v937
        %v962 = vadd.f32 %v885, %v938
        %v963 = vadd.f32 %v886, %v939
        %v964 = vadd.f32 %v887, %v940
        %v965 = vadd.f32 %v888, %v941
        %v966 = vadd.f32 %v889, %v942
        %v967 = vld [vmem:[%s658 + $0x4] sm:$0xff]
        %v968 = vld [vmem:[%s658 + $0xc] sm:$0xf]
        %v969 = vld [vmem:[%s658 + $0x14] sm:$0xff]
        %v970 = vld [vmem:[%s658 + $0x1c] sm:$0xf]
        %v971 = vld [vmem:[%s658 + $0x24] sm:$0xff]
        %v972 = vld [vmem:[%s658 + $0x2c] sm:$0xf]
        %v973 = vld [vmem:[%s658 + $0x34] sm:$0xff]
        %v974 = vld [vmem:[%s658 + $0x3c] sm:$0xf]
        %v975 = vld [vmem:[%s658 + $0x44] sm:$0xff]
        %v976 = vld [vmem:[%s658 + $0x4c] sm:$0xf]
        %v977 = vld [vmem:[%s658 + $0x54] sm:$0xff]
        %v978 = vld [vmem:[%s658 + $0x5c] sm:$0xf]
        %v979 = vld [vmem:[%s658 + $0x64] sm:$0xff]
        %v980 = vld [vmem:[%s658 + $0x6c] sm:$0xf]
        %v981 = vld [vmem:[%s658 + $0x74] sm:$0xff]
        %v982 = vld [vmem:[%s658 + $0x7c] sm:$0xf]
        %v983 = vld [vmem:[%s658 + $0x84] sm:$0xff]
        %v984 = vld [vmem:[%s658 + $0x8c] sm:$0xf]
        %v985 = vld [vmem:[%s658 + $0x94] sm:$0xff]
        %v986 = vld [vmem:[%s658 + $0x9c] sm:$0xf]
        %v987 = vld [vmem:[%s658 + $0xa4] sm:$0xff]
        %v988 = vld [vmem:[%s658 + $0xac] sm:$0xf]
        %v989 = vld [vmem:[%s658 + $0xb4] sm:$0xff]
        %v990 = vld [vmem:[%s658 + $0xbc] sm:$0xf]
        %v991 = vld [vmem:[#allocation6 + $0x9] sm:$0x1]
        %v992 = vlaneseq
        %v993 = vshrl.u32 %v992, 7
        %v994 = vsub.s32 0, %v993
        %v995 = vrot.slane %v991, %v994
        %v996 = vmul.f32 %v967, %v995
        %v997 = vmul.f32 %v968, %v995
        %v998 = vmul.f32 %v969, %v995
        %v999 = vmul.f32 %v970, %v995
        %v1000 = vmul.f32 %v971, %v995
        %v1001 = vmul.f32 %v972, %v995
        %v1002 = vmul.f32 %v973, %v995
        %v1003 = vmul.f32 %v974, %v995
        %v1004 = vmul.f32 %v975, %v995
        %v1005 = vmul.f32 %v976, %v995
        %v1006 = vmul.f32 %v977, %v995
        %v1007 = vmul.f32 %v978, %v995
        %v1008 = vmul.f32 %v979, %v995
        %v1009 = vmul.f32 %v980, %v995
        %v1010 = vmul.f32 %v981, %v995
        %v1011 = vmul.f32 %v982, %v995
        %v1012 = vmul.f32 %v983, %v995
        %v1013 = vmul.f32 %v984, %v995
        %v1014 = vmul.f32 %v985, %v995
        %v1015 = vmul.f32 %v986, %v995
        %v1016 = vmul.f32 %v987, %v995
        %v1017 = vmul.f32 %v988, %v995
        %v1018 = vmul.f32 %v989, %v995
        %v1019 = vmul.f32 %v990, %v995
        %v1020 = vadd.f32 %v943, %v996
        %v1021 = vadd.f32 %v944, %v997
        %v1022 = vadd.f32 %v945, %v998
        %v1023 = vadd.f32 %v946, %v999
        %v1024 = vadd.f32 %v947, %v1000
        %v1025 = vadd.f32 %v948, %v1001
        %v1026 = vadd.f32 %v949, %v1002
        %v1027 = vadd.f32 %v950, %v1003
        %v1028 = vadd.f32 %v951, %v1004
        %v1029 = vadd.f32 %v952, %v1005
        %v1030 = vadd.f32 %v953, %v1006
        %v1031 = vadd.f32 %v954, %v1007
        %v1032 = vadd.f32 %v955, %v1008
        %v1033 = vadd.f32 %v956, %v1009
        %v1034 = vadd.f32 %v957, %v1010
        %v1035 = vadd.f32 %v958, %v1011
        %v1036 = vadd.f32 %v959, %v1012
        %v1037 = vadd.f32 %v960, %v1013
        %v1038 = vadd.f32 %v961, %v1014
        %v1039 = vadd.f32 %v962, %v1015
        %v1040 = vadd.f32 %v963, %v1016
        %v1041 = vadd.f32 %v964, %v1017
        %v1042 = vadd.f32 %v965, %v1018
        %v1043 = vadd.f32 %v966, %v1019
        %s1044 = scalar_lea.vmem %s237, 32 [#allocation3]
        %v1045 = vld [vmem:[%s1044] sm:$0xff]
        %v1046 = vld [vmem:[%s1044 + $0x8] sm:$0xf]
        %v1047 = vld [vmem:[%s1044 + $0x10] sm:$0xff]
        %v1048 = vld [vmem:[%s1044 + $0x18] sm:$0xf]
        %v1049 = vld [vmem:[%s1044 + $0x20] sm:$0xff]
        %v1050 = vld [vmem:[%s1044 + $0x28] sm:$0xf]
        %v1051 = vld [vmem:[%s1044 + $0x30] sm:$0xff]
        %v1052 = vld [vmem:[%s1044 + $0x38] sm:$0xf]
        %v1053 = vld [vmem:[%s1044 + $0x40] sm:$0xff]
        %v1054 = vld [vmem:[%s1044 + $0x48] sm:$0xf]
        %v1055 = vld [vmem:[%s1044 + $0x50] sm:$0xff]
        %v1056 = vld [vmem:[%s1044 + $0x58] sm:$0xf]
        %v1057 = vld [vmem:[%s1044 + $0x60] sm:$0xff]
        %v1058 = vld [vmem:[%s1044 + $0x68] sm:$0xf]
        %v1059 = vld [vmem:[%s1044 + $0x70] sm:$0xff]
        %v1060 = vld [vmem:[%s1044 + $0x78] sm:$0xf]
        %v1061 = vld [vmem:[%s1044 + $0x80] sm:$0xff]
        %v1062 = vld [vmem:[%s1044 + $0x88] sm:$0xf]
        %v1063 = vld [vmem:[%s1044 + $0x90] sm:$0xff]
        %v1064 = vld [vmem:[%s1044 + $0x98] sm:$0xf]
        %v1065 = vld [vmem:[%s1044 + $0xa0] sm:$0xff]
        %v1066 = vld [vmem:[%s1044 + $0xa8] sm:$0xf]
        %v1067 = vld [vmem:[%s1044 + $0xb0] sm:$0xff]
        %v1068 = vld [vmem:[%s1044 + $0xb8] sm:$0xf]
        %v1069 = vld [vmem:[#allocation6 + $0xa] sm:$0x1]
        %v1070 = vlaneseq
        %v1071 = vshrl.u32 %v1070, 7
        %v1072 = vsub.s32 0, %v1071
        %v1073 = vrot.slane %v1069, %v1072
        %v1074 = vmul.f32 %v1045, %v1073
        %v1075 = vmul.f32 %v1046, %v1073
        %v1076 = vmul.f32 %v1047, %v1073
        %v1077 = vmul.f32 %v1048, %v1073
        %v1078 = vmul.f32 %v1049, %v1073
        %v1079 = vmul.f32 %v1050, %v1073
        %v1080 = vmul.f32 %v1051, %v1073
        %v1081 = vmul.f32 %v1052, %v1073
        %v1082 = vmul.f32 %v1053, %v1073
        %v1083 = vmul.f32 %v1054, %v1073
        %v1084 = vmul.f32 %v1055, %v1073
        %v1085 = vmul.f32 %v1056, %v1073
        %v1086 = vmul.f32 %v1057, %v1073
        %v1087 = vmul.f32 %v1058, %v1073
        %v1088 = vmul.f32 %v1059, %v1073
        %v1089 = vmul.f32 %v1060, %v1073
        %v1090 = vmul.f32 %v1061, %v1073
        %v1091 = vmul.f32 %v1062, %v1073
        %v1092 = vmul.f32 %v1063, %v1073
        %v1093 = vmul.f32 %v1064, %v1073
        %v1094 = vmul.f32 %v1065, %v1073
        %v1095 = vmul.f32 %v1066, %v1073
        %v1096 = vmul.f32 %v1067, %v1073
        %v1097 = vmul.f32 %v1068, %v1073
        %v1098 = vadd.f32 %v1020, %v1074
        %v1099 = vadd.f32 %v1021, %v1075
        %v1100 = vadd.f32 %v1022, %v1076
        %v1101 = vadd.f32 %v1023, %v1077
        %v1102 = vadd.f32 %v1024, %v1078
        %v1103 = vadd.f32 %v1025, %v1079
        %v1104 = vadd.f32 %v1026, %v1080
        %v1105 = vadd.f32 %v1027, %v1081
        %v1106 = vadd.f32 %v1028, %v1082
        %v1107 = vadd.f32 %v1029, %v1083
        %v1108 = vadd.f32 %v1030, %v1084
        %v1109 = vadd.f32 %v1031, %v1085
        %v1110 = vadd.f32 %v1032, %v1086
        %v1111 = vadd.f32 %v1033, %v1087
        %v1112 = vadd.f32 %v1034, %v1088
        %v1113 = vadd.f32 %v1035, %v1089
        %v1114 = vadd.f32 %v1036, %v1090
        %v1115 = vadd.f32 %v1037, %v1091
        %v1116 = vadd.f32 %v1038, %v1092
        %v1117 = vadd.f32 %v1039, %v1093
        %v1118 = vadd.f32 %v1040, %v1094
        %v1119 = vadd.f32 %v1041, %v1095
        %v1120 = vadd.f32 %v1042, %v1096
        %v1121 = vadd.f32 %v1043, %v1097
        %v1122 = vld [vmem:[%s1044 + $0x1] sm:$0xff]
        %v1123 = vld [vmem:[%s1044 + $0x9] sm:$0xf]
        %v1124 = vld [vmem:[%s1044 + $0x11] sm:$0xff]
        %v1125 = vld [vmem:[%s1044 + $0x19] sm:$0xf]
        %v1126 = vld [vmem:[%s1044 + $0x21] sm:$0xff]
        %v1127 = vld [vmem:[%s1044 + $0x29] sm:$0xf]
        %v1128 = vld [vmem:[%s1044 + $0x31] sm:$0xff]
        %v1129 = vld [vmem:[%s1044 + $0x39] sm:$0xf]
        %v1130 = vld [vmem:[%s1044 + $0x41] sm:$0xff]
        %v1131 = vld [vmem:[%s1044 + $0x49] sm:$0xf]
        %v1132 = vld [vmem:[%s1044 + $0x51] sm:$0xff]
        %v1133 = vld [vmem:[%s1044 + $0x59] sm:$0xf]
        %v1134 = vld [vmem:[%s1044 + $0x61] sm:$0xff]
        %v1135 = vld [vmem:[%s1044 + $0x69] sm:$0xf]
        %v1136 = vld [vmem:[%s1044 + $0x71] sm:$0xff]
        %v1137 = vld [vmem:[%s1044 + $0x79] sm:$0xf]
        %v1138 = vld [vmem:[%s1044 + $0x81] sm:$0xff]
        %v1139 = vld [vmem:[%s1044 + $0x89] sm:$0xf]
        %v1140 = vld [vmem:[%s1044 + $0x91] sm:$0xff]
        %v1141 = vld [vmem:[%s1044 + $0x99] sm:$0xf]
        %v1142 = vld [vmem:[%s1044 + $0xa1] sm:$0xff]
        %v1143 = vld [vmem:[%s1044 + $0xa9] sm:$0xf]
        %v1144 = vld [vmem:[%s1044 + $0xb1] sm:$0xff]
        %v1145 = vld [vmem:[%s1044 + $0xb9] sm:$0xf]
        %v1146 = vld [vmem:[#allocation6 + $0xb] sm:$0x1]
        %v1147 = vlaneseq
        %v1148 = vshrl.u32 %v1147, 7
        %v1149 = vsub.s32 0, %v1148
        %v1150 = vrot.slane %v1146, %v1149
        %v1151 = vmul.f32 %v1122, %v1150
        %v1152 = vmul.f32 %v1123, %v1150
        %v1153 = vmul.f32 %v1124, %v1150
        %v1154 = vmul.f32 %v1125, %v1150
        %v1155 = vmul.f32 %v1126, %v1150
        %v1156 = vmul.f32 %v1127, %v1150
        %v1157 = vmul.f32 %v1128, %v1150
        %v1158 = vmul.f32 %v1129, %v1150
        %v1159 = vmul.f32 %v1130, %v1150
        %v1160 = vmul.f32 %v1131, %v1150
        %v1161 = vmul.f32 %v1132, %v1150
        %v1162 = vmul.f32 %v1133, %v1150
        %v1163 = vmul.f32 %v1134, %v1150
        %v1164 = vmul.f32 %v1135, %v1150
        %v1165 = vmul.f32 %v1136, %v1150
        %v1166 = vmul.f32 %v1137, %v1150
        %v1167 = vmul.f32 %v1138, %v1150
        %v1168 = vmul.f32 %v1139, %v1150
        %v1169 = vmul.f32 %v1140, %v1150
        %v1170 = vmul.f32 %v1141, %v1150
        %v1171 = vmul.f32 %v1142, %v1150
        %v1172 = vmul.f32 %v1143, %v1150
        %v1173 = vmul.f32 %v1144, %v1150
        %v1174 = vmul.f32 %v1145, %v1150
        %v1175 = vadd.f32 %v1098, %v1151
        %v1176 = vadd.f32 %v1099, %v1152
        %v1177 = vadd.f32 %v1100, %v1153
        %v1178 = vadd.f32 %v1101, %v1154
        %v1179 = vadd.f32 %v1102, %v1155
        %v1180 = vadd.f32 %v1103, %v1156
        %v1181 = vadd.f32 %v1104, %v1157
        %v1182 = vadd.f32 %v1105, %v1158
        %v1183 = vadd.f32 %v1106, %v1159
        %v1184 = vadd.f32 %v1107, %v1160
        %v1185 = vadd.f32 %v1108, %v1161
        %v1186 = vadd.f32 %v1109, %v1162
        %v1187 = vadd.f32 %v1110, %v1163
        %v1188 = vadd.f32 %v1111, %v1164
        %v1189 = vadd.f32 %v1112, %v1165
        %v1190 = vadd.f32 %v1113, %v1166
        %v1191 = vadd.f32 %v1114, %v1167
        %v1192 = vadd.f32 %v1115, %v1168
        %v1193 = vadd.f32 %v1116, %v1169
        %v1194 = vadd.f32 %v1117, %v1170
        %v1195 = vadd.f32 %v1118, %v1171
        %v1196 = vadd.f32 %v1119, %v1172
        %v1197 = vadd.f32 %v1120, %v1173
        %v1198 = vadd.f32 %v1121, %v1174
        %v1199 = vld [vmem:[%s1044 + $0x2] sm:$0xff]
        %v1200 = vld [vmem:[%s1044 + $0xa] sm:$0xf]
        %v1201 = vld [vmem:[%s1044 + $0x12] sm:$0xff]
        %v1202 = vld [vmem:[%s1044 + $0x1a] sm:$0xf]
        %v1203 = vld [vmem:[%s1044 + $0x22] sm:$0xff]
        %v1204 = vld [vmem:[%s1044 + $0x2a] sm:$0xf]
        %v1205 = vld [vmem:[%s1044 + $0x32] sm:$0xff]
        %v1206 = vld [vmem:[%s1044 + $0x3a] sm:$0xf]
        %v1207 = vld [vmem:[%s1044 + $0x42] sm:$0xff]
        %v1208 = vld [vmem:[%s1044 + $0x4a] sm:$0xf]
        %v1209 = vld [vmem:[%s1044 + $0x52] sm:$0xff]
        %v1210 = vld [vmem:[%s1044 + $0x5a] sm:$0xf]
        %v1211 = vld [vmem:[%s1044 + $0x62] sm:$0xff]
        %v1212 = vld [vmem:[%s1044 + $0x6a] sm:$0xf]
        %v1213 = vld [vmem:[%s1044 + $0x72] sm:$0xff]
        %v1214 = vld [vmem:[%s1044 + $0x7a] sm:$0xf]
        %v1215 = vld [vmem:[%s1044 + $0x82] sm:$0xff]
        %v1216 = vld [vmem:[%s1044 + $0x8a] sm:$0xf]
        %v1217 = vld [vmem:[%s1044 + $0x92] sm:$0xff]
        %v1218 = vld [vmem:[%s1044 + $0x9a] sm:$0xf]
        %v1219 = vld [vmem:[%s1044 + $0xa2] sm:$0xff]
        %v1220 = vld [vmem:[%s1044 + $0xaa] sm:$0xf]
        %v1221 = vld [vmem:[%s1044 + $0xb2] sm:$0xff]
        %v1222 = vld [vmem:[%s1044 + $0xba] sm:$0xf]
        %v1223 = vld [vmem:[#allocation6 + $0xc] sm:$0x1]
        %v1224 = vlaneseq
        %v1225 = vshrl.u32 %v1224, 7
        %v1226 = vsub.s32 0, %v1225
        %v1227 = vrot.slane %v1223, %v1226
        %v1228 = vmul.f32 %v1199, %v1227
        %v1229 = vmul.f32 %v1200, %v1227
        %v1230 = vmul.f32 %v1201, %v1227
        %v1231 = vmul.f32 %v1202, %v1227
        %v1232 = vmul.f32 %v1203, %v1227
        %v1233 = vmul.f32 %v1204, %v1227
        %v1234 = vmul.f32 %v1205, %v1227
        %v1235 = vmul.f32 %v1206, %v1227
        %v1236 = vmul.f32 %v1207, %v1227
        %v1237 = vmul.f32 %v1208, %v1227
        %v1238 = vmul.f32 %v1209, %v1227
        %v1239 = vmul.f32 %v1210, %v1227
        %v1240 = vmul.f32 %v1211, %v1227
        %v1241 = vmul.f32 %v1212, %v1227
        %v1242 = vmul.f32 %v1213, %v1227
        %v1243 = vmul.f32 %v1214, %v1227
        %v1244 = vmul.f32 %v1215, %v1227
        %v1245 = vmul.f32 %v1216, %v1227
        %v1246 = vmul.f32 %v1217, %v1227
        %v1247 = vmul.f32 %v1218, %v1227
        %v1248 = vmul.f32 %v1219, %v1227
        %v1249 = vmul.f32 %v1220, %v1227
        %v1250 = vmul.f32 %v1221, %v1227
        %v1251 = vmul.f32 %v1222, %v1227
        %v1252 = vadd.f32 %v1175, %v1228
        %v1253 = vadd.f32 %v1176, %v1229
        %v1254 = vadd.f32 %v1177, %v1230
        %v1255 = vadd.f32 %v1178, %v1231
        %v1256 = vadd.f32 %v1179, %v1232
        %v1257 = vadd.f32 %v1180, %v1233
        %v1258 = vadd.f32 %v1181, %v1234
        %v1259 = vadd.f32 %v1182, %v1235
        %v1260 = vadd.f32 %v1183, %v1236
        %v1261 = vadd.f32 %v1184, %v1237
        %v1262 = vadd.f32 %v1185, %v1238
        %v1263 = vadd.f32 %v1186, %v1239
        %v1264 = vadd.f32 %v1187, %v1240
        %v1265 = vadd.f32 %v1188, %v1241
        %v1266 = vadd.f32 %v1189, %v1242
        %v1267 = vadd.f32 %v1190, %v1243
        %v1268 = vadd.f32 %v1191, %v1244
        %v1269 = vadd.f32 %v1192, %v1245
        %v1270 = vadd.f32 %v1193, %v1246
        %v1271 = vadd.f32 %v1194, %v1247
        %v1272 = vadd.f32 %v1195, %v1248
        %v1273 = vadd.f32 %v1196, %v1249
        %v1274 = vadd.f32 %v1197, %v1250
        %v1275 = vadd.f32 %v1198, %v1251
        %v1276 = vld [vmem:[%s1044 + $0x3] sm:$0xff]
        %v1277 = vld [vmem:[%s1044 + $0xb] sm:$0xf]
        %v1278 = vld [vmem:[%s1044 + $0x13] sm:$0xff]
        %v1279 = vld [vmem:[%s1044 + $0x1b] sm:$0xf]
        %v1280 = vld [vmem:[%s1044 + $0x23] sm:$0xff]
        %v1281 = vld [vmem:[%s1044 + $0x2b] sm:$0xf]
        %v1282 = vld [vmem:[%s1044 + $0x33] sm:$0xff]
        %v1283 = vld [vmem:[%s1044 + $0x3b] sm:$0xf]
        %v1284 = vld [vmem:[%s1044 + $0x43] sm:$0xff]
        %v1285 = vld [vmem:[%s1044 + $0x4b] sm:$0xf]
        %v1286 = vld [vmem:[%s1044 + $0x53] sm:$0xff]
        %v1287 = vld [vmem:[%s1044 + $0x5b] sm:$0xf]
        %v1288 = vld [vmem:[%s1044 + $0x63] sm:$0xff]
        %v1289 = vld [vmem:[%s1044 + $0x6b] sm:$0xf]
        %v1290 = vld [vmem:[%s1044 + $0x73] sm:$0xff]
        %v1291 = vld [vmem:[%s1044 + $0x7b] sm:$0xf]
        %v1292 = vld [vmem:[%s1044 + $0x83] sm:$0xff]
        %v1293 = vld [vmem:[%s1044 + $0x8b] sm:$0xf]
        %v1294 = vld [vmem:[%s1044 + $0x93] sm:$0xff]
        %v1295 = vld [vmem:[%s1044 + $0x9b] sm:$0xf]
        %v1296 = vld [vmem:[%s1044 + $0xa3] sm:$0xff]
        %v1297 = vld [vmem:[%s1044 + $0xab] sm:$0xf]
        %v1298 = vld [vmem:[%s1044 + $0xb3] sm:$0xff]
        %v1299 = vld [vmem:[%s1044 + $0xbb] sm:$0xf]
        %v1300 = vld [vmem:[#allocation6 + $0xd] sm:$0x1]
        %v1301 = vlaneseq
        %v1302 = vshrl.u32 %v1301, 7
        %v1303 = vsub.s32 0, %v1302
        %v1304 = vrot.slane %v1300, %v1303
        %v1305 = vmul.f32 %v1276, %v1304
        %v1306 = vmul.f32 %v1277, %v1304
        %v1307 = vmul.f32 %v1278, %v1304
        %v1308 = vmul.f32 %v1279, %v1304
        %v1309 = vmul.f32 %v1280, %v1304
        %v1310 = vmul.f32 %v1281, %v1304
        %v1311 = vmul.f32 %v1282, %v1304
        %v1312 = vmul.f32 %v1283, %v1304
        %v1313 = vmul.f32 %v1284, %v1304
        %v1314 = vmul.f32 %v1285, %v1304
        %v1315 = vmul.f32 %v1286, %v1304
        %v1316 = vmul.f32 %v1287, %v1304
        %v1317 = vmul.f32 %v1288, %v1304
        %v1318 = vmul.f32 %v1289, %v1304
        %v1319 = vmul.f32 %v1290, %v1304
        %v1320 = vmul.f32 %v1291, %v1304
        %v1321 = vmul.f32 %v1292, %v1304
        %v1322 = vmul.f32 %v1293, %v1304
        %v1323 = vmul.f32 %v1294, %v1304
        %v1324 = vmul.f32 %v1295, %v1304
        %v1325 = vmul.f32 %v1296, %v1304
        %v1326 = vmul.f32 %v1297, %v1304
        %v1327 = vmul.f32 %v1298, %v1304
        %v1328 = vmul.f32 %v1299, %v1304
        %v1329 = vadd.f32 %v1252, %v1305
        %v1330 = vadd.f32 %v1253, %v1306
        %v1331 = vadd.f32 %v1254, %v1307
        %v1332 = vadd.f32 %v1255, %v1308
        %v1333 = vadd.f32 %v1256, %v1309
        %v1334 = vadd.f32 %v1257, %v1310
        %v1335 = vadd.f32 %v1258, %v1311
        %v1336 = vadd.f32 %v1259, %v1312
        %v1337 = vadd.f32 %v1260, %v1313
        %v1338 = vadd.f32 %v1261, %v1314
        %v1339 = vadd.f32 %v1262, %v1315
        %v1340 = vadd.f32 %v1263, %v1316
        %v1341 = vadd.f32 %v1264, %v1317
        %v1342 = vadd.f32 %v1265, %v1318
        %v1343 = vadd.f32 %v1266, %v1319
        %v1344 = vadd.f32 %v1267, %v1320
        %v1345 = vadd.f32 %v1268, %v1321
        %v1346 = vadd.f32 %v1269, %v1322
        %v1347 = vadd.f32 %v1270, %v1323
        %v1348 = vadd.f32 %v1271, %v1324
        %v1349 = vadd.f32 %v1272, %v1325
        %v1350 = vadd.f32 %v1273, %v1326
        %v1351 = vadd.f32 %v1274, %v1327
        %v1352 = vadd.f32 %v1275, %v1328
        %v1353 = vld [vmem:[%s1044 + $0x4] sm:$0xff]
        %v1354 = vld [vmem:[%s1044 + $0xc] sm:$0xf]
        %v1355 = vld [vmem:[%s1044 + $0x14] sm:$0xff]
        %v1356 = vld [vmem:[%s1044 + $0x1c] sm:$0xf]
        %v1357 = vld [vmem:[%s1044 + $0x24] sm:$0xff]
        %v1358 = vld [vmem:[%s1044 + $0x2c] sm:$0xf]
        %v1359 = vld [vmem:[%s1044 + $0x34] sm:$0xff]
        %v1360 = vld [vmem:[%s1044 + $0x3c] sm:$0xf]
        %v1361 = vld [vmem:[%s1044 + $0x44] sm:$0xff]
        %v1362 = vld [vmem:[%s1044 + $0x4c] sm:$0xf]
        %v1363 = vld [vmem:[%s1044 + $0x54] sm:$0xff]
        %v1364 = vld [vmem:[%s1044 + $0x5c] sm:$0xf]
        %v1365 = vld [vmem:[%s1044 + $0x64] sm:$0xff]
        %v1366 = vld [vmem:[%s1044 + $0x6c] sm:$0xf]
        %v1367 = vld [vmem:[%s1044 + $0x74] sm:$0xff]
        %v1368 = vld [vmem:[%s1044 + $0x7c] sm:$0xf]
        %v1369 = vld [vmem:[%s1044 + $0x84] sm:$0xff]
        %v1370 = vld [vmem:[%s1044 + $0x8c] sm:$0xf]
        %v1371 = vld [vmem:[%s1044 + $0x94] sm:$0xff]
        %v1372 = vld [vmem:[%s1044 + $0x9c] sm:$0xf]
        %v1373 = vld [vmem:[%s1044 + $0xa4] sm:$0xff]
        %v1374 = vld [vmem:[%s1044 + $0xac] sm:$0xf]
        %v1375 = vld [vmem:[%s1044 + $0xb4] sm:$0xff]
        %v1376 = vld [vmem:[%s1044 + $0xbc] sm:$0xf]
        %v1377 = vld [vmem:[#allocation6 + $0xe] sm:$0x1]
        %v1378 = vlaneseq
        %v1379 = vshrl.u32 %v1378, 7
        %v1380 = vsub.s32 0, %v1379
        %v1381 = vrot.slane %v1377, %v1380
        %v1382 = vmul.f32 %v1353, %v1381
        %v1383 = vmul.f32 %v1354, %v1381
        %v1384 = vmul.f32 %v1355, %v1381
        %v1385 = vmul.f32 %v1356, %v1381
        %v1386 = vmul.f32 %v1357, %v1381
        %v1387 = vmul.f32 %v1358, %v1381
        %v1388 = vmul.f32 %v1359, %v1381
        %v1389 = vmul.f32 %v1360, %v1381
        %v1390 = vmul.f32 %v1361, %v1381
        %v1391 = vmul.f32 %v1362, %v1381
        %v1392 = vmul.f32 %v1363, %v1381
        %v1393 = vmul.f32 %v1364, %v1381
        %v1394 = vmul.f32 %v1365, %v1381
        %v1395 = vmul.f32 %v1366, %v1381
        %v1396 = vmul.f32 %v1367, %v1381
        %v1397 = vmul.f32 %v1368, %v1381
        %v1398 = vmul.f32 %v1369, %v1381
        %v1399 = vmul.f32 %v1370, %v1381
        %v1400 = vmul.f32 %v1371, %v1381
        %v1401 = vmul.f32 %v1372, %v1381
        %v1402 = vmul.f32 %v1373, %v1381
        %v1403 = vmul.f32 %v1374, %v1381
        %v1404 = vmul.f32 %v1375, %v1381
        %v1405 = vmul.f32 %v1376, %v1381
        %v1406 = vadd.f32 %v1329, %v1382
        %v1407 = vadd.f32 %v1330, %v1383
        %v1408 = vadd.f32 %v1331, %v1384
        %v1409 = vadd.f32 %v1332, %v1385
        %v1410 = vadd.f32 %v1333, %v1386
        %v1411 = vadd.f32 %v1334, %v1387
        %v1412 = vadd.f32 %v1335, %v1388
        %v1413 = vadd.f32 %v1336, %v1389
        %v1414 = vadd.f32 %v1337, %v1390
        %v1415 = vadd.f32 %v1338, %v1391
        %v1416 = vadd.f32 %v1339, %v1392
        %v1417 = vadd.f32 %v1340, %v1393
        %v1418 = vadd.f32 %v1341, %v1394
        %v1419 = vadd.f32 %v1342, %v1395
        %v1420 = vadd.f32 %v1343, %v1396
        %v1421 = vadd.f32 %v1344, %v1397
        %v1422 = vadd.f32 %v1345, %v1398
        %v1423 = vadd.f32 %v1346, %v1399
        %v1424 = vadd.f32 %v1347, %v1400
        %v1425 = vadd.f32 %v1348, %v1401
        %v1426 = vadd.f32 %v1349, %v1402
        %v1427 = vadd.f32 %v1350, %v1403
        %v1428 = vadd.f32 %v1351, %v1404
        %v1429 = vadd.f32 %v1352, %v1405
        %s1430 = scalar_lea.vmem %s237, 48 [#allocation3]
        %v1431 = vld [vmem:[%s1430] sm:$0xff]
        %v1432 = vld [vmem:[%s1430 + $0x8] sm:$0xf]
        %v1433 = vld [vmem:[%s1430 + $0x10] sm:$0xff]
        %v1434 = vld [vmem:[%s1430 + $0x18] sm:$0xf]
        %v1435 = vld [vmem:[%s1430 + $0x20] sm:$0xff]
        %v1436 = vld [vmem:[%s1430 + $0x28] sm:$0xf]
        %v1437 = vld [vmem:[%s1430 + $0x30] sm:$0xff]
        %v1438 = vld [vmem:[%s1430 + $0x38] sm:$0xf]
        %v1439 = vld [vmem:[%s1430 + $0x40] sm:$0xff]
        %v1440 = vld [vmem:[%s1430 + $0x48] sm:$0xf]
        %v1441 = vld [vmem:[%s1430 + $0x50] sm:$0xff]
        %v1442 = vld [vmem:[%s1430 + $0x58] sm:$0xf]
        %v1443 = vld [vmem:[%s1430 + $0x60] sm:$0xff]
        %v1444 = vld [vmem:[%s1430 + $0x68] sm:$0xf]
        %v1445 = vld [vmem:[%s1430 + $0x70] sm:$0xff]
        %v1446 = vld [vmem:[%s1430 + $0x78] sm:$0xf]
        %v1447 = vld [vmem:[%s1430 + $0x80] sm:$0xff]
        %v1448 = vld [vmem:[%s1430 + $0x88] sm:$0xf]
        %v1449 = vld [vmem:[%s1430 + $0x90] sm:$0xff]
        %v1450 = vld [vmem:[%s1430 + $0x98] sm:$0xf]
        %v1451 = vld [vmem:[%s1430 + $0xa0] sm:$0xff]
        %v1452 = vld [vmem:[%s1430 + $0xa8] sm:$0xf]
        %v1453 = vld [vmem:[%s1430 + $0xb0] sm:$0xff]
        %v1454 = vld [vmem:[%s1430 + $0xb8] sm:$0xf]
        %v1455 = vld [vmem:[#allocation6 + $0xf] sm:$0x1]
        %v1456 = vlaneseq
        %v1457 = vshrl.u32 %v1456, 7
        %v1458 = vsub.s32 0, %v1457
        %v1459 = vrot.slane %v1455, %v1458
        %v1460 = vmul.f32 %v1431, %v1459
        %v1461 = vmul.f32 %v1432, %v1459
        %v1462 = vmul.f32 %v1433, %v1459
        %v1463 = vmul.f32 %v1434, %v1459
        %v1464 = vmul.f32 %v1435, %v1459
        %v1465 = vmul.f32 %v1436, %v1459
        %v1466 = vmul.f32 %v1437, %v1459
        %v1467 = vmul.f32 %v1438, %v1459
        %v1468 = vmul.f32 %v1439, %v1459
        %v1469 = vmul.f32 %v1440, %v1459
        %v1470 = vmul.f32 %v1441, %v1459
        %v1471 = vmul.f32 %v1442, %v1459
        %v1472 = vmul.f32 %v1443, %v1459
        %v1473 = vmul.f32 %v1444, %v1459
        %v1474 = vmul.f32 %v1445, %v1459
        %v1475 = vmul.f32 %v1446, %v1459
        %v1476 = vmul.f32 %v1447, %v1459
        %v1477 = vmul.f32 %v1448, %v1459
        %v1478 = vmul.f32 %v1449, %v1459
        %v1479 = vmul.f32 %v1450, %v1459
        %v1480 = vmul.f32 %v1451, %v1459
        %v1481 = vmul.f32 %v1452, %v1459
        %v1482 = vmul.f32 %v1453, %v1459
        %v1483 = vmul.f32 %v1454, %v1459
        %v1484 = vadd.f32 %v1406, %v1460
        %v1485 = vadd.f32 %v1407, %v1461
        %v1486 = vadd.f32 %v1408, %v1462
        %v1487 = vadd.f32 %v1409, %v1463
        %v1488 = vadd.f32 %v1410, %v1464
        %v1489 = vadd.f32 %v1411, %v1465
        %v1490 = vadd.f32 %v1412, %v1466
        %v1491 = vadd.f32 %v1413, %v1467
        %v1492 = vadd.f32 %v1414, %v1468
        %v1493 = vadd.f32 %v1415, %v1469
        %v1494 = vadd.f32 %v1416, %v1470
        %v1495 = vadd.f32 %v1417, %v1471
        %v1496 = vadd.f32 %v1418, %v1472
        %v1497 = vadd.f32 %v1419, %v1473
        %v1498 = vadd.f32 %v1420, %v1474
        %v1499 = vadd.f32 %v1421, %v1475
        %v1500 = vadd.f32 %v1422, %v1476
        %v1501 = vadd.f32 %v1423, %v1477
        %v1502 = vadd.f32 %v1424, %v1478
        %v1503 = vadd.f32 %v1425, %v1479
        %v1504 = vadd.f32 %v1426, %v1480
        %v1505 = vadd.f32 %v1427, %v1481
        %v1506 = vadd.f32 %v1428, %v1482
        %v1507 = vadd.f32 %v1429, %v1483
        %v1508 = vld [vmem:[%s1430 + $0x1] sm:$0xff]
        %v1509 = vld [vmem:[%s1430 + $0x9] sm:$0xf]
        %v1510 = vld [vmem:[%s1430 + $0x11] sm:$0xff]
        %v1511 = vld [vmem:[%s1430 + $0x19] sm:$0xf]
        %v1512 = vld [vmem:[%s1430 + $0x21] sm:$0xff]
        %v1513 = vld [vmem:[%s1430 + $0x29] sm:$0xf]
        %v1514 = vld [vmem:[%s1430 + $0x31] sm:$0xff]
        %v1515 = vld [vmem:[%s1430 + $0x39] sm:$0xf]
        %v1516 = vld [vmem:[%s1430 + $0x41] sm:$0xff]
        %v1517 = vld [vmem:[%s1430 + $0x49] sm:$0xf]
        %v1518 = vld [vmem:[%s1430 + $0x51] sm:$0xff]
        %v1519 = vld [vmem:[%s1430 + $0x59] sm:$0xf]
        %v1520 = vld [vmem:[%s1430 + $0x61] sm:$0xff]
        %v1521 = vld [vmem:[%s1430 + $0x69] sm:$0xf]
        %v1522 = vld [vmem:[%s1430 + $0x71] sm:$0xff]
        %v1523 = vld [vmem:[%s1430 + $0x79] sm:$0xf]
        %v1524 = vld [vmem:[%s1430 + $0x81] sm:$0xff]
        %v1525 = vld [vmem:[%s1430 + $0x89] sm:$0xf]
        %v1526 = vld [vmem:[%s1430 + $0x91] sm:$0xff]
        %v1527 = vld [vmem:[%s1430 + $0x99] sm:$0xf]
        %v1528 = vld [vmem:[%s1430 + $0xa1] sm:$0xff]
        %v1529 = vld [vmem:[%s1430 + $0xa9] sm:$0xf]
        %v1530 = vld [vmem:[%s1430 + $0xb1] sm:$0xff]
        %v1531 = vld [vmem:[%s1430 + $0xb9] sm:$0xf]
        %v1532 = vld [vmem:[#allocation6 + $0x10] sm:$0x1]
        %v1533 = vlaneseq
        %v1534 = vshrl.u32 %v1533, 7
        %v1535 = vsub.s32 0, %v1534
        %v1536 = vrot.slane %v1532, %v1535
        %v1537 = vmul.f32 %v1508, %v1536
        %v1538 = vmul.f32 %v1509, %v1536
        %v1539 = vmul.f32 %v1510, %v1536
        %v1540 = vmul.f32 %v1511, %v1536
        %v1541 = vmul.f32 %v1512, %v1536
        %v1542 = vmul.f32 %v1513, %v1536
        %v1543 = vmul.f32 %v1514, %v1536
        %v1544 = vmul.f32 %v1515, %v1536
        %v1545 = vmul.f32 %v1516, %v1536
        %v1546 = vmul.f32 %v1517, %v1536
        %v1547 = vmul.f32 %v1518, %v1536
        %v1548 = vmul.f32 %v1519, %v1536
        %v1549 = vmul.f32 %v1520, %v1536
        %v1550 = vmul.f32 %v1521, %v1536
        %v1551 = vmul.f32 %v1522, %v1536
        %v1552 = vmul.f32 %v1523, %v1536
        %v1553 = vmul.f32 %v1524, %v1536
        %v1554 = vmul.f32 %v1525, %v1536
        %v1555 = vmul.f32 %v1526, %v1536
        %v1556 = vmul.f32 %v1527, %v1536
        %v1557 = vmul.f32 %v1528, %v1536
        %v1558 = vmul.f32 %v1529, %v1536
        %v1559 = vmul.f32 %v1530, %v1536
        %v1560 = vmul.f32 %v1531, %v1536
        %v1561 = vadd.f32 %v1484, %v1537
        %v1562 = vadd.f32 %v1485, %v1538
        %v1563 = vadd.f32 %v1486, %v1539
        %v1564 = vadd.f32 %v1487, %v1540
        %v1565 = vadd.f32 %v1488, %v1541
        %v1566 = vadd.f32 %v1489, %v1542
        %v1567 = vadd.f32 %v1490, %v1543
        %v1568 = vadd.f32 %v1491, %v1544
        %v1569 = vadd.f32 %v1492, %v1545
        %v1570 = vadd.f32 %v1493, %v1546
        %v1571 = vadd.f32 %v1494, %v1547
        %v1572 = vadd.f32 %v1495, %v1548
        %v1573 = vadd.f32 %v1496, %v1549
        %v1574 = vadd.f32 %v1497, %v1550
        %v1575 = vadd.f32 %v1498, %v1551
        %v1576 = vadd.f32 %v1499, %v1552
        %v1577 = vadd.f32 %v1500, %v1553
        %v1578 = vadd.f32 %v1501, %v1554
        %v1579 = vadd.f32 %v1502, %v1555
        %v1580 = vadd.f32 %v1503, %v1556
        %v1581 = vadd.f32 %v1504, %v1557
        %v1582 = vadd.f32 %v1505, %v1558
        %v1583 = vadd.f32 %v1506, %v1559
        %v1584 = vadd.f32 %v1507, %v1560
        %v1585 = vld [vmem:[%s1430 + $0x2] sm:$0xff]
        %v1586 = vld [vmem:[%s1430 + $0xa] sm:$0xf]
        %v1587 = vld [vmem:[%s1430 + $0x12] sm:$0xff]
        %v1588 = vld [vmem:[%s1430 + $0x1a] sm:$0xf]
        %v1589 = vld [vmem:[%s1430 + $0x22] sm:$0xff]
        %v1590 = vld [vmem:[%s1430 + $0x2a] sm:$0xf]
        %v1591 = vld [vmem:[%s1430 + $0x32] sm:$0xff]
        %v1592 = vld [vmem:[%s1430 + $0x3a] sm:$0xf]
        %v1593 = vld [vmem:[%s1430 + $0x42] sm:$0xff]
        %v1594 = vld [vmem:[%s1430 + $0x4a] sm:$0xf]
        %v1595 = vld [vmem:[%s1430 + $0x52] sm:$0xff]
        %v1596 = vld [vmem:[%s1430 + $0x5a] sm:$0xf]
        %v1597 = vld [vmem:[%s1430 + $0x62] sm:$0xff]
        %v1598 = vld [vmem:[%s1430 + $0x6a] sm:$0xf]
        %v1599 = vld [vmem:[%s1430 + $0x72] sm:$0xff]
        %v1600 = vld [vmem:[%s1430 + $0x7a] sm:$0xf]
        %v1601 = vld [vmem:[%s1430 + $0x82] sm:$0xff]
        %v1602 = vld [vmem:[%s1430 + $0x8a] sm:$0xf]
        %v1603 = vld [vmem:[%s1430 + $0x92] sm:$0xff]
        %v1604 = vld [vmem:[%s1430 + $0x9a] sm:$0xf]
        %v1605 = vld [vmem:[%s1430 + $0xa2] sm:$0xff]
        %v1606 = vld [vmem:[%s1430 + $0xaa] sm:$0xf]
        %v1607 = vld [vmem:[%s1430 + $0xb2] sm:$0xff]
        %v1608 = vld [vmem:[%s1430 + $0xba] sm:$0xf]
        %v1609 = vld [vmem:[#allocation6 + $0x11] sm:$0x1]
        %v1610 = vlaneseq
        %v1611 = vshrl.u32 %v1610, 7
        %v1612 = vsub.s32 0, %v1611
        %v1613 = vrot.slane %v1609, %v1612
        %v1614 = vmul.f32 %v1585, %v1613
        %v1615 = vmul.f32 %v1586, %v1613
        %v1616 = vmul.f32 %v1587, %v1613
        %v1617 = vmul.f32 %v1588, %v1613
        %v1618 = vmul.f32 %v1589, %v1613
        %v1619 = vmul.f32 %v1590, %v1613
        %v1620 = vmul.f32 %v1591, %v1613
        %v1621 = vmul.f32 %v1592, %v1613
        %v1622 = vmul.f32 %v1593, %v1613
        %v1623 = vmul.f32 %v1594, %v1613
        %v1624 = vmul.f32 %v1595, %v1613
        %v1625 = vmul.f32 %v1596, %v1613
        %v1626 = vmul.f32 %v1597, %v1613
        %v1627 = vmul.f32 %v1598, %v1613
        %v1628 = vmul.f32 %v1599, %v1613
        %v1629 = vmul.f32 %v1600, %v1613
        %v1630 = vmul.f32 %v1601, %v1613
        %v1631 = vmul.f32 %v1602, %v1613
        %v1632 = vmul.f32 %v1603, %v1613
        %v1633 = vmul.f32 %v1604, %v1613
        %v1634 = vmul.f32 %v1605, %v1613
        %v1635 = vmul.f32 %v1606, %v1613
        %v1636 = vmul.f32 %v1607, %v1613
        %v1637 = vmul.f32 %v1608, %v1613
        %v1638 = vadd.f32 %v1561, %v1614
        %v1639 = vadd.f32 %v1562, %v1615
        %v1640 = vadd.f32 %v1563, %v1616
        %v1641 = vadd.f32 %v1564, %v1617
        %v1642 = vadd.f32 %v1565, %v1618
        %v1643 = vadd.f32 %v1566, %v1619
        %v1644 = vadd.f32 %v1567, %v1620
        %v1645 = vadd.f32 %v1568, %v1621
        %v1646 = vadd.f32 %v1569, %v1622
        %v1647 = vadd.f32 %v1570, %v1623
        %v1648 = vadd.f32 %v1571, %v1624
        %v1649 = vadd.f32 %v1572, %v1625
        %v1650 = vadd.f32 %v1573, %v1626
        %v1651 = vadd.f32 %v1574, %v1627
        %v1652 = vadd.f32 %v1575, %v1628
        %v1653 = vadd.f32 %v1576, %v1629
        %v1654 = vadd.f32 %v1577, %v1630
        %v1655 = vadd.f32 %v1578, %v1631
        %v1656 = vadd.f32 %v1579, %v1632
        %v1657 = vadd.f32 %v1580, %v1633
        %v1658 = vadd.f32 %v1581, %v1634
        %v1659 = vadd.f32 %v1582, %v1635
        %v1660 = vadd.f32 %v1583, %v1636
        %v1661 = vadd.f32 %v1584, %v1637
        %v1662 = vld [vmem:[%s1430 + $0x3] sm:$0xff]
        %v1663 = vld [vmem:[%s1430 + $0xb] sm:$0xf]
        %v1664 = vld [vmem:[%s1430 + $0x13] sm:$0xff]
        %v1665 = vld [vmem:[%s1430 + $0x1b] sm:$0xf]
        %v1666 = vld [vmem:[%s1430 + $0x23] sm:$0xff]
        %v1667 = vld [vmem:[%s1430 + $0x2b] sm:$0xf]
        %v1668 = vld [vmem:[%s1430 + $0x33] sm:$0xff]
        %v1669 = vld [vmem:[%s1430 + $0x3b] sm:$0xf]
        %v1670 = vld [vmem:[%s1430 + $0x43] sm:$0xff]
        %v1671 = vld [vmem:[%s1430 + $0x4b] sm:$0xf]
        %v1672 = vld [vmem:[%s1430 + $0x53] sm:$0xff]
        %v1673 = vld [vmem:[%s1430 + $0x5b] sm:$0xf]
        %v1674 = vld [vmem:[%s1430 + $0x63] sm:$0xff]
        %v1675 = vld [vmem:[%s1430 + $0x6b] sm:$0xf]
        %v1676 = vld [vmem:[%s1430 + $0x73] sm:$0xff]
        %v1677 = vld [vmem:[%s1430 + $0x7b] sm:$0xf]
        %v1678 = vld [vmem:[%s1430 + $0x83] sm:$0xff]
        %v1679 = vld [vmem:[%s1430 + $0x8b] sm:$0xf]
        %v1680 = vld [vmem:[%s1430 + $0x93] sm:$0xff]
        %v1681 = vld [vmem:[%s1430 + $0x9b] sm:$0xf]
        %v1682 = vld [vmem:[%s1430 + $0xa3] sm:$0xff]
        %v1683 = vld [vmem:[%s1430 + $0xab] sm:$0xf]
        %v1684 = vld [vmem:[%s1430 + $0xb3] sm:$0xff]
        %v1685 = vld [vmem:[%s1430 + $0xbb] sm:$0xf]
        %v1686 = vld [vmem:[#allocation6 + $0x12] sm:$0x1]
        %v1687 = vlaneseq
        %v1688 = vshrl.u32 %v1687, 7
        %v1689 = vsub.s32 0, %v1688
        %v1690 = vrot.slane %v1686, %v1689
        %v1691 = vmul.f32 %v1662, %v1690
        %v1692 = vmul.f32 %v1663, %v1690
        %v1693 = vmul.f32 %v1664, %v1690
        %v1694 = vmul.f32 %v1665, %v1690
        %v1695 = vmul.f32 %v1666, %v1690
        %v1696 = vmul.f32 %v1667, %v1690
        %v1697 = vmul.f32 %v1668, %v1690
        %v1698 = vmul.f32 %v1669, %v1690
        %v1699 = vmul.f32 %v1670, %v1690
        %v1700 = vmul.f32 %v1671, %v1690
        %v1701 = vmul.f32 %v1672, %v1690
        %v1702 = vmul.f32 %v1673, %v1690
        %v1703 = vmul.f32 %v1674, %v1690
        %v1704 = vmul.f32 %v1675, %v1690
        %v1705 = vmul.f32 %v1676, %v1690
        %v1706 = vmul.f32 %v1677, %v1690
        %v1707 = vmul.f32 %v1678, %v1690
        %v1708 = vmul.f32 %v1679, %v1690
        %v1709 = vmul.f32 %v1680, %v1690
        %v1710 = vmul.f32 %v1681, %v1690
        %v1711 = vmul.f32 %v1682, %v1690
        %v1712 = vmul.f32 %v1683, %v1690
        %v1713 = vmul.f32 %v1684, %v1690
        %v1714 = vmul.f32 %v1685, %v1690
        %v1715 = vadd.f32 %v1638, %v1691
        %v1716 = vadd.f32 %v1639, %v1692
        %v1717 = vadd.f32 %v1640, %v1693
        %v1718 = vadd.f32 %v1641, %v1694
        %v1719 = vadd.f32 %v1642, %v1695
        %v1720 = vadd.f32 %v1643, %v1696
        %v1721 = vadd.f32 %v1644, %v1697
        %v1722 = vadd.f32 %v1645, %v1698
        %v1723 = vadd.f32 %v1646, %v1699
        %v1724 = vadd.f32 %v1647, %v1700
        %v1725 = vadd.f32 %v1648, %v1701
        %v1726 = vadd.f32 %v1649, %v1702
        %v1727 = vadd.f32 %v1650, %v1703
        %v1728 = vadd.f32 %v1651, %v1704
        %v1729 = vadd.f32 %v1652, %v1705
        %v1730 = vadd.f32 %v1653, %v1706
        %v1731 = vadd.f32 %v1654, %v1707
        %v1732 = vadd.f32 %v1655, %v1708
        %v1733 = vadd.f32 %v1656, %v1709
        %v1734 = vadd.f32 %v1657, %v1710
        %v1735 = vadd.f32 %v1658, %v1711
        %v1736 = vadd.f32 %v1659, %v1712
        %v1737 = vadd.f32 %v1660, %v1713
        %v1738 = vadd.f32 %v1661, %v1714
        %v1739 = vld [vmem:[%s1430 + $0x4] sm:$0xff]
        %v1740 = vld [vmem:[%s1430 + $0xc] sm:$0xf]
        %v1741 = vld [vmem:[%s1430 + $0x14] sm:$0xff]
        %v1742 = vld [vmem:[%s1430 + $0x1c] sm:$0xf]
        %v1743 = vld [vmem:[%s1430 + $0x24] sm:$0xff]
        %v1744 = vld [vmem:[%s1430 + $0x2c] sm:$0xf]
        %v1745 = vld [vmem:[%s1430 + $0x34] sm:$0xff]
        %v1746 = vld [vmem:[%s1430 + $0x3c] sm:$0xf]
        %v1747 = vld [vmem:[%s1430 + $0x44] sm:$0xff]
        %v1748 = vld [vmem:[%s1430 + $0x4c] sm:$0xf]
        %v1749 = vld [vmem:[%s1430 + $0x54] sm:$0xff]
        %v1750 = vld [vmem:[%s1430 + $0x5c] sm:$0xf]
        %v1751 = vld [vmem:[%s1430 + $0x64] sm:$0xff]
        %v1752 = vld [vmem:[%s1430 + $0x6c] sm:$0xf]
        %v1753 = vld [vmem:[%s1430 + $0x74] sm:$0xff]
        %v1754 = vld [vmem:[%s1430 + $0x7c] sm:$0xf]
        %v1755 = vld [vmem:[%s1430 + $0x84] sm:$0xff]
        %v1756 = vld [vmem:[%s1430 + $0x8c] sm:$0xf]
        %v1757 = vld [vmem:[%s1430 + $0x94] sm:$0xff]
        %v1758 = vld [vmem:[%s1430 + $0x9c] sm:$0xf]
        %v1759 = vld [vmem:[%s1430 + $0xa4] sm:$0xff]
        %v1760 = vld [vmem:[%s1430 + $0xac] sm:$0xf]
        %v1761 = vld [vmem:[%s1430 + $0xb4] sm:$0xff]
        %v1762 = vld [vmem:[%s1430 + $0xbc] sm:$0xf]
        %v1763 = vld [vmem:[#allocation6 + $0x13] sm:$0x1]
        %v1764 = vlaneseq
        %v1765 = vshrl.u32 %v1764, 7
        %v1766 = vsub.s32 0, %v1765
        %v1767 = vrot.slane %v1763, %v1766
        %v1768 = vmul.f32 %v1739, %v1767
        %v1769 = vmul.f32 %v1740, %v1767
        %v1770 = vmul.f32 %v1741, %v1767
        %v1771 = vmul.f32 %v1742, %v1767
        %v1772 = vmul.f32 %v1743, %v1767
        %v1773 = vmul.f32 %v1744, %v1767
        %v1774 = vmul.f32 %v1745, %v1767
        %v1775 = vmul.f32 %v1746, %v1767
        %v1776 = vmul.f32 %v1747, %v1767
        %v1777 = vmul.f32 %v1748, %v1767
        %v1778 = vmul.f32 %v1749, %v1767
        %v1779 = vmul.f32 %v1750, %v1767
        %v1780 = vmul.f32 %v1751, %v1767
        %v1781 = vmul.f32 %v1752, %v1767
        %v1782 = vmul.f32 %v1753, %v1767
        %v1783 = vmul.f32 %v1754, %v1767
        %v1784 = vmul.f32 %v1755, %v1767
        %v1785 = vmul.f32 %v1756, %v1767
        %v1786 = vmul.f32 %v1757, %v1767
        %v1787 = vmul.f32 %v1758, %v1767
        %v1788 = vmul.f32 %v1759, %v1767
        %v1789 = vmul.f32 %v1760, %v1767
        %v1790 = vmul.f32 %v1761, %v1767
        %v1791 = vmul.f32 %v1762, %v1767
        %v1792 = vadd.f32 %v1715, %v1768
        %v1793 = vadd.f32 %v1716, %v1769
        %v1794 = vadd.f32 %v1717, %v1770
        %v1795 = vadd.f32 %v1718, %v1771
        %v1796 = vadd.f32 %v1719, %v1772
        %v1797 = vadd.f32 %v1720, %v1773
        %v1798 = vadd.f32 %v1721, %v1774
        %v1799 = vadd.f32 %v1722, %v1775
        %v1800 = vadd.f32 %v1723, %v1776
        %v1801 = vadd.f32 %v1724, %v1777
        %v1802 = vadd.f32 %v1725, %v1778
        %v1803 = vadd.f32 %v1726, %v1779
        %v1804 = vadd.f32 %v1727, %v1780
        %v1805 = vadd.f32 %v1728, %v1781
        %v1806 = vadd.f32 %v1729, %v1782
        %v1807 = vadd.f32 %v1730, %v1783
        %v1808 = vadd.f32 %v1731, %v1784
        %v1809 = vadd.f32 %v1732, %v1785
        %v1810 = vadd.f32 %v1733, %v1786
        %v1811 = vadd.f32 %v1734, %v1787
        %v1812 = vadd.f32 %v1735, %v1788
        %v1813 = vadd.f32 %v1736, %v1789
        %v1814 = vadd.f32 %v1737, %v1790
        %v1815 = vadd.f32 %v1738, %v1791
        %s1816 = scalar_lea.vmem %s237, 64 [#allocation3]
        %v1817 = vld [vmem:[%s1816] sm:$0xff]
        %v1818 = vld [vmem:[%s1816 + $0x8] sm:$0xf]
        %v1819 = vld [vmem:[%s1816 + $0x10] sm:$0xff]
        %v1820 = vld [vmem:[%s1816 + $0x18] sm:$0xf]
        %v1821 = vld [vmem:[%s1816 + $0x20] sm:$0xff]
        %v1822 = vld [vmem:[%s1816 + $0x28] sm:$0xf]
        %v1823 = vld [vmem:[%s1816 + $0x30] sm:$0xff]
        %v1824 = vld [vmem:[%s1816 + $0x38] sm:$0xf]
        %v1825 = vld [vmem:[%s1816 + $0x40] sm:$0xff]
        %v1826 = vld [vmem:[%s1816 + $0x48] sm:$0xf]
        %v1827 = vld [vmem:[%s1816 + $0x50] sm:$0xff]
        %v1828 = vld [vmem:[%s1816 + $0x58] sm:$0xf]
        %v1829 = vld [vmem:[%s1816 + $0x60] sm:$0xff]
        %v1830 = vld [vmem:[%s1816 + $0x68] sm:$0xf]
        %v1831 = vld [vmem:[%s1816 + $0x70] sm:$0xff]
        %v1832 = vld [vmem:[%s1816 + $0x78] sm:$0xf]
        %v1833 = vld [vmem:[%s1816 + $0x80] sm:$0xff]
        %v1834 = vld [vmem:[%s1816 + $0x88] sm:$0xf]
        %v1835 = vld [vmem:[%s1816 + $0x90] sm:$0xff]
        %v1836 = vld [vmem:[%s1816 + $0x98] sm:$0xf]
        %v1837 = vld [vmem:[%s1816 + $0xa0] sm:$0xff]
        %v1838 = vld [vmem:[%s1816 + $0xa8] sm:$0xf]
        %v1839 = vld [vmem:[%s1816 + $0xb0] sm:$0xff]
        %v1840 = vld [vmem:[%s1816 + $0xb8] sm:$0xf]
        %v1841 = vld [vmem:[#allocation6 + $0x14] sm:$0x1]
        %v1842 = vlaneseq
        %v1843 = vshrl.u32 %v1842, 7
        %v1844 = vsub.s32 0, %v1843
        %v1845 = vrot.slane %v1841, %v1844
        %v1846 = vmul.f32 %v1817, %v1845
        %v1847 = vmul.f32 %v1818, %v1845
        %v1848 = vmul.f32 %v1819, %v1845
        %v1849 = vmul.f32 %v1820, %v1845
        %v1850 = vmul.f32 %v1821, %v1845
        %v1851 = vmul.f32 %v1822, %v1845
        %v1852 = vmul.f32 %v1823, %v1845
        %v1853 = vmul.f32 %v1824, %v1845
        %v1854 = vmul.f32 %v1825, %v1845
        %v1855 = vmul.f32 %v1826, %v1845
        %v1856 = vmul.f32 %v1827, %v1845
        %v1857 = vmul.f32 %v1828, %v1845
        %v1858 = vmul.f32 %v1829, %v1845
        %v1859 = vmul.f32 %v1830, %v1845
        %v1860 = vmul.f32 %v1831, %v1845
        %v1861 = vmul.f32 %v1832, %v1845
        %v1862 = vmul.f32 %v1833, %v1845
        %v1863 = vmul.f32 %v1834, %v1845
        %v1864 = vmul.f32 %v1835, %v1845
        %v1865 = vmul.f32 %v1836, %v1845
        %v1866 = vmul.f32 %v1837, %v1845
        %v1867 = vmul.f32 %v1838, %v1845
        %v1868 = vmul.f32 %v1839, %v1845
        %v1869 = vmul.f32 %v1840, %v1845
        %v1870 = vadd.f32 %v1792, %v1846
        %v1871 = vadd.f32 %v1793, %v1847
        %v1872 = vadd.f32 %v1794, %v1848
        %v1873 = vadd.f32 %v1795, %v1849
        %v1874 = vadd.f32 %v1796, %v1850
        %v1875 = vadd.f32 %v1797, %v1851
        %v1876 = vadd.f32 %v1798, %v1852
        %v1877 = vadd.f32 %v1799, %v1853
        %v1878 = vadd.f32 %v1800, %v1854
        %v1879 = vadd.f32 %v1801, %v1855
        %v1880 = vadd.f32 %v1802, %v1856
        %v1881 = vadd.f32 %v1803, %v1857
        %v1882 = vadd.f32 %v1804, %v1858
        %v1883 = vadd.f32 %v1805, %v1859
        %v1884 = vadd.f32 %v1806, %v1860
        %v1885 = vadd.f32 %v1807, %v1861
        %v1886 = vadd.f32 %v1808, %v1862
        %v1887 = vadd.f32 %v1809, %v1863
        %v1888 = vadd.f32 %v1810, %v1864
        %v1889 = vadd.f32 %v1811, %v1865
        %v1890 = vadd.f32 %v1812, %v1866
        %v1891 = vadd.f32 %v1813, %v1867
        %v1892 = vadd.f32 %v1814, %v1868
        %v1893 = vadd.f32 %v1815, %v1869
        %v1894 = vld [vmem:[%s1816 + $0x1] sm:$0xff]
        %v1895 = vld [vmem:[%s1816 + $0x9] sm:$0xf]
        %v1896 = vld [vmem:[%s1816 + $0x11] sm:$0xff]
        %v1897 = vld [vmem:[%s1816 + $0x19] sm:$0xf]
        %v1898 = vld [vmem:[%s1816 + $0x21] sm:$0xff]
        %v1899 = vld [vmem:[%s1816 + $0x29] sm:$0xf]
        %v1900 = vld [vmem:[%s1816 + $0x31] sm:$0xff]
        %v1901 = vld [vmem:[%s1816 + $0x39] sm:$0xf]
        %v1902 = vld [vmem:[%s1816 + $0x41] sm:$0xff]
        %v1903 = vld [vmem:[%s1816 + $0x49] sm:$0xf]
        %v1904 = vld [vmem:[%s1816 + $0x51] sm:$0xff]
        %v1905 = vld [vmem:[%s1816 + $0x59] sm:$0xf]
        %v1906 = vld [vmem:[%s1816 + $0x61] sm:$0xff]
        %v1907 = vld [vmem:[%s1816 + $0x69] sm:$0xf]
        %v1908 = vld [vmem:[%s1816 + $0x71] sm:$0xff]
        %v1909 = vld [vmem:[%s1816 + $0x79] sm:$0xf]
        %v1910 = vld [vmem:[%s1816 + $0x81] sm:$0xff]
        %v1911 = vld [vmem:[%s1816 + $0x89] sm:$0xf]
        %v1912 = vld [vmem:[%s1816 + $0x91] sm:$0xff]
        %v1913 = vld [vmem:[%s1816 + $0x99] sm:$0xf]
        %v1914 = vld [vmem:[%s1816 + $0xa1] sm:$0xff]
        %v1915 = vld [vmem:[%s1816 + $0xa9] sm:$0xf]
        %v1916 = vld [vmem:[%s1816 + $0xb1] sm:$0xff]
        %v1917 = vld [vmem:[%s1816 + $0xb9] sm:$0xf]
        %v1918 = vld [vmem:[#allocation6 + $0x15] sm:$0x1]
        %v1919 = vlaneseq
        %v1920 = vshrl.u32 %v1919, 7
        %v1921 = vsub.s32 0, %v1920
        %v1922 = vrot.slane %v1918, %v1921
        %v1923 = vmul.f32 %v1894, %v1922
        %v1924 = vmul.f32 %v1895, %v1922
        %v1925 = vmul.f32 %v1896, %v1922
        %v1926 = vmul.f32 %v1897, %v1922
        %v1927 = vmul.f32 %v1898, %v1922
        %v1928 = vmul.f32 %v1899, %v1922
        %v1929 = vmul.f32 %v1900, %v1922
        %v1930 = vmul.f32 %v1901, %v1922
        %v1931 = vmul.f32 %v1902, %v1922
        %v1932 = vmul.f32 %v1903, %v1922
        %v1933 = vmul.f32 %v1904, %v1922
        %v1934 = vmul.f32 %v1905, %v1922
        %v1935 = vmul.f32 %v1906, %v1922
        %v1936 = vmul.f32 %v1907, %v1922
        %v1937 = vmul.f32 %v1908, %v1922
        %v1938 = vmul.f32 %v1909, %v1922
        %v1939 = vmul.f32 %v1910, %v1922
        %v1940 = vmul.f32 %v1911, %v1922
        %v1941 = vmul.f32 %v1912, %v1922
        %v1942 = vmul.f32 %v1913, %v1922
        %v1943 = vmul.f32 %v1914, %v1922
        %v1944 = vmul.f32 %v1915, %v1922
        %v1945 = vmul.f32 %v1916, %v1922
        %v1946 = vmul.f32 %v1917, %v1922
        %v1947 = vadd.f32 %v1870, %v1923
        %v1948 = vadd.f32 %v1871, %v1924
        %v1949 = vadd.f32 %v1872, %v1925
        %v1950 = vadd.f32 %v1873, %v1926
        %v1951 = vadd.f32 %v1874, %v1927
        %v1952 = vadd.f32 %v1875, %v1928
        %v1953 = vadd.f32 %v1876, %v1929
        %v1954 = vadd.f32 %v1877, %v1930
        %v1955 = vadd.f32 %v1878, %v1931
        %v1956 = vadd.f32 %v1879, %v1932
        %v1957 = vadd.f32 %v1880, %v1933
        %v1958 = vadd.f32 %v1881, %v1934
        %v1959 = vadd.f32 %v1882, %v1935
        %v1960 = vadd.f32 %v1883, %v1936
        %v1961 = vadd.f32 %v1884, %v1937
        %v1962 = vadd.f32 %v1885, %v1938
        %v1963 = vadd.f32 %v1886, %v1939
        %v1964 = vadd.f32 %v1887, %v1940
        %v1965 = vadd.f32 %v1888, %v1941
        %v1966 = vadd.f32 %v1889, %v1942
        %v1967 = vadd.f32 %v1890, %v1943
        %v1968 = vadd.f32 %v1891, %v1944
        %v1969 = vadd.f32 %v1892, %v1945
        %v1970 = vadd.f32 %v1893, %v1946
        %v1971 = vld [vmem:[%s1816 + $0x2] sm:$0xff]
        %v1972 = vld [vmem:[%s1816 + $0xa] sm:$0xf]
        %v1973 = vld [vmem:[%s1816 + $0x12] sm:$0xff]
        %v1974 = vld [vmem:[%s1816 + $0x1a] sm:$0xf]
        %v1975 = vld [vmem:[%s1816 + $0x22] sm:$0xff]
        %v1976 = vld [vmem:[%s1816 + $0x2a] sm:$0xf]
        %v1977 = vld [vmem:[%s1816 + $0x32] sm:$0xff]
        %v1978 = vld [vmem:[%s1816 + $0x3a] sm:$0xf]
        %v1979 = vld [vmem:[%s1816 + $0x42] sm:$0xff]
        %v1980 = vld [vmem:[%s1816 + $0x4a] sm:$0xf]
        %v1981 = vld [vmem:[%s1816 + $0x52] sm:$0xff]
        %v1982 = vld [vmem:[%s1816 + $0x5a] sm:$0xf]
        %v1983 = vld [vmem:[%s1816 + $0x62] sm:$0xff]
        %v1984 = vld [vmem:[%s1816 + $0x6a] sm:$0xf]
        %v1985 = vld [vmem:[%s1816 + $0x72] sm:$0xff]
        %v1986 = vld [vmem:[%s1816 + $0x7a] sm:$0xf]
        %v1987 = vld [vmem:[%s1816 + $0x82] sm:$0xff]
        %v1988 = vld [vmem:[%s1816 + $0x8a] sm:$0xf]
        %v1989 = vld [vmem:[%s1816 + $0x92] sm:$0xff]
        %v1990 = vld [vmem:[%s1816 + $0x9a] sm:$0xf]
        %v1991 = vld [vmem:[%s1816 + $0xa2] sm:$0xff]
        %v1992 = vld [vmem:[%s1816 + $0xaa] sm:$0xf]
        %v1993 = vld [vmem:[%s1816 + $0xb2] sm:$0xff]
        %v1994 = vld [vmem:[%s1816 + $0xba] sm:$0xf]
        %v1995 = vld [vmem:[#allocation6 + $0x16] sm:$0x1]
        %v1996 = vlaneseq
        %v1997 = vshrl.u32 %v1996, 7
        %v1998 = vsub.s32 0, %v1997
        %v1999 = vrot.slane %v1995, %v1998
        %v2000 = vmul.f32 %v1971, %v1999
        %v2001 = vmul.f32 %v1972, %v1999
        %v2002 = vmul.f32 %v1973, %v1999
        %v2003 = vmul.f32 %v1974, %v1999
        %v2004 = vmul.f32 %v1975, %v1999
        %v2005 = vmul.f32 %v1976, %v1999
        %v2006 = vmul.f32 %v1977, %v1999
        %v2007 = vmul.f32 %v1978, %v1999
        %v2008 = vmul.f32 %v1979, %v1999
        %v2009 = vmul.f32 %v1980, %v1999
        %v2010 = vmul.f32 %v1981, %v1999
        %v2011 = vmul.f32 %v1982, %v1999
        %v2012 = vmul.f32 %v1983, %v1999
        %v2013 = vmul.f32 %v1984, %v1999
        %v2014 = vmul.f32 %v1985, %v1999
        %v2015 = vmul.f32 %v1986, %v1999
        %v2016 = vmul.f32 %v1987, %v1999
        %v2017 = vmul.f32 %v1988, %v1999
        %v2018 = vmul.f32 %v1989, %v1999
        %v2019 = vmul.f32 %v1990, %v1999
        %v2020 = vmul.f32 %v1991, %v1999
        %v2021 = vmul.f32 %v1992, %v1999
        %v2022 = vmul.f32 %v1993, %v1999
        %v2023 = vmul.f32 %v1994, %v1999
        %v2024 = vadd.f32 %v1947, %v2000
        %v2025 = vadd.f32 %v1948, %v2001
        %v2026 = vadd.f32 %v1949, %v2002
        %v2027 = vadd.f32 %v1950, %v2003
        %v2028 = vadd.f32 %v1951, %v2004
        %v2029 = vadd.f32 %v1952, %v2005
        %v2030 = vadd.f32 %v1953, %v2006
        %v2031 = vadd.f32 %v1954, %v2007
        %v2032 = vadd.f32 %v1955, %v2008
        %v2033 = vadd.f32 %v1956, %v2009
        %v2034 = vadd.f32 %v1957, %v2010
        %v2035 = vadd.f32 %v1958, %v2011
        %v2036 = vadd.f32 %v1959, %v2012
        %v2037 = vadd.f32 %v1960, %v2013
        %v2038 = vadd.f32 %v1961, %v2014
        %v2039 = vadd.f32 %v1962, %v2015
        %v2040 = vadd.f32 %v1963, %v2016
        %v2041 = vadd.f32 %v1964, %v2017
        %v2042 = vadd.f32 %v1965, %v2018
        %v2043 = vadd.f32 %v1966, %v2019
        %v2044 = vadd.f32 %v1967, %v2020
        %v2045 = vadd.f32 %v1968, %v2021
        %v2046 = vadd.f32 %v1969, %v2022
        %v2047 = vadd.f32 %v1970, %v2023
        %v2048 = vld [vmem:[%s1816 + $0x3] sm:$0xff]
        %v2049 = vld [vmem:[%s1816 + $0xb] sm:$0xf]
        %v2050 = vld [vmem:[%s1816 + $0x13] sm:$0xff]
        %v2051 = vld [vmem:[%s1816 + $0x1b] sm:$0xf]
        %v2052 = vld [vmem:[%s1816 + $0x23] sm:$0xff]
        %v2053 = vld [vmem:[%s1816 + $0x2b] sm:$0xf]
        %v2054 = vld [vmem:[%s1816 + $0x33] sm:$0xff]
        %v2055 = vld [vmem:[%s1816 + $0x3b] sm:$0xf]
        %v2056 = vld [vmem:[%s1816 + $0x43] sm:$0xff]
        %v2057 = vld [vmem:[%s1816 + $0x4b] sm:$0xf]
        %v2058 = vld [vmem:[%s1816 + $0x53] sm:$0xff]
        %v2059 = vld [vmem:[%s1816 + $0x5b] sm:$0xf]
        %v2060 = vld [vmem:[%s1816 + $0x63] sm:$0xff]
        %v2061 = vld [vmem:[%s1816 + $0x6b] sm:$0xf]
        %v2062 = vld [vmem:[%s1816 + $0x73] sm:$0xff]
        %v2063 = vld [vmem:[%s1816 + $0x7b] sm:$0xf]
        %v2064 = vld [vmem:[%s1816 + $0x83] sm:$0xff]
        %v2065 = vld [vmem:[%s1816 + $0x8b] sm:$0xf]
        %v2066 = vld [vmem:[%s1816 + $0x93] sm:$0xff]
        %v2067 = vld [vmem:[%s1816 + $0x9b] sm:$0xf]
        %v2068 = vld [vmem:[%s1816 + $0xa3] sm:$0xff]
        %v2069 = vld [vmem:[%s1816 + $0xab] sm:$0xf]
        %v2070 = vld [vmem:[%s1816 + $0xb3] sm:$0xff]
        %v2071 = vld [vmem:[%s1816 + $0xbb] sm:$0xf]
        %v2072 = vld [vmem:[#allocation6 + $0x17] sm:$0x1]
        %v2073 = vlaneseq
        %v2074 = vshrl.u32 %v2073, 7
        %v2075 = vsub.s32 0, %v2074
        %v2076 = vrot.slane %v2072, %v2075
        %v2077 = vmul.f32 %v2048, %v2076
        %v2078 = vmul.f32 %v2049, %v2076
        %v2079 = vmul.f32 %v2050, %v2076
        %v2080 = vmul.f32 %v2051, %v2076
        %v2081 = vmul.f32 %v2052, %v2076
        %v2082 = vmul.f32 %v2053, %v2076
        %v2083 = vmul.f32 %v2054, %v2076
        %v2084 = vmul.f32 %v2055, %v2076
        %v2085 = vmul.f32 %v2056, %v2076
        %v2086 = vmul.f32 %v2057, %v2076
        %v2087 = vmul.f32 %v2058, %v2076
        %v2088 = vmul.f32 %v2059, %v2076
        %v2089 = vmul.f32 %v2060, %v2076
        %v2090 = vmul.f32 %v2061, %v2076
        %v2091 = vmul.f32 %v2062, %v2076
        %v2092 = vmul.f32 %v2063, %v2076
        %v2093 = vmul.f32 %v2064, %v2076
        %v2094 = vmul.f32 %v2065, %v2076
        %v2095 = vmul.f32 %v2066, %v2076
        %v2096 = vmul.f32 %v2067, %v2076
        %v2097 = vmul.f32 %v2068, %v2076
        %v2098 = vmul.f32 %v2069, %v2076
        %v2099 = vmul.f32 %v2070, %v2076
        %v2100 = vmul.f32 %v2071, %v2076
        %v2101 = vadd.f32 %v2024, %v2077
        %v2102 = vadd.f32 %v2025, %v2078
        %v2103 = vadd.f32 %v2026, %v2079
        %v2104 = vadd.f32 %v2027, %v2080
        %v2105 = vadd.f32 %v2028, %v2081
        %v2106 = vadd.f32 %v2029, %v2082
        %v2107 = vadd.f32 %v2030, %v2083
        %v2108 = vadd.f32 %v2031, %v2084
        %v2109 = vadd.f32 %v2032, %v2085
        %v2110 = vadd.f32 %v2033, %v2086
        %v2111 = vadd.f32 %v2034, %v2087
        %v2112 = vadd.f32 %v2035, %v2088
        %v2113 = vadd.f32 %v2036, %v2089
        %v2114 = vadd.f32 %v2037, %v2090
        %v2115 = vadd.f32 %v2038, %v2091
        %v2116 = vadd.f32 %v2039, %v2092
        %v2117 = vadd.f32 %v2040, %v2093
        %v2118 = vadd.f32 %v2041, %v2094
        %v2119 = vadd.f32 %v2042, %v2095
        %v2120 = vadd.f32 %v2043, %v2096
        %v2121 = vadd.f32 %v2044, %v2097
        %v2122 = vadd.f32 %v2045, %v2098
        %v2123 = vadd.f32 %v2046, %v2099
        %v2124 = vadd.f32 %v2047, %v2100
        %v2125 = vld [vmem:[%s1816 + $0x4] sm:$0xff]
        %v2126 = vld [vmem:[%s1816 + $0xc] sm:$0xf]
        %v2127 = vld [vmem:[%s1816 + $0x14] sm:$0xff]
        %v2128 = vld [vmem:[%s1816 + $0x1c] sm:$0xf]
        %v2129 = vld [vmem:[%s1816 + $0x24] sm:$0xff]
        %v2130 = vld [vmem:[%s1816 + $0x2c] sm:$0xf]
        %v2131 = vld [vmem:[%s1816 + $0x34] sm:$0xff]
        %v2132 = vld [vmem:[%s1816 + $0x3c] sm:$0xf]
        %v2133 = vld [vmem:[%s1816 + $0x44] sm:$0xff]
        %v2134 = vld [vmem:[%s1816 + $0x4c] sm:$0xf]
        %v2135 = vld [vmem:[%s1816 + $0x54] sm:$0xff]
        %v2136 = vld [vmem:[%s1816 + $0x5c] sm:$0xf]
        %v2137 = vld [vmem:[%s1816 + $0x64] sm:$0xff]
        %v2138 = vld [vmem:[%s1816 + $0x6c] sm:$0xf]
        %v2139 = vld [vmem:[%s1816 + $0x74] sm:$0xff]
        %v2140 = vld [vmem:[%s1816 + $0x7c] sm:$0xf]
        %v2141 = vld [vmem:[%s1816 + $0x84] sm:$0xff]
        %v2142 = vld [vmem:[%s1816 + $0x8c] sm:$0xf]
        %v2143 = vld [vmem:[%s1816 + $0x94] sm:$0xff]
        %v2144 = vld [vmem:[%s1816 + $0x9c] sm:$0xf]
        %v2145 = vld [vmem:[%s1816 + $0xa4] sm:$0xff]
        %v2146 = vld [vmem:[%s1816 + $0xac] sm:$0xf]
        %v2147 = vld [vmem:[%s1816 + $0xb4] sm:$0xff]
        %v2148 = vld [vmem:[%s1816 + $0xbc] sm:$0xf]
        %v2149 = vld [vmem:[#allocation6 + $0x18] sm:$0x1]
        %v2150 = vlaneseq
        %v2151 = vshrl.u32 %v2150, 7
        %v2152 = vsub.s32 0, %v2151
        %v2153 = vrot.slane %v2149, %v2152
        %v2154 = vmul.f32 %v2125, %v2153
        %v2155 = vmul.f32 %v2126, %v2153
        %v2156 = vmul.f32 %v2127, %v2153
        %v2157 = vmul.f32 %v2128, %v2153
        %v2158 = vmul.f32 %v2129, %v2153
        %v2159 = vmul.f32 %v2130, %v2153
        %v2160 = vmul.f32 %v2131, %v2153
        %v2161 = vmul.f32 %v2132, %v2153
        %v2162 = vmul.f32 %v2133, %v2153
        %v2163 = vmul.f32 %v2134, %v2153
        %v2164 = vmul.f32 %v2135, %v2153
        %v2165 = vmul.f32 %v2136, %v2153
        %v2166 = vmul.f32 %v2137, %v2153
        %v2167 = vmul.f32 %v2138, %v2153
        %v2168 = vmul.f32 %v2139, %v2153
        %v2169 = vmul.f32 %v2140, %v2153
        %v2170 = vmul.f32 %v2141, %v2153
        %v2171 = vmul.f32 %v2142, %v2153
        %v2172 = vmul.f32 %v2143, %v2153
        %v2173 = vmul.f32 %v2144, %v2153
        %v2174 = vmul.f32 %v2145, %v2153
        %v2175 = vmul.f32 %v2146, %v2153
        %v2176 = vmul.f32 %v2147, %v2153
        %v2177 = vmul.f32 %v2148, %v2153
        %v2178 = vadd.f32 %v2101, %v2154
        %v2179 = vadd.f32 %v2102, %v2155
        %v2180 = vadd.f32 %v2103, %v2156
        %v2181 = vadd.f32 %v2104, %v2157
        %v2182 = vadd.f32 %v2105, %v2158
        %v2183 = vadd.f32 %v2106, %v2159
        %v2184 = vadd.f32 %v2107, %v2160
        %v2185 = vadd.f32 %v2108, %v2161
        %v2186 = vadd.f32 %v2109, %v2162
        %v2187 = vadd.f32 %v2110, %v2163
        %v2188 = vadd.f32 %v2111, %v2164
        %v2189 = vadd.f32 %v2112, %v2165
        %v2190 = vadd.f32 %v2113, %v2166
        %v2191 = vadd.f32 %v2114, %v2167
        %v2192 = vadd.f32 %v2115, %v2168
        %v2193 = vadd.f32 %v2116, %v2169
        %v2194 = vadd.f32 %v2117, %v2170
        %v2195 = vadd.f32 %v2118, %v2171
        %v2196 = vadd.f32 %v2119, %v2172
        %v2197 = vadd.f32 %v2120, %v2173
        %v2198 = vadd.f32 %v2121, %v2174
        %v2199 = vadd.f32 %v2122, %v2175
        %v2200 = vadd.f32 %v2123, %v2176
        %v2201 = vadd.f32 %v2124, %v2177
        %v2202 = vld [vmem:[%s2] sm:$0x1]
        %v2204 = vlaneseq
        %v2205 = vshrl.u32 %v2204, 7
        %v2206 = vsub.s32 0, %v2205
        %v2207 = vrot.slane %v2202, %v2206
        %v2209 = vadd.f32 %v2178, %v2207
        %v2210 = vadd.f32 %v2179, %v2207
        %v2211 = vadd.f32 %v2180, %v2207
        %v2212 = vadd.f32 %v2181, %v2207
        %v2213 = vadd.f32 %v2182, %v2207
        %v2214 = vadd.f32 %v2183, %v2207
        %v2215 = vadd.f32 %v2184, %v2207
        %v2216 = vadd.f32 %v2185, %v2207
        %v2217 = vadd.f32 %v2186, %v2207
        %v2218 = vadd.f32 %v2187, %v2207
        %v2219 = vadd.f32 %v2188, %v2207
        %v2220 = vadd.f32 %v2189, %v2207
        %v2221 = vadd.f32 %v2190, %v2207
        %v2222 = vadd.f32 %v2191, %v2207
        %v2223 = vadd.f32 %v2192, %v2207
        %v2224 = vadd.f32 %v2193, %v2207
        %v2225 = vadd.f32 %v2194, %v2207
        %v2226 = vadd.f32 %v2195, %v2207
        %v2227 = vadd.f32 %v2196, %v2207
        %v2228 = vadd.f32 %v2197, %v2207
        %v2229 = vadd.f32 %v2198, %v2207
        %v2230 = vadd.f32 %v2199, %v2207
        %v2231 = vadd.f32 %v2200, %v2207
        %v2232 = vadd.f32 %v2201, %v2207
        %v2233 = vmax.f32 %v2209, 0.0
        %v2234 = vmax.f32 %v2210, 0.0
        %v2235 = vmax.f32 %v2211, 0.0
        %v2236 = vmax.f32 %v2212, 0.0
        %v2237 = vmax.f32 %v2213, 0.0
        %v2238 = vmax.f32 %v2214, 0.0
        %v2239 = vmax.f32 %v2215, 0.0
        %v2240 = vmax.f32 %v2216, 0.0
        %v2241 = vmax.f32 %v2217, 0.0
        %v2242 = vmax.f32 %v2218, 0.0
        %v2243 = vmax.f32 %v2219, 0.0
        %v2244 = vmax.f32 %v2220, 0.0
        %v2245 = vmax.f32 %v2221, 0.0
        %v2246 = vmax.f32 %v2222, 0.0
        %v2247 = vmax.f32 %v2223, 0.0
        %v2248 = vmax.f32 %v2224, 0.0
        %v2249 = vmax.f32 %v2225, 0.0
        %v2250 = vmax.f32 %v2226, 0.0
        %v2251 = vmax.f32 %v2227, 0.0
        %v2252 = vmax.f32 %v2228, 0.0
        %v2253 = vmax.f32 %v2229, 0.0
        %v2254 = vmax.f32 %v2230, 0.0
        %v2255 = vmax.f32 %v2231, 0.0
        %v2256 = vmax.f32 %v2232, 0.0
        %vm2257 = vcmask 261120
        %2258 = vst.msk [vmem:[#allocation2] sm:$0xff] %vm2257, %v2233
        %vm2259 = vcmask 257024
        %2260 = vst.msk [vmem:[#allocation2 + $0x8] sm:$0xf] %vm2259, %v2234
        %2261 = vst.msk [vmem:[#allocation2 + $0x10] sm:$0xff] %vm2257, %v2235
        %2262 = vst.msk [vmem:[#allocation2 + $0x18] sm:$0xf] %vm2259, %v2236
        %2263 = vst.msk [vmem:[#allocation2 + $0x20] sm:$0xff] %vm2257, %v2237
        %2264 = vst.msk [vmem:[#allocation2 + $0x28] sm:$0xf] %vm2259, %v2238
        %2265 = vst.msk [vmem:[#allocation2 + $0x30] sm:$0xff] %vm2257, %v2239
        %2266 = vst.msk [vmem:[#allocation2 + $0x38] sm:$0xf] %vm2259, %v2240
        %2267 = vst.msk [vmem:[#allocation2 + $0x40] sm:$0xff] %vm2257, %v2241
        %2268 = vst.msk [vmem:[#allocation2 + $0x48] sm:$0xf] %vm2259, %v2242
        %2269 = vst.msk [vmem:[#allocation2 + $0x50] sm:$0xff] %vm2257, %v2243
        %2270 = vst.msk [vmem:[#allocation2 + $0x58] sm:$0xf] %vm2259, %v2244
        %2271 = vst.msk [vmem:[#allocation2 + $0x60] sm:$0xff] %vm2257, %v2245
        %2272 = vst.msk [vmem:[#allocation2 + $0x68] sm:$0xf] %vm2259, %v2246
        %2273 = vst.msk [vmem:[#allocation2 + $0x70] sm:$0xff] %vm2257, %v2247
        %2274 = vst.msk [vmem:[#allocation2 + $0x78] sm:$0xf] %vm2259, %v2248
        %2275 = vst.msk [vmem:[#allocation2 + $0x80] sm:$0xff] %vm2257, %v2249
        %2276 = vst.msk [vmem:[#allocation2 + $0x88] sm:$0xf] %vm2259, %v2250
        %2277 = vst.msk [vmem:[#allocation2 + $0x90] sm:$0xff] %vm2257, %v2251
        %2278 = vst.msk [vmem:[#allocation2 + $0x98] sm:$0xf] %vm2259, %v2252
        %2279 = vst.msk [vmem:[#allocation2 + $0xa0] sm:$0xff] %vm2257, %v2253
        %2280 = vst.msk [vmem:[#allocation2 + $0xa8] sm:$0xf] %vm2259, %v2254
        %2281 = vst.msk [vmem:[#allocation2 + $0xb0] sm:$0xff] %vm2257, %v2255
        %2282 = vst.msk [vmem:[#allocation2 + $0xb8] sm:$0xf] %vm2259, %v2256
        %v2283 = vld [vmem:[#allocation2] sm:$0xff]
        %v2284 = vld [vmem:[#allocation2 + $0x10] sm:$0xff]
        %v2285 = vld [vmem:[#allocation2 + $0x20] sm:$0xff]
        %v2286 = vld [vmem:[#allocation2 + $0x30] sm:$0xff]
        %v2287 = vld [vmem:[#allocation2 + $0x40] sm:$0xff]
        %v2288 = vld [vmem:[#allocation2 + $0x50] sm:$0xff]
        %v2289 = vld [vmem:[#allocation2 + $0x60] sm:$0xff]
        %v2290 = vld [vmem:[#allocation2 + $0x70] sm:$0xff]
        %v2291 = vld [vmem:[#allocation2 + $0x80] sm:$0xff]
        %v2292 = vld [vmem:[#allocation2 + $0x90] sm:$0xff]
        %v2293 = vld [vmem:[#allocation2 + $0xa0] sm:$0xff]
        %v2294 = vld [vmem:[#allocation2 + $0xb0] sm:$0xff]
        %v2295 = vld [vmem:[#allocation8] sm:$0xff]
        %v2296 = vld [vmem:[#allocation8 + $0x8] sm:$0xff]
        %v2297 = vld [vmem:[#allocation8 + $0x10] sm:$0xff]
        %v2298 = vld [vmem:[#allocation8 + $0x18] sm:$0xff]
        %s2299 = scalar_lea.vmem [#allocation8], 160
        %v2300 = vld [vmem:[%s2299] sm:$0xff]
        %v2301 = vld [vmem:[%s2299 + $0x8] sm:$0xff]
        %v2302 = vld [vmem:[%s2299 + $0x10] sm:$0xff]
        %v2303 = vld [vmem:[%s2299 + $0x18] sm:$0xff]
        %v2305 = vsel %vm2257, %v2284, 0
        %v2308 = vsel %vm2257, %v2285, 0
        %v2311 = vsel %vm2257, %v2286, 0
        %v2314 = vsel %vm2257, %v2287, 0
        %v2317 = vsel %vm2257, %v2288, 0
        %v2320 = vsel %vm2257, %v2289, 0
        %v2323 = vsel %vm2257, %v2290, 0
        %v2326 = vsel %vm2257, %v2291, 0
        %2328 = vmatprep.subr.mxu0 0.0
        %2329 = vmatpush1.msra.mxu0 0.0
        %2330 = vmatprep.subr.mxu0 0.0
        %2331 = vmatpush1.msra.mxu0 0.0
        %2332 = vmatprep.subr.mxu0 0.0
        %2333 = vmatpush1.msra.mxu0 0.0
        %2334 = vmatprep.subr.mxu0 0.0
        %2335 = vmatpush1.msra.mxu0 0.0
        %2336 = vmatprep.subr.mxu0 0.0
        %2337 = vmatpush1.msra.mxu0 0.0
        %2338 = vmatprep.subr.mxu0 0.0
        %2339 = vmatpush1.msra.mxu0 0.0
        %2340 = vmatprep.subr.mxu0 0.0
        %2341 = vmatpush1.msra.mxu0 0.0
        %2342 = vmatprep.subr.mxu0 0.0
        %2343 = vmatpush1.msra.mxu0 0.0
        %2344 = vmatprep.subr.mxu0 0.0
        %2345 = vmatpush1.msra.mxu0 0.0
        %2346 = vmatprep.subr.mxu0 0.0
        %2347 = vmatpush1.msra.mxu0 0.0
        %2348 = vmatprep.subr.mxu0 0.0
        %2349 = vmatpush1.msra.mxu0 0.0
        %2350 = vmatprep.subr.mxu0 0.0
        %2351 = vmatpush1.msra.mxu0 0.0
        %2352 = vmatprep.subr.mxu0 0.0
        %2353 = vmatpush1.msra.mxu0 %v2303
        %2354 = vmatprep.subr.mxu0 0.0
        %2355 = vmatpush1.msra.mxu0 %v2302
        %2356 = vmatprep.subr.mxu0 0.0
        %2357 = vmatpush1.msra.mxu0 %v2301
        %2358 = vmatprep.subr.mxu0 0.0
        %2359 = vmatpush1.msra.mxu0 %v2300
        %2360 = vmatprep.subr.mxu0 0.0
        %2361 = vmatpush2.msra.mxu0 0.0
        %2362 = vmatprep.subr.mxu0 0.0
        %2363 = vmatpush2.msra.mxu0 0.0
        %2364 = vmatprep.subr.mxu0 0.0
        %2365 = vmatpush2.msra.mxu0 0.0
        %2366 = vmatprep.subr.mxu0 0.0
        %2367 = vmatpush2.msra.mxu0 0.0
        %2368 = vmatprep.subr.mxu0 0.0
        %2369 = vmatpush2.msra.mxu0 0.0
        %2370 = vmatprep.subr.mxu0 0.0
        %2371 = vmatpush2.msra.mxu0 0.0
        %2372 = vmatprep.subr.mxu0 0.0
        %2373 = vmatpush2.msra.mxu0 0.0
        %2374 = vmatprep.subr.mxu0 0.0
        %2375 = vmatpush2.msra.mxu0 0.0
        %2376 = vmatprep.subr.mxu0 0.0
        %2377 = vmatpush2.msra.mxu0 0.0
        %2378 = vmatprep.subr.mxu0 0.0
        %2379 = vmatpush2.msra.mxu0 0.0
        %2380 = vmatprep.subr.mxu0 0.0
        %2381 = vmatpush2.msra.mxu0 0.0
        %2382 = vmatprep.subr.mxu0 0.0
        %2383 = vmatpush2.msra.mxu0 0.0
        %2384 = vmatprep.subr.mxu0 0.0
        %2385 = vmatpush2.msra.mxu0 0.0
        %2386 = vmatprep.subr.mxu0 0.0
        %2387 = vmatpush2.msra.mxu0 0.0
        %2388 = vmatprep.subr.mxu0 0.0
        %2389 = vmatpush2.msra.mxu0 0.0
        %2390 = vmatprep.subr.mxu0 0.0
        %2391 = vmatpush2.msra.mxu0 0.0
        %2392 = vmatprep.mubr.f32.mxu0 0.0
        %2393 = vmatmul.mubr.f32.gmra.mxu0 %v2305
        %v2394 = vpop.f32.mrf.mxu0
        %v2395 = vadd.f32 0.0, %v2394
        %v2396 = vpop.f32.mrf.mxu0
        %2397 = vmatprep.mubr.f32.mxu0 0.0
        %2398 = vmatmul.mubr.f32.gmra.mxu0 %v2308
        %v2399 = vpop.f32.mrf.mxu0
        %v2400 = vadd.f32 0.0, %v2399
        %v2401 = vpop.f32.mrf.mxu0
        %2402 = vmatprep.mubr.f32.mxu0 0.0
        %2403 = vmatmul.mubr.f32.gmra.mxu0 %v2311
        %v2404 = vpop.f32.mrf.mxu0
        %v2405 = vadd.f32 0.0, %v2404
        %v2406 = vpop.f32.mrf.mxu0
        %2407 = vmatprep.mubr.f32.mxu0 0.0
        %2408 = vmatmul.mubr.f32.gmra.mxu0 %v2314
        %v2409 = vpop.f32.mrf.mxu0
        %v2410 = vadd.f32 0.0, %v2409
        %v2411 = vpop.f32.mrf.mxu0
        %2412 = vmatprep.mubr.f32.mxu0 0.0
        %2413 = vmatmul.mubr.f32.gmra.mxu0 %v2317
        %v2414 = vpop.f32.mrf.mxu0
        %v2415 = vadd.f32 0.0, %v2414
        %v2416 = vpop.f32.mrf.mxu0
        %2417 = vmatprep.mubr.f32.mxu0 0.0
        %2418 = vmatmul.mubr.f32.gmra.mxu0 %v2320
        %v2419 = vpop.f32.mrf.mxu0
        %v2420 = vadd.f32 0.0, %v2419
        %v2421 = vpop.f32.mrf.mxu0
        %2422 = vmatprep.mubr.f32.mxu0 0.0
        %2423 = vmatmul.mubr.f32.gmra.mxu0 %v2323
        %v2424 = vpop.f32.mrf.mxu0
        %v2425 = vadd.f32 0.0, %v2424
        %v2426 = vpop.f32.mrf.mxu0
        %2427 = vmatprep.mubr.f32.mxu0 0.0
        %2428 = vmatmul.mubr.f32.gmra.mxu0 %v2326
        %v2429 = vpop.f32.mrf.mxu0
        %v2430 = vadd.f32 0.0, %v2429
        %v2431 = vpop.f32.mrf.mxu0
        %2432 = vdwg.mxu0
        %v2434 = vsel %vm2257, %v2283, 0
        %2436 = vmatprep.subr.mxu0 0.0
        %2437 = vmatpush1.msra.mxu0 0.0
        %2438 = vmatprep.subr.mxu0 0.0
        %2439 = vmatpush1.msra.mxu0 0.0
        %2440 = vmatprep.subr.mxu0 0.0
        %2441 = vmatpush1.msra.mxu0 0.0
        %2442 = vmatprep.subr.mxu0 0.0
        %2443 = vmatpush1.msra.mxu0 0.0
        %2444 = vmatprep.subr.mxu0 0.0
        %2445 = vmatpush1.msra.mxu0 0.0
        %2446 = vmatprep.subr.mxu0 0.0
        %2447 = vmatpush1.msra.mxu0 0.0
        %2448 = vmatprep.subr.mxu0 0.0
        %2449 = vmatpush1.msra.mxu0 0.0
        %2450 = vmatprep.subr.mxu0 0.0
        %2451 = vmatpush1.msra.mxu0 0.0
        %2452 = vmatprep.subr.mxu0 0.0
        %2453 = vmatpush1.msra.mxu0 0.0
        %2454 = vmatprep.subr.mxu0 0.0
        %2455 = vmatpush1.msra.mxu0 0.0
        %2456 = vmatprep.subr.mxu0 0.0
        %2457 = vmatpush1.msra.mxu0 0.0
        %2458 = vmatprep.subr.mxu0 0.0
        %2459 = vmatpush1.msra.mxu0 0.0
        %2460 = vmatprep.subr.mxu0 0.0
        %2461 = vmatpush1.msra.mxu0 %v2298
        %2462 = vmatprep.subr.mxu0 0.0
        %2463 = vmatpush1.msra.mxu0 %v2297
        %2464 = vmatprep.subr.mxu0 0.0
        %2465 = vmatpush1.msra.mxu0 %v2296
        %2466 = vmatprep.subr.mxu0 0.0
        %2467 = vmatpush1.msra.mxu0 %v2295
        %2468 = vmatprep.subr.mxu0 0.0
        %2469 = vmatpush2.msra.mxu0 0.0
        %2470 = vmatprep.subr.mxu0 0.0
        %2471 = vmatpush2.msra.mxu0 0.0
        %2472 = vmatprep.subr.mxu0 0.0
        %2473 = vmatpush2.msra.mxu0 0.0
        %2474 = vmatprep.subr.mxu0 0.0
        %2475 = vmatpush2.msra.mxu0 0.0
        %2476 = vmatprep.subr.mxu0 0.0
        %2477 = vmatpush2.msra.mxu0 0.0
        %2478 = vmatprep.subr.mxu0 0.0
        %2479 = vmatpush2.msra.mxu0 0.0
        %2480 = vmatprep.subr.mxu0 0.0
        %2481 = vmatpush2.msra.mxu0 0.0
        %2482 = vmatprep.subr.mxu0 0.0
        %2483 = vmatpush2.msra.mxu0 0.0
        %2484 = vmatprep.subr.mxu0 0.0
        %2485 = vmatpush2.msra.mxu0 0.0
        %2486 = vmatprep.subr.mxu0 0.0
        %2487 = vmatpush2.msra.mxu0 0.0
        %2488 = vmatprep.subr.mxu0 0.0
        %2489 = vmatpush2.msra.mxu0 0.0
        %2490 = vmatprep.subr.mxu0 0.0
        %2491 = vmatpush2.msra.mxu0 0.0
        %2492 = vmatprep.subr.mxu0 0.0
        %2493 = vmatpush2.msra.mxu0 0.0
        %2494 = vmatprep.subr.mxu0 0.0
        %2495 = vmatpush2.msra.mxu0 0.0
        %2496 = vmatprep.subr.mxu0 0.0
        %2497 = vmatpush2.msra.mxu0 0.0
        %2498 = vmatprep.subr.mxu0 0.0
        %2499 = vmatpush2.msra.mxu0 0.0
        %2500 = vmatprep.mubr.f32.mxu0 0.0
        %2501 = vmatmul.mubr.f32.gmra.mxu0 %v2434
        %v2502 = vpop.f32.mrf.mxu0
        %v2503 = vadd.f32 %v2395, %v2502
        %v2504 = vpop.f32.mrf.mxu0
        %2505 = vmatprep.mubr.f32.mxu0 0.0
        %2506 = vmatmul.mubr.f32.gmra.mxu0 %v2305
        %v2507 = vpop.f32.mrf.mxu0
        %v2508 = vadd.f32 %v2400, %v2507
        %v2509 = vpop.f32.mrf.mxu0
        %2510 = vmatprep.mubr.f32.mxu0 0.0
        %2511 = vmatmul.mubr.f32.gmra.mxu0 %v2308
        %v2512 = vpop.f32.mrf.mxu0
        %v2513 = vadd.f32 %v2405, %v2512
        %v2514 = vpop.f32.mrf.mxu0
        %2515 = vmatprep.mubr.f32.mxu0 0.0
        %2516 = vmatmul.mubr.f32.gmra.mxu0 %v2311
        %v2517 = vpop.f32.mrf.mxu0
        %v2518 = vadd.f32 %v2410, %v2517
        %v2519 = vpop.f32.mrf.mxu0
        %2520 = vmatprep.mubr.f32.mxu0 0.0
        %2521 = vmatmul.mubr.f32.gmra.mxu0 %v2314
        %v2522 = vpop.f32.mrf.mxu0
        %v2523 = vadd.f32 %v2415, %v2522
        %v2524 = vpop.f32.mrf.mxu0
        %2525 = vmatprep.mubr.f32.mxu0 0.0
        %2526 = vmatmul.mubr.f32.gmra.mxu0 %v2317
        %v2527 = vpop.f32.mrf.mxu0
        %v2528 = vadd.f32 %v2420, %v2527
        %v2529 = vpop.f32.mrf.mxu0
        %2530 = vmatprep.mubr.f32.mxu0 0.0
        %2531 = vmatmul.mubr.f32.gmra.mxu0 %v2320
        %v2532 = vpop.f32.mrf.mxu0
        %v2533 = vadd.f32 %v2425, %v2532
        %v2534 = vpop.f32.mrf.mxu0
        %2535 = vmatprep.mubr.f32.mxu0 0.0
        %2536 = vmatmul.mubr.f32.gmra.mxu0 %v2323
        %v2537 = vpop.f32.mrf.mxu0
        %v2538 = vadd.f32 %v2430, %v2537
        %v2539 = vpop.f32.mrf.mxu0
        %2540 = vdwg.mxu0
        %s2541 = scalar_lea.vmem [#allocation8], 320
        %v2542 = vld [vmem:[%s2541] sm:$0xff]
        %v2543 = vld [vmem:[%s2541 + $0x8] sm:$0xff]
        %v2544 = vld [vmem:[%s2541 + $0x10] sm:$0xff]
        %v2545 = vld [vmem:[%s2541 + $0x18] sm:$0xff]
        %v2547 = vsel %vm2257, %v2292, 0
        %2549 = vmatprep.subr.mxu0 0.0
        %2550 = vmatpush1.msra.mxu0 0.0
        %2551 = vmatprep.subr.mxu0 0.0
        %2552 = vmatpush1.msra.mxu0 0.0
        %2553 = vmatprep.subr.mxu0 0.0
        %2554 = vmatpush1.msra.mxu0 0.0
        %2555 = vmatprep.subr.mxu0 0.0
        %2556 = vmatpush1.msra.mxu0 0.0
        %2557 = vmatprep.subr.mxu0 0.0
        %2558 = vmatpush1.msra.mxu0 0.0
        %2559 = vmatprep.subr.mxu0 0.0
        %2560 = vmatpush1.msra.mxu0 0.0
        %2561 = vmatprep.subr.mxu0 0.0
        %2562 = vmatpush1.msra.mxu0 0.0
        %2563 = vmatprep.subr.mxu0 0.0
        %2564 = vmatpush1.msra.mxu0 0.0
        %2565 = vmatprep.subr.mxu0 0.0
        %2566 = vmatpush1.msra.mxu0 0.0
        %2567 = vmatprep.subr.mxu0 0.0
        %2568 = vmatpush1.msra.mxu0 0.0
        %2569 = vmatprep.subr.mxu0 0.0
        %2570 = vmatpush1.msra.mxu0 0.0
        %2571 = vmatprep.subr.mxu0 0.0
        %2572 = vmatpush1.msra.mxu0 0.0
        %2573 = vmatprep.subr.mxu0 0.0
        %2574 = vmatpush1.msra.mxu0 %v2545
        %2575 = vmatprep.subr.mxu0 0.0
        %2576 = vmatpush1.msra.mxu0 %v2544
        %2577 = vmatprep.subr.mxu0 0.0
        %2578 = vmatpush1.msra.mxu0 %v2543
        %2579 = vmatprep.subr.mxu0 0.0
        %2580 = vmatpush1.msra.mxu0 %v2542
        %2581 = vmatprep.subr.mxu0 0.0
        %2582 = vmatpush2.msra.mxu0 0.0
        %2583 = vmatprep.subr.mxu0 0.0
        %2584 = vmatpush2.msra.mxu0 0.0
        %2585 = vmatprep.subr.mxu0 0.0
        %2586 = vmatpush2.msra.mxu0 0.0
        %2587 = vmatprep.subr.mxu0 0.0
        %2588 = vmatpush2.msra.mxu0 0.0
        %2589 = vmatprep.subr.mxu0 0.0
        %2590 = vmatpush2.msra.mxu0 0.0
        %2591 = vmatprep.subr.mxu0 0.0
        %2592 = vmatpush2.msra.mxu0 0.0
        %2593 = vmatprep.subr.mxu0 0.0
        %2594 = vmatpush2.msra.mxu0 0.0
        %2595 = vmatprep.subr.mxu0 0.0
        %2596 = vmatpush2.msra.mxu0 0.0
        %2597 = vmatprep.subr.mxu0 0.0
        %2598 = vmatpush2.msra.mxu0 0.0
        %2599 = vmatprep.subr.mxu0 0.0
        %2600 = vmatpush2.msra.mxu0 0.0
        %2601 = vmatprep.subr.mxu0 0.0
        %2602 = vmatpush2.msra.mxu0 0.0
        %2603 = vmatprep.subr.mxu0 0.0
        %2604 = vmatpush2.msra.mxu0 0.0
        %2605 = vmatprep.subr.mxu0 0.0
        %2606 = vmatpush2.msra.mxu0 0.0
        %2607 = vmatprep.subr.mxu0 0.0
        %2608 = vmatpush2.msra.mxu0 0.0
        %2609 = vmatprep.subr.mxu0 0.0
        %2610 = vmatpush2.msra.mxu0 0.0
        %2611 = vmatprep.subr.mxu0 0.0
        %2612 = vmatpush2.msra.mxu0 0.0
        %2613 = vmatprep.mubr.f32.mxu0 0.0
        %2614 = vmatmul.mubr.f32.gmra.mxu0 %v2308
        %v2615 = vpop.f32.mrf.mxu0
        %v2616 = vadd.f32 0.0, %v2615
        %v2617 = vpop.f32.mrf.mxu0
        %2618 = vmatprep.mubr.f32.mxu0 0.0
        %2619 = vmatmul.mubr.f32.gmra.mxu0 %v2311
        %v2620 = vpop.f32.mrf.mxu0
        %v2621 = vadd.f32 0.0, %v2620
        %v2622 = vpop.f32.mrf.mxu0
        %2623 = vmatprep.mubr.f32.mxu0 0.0
        %2624 = vmatmul.mubr.f32.gmra.mxu0 %v2314
        %v2625 = vpop.f32.mrf.mxu0
        %v2626 = vadd.f32 0.0, %v2625
        %v2627 = vpop.f32.mrf.mxu0
        %2628 = vmatprep.mubr.f32.mxu0 0.0
        %2629 = vmatmul.mubr.f32.gmra.mxu0 %v2317
        %v2630 = vpop.f32.mrf.mxu0
        %v2631 = vadd.f32 0.0, %v2630
        %v2632 = vpop.f32.mrf.mxu0
        %2633 = vmatprep.mubr.f32.mxu0 0.0
        %2634 = vmatmul.mubr.f32.gmra.mxu0 %v2320
        %v2635 = vpop.f32.mrf.mxu0
        %v2636 = vadd.f32 0.0, %v2635
        %v2637 = vpop.f32.mrf.mxu0
        %2638 = vmatprep.mubr.f32.mxu0 0.0
        %2639 = vmatmul.mubr.f32.gmra.mxu0 %v2323
        %v2640 = vpop.f32.mrf.mxu0
        %v2641 = vadd.f32 0.0, %v2640
        %v2642 = vpop.f32.mrf.mxu0
        %2643 = vmatprep.mubr.f32.mxu0 0.0
        %2644 = vmatmul.mubr.f32.gmra.mxu0 %v2326
        %v2645 = vpop.f32.mrf.mxu0
        %v2646 = vadd.f32 0.0, %v2645
        %v2647 = vpop.f32.mrf.mxu0
        %2648 = vmatprep.mubr.f32.mxu0 0.0
        %2649 = vmatmul.mubr.f32.gmra.mxu0 %v2547
        %v2650 = vpop.f32.mrf.mxu0
        %v2651 = vadd.f32 0.0, %v2650
        %v2652 = vpop.f32.mrf.mxu0
        %2653 = vdwg.mxu0
        %v2654 = vadd.f32 %v2503, %v2616
        %v2655 = vadd.f32 %v2508, %v2621
        %v2656 = vadd.f32 %v2513, %v2626
        %v2657 = vadd.f32 %v2518, %v2631
        %v2658 = vadd.f32 %v2523, %v2636
        %v2659 = vadd.f32 %v2528, %v2641
        %v2660 = vadd.f32 %v2533, %v2646
        %v2661 = vadd.f32 %v2538, %v2651
        %s2662 = scalar_lea.vmem [#allocation8], 480
        %v2663 = vld [vmem:[%s2662] sm:$0xff]
        %v2664 = vld [vmem:[%s2662 + $0x8] sm:$0xff]
        %v2665 = vld [vmem:[%s2662 + $0x10] sm:$0xff]
        %v2666 = vld [vmem:[%s2662 + $0x18] sm:$0xff]
        %v2668 = vsel %vm2257, %v2293, 0
        %2670 = vmatprep.subr.mxu0 0.0
        %2671 = vmatpush1.msra.mxu0 0.0
        %2672 = vmatprep.subr.mxu0 0.0
        %2673 = vmatpush1.msra.mxu0 0.0
        %2674 = vmatprep.subr.mxu0 0.0
        %2675 = vmatpush1.msra.mxu0 0.0
        %2676 = vmatprep.subr.mxu0 0.0
        %2677 = vmatpush1.msra.mxu0 0.0
        %2678 = vmatprep.subr.mxu0 0.0
        %2679 = vmatpush1.msra.mxu0 0.0
        %2680 = vmatprep.subr.mxu0 0.0
        %2681 = vmatpush1.msra.mxu0 0.0
        %2682 = vmatprep.subr.mxu0 0.0
        %2683 = vmatpush1.msra.mxu0 0.0
        %2684 = vmatprep.subr.mxu0 0.0
        %2685 = vmatpush1.msra.mxu0 0.0
        %2686 = vmatprep.subr.mxu0 0.0
        %2687 = vmatpush1.msra.mxu0 0.0
        %2688 = vmatprep.subr.mxu0 0.0
        %2689 = vmatpush1.msra.mxu0 0.0
        %2690 = vmatprep.subr.mxu0 0.0
        %2691 = vmatpush1.msra.mxu0 0.0
        %2692 = vmatprep.subr.mxu0 0.0
        %2693 = vmatpush1.msra.mxu0 0.0
        %2694 = vmatprep.subr.mxu0 0.0
        %2695 = vmatpush1.msra.mxu0 %v2666
        %2696 = vmatprep.subr.mxu0 0.0
        %2697 = vmatpush1.msra.mxu0 %v2665
        %2698 = vmatprep.subr.mxu0 0.0
        %2699 = vmatpush1.msra.mxu0 %v2664
        %2700 = vmatprep.subr.mxu0 0.0
        %2701 = vmatpush1.msra.mxu0 %v2663
        %2702 = vmatprep.subr.mxu0 0.0
        %2703 = vmatpush2.msra.mxu0 0.0
        %2704 = vmatprep.subr.mxu0 0.0
        %2705 = vmatpush2.msra.mxu0 0.0
        %2706 = vmatprep.subr.mxu0 0.0
        %2707 = vmatpush2.msra.mxu0 0.0
        %2708 = vmatprep.subr.mxu0 0.0
        %2709 = vmatpush2.msra.mxu0 0.0
        %2710 = vmatprep.subr.mxu0 0.0
        %2711 = vmatpush2.msra.mxu0 0.0
        %2712 = vmatprep.subr.mxu0 0.0
        %2713 = vmatpush2.msra.mxu0 0.0
        %2714 = vmatprep.subr.mxu0 0.0
        %2715 = vmatpush2.msra.mxu0 0.0
        %2716 = vmatprep.subr.mxu0 0.0
        %2717 = vmatpush2.msra.mxu0 0.0
        %2718 = vmatprep.subr.mxu0 0.0
        %2719 = vmatpush2.msra.mxu0 0.0
        %2720 = vmatprep.subr.mxu0 0.0
        %2721 = vmatpush2.msra.mxu0 0.0
        %2722 = vmatprep.subr.mxu0 0.0
        %2723 = vmatpush2.msra.mxu0 0.0
        %2724 = vmatprep.subr.mxu0 0.0
        %2725 = vmatpush2.msra.mxu0 0.0
        %2726 = vmatprep.subr.mxu0 0.0
        %2727 = vmatpush2.msra.mxu0 0.0
        %2728 = vmatprep.subr.mxu0 0.0
        %2729 = vmatpush2.msra.mxu0 0.0
        %2730 = vmatprep.subr.mxu0 0.0
        %2731 = vmatpush2.msra.mxu0 0.0
        %2732 = vmatprep.subr.mxu0 0.0
        %2733 = vmatpush2.msra.mxu0 0.0
        %2734 = vmatprep.mubr.f32.mxu0 0.0
        %2735 = vmatmul.mubr.f32.gmra.mxu0 %v2311
        %v2736 = vpop.f32.mrf.mxu0
        %v2737 = vadd.f32 0.0, %v2736
        %v2738 = vpop.f32.mrf.mxu0
        %2739 = vmatprep.mubr.f32.mxu0 0.0
        %2740 = vmatmul.mubr.f32.gmra.mxu0 %v2314
        %v2741 = vpop.f32.mrf.mxu0
        %v2742 = vadd.f32 0.0, %v2741
        %v2743 = vpop.f32.mrf.mxu0
        %2744 = vmatprep.mubr.f32.mxu0 0.0
        %2745 = vmatmul.mubr.f32.gmra.mxu0 %v2317
        %v2746 = vpop.f32.mrf.mxu0
        %v2747 = vadd.f32 0.0, %v2746
        %v2748 = vpop.f32.mrf.mxu0
        %2749 = vmatprep.mubr.f32.mxu0 0.0
        %2750 = vmatmul.mubr.f32.gmra.mxu0 %v2320
        %v2751 = vpop.f32.mrf.mxu0
        %v2752 = vadd.f32 0.0, %v2751
        %v2753 = vpop.f32.mrf.mxu0
        %2754 = vmatprep.mubr.f32.mxu0 0.0
        %2755 = vmatmul.mubr.f32.gmra.mxu0 %v2323
        %v2756 = vpop.f32.mrf.mxu0
        %v2757 = vadd.f32 0.0, %v2756
        %v2758 = vpop.f32.mrf.mxu0
        %2759 = vmatprep.mubr.f32.mxu0 0.0
        %2760 = vmatmul.mubr.f32.gmra.mxu0 %v2326
        %v2761 = vpop.f32.mrf.mxu0
        %v2762 = vadd.f32 0.0, %v2761
        %v2763 = vpop.f32.mrf.mxu0
        %2764 = vmatprep.mubr.f32.mxu0 0.0
        %2765 = vmatmul.mubr.f32.gmra.mxu0 %v2547
        %v2766 = vpop.f32.mrf.mxu0
        %v2767 = vadd.f32 0.0, %v2766
        %v2768 = vpop.f32.mrf.mxu0
        %2769 = vmatprep.mubr.f32.mxu0 0.0
        %2770 = vmatmul.mubr.f32.gmra.mxu0 %v2668
        %v2771 = vpop.f32.mrf.mxu0
        %v2772 = vadd.f32 0.0, %v2771
        %v2773 = vpop.f32.mrf.mxu0
        %2774 = vdwg.mxu0
        %v2775 = vadd.f32 %v2654, %v2737
        %v2776 = vadd.f32 %v2655, %v2742
        %v2777 = vadd.f32 %v2656, %v2747
        %v2778 = vadd.f32 %v2657, %v2752
        %v2779 = vadd.f32 %v2658, %v2757
        %v2780 = vadd.f32 %v2659, %v2762
        %v2781 = vadd.f32 %v2660, %v2767
        %v2782 = vadd.f32 %v2661, %v2772
        %s2783 = scalar_lea.vmem [#allocation8], 640
        %v2784 = vld [vmem:[%s2783] sm:$0xff]
        %v2785 = vld [vmem:[%s2783 + $0x8] sm:$0xff]
        %v2786 = vld [vmem:[%s2783 + $0x10] sm:$0xff]
        %v2787 = vld [vmem:[%s2783 + $0x18] sm:$0xff]
        %v2789 = vsel %vm2257, %v2294, 0
        %2791 = vmatprep.subr.mxu0 0.0
        %2792 = vmatpush1.msra.mxu0 0.0
        %2793 = vmatprep.subr.mxu0 0.0
        %2794 = vmatpush1.msra.mxu0 0.0
        %2795 = vmatprep.subr.mxu0 0.0
        %2796 = vmatpush1.msra.mxu0 0.0
        %2797 = vmatprep.subr.mxu0 0.0
        %2798 = vmatpush1.msra.mxu0 0.0
        %2799 = vmatprep.subr.mxu0 0.0
        %2800 = vmatpush1.msra.mxu0 0.0
        %2801 = vmatprep.subr.mxu0 0.0
        %2802 = vmatpush1.msra.mxu0 0.0
        %2803 = vmatprep.subr.mxu0 0.0
        %2804 = vmatpush1.msra.mxu0 0.0
        %2805 = vmatprep.subr.mxu0 0.0
        %2806 = vmatpush1.msra.mxu0 0.0
        %2807 = vmatprep.subr.mxu0 0.0
        %2808 = vmatpush1.msra.mxu0 0.0
        %2809 = vmatprep.subr.mxu0 0.0
        %2810 = vmatpush1.msra.mxu0 0.0
        %2811 = vmatprep.subr.mxu0 0.0
        %2812 = vmatpush1.msra.mxu0 0.0
        %2813 = vmatprep.subr.mxu0 0.0
        %2814 = vmatpush1.msra.mxu0 0.0
        %2815 = vmatprep.subr.mxu0 0.0
        %2816 = vmatpush1.msra.mxu0 %v2787
        %2817 = vmatprep.subr.mxu0 0.0
        %2818 = vmatpush1.msra.mxu0 %v2786
        %2819 = vmatprep.subr.mxu0 0.0
        %2820 = vmatpush1.msra.mxu0 %v2785
        %2821 = vmatprep.subr.mxu0 0.0
        %2822 = vmatpush1.msra.mxu0 %v2784
        %2823 = vmatprep.subr.mxu0 0.0
        %2824 = vmatpush2.msra.mxu0 0.0
        %2825 = vmatprep.subr.mxu0 0.0
        %2826 = vmatpush2.msra.mxu0 0.0
        %2827 = vmatprep.subr.mxu0 0.0
        %2828 = vmatpush2.msra.mxu0 0.0
        %2829 = vmatprep.subr.mxu0 0.0
        %2830 = vmatpush2.msra.mxu0 0.0
        %2831 = vmatprep.subr.mxu0 0.0
        %2832 = vmatpush2.msra.mxu0 0.0
        %2833 = vmatprep.subr.mxu0 0.0
        %2834 = vmatpush2.msra.mxu0 0.0
        %2835 = vmatprep.subr.mxu0 0.0
        %2836 = vmatpush2.msra.mxu0 0.0
        %2837 = vmatprep.subr.mxu0 0.0
        %2838 = vmatpush2.msra.mxu0 0.0
        %2839 = vmatprep.subr.mxu0 0.0
        %2840 = vmatpush2.msra.mxu0 0.0
        %2841 = vmatprep.subr.mxu0 0.0
        %2842 = vmatpush2.msra.mxu0 0.0
        %2843 = vmatprep.subr.mxu0 0.0
        %2844 = vmatpush2.msra.mxu0 0.0
        %2845 = vmatprep.subr.mxu0 0.0
        %2846 = vmatpush2.msra.mxu0 0.0
        %2847 = vmatprep.subr.mxu0 0.0
        %2848 = vmatpush2.msra.mxu0 0.0
        %2849 = vmatprep.subr.mxu0 0.0
        %2850 = vmatpush2.msra.mxu0 0.0
        %2851 = vmatprep.subr.mxu0 0.0
        %2852 = vmatpush2.msra.mxu0 0.0
        %2853 = vmatprep.subr.mxu0 0.0
        %2854 = vmatpush2.msra.mxu0 0.0
        %2855 = vmatprep.mubr.f32.mxu0 0.0
        %2856 = vmatmul.mubr.f32.gmra.mxu0 %v2314
        %v2857 = vpop.f32.mrf.mxu0
        %v2858 = vadd.f32 0.0, %v2857
        %v2859 = vpop.f32.mrf.mxu0
        %2860 = vmatprep.mubr.f32.mxu0 0.0
        %2861 = vmatmul.mubr.f32.gmra.mxu0 %v2317
        %v2862 = vpop.f32.mrf.mxu0
        %v2863 = vadd.f32 0.0, %v2862
        %v2864 = vpop.f32.mrf.mxu0
        %2865 = vmatprep.mubr.f32.mxu0 0.0
        %2866 = vmatmul.mubr.f32.gmra.mxu0 %v2320
        %v2867 = vpop.f32.mrf.mxu0
        %v2868 = vadd.f32 0.0, %v2867
        %v2869 = vpop.f32.mrf.mxu0
        %2870 = vmatprep.mubr.f32.mxu0 0.0
        %2871 = vmatmul.mubr.f32.gmra.mxu0 %v2323
        %v2872 = vpop.f32.mrf.mxu0
        %v2873 = vadd.f32 0.0, %v2872
        %v2874 = vpop.f32.mrf.mxu0
        %2875 = vmatprep.mubr.f32.mxu0 0.0
        %2876 = vmatmul.mubr.f32.gmra.mxu0 %v2326
        %v2877 = vpop.f32.mrf.mxu0
        %v2878 = vadd.f32 0.0, %v2877
        %v2879 = vpop.f32.mrf.mxu0
        %2880 = vmatprep.mubr.f32.mxu0 0.0
        %2881 = vmatmul.mubr.f32.gmra.mxu0 %v2547
        %v2882 = vpop.f32.mrf.mxu0
        %v2883 = vadd.f32 0.0, %v2882
        %v2884 = vpop.f32.mrf.mxu0
        %2885 = vmatprep.mubr.f32.mxu0 0.0
        %2886 = vmatmul.mubr.f32.gmra.mxu0 %v2668
        %v2887 = vpop.f32.mrf.mxu0
        %v2888 = vadd.f32 0.0, %v2887
        %v2889 = vpop.f32.mrf.mxu0
        %2890 = vmatprep.mubr.f32.mxu0 0.0
        %2891 = vmatmul.mubr.f32.gmra.mxu0 %v2789
        %v2892 = vpop.f32.mrf.mxu0
        %v2893 = vadd.f32 0.0, %v2892
        %v2894 = vpop.f32.mrf.mxu0
        %2895 = vdwg.mxu0
        %v2896 = vadd.f32 %v2775, %v2858
        %v2897 = vadd.f32 %v2776, %v2863
        %v2898 = vadd.f32 %v2777, %v2868
        %v2899 = vadd.f32 %v2778, %v2873
        %v2900 = vadd.f32 %v2779, %v2878
        %v2901 = vadd.f32 %v2780, %v2883
        %v2902 = vadd.f32 %v2781, %v2888
        %v2903 = vadd.f32 %v2782, %v2893
        %v2904 = vld [vmem:[#allocation2 + $0x1] sm:$0xff]
        %v2905 = vld [vmem:[#allocation2 + $0x11] sm:$0xff]
        %v2906 = vld [vmem:[#allocation2 + $0x21] sm:$0xff]
        %v2907 = vld [vmem:[#allocation2 + $0x31] sm:$0xff]
        %v2908 = vld [vmem:[#allocation2 + $0x41] sm:$0xff]
        %v2909 = vld [vmem:[#allocation2 + $0x51] sm:$0xff]
        %v2910 = vld [vmem:[#allocation2 + $0x61] sm:$0xff]
        %v2911 = vld [vmem:[#allocation2 + $0x71] sm:$0xff]
        %v2912 = vld [vmem:[#allocation2 + $0x81] sm:$0xff]
        %v2913 = vld [vmem:[#allocation2 + $0x91] sm:$0xff]
        %v2914 = vld [vmem:[#allocation2 + $0xa1] sm:$0xff]
        %v2915 = vld [vmem:[#allocation2 + $0xb1] sm:$0xff]
        %s2916 = scalar_lea.vmem [#allocation8], 32
        %v2917 = vld [vmem:[%s2916] sm:$0xff]
        %v2918 = vld [vmem:[%s2916 + $0x8] sm:$0xff]
        %v2919 = vld [vmem:[%s2916 + $0x10] sm:$0xff]
        %v2920 = vld [vmem:[%s2916 + $0x18] sm:$0xff]
        %v2922 = vsel %vm2257, %v2904, 0
        %v2925 = vsel %vm2257, %v2905, 0
        %v2928 = vsel %vm2257, %v2906, 0
        %v2931 = vsel %vm2257, %v2907, 0
        %v2934 = vsel %vm2257, %v2908, 0
        %v2937 = vsel %vm2257, %v2909, 0
        %v2940 = vsel %vm2257, %v2910, 0
        %v2943 = vsel %vm2257, %v2911, 0
        %2945 = vmatprep.subr.mxu0 0.0
        %2946 = vmatpush1.msra.mxu0 0.0
        %2947 = vmatprep.subr.mxu0 0.0
        %2948 = vmatpush1.msra.mxu0 0.0
        %2949 = vmatprep.subr.mxu0 0.0
        %2950 = vmatpush1.msra.mxu0 0.0
        %2951 = vmatprep.subr.mxu0 0.0
        %2952 = vmatpush1.msra.mxu0 0.0
        %2953 = vmatprep.subr.mxu0 0.0
        %2954 = vmatpush1.msra.mxu0 0.0
        %2955 = vmatprep.subr.mxu0 0.0
        %2956 = vmatpush1.msra.mxu0 0.0
        %2957 = vmatprep.subr.mxu0 0.0
        %2958 = vmatpush1.msra.mxu0 0.0
        %2959 = vmatprep.subr.mxu0 0.0
        %2960 = vmatpush1.msra.mxu0 0.0
        %2961 = vmatprep.subr.mxu0 0.0
        %2962 = vmatpush1.msra.mxu0 0.0
        %2963 = vmatprep.subr.mxu0 0.0
        %2964 = vmatpush1.msra.mxu0 0.0
        %2965 = vmatprep.subr.mxu0 0.0
        %2966 = vmatpush1.msra.mxu0 0.0
        %2967 = vmatprep.subr.mxu0 0.0
        %2968 = vmatpush1.msra.mxu0 0.0
        %2969 = vmatprep.subr.mxu0 0.0
        %2970 = vmatpush1.msra.mxu0 %v2920
        %2971 = vmatprep.subr.mxu0 0.0
        %2972 = vmatpush1.msra.mxu0 %v2919
        %2973 = vmatprep.subr.mxu0 0.0
        %2974 = vmatpush1.msra.mxu0 %v2918
        %2975 = vmatprep.subr.mxu0 0.0
        %2976 = vmatpush1.msra.mxu0 %v2917
        %2977 = vmatprep.subr.mxu0 0.0
        %2978 = vmatpush2.msra.mxu0 0.0
        %2979 = vmatprep.subr.mxu0 0.0
        %2980 = vmatpush2.msra.mxu0 0.0
        %2981 = vmatprep.subr.mxu0 0.0
        %2982 = vmatpush2.msra.mxu0 0.0
        %2983 = vmatprep.subr.mxu0 0.0
        %2984 = vmatpush2.msra.mxu0 0.0
        %2985 = vmatprep.subr.mxu0 0.0
        %2986 = vmatpush2.msra.mxu0 0.0
        %2987 = vmatprep.subr.mxu0 0.0
        %2988 = vmatpush2.msra.mxu0 0.0
        %2989 = vmatprep.subr.mxu0 0.0
        %2990 = vmatpush2.msra.mxu0 0.0
        %2991 = vmatprep.subr.mxu0 0.0
        %2992 = vmatpush2.msra.mxu0 0.0
        %2993 = vmatprep.subr.mxu0 0.0
        %2994 = vmatpush2.msra.mxu0 0.0
        %2995 = vmatprep.subr.mxu0 0.0
        %2996 = vmatpush2.msra.mxu0 0.0
        %2997 = vmatprep.subr.mxu0 0.0
        %2998 = vmatpush2.msra.mxu0 0.0
        %2999 = vmatprep.subr.mxu0 0.0
        %3000 = vmatpush2.msra.mxu0 0.0
        %3001 = vmatprep.subr.mxu0 0.0
        %3002 = vmatpush2.msra.mxu0 0.0
        %3003 = vmatprep.subr.mxu0 0.0
        %3004 = vmatpush2.msra.mxu0 0.0
        %3005 = vmatprep.subr.mxu0 0.0
        %3006 = vmatpush2.msra.mxu0 0.0
        %3007 = vmatprep.subr.mxu0 0.0
        %3008 = vmatpush2.msra.mxu0 0.0
        %3009 = vmatprep.mubr.f32.mxu0 0.0
        %3010 = vmatmul.mubr.f32.gmra.mxu0 %v2922
        %v3011 = vpop.f32.mrf.mxu0
        %v3012 = vadd.f32 0.0, %v3011
        %v3013 = vpop.f32.mrf.mxu0
        %3014 = vmatprep.mubr.f32.mxu0 0.0
        %3015 = vmatmul.mubr.f32.gmra.mxu0 %v2925
        %v3016 = vpop.f32.mrf.mxu0
        %v3017 = vadd.f32 0.0, %v3016
        %v3018 = vpop.f32.mrf.mxu0
        %3019 = vmatprep.mubr.f32.mxu0 0.0
        %3020 = vmatmul.mubr.f32.gmra.mxu0 %v2928
        %v3021 = vpop.f32.mrf.mxu0
        %v3022 = vadd.f32 0.0, %v3021
        %v3023 = vpop.f32.mrf.mxu0
        %3024 = vmatprep.mubr.f32.mxu0 0.0
        %3025 = vmatmul.mubr.f32.gmra.mxu0 %v2931
        %v3026 = vpop.f32.mrf.mxu0
        %v3027 = vadd.f32 0.0, %v3026
        %v3028 = vpop.f32.mrf.mxu0
        %3029 = vmatprep.mubr.f32.mxu0 0.0
        %3030 = vmatmul.mubr.f32.gmra.mxu0 %v2934
        %v3031 = vpop.f32.mrf.mxu0
        %v3032 = vadd.f32 0.0, %v3031
        %v3033 = vpop.f32.mrf.mxu0
        %3034 = vmatprep.mubr.f32.mxu0 0.0
        %3035 = vmatmul.mubr.f32.gmra.mxu0 %v2937
        %v3036 = vpop.f32.mrf.mxu0
        %v3037 = vadd.f32 0.0, %v3036
        %v3038 = vpop.f32.mrf.mxu0
        %3039 = vmatprep.mubr.f32.mxu0 0.0
        %3040 = vmatmul.mubr.f32.gmra.mxu0 %v2940
        %v3041 = vpop.f32.mrf.mxu0
        %v3042 = vadd.f32 0.0, %v3041
        %v3043 = vpop.f32.mrf.mxu0
        %3044 = vmatprep.mubr.f32.mxu0 0.0
        %3045 = vmatmul.mubr.f32.gmra.mxu0 %v2943
        %v3046 = vpop.f32.mrf.mxu0
        %v3047 = vadd.f32 0.0, %v3046
        %v3048 = vpop.f32.mrf.mxu0
        %3049 = vdwg.mxu0
        %v3050 = vadd.f32 %v2896, %v3012
        %v3051 = vadd.f32 %v2897, %v3017
        %v3052 = vadd.f32 %v2898, %v3022
        %v3053 = vadd.f32 %v2899, %v3027
        %v3054 = vadd.f32 %v2900, %v3032
        %v3055 = vadd.f32 %v2901, %v3037
        %v3056 = vadd.f32 %v2902, %v3042
        %v3057 = vadd.f32 %v2903, %v3047
        %s3058 = scalar_lea.vmem [#allocation8], 192
        %v3059 = vld [vmem:[%s3058] sm:$0xff]
        %v3060 = vld [vmem:[%s3058 + $0x8] sm:$0xff]
        %v3061 = vld [vmem:[%s3058 + $0x10] sm:$0xff]
        %v3062 = vld [vmem:[%s3058 + $0x18] sm:$0xff]
        %v3064 = vsel %vm2257, %v2912, 0
        %3066 = vmatprep.subr.mxu0 0.0
        %3067 = vmatpush1.msra.mxu0 0.0
        %3068 = vmatprep.subr.mxu0 0.0
        %3069 = vmatpush1.msra.mxu0 0.0
        %3070 = vmatprep.subr.mxu0 0.0
        %3071 = vmatpush1.msra.mxu0 0.0
        %3072 = vmatprep.subr.mxu0 0.0
        %3073 = vmatpush1.msra.mxu0 0.0
        %3074 = vmatprep.subr.mxu0 0.0
        %3075 = vmatpush1.msra.mxu0 0.0
        %3076 = vmatprep.subr.mxu0 0.0
        %3077 = vmatpush1.msra.mxu0 0.0
        %3078 = vmatprep.subr.mxu0 0.0
        %3079 = vmatpush1.msra.mxu0 0.0
        %3080 = vmatprep.subr.mxu0 0.0
        %3081 = vmatpush1.msra.mxu0 0.0
        %3082 = vmatprep.subr.mxu0 0.0
        %3083 = vmatpush1.msra.mxu0 0.0
        %3084 = vmatprep.subr.mxu0 0.0
        %3085 = vmatpush1.msra.mxu0 0.0
        %3086 = vmatprep.subr.mxu0 0.0
        %3087 = vmatpush1.msra.mxu0 0.0
        %3088 = vmatprep.subr.mxu0 0.0
        %3089 = vmatpush1.msra.mxu0 0.0
        %3090 = vmatprep.subr.mxu0 0.0
        %3091 = vmatpush1.msra.mxu0 %v3062
        %3092 = vmatprep.subr.mxu0 0.0
        %3093 = vmatpush1.msra.mxu0 %v3061
        %3094 = vmatprep.subr.mxu0 0.0
        %3095 = vmatpush1.msra.mxu0 %v3060
        %3096 = vmatprep.subr.mxu0 0.0
        %3097 = vmatpush1.msra.mxu0 %v3059
        %3098 = vmatprep.subr.mxu0 0.0
        %3099 = vmatpush2.msra.mxu0 0.0
        %3100 = vmatprep.subr.mxu0 0.0
        %3101 = vmatpush2.msra.mxu0 0.0
        %3102 = vmatprep.subr.mxu0 0.0
        %3103 = vmatpush2.msra.mxu0 0.0
        %3104 = vmatprep.subr.mxu0 0.0
        %3105 = vmatpush2.msra.mxu0 0.0
        %3106 = vmatprep.subr.mxu0 0.0
        %3107 = vmatpush2.msra.mxu0 0.0
        %3108 = vmatprep.subr.mxu0 0.0
        %3109 = vmatpush2.msra.mxu0 0.0
        %3110 = vmatprep.subr.mxu0 0.0
        %3111 = vmatpush2.msra.mxu0 0.0
        %3112 = vmatprep.subr.mxu0 0.0
        %3113 = vmatpush2.msra.mxu0 0.0
        %3114 = vmatprep.subr.mxu0 0.0
        %3115 = vmatpush2.msra.mxu0 0.0
        %3116 = vmatprep.subr.mxu0 0.0
        %3117 = vmatpush2.msra.mxu0 0.0
        %3118 = vmatprep.subr.mxu0 0.0
        %3119 = vmatpush2.msra.mxu0 0.0
        %3120 = vmatprep.subr.mxu0 0.0
        %3121 = vmatpush2.msra.mxu0 0.0
        %3122 = vmatprep.subr.mxu0 0.0
        %3123 = vmatpush2.msra.mxu0 0.0
        %3124 = vmatprep.subr.mxu0 0.0
        %3125 = vmatpush2.msra.mxu0 0.0
        %3126 = vmatprep.subr.mxu0 0.0
        %3127 = vmatpush2.msra.mxu0 0.0
        %3128 = vmatprep.subr.mxu0 0.0
        %3129 = vmatpush2.msra.mxu0 0.0
        %3130 = vmatprep.mubr.f32.mxu0 0.0
        %3131 = vmatmul.mubr.f32.gmra.mxu0 %v2925
        %v3132 = vpop.f32.mrf.mxu0
        %v3133 = vadd.f32 0.0, %v3132
        %v3134 = vpop.f32.mrf.mxu0
        %3135 = vmatprep.mubr.f32.mxu0 0.0
        %3136 = vmatmul.mubr.f32.gmra.mxu0 %v2928
        %v3137 = vpop.f32.mrf.mxu0
        %v3138 = vadd.f32 0.0, %v3137
        %v3139 = vpop.f32.mrf.mxu0
        %3140 = vmatprep.mubr.f32.mxu0 0.0
        %3141 = vmatmul.mubr.f32.gmra.mxu0 %v2931
        %v3142 = vpop.f32.mrf.mxu0
        %v3143 = vadd.f32 0.0, %v3142
        %v3144 = vpop.f32.mrf.mxu0
        %3145 = vmatprep.mubr.f32.mxu0 0.0
        %3146 = vmatmul.mubr.f32.gmra.mxu0 %v2934
        %v3147 = vpop.f32.mrf.mxu0
        %v3148 = vadd.f32 0.0, %v3147
        %v3149 = vpop.f32.mrf.mxu0
        %3150 = vmatprep.mubr.f32.mxu0 0.0
        %3151 = vmatmul.mubr.f32.gmra.mxu0 %v2937
        %v3152 = vpop.f32.mrf.mxu0
        %v3153 = vadd.f32 0.0, %v3152
        %v3154 = vpop.f32.mrf.mxu0
        %3155 = vmatprep.mubr.f32.mxu0 0.0
        %3156 = vmatmul.mubr.f32.gmra.mxu0 %v2940
        %v3157 = vpop.f32.mrf.mxu0
        %v3158 = vadd.f32 0.0, %v3157
        %v3159 = vpop.f32.mrf.mxu0
        %3160 = vmatprep.mubr.f32.mxu0 0.0
        %3161 = vmatmul.mubr.f32.gmra.mxu0 %v2943
        %v3162 = vpop.f32.mrf.mxu0
        %v3163 = vadd.f32 0.0, %v3162
        %v3164 = vpop.f32.mrf.mxu0
        %3165 = vmatprep.mubr.f32.mxu0 0.0
        %3166 = vmatmul.mubr.f32.gmra.mxu0 %v3064
        %v3167 = vpop.f32.mrf.mxu0
        %v3168 = vadd.f32 0.0, %v3167
        %v3169 = vpop.f32.mrf.mxu0
        %3170 = vdwg.mxu0
        %v3171 = vadd.f32 %v3050, %v3133
        %v3172 = vadd.f32 %v3051, %v3138
        %v3173 = vadd.f32 %v3052, %v3143
        %v3174 = vadd.f32 %v3053, %v3148
        %v3175 = vadd.f32 %v3054, %v3153
        %v3176 = vadd.f32 %v3055, %v3158
        %v3177 = vadd.f32 %v3056, %v3163
        %v3178 = vadd.f32 %v3057, %v3168
        %s3179 = scalar_lea.vmem [#allocation8], 352
        %v3180 = vld [vmem:[%s3179] sm:$0xff]
        %v3181 = vld [vmem:[%s3179 + $0x8] sm:$0xff]
        %v3182 = vld [vmem:[%s3179 + $0x10] sm:$0xff]
        %v3183 = vld [vmem:[%s3179 + $0x18] sm:$0xff]
        %v3185 = vsel %vm2257, %v2913, 0
        %3187 = vmatprep.subr.mxu0 0.0
        %3188 = vmatpush1.msra.mxu0 0.0
        %3189 = vmatprep.subr.mxu0 0.0
        %3190 = vmatpush1.msra.mxu0 0.0
        %3191 = vmatprep.subr.mxu0 0.0
        %3192 = vmatpush1.msra.mxu0 0.0
        %3193 = vmatprep.subr.mxu0 0.0
        %3194 = vmatpush1.msra.mxu0 0.0
        %3195 = vmatprep.subr.mxu0 0.0
        %3196 = vmatpush1.msra.mxu0 0.0
        %3197 = vmatprep.subr.mxu0 0.0
        %3198 = vmatpush1.msra.mxu0 0.0
        %3199 = vmatprep.subr.mxu0 0.0
        %3200 = vmatpush1.msra.mxu0 0.0
        %3201 = vmatprep.subr.mxu0 0.0
        %3202 = vmatpush1.msra.mxu0 0.0
        %3203 = vmatprep.subr.mxu0 0.0
        %3204 = vmatpush1.msra.mxu0 0.0
        %3205 = vmatprep.subr.mxu0 0.0
        %3206 = vmatpush1.msra.mxu0 0.0
        %3207 = vmatprep.subr.mxu0 0.0
        %3208 = vmatpush1.msra.mxu0 0.0
        %3209 = vmatprep.subr.mxu0 0.0
        %3210 = vmatpush1.msra.mxu0 0.0
        %3211 = vmatprep.subr.mxu0 0.0
        %3212 = vmatpush1.msra.mxu0 %v3183
        %3213 = vmatprep.subr.mxu0 0.0
        %3214 = vmatpush1.msra.mxu0 %v3182
        %3215 = vmatprep.subr.mxu0 0.0
        %3216 = vmatpush1.msra.mxu0 %v3181
        %3217 = vmatprep.subr.mxu0 0.0
        %3218 = vmatpush1.msra.mxu0 %v3180
        %3219 = vmatprep.subr.mxu0 0.0
        %3220 = vmatpush2.msra.mxu0 0.0
        %3221 = vmatprep.subr.mxu0 0.0
        %3222 = vmatpush2.msra.mxu0 0.0
        %3223 = vmatprep.subr.mxu0 0.0
        %3224 = vmatpush2.msra.mxu0 0.0
        %3225 = vmatprep.subr.mxu0 0.0
        %3226 = vmatpush2.msra.mxu0 0.0
        %3227 = vmatprep.subr.mxu0 0.0
        %3228 = vmatpush2.msra.mxu0 0.0
        %3229 = vmatprep.subr.mxu0 0.0
        %3230 = vmatpush2.msra.mxu0 0.0
        %3231 = vmatprep.subr.mxu0 0.0
        %3232 = vmatpush2.msra.mxu0 0.0
        %3233 = vmatprep.subr.mxu0 0.0
        %3234 = vmatpush2.msra.mxu0 0.0
        %3235 = vmatprep.subr.mxu0 0.0
        %3236 = vmatpush2.msra.mxu0 0.0
        %3237 = vmatprep.subr.mxu0 0.0
        %3238 = vmatpush2.msra.mxu0 0.0
        %3239 = vmatprep.subr.mxu0 0.0
        %3240 = vmatpush2.msra.mxu0 0.0
        %3241 = vmatprep.subr.mxu0 0.0
        %3242 = vmatpush2.msra.mxu0 0.0
        %3243 = vmatprep.subr.mxu0 0.0
        %3244 = vmatpush2.msra.mxu0 0.0
        %3245 = vmatprep.subr.mxu0 0.0
        %3246 = vmatpush2.msra.mxu0 0.0
        %3247 = vmatprep.subr.mxu0 0.0
        %3248 = vmatpush2.msra.mxu0 0.0
        %3249 = vmatprep.subr.mxu0 0.0
        %3250 = vmatpush2.msra.mxu0 0.0
        %3251 = vmatprep.mubr.f32.mxu0 0.0
        %3252 = vmatmul.mubr.f32.gmra.mxu0 %v2928
        %v3253 = vpop.f32.mrf.mxu0
        %v3254 = vadd.f32 0.0, %v3253
        %v3255 = vpop.f32.mrf.mxu0
        %3256 = vmatprep.mubr.f32.mxu0 0.0
        %3257 = vmatmul.mubr.f32.gmra.mxu0 %v2931
        %v3258 = vpop.f32.mrf.mxu0
        %v3259 = vadd.f32 0.0, %v3258
        %v3260 = vpop.f32.mrf.mxu0
        %3261 = vmatprep.mubr.f32.mxu0 0.0
        %3262 = vmatmul.mubr.f32.gmra.mxu0 %v2934
        %v3263 = vpop.f32.mrf.mxu0
        %v3264 = vadd.f32 0.0, %v3263
        %v3265 = vpop.f32.mrf.mxu0
        %3266 = vmatprep.mubr.f32.mxu0 0.0
        %3267 = vmatmul.mubr.f32.gmra.mxu0 %v2937
        %v3268 = vpop.f32.mrf.mxu0
        %v3269 = vadd.f32 0.0, %v3268
        %v3270 = vpop.f32.mrf.mxu0
        %3271 = vmatprep.mubr.f32.mxu0 0.0
        %3272 = vmatmul.mubr.f32.gmra.mxu0 %v2940
        %v3273 = vpop.f32.mrf.mxu0
        %v3274 = vadd.f32 0.0, %v3273
        %v3275 = vpop.f32.mrf.mxu0
        %3276 = vmatprep.mubr.f32.mxu0 0.0
        %3277 = vmatmul.mubr.f32.gmra.mxu0 %v2943
        %v3278 = vpop.f32.mrf.mxu0
        %v3279 = vadd.f32 0.0, %v3278
        %v3280 = vpop.f32.mrf.mxu0
        %3281 = vmatprep.mubr.f32.mxu0 0.0
        %3282 = vmatmul.mubr.f32.gmra.mxu0 %v3064
        %v3283 = vpop.f32.mrf.mxu0
        %v3284 = vadd.f32 0.0, %v3283
        %v3285 = vpop.f32.mrf.mxu0
        %3286 = vmatprep.mubr.f32.mxu0 0.0
        %3287 = vmatmul.mubr.f32.gmra.mxu0 %v3185
        %v3288 = vpop.f32.mrf.mxu0
        %v3289 = vadd.f32 0.0, %v3288
        %v3290 = vpop.f32.mrf.mxu0
        %3291 = vdwg.mxu0
        %v3292 = vadd.f32 %v3171, %v3254
        %v3293 = vadd.f32 %v3172, %v3259
        %v3294 = vadd.f32 %v3173, %v3264
        %v3295 = vadd.f32 %v3174, %v3269
        %v3296 = vadd.f32 %v3175, %v3274
        %v3297 = vadd.f32 %v3176, %v3279
        %v3298 = vadd.f32 %v3177, %v3284
        %v3299 = vadd.f32 %v3178, %v3289
        %s3300 = scalar_lea.vmem [#allocation8], 512
        %v3301 = vld [vmem:[%s3300] sm:$0xff]
        %v3302 = vld [vmem:[%s3300 + $0x8] sm:$0xff]
        %v3303 = vld [vmem:[%s3300 + $0x10] sm:$0xff]
        %v3304 = vld [vmem:[%s3300 + $0x18] sm:$0xff]
        %v3306 = vsel %vm2257, %v2914, 0
        %3308 = vmatprep.subr.mxu0 0.0
        %3309 = vmatpush1.msra.mxu0 0.0
        %3310 = vmatprep.subr.mxu0 0.0
        %3311 = vmatpush1.msra.mxu0 0.0
        %3312 = vmatprep.subr.mxu0 0.0
        %3313 = vmatpush1.msra.mxu0 0.0
        %3314 = vmatprep.subr.mxu0 0.0
        %3315 = vmatpush1.msra.mxu0 0.0
        %3316 = vmatprep.subr.mxu0 0.0
        %3317 = vmatpush1.msra.mxu0 0.0
        %3318 = vmatprep.subr.mxu0 0.0
        %3319 = vmatpush1.msra.mxu0 0.0
        %3320 = vmatprep.subr.mxu0 0.0
        %3321 = vmatpush1.msra.mxu0 0.0
        %3322 = vmatprep.subr.mxu0 0.0
        %3323 = vmatpush1.msra.mxu0 0.0
        %3324 = vmatprep.subr.mxu0 0.0
        %3325 = vmatpush1.msra.mxu0 0.0
        %3326 = vmatprep.subr.mxu0 0.0
        %3327 = vmatpush1.msra.mxu0 0.0
        %3328 = vmatprep.subr.mxu0 0.0
        %3329 = vmatpush1.msra.mxu0 0.0
        %3330 = vmatprep.subr.mxu0 0.0
        %3331 = vmatpush1.msra.mxu0 0.0
        %3332 = vmatprep.subr.mxu0 0.0
        %3333 = vmatpush1.msra.mxu0 %v3304
        %3334 = vmatprep.subr.mxu0 0.0
        %3335 = vmatpush1.msra.mxu0 %v3303
        %3336 = vmatprep.subr.mxu0 0.0
        %3337 = vmatpush1.msra.mxu0 %v3302
        %3338 = vmatprep.subr.mxu0 0.0
        %3339 = vmatpush1.msra.mxu0 %v3301
        %3340 = vmatprep.subr.mxu0 0.0
        %3341 = vmatpush2.msra.mxu0 0.0
        %3342 = vmatprep.subr.mxu0 0.0
        %3343 = vmatpush2.msra.mxu0 0.0
        %3344 = vmatprep.subr.mxu0 0.0
        %3345 = vmatpush2.msra.mxu0 0.0
        %3346 = vmatprep.subr.mxu0 0.0
        %3347 = vmatpush2.msra.mxu0 0.0
        %3348 = vmatprep.subr.mxu0 0.0
        %3349 = vmatpush2.msra.mxu0 0.0
        %3350 = vmatprep.subr.mxu0 0.0
        %3351 = vmatpush2.msra.mxu0 0.0
        %3352 = vmatprep.subr.mxu0 0.0
        %3353 = vmatpush2.msra.mxu0 0.0
        %3354 = vmatprep.subr.mxu0 0.0
        %3355 = vmatpush2.msra.mxu0 0.0
        %3356 = vmatprep.subr.mxu0 0.0
        %3357 = vmatpush2.msra.mxu0 0.0
        %3358 = vmatprep.subr.mxu0 0.0
        %3359 = vmatpush2.msra.mxu0 0.0
        %3360 = vmatprep.subr.mxu0 0.0
        %3361 = vmatpush2.msra.mxu0 0.0
        %3362 = vmatprep.subr.mxu0 0.0
        %3363 = vmatpush2.msra.mxu0 0.0
        %3364 = vmatprep.subr.mxu0 0.0
        %3365 = vmatpush2.msra.mxu0 0.0
        %3366 = vmatprep.subr.mxu0 0.0
        %3367 = vmatpush2.msra.mxu0 0.0
        %3368 = vmatprep.subr.mxu0 0.0
        %3369 = vmatpush2.msra.mxu0 0.0
        %3370 = vmatprep.subr.mxu0 0.0
        %3371 = vmatpush2.msra.mxu0 0.0
        %3372 = vmatprep.mubr.f32.mxu0 0.0
        %3373 = vmatmul.mubr.f32.gmra.mxu0 %v2931
        %v3374 = vpop.f32.mrf.mxu0
        %v3375 = vadd.f32 0.0, %v3374
        %v3376 = vpop.f32.mrf.mxu0
        %3377 = vmatprep.mubr.f32.mxu0 0.0
        %3378 = vmatmul.mubr.f32.gmra.mxu0 %v2934
        %v3379 = vpop.f32.mrf.mxu0
        %v3380 = vadd.f32 0.0, %v3379
        %v3381 = vpop.f32.mrf.mxu0
        %3382 = vmatprep.mubr.f32.mxu0 0.0
        %3383 = vmatmul.mubr.f32.gmra.mxu0 %v2937
        %v3384 = vpop.f32.mrf.mxu0
        %v3385 = vadd.f32 0.0, %v3384
        %v3386 = vpop.f32.mrf.mxu0
        %3387 = vmatprep.mubr.f32.mxu0 0.0
        %3388 = vmatmul.mubr.f32.gmra.mxu0 %v2940
        %v3389 = vpop.f32.mrf.mxu0
        %v3390 = vadd.f32 0.0, %v3389
        %v3391 = vpop.f32.mrf.mxu0
        %3392 = vmatprep.mubr.f32.mxu0 0.0
        %3393 = vmatmul.mubr.f32.gmra.mxu0 %v2943
        %v3394 = vpop.f32.mrf.mxu0
        %v3395 = vadd.f32 0.0, %v3394
        %v3396 = vpop.f32.mrf.mxu0
        %3397 = vmatprep.mubr.f32.mxu0 0.0
        %3398 = vmatmul.mubr.f32.gmra.mxu0 %v3064
        %v3399 = vpop.f32.mrf.mxu0
        %v3400 = vadd.f32 0.0, %v3399
        %v3401 = vpop.f32.mrf.mxu0
        %3402 = vmatprep.mubr.f32.mxu0 0.0
        %3403 = vmatmul.mubr.f32.gmra.mxu0 %v3185
        %v3404 = vpop.f32.mrf.mxu0
        %v3405 = vadd.f32 0.0, %v3404
        %v3406 = vpop.f32.mrf.mxu0
        %3407 = vmatprep.mubr.f32.mxu0 0.0
        %3408 = vmatmul.mubr.f32.gmra.mxu0 %v3306
        %v3409 = vpop.f32.mrf.mxu0
        %v3410 = vadd.f32 0.0, %v3409
        %v3411 = vpop.f32.mrf.mxu0
        %3412 = vdwg.mxu0
        %v3413 = vadd.f32 %v3292, %v3375
        %v3414 = vadd.f32 %v3293, %v3380
        %v3415 = vadd.f32 %v3294, %v3385
        %v3416 = vadd.f32 %v3295, %v3390
        %v3417 = vadd.f32 %v3296, %v3395
        %v3418 = vadd.f32 %v3297, %v3400
        %v3419 = vadd.f32 %v3298, %v3405
        %v3420 = vadd.f32 %v3299, %v3410
        %s3421 = scalar_lea.vmem [#allocation8], 672
        %v3422 = vld [vmem:[%s3421] sm:$0xff]
        %v3423 = vld [vmem:[%s3421 + $0x8] sm:$0xff]
        %v3424 = vld [vmem:[%s3421 + $0x10] sm:$0xff]
        %v3425 = vld [vmem:[%s3421 + $0x18] sm:$0xff]
        %v3427 = vsel %vm2257, %v2915, 0
        %3429 = vmatprep.subr.mxu0 0.0
        %3430 = vmatpush1.msra.mxu0 0.0
        %3431 = vmatprep.subr.mxu0 0.0
        %3432 = vmatpush1.msra.mxu0 0.0
        %3433 = vmatprep.subr.mxu0 0.0
        %3434 = vmatpush1.msra.mxu0 0.0
        %3435 = vmatprep.subr.mxu0 0.0
        %3436 = vmatpush1.msra.mxu0 0.0
        %3437 = vmatprep.subr.mxu0 0.0
        %3438 = vmatpush1.msra.mxu0 0.0
        %3439 = vmatprep.subr.mxu0 0.0
        %3440 = vmatpush1.msra.mxu0 0.0
        %3441 = vmatprep.subr.mxu0 0.0
        %3442 = vmatpush1.msra.mxu0 0.0
        %3443 = vmatprep.subr.mxu0 0.0
        %3444 = vmatpush1.msra.mxu0 0.0
        %3445 = vmatprep.subr.mxu0 0.0
        %3446 = vmatpush1.msra.mxu0 0.0
        %3447 = vmatprep.subr.mxu0 0.0
        %3448 = vmatpush1.msra.mxu0 0.0
        %3449 = vmatprep.subr.mxu0 0.0
        %3450 = vmatpush1.msra.mxu0 0.0
        %3451 = vmatprep.subr.mxu0 0.0
        %3452 = vmatpush1.msra.mxu0 0.0
        %3453 = vmatprep.subr.mxu0 0.0
        %3454 = vmatpush1.msra.mxu0 %v3425
        %3455 = vmatprep.subr.mxu0 0.0
        %3456 = vmatpush1.msra.mxu0 %v3424
        %3457 = vmatprep.subr.mxu0 0.0
        %3458 = vmatpush1.msra.mxu0 %v3423
        %3459 = vmatprep.subr.mxu0 0.0
        %3460 = vmatpush1.msra.mxu0 %v3422
        %3461 = vmatprep.subr.mxu0 0.0
        %3462 = vmatpush2.msra.mxu0 0.0
        %3463 = vmatprep.subr.mxu0 0.0
        %3464 = vmatpush2.msra.mxu0 0.0
        %3465 = vmatprep.subr.mxu0 0.0
        %3466 = vmatpush2.msra.mxu0 0.0
        %3467 = vmatprep.subr.mxu0 0.0
        %3468 = vmatpush2.msra.mxu0 0.0
        %3469 = vmatprep.subr.mxu0 0.0
        %3470 = vmatpush2.msra.mxu0 0.0
        %3471 = vmatprep.subr.mxu0 0.0
        %3472 = vmatpush2.msra.mxu0 0.0
        %3473 = vmatprep.subr.mxu0 0.0
        %3474 = vmatpush2.msra.mxu0 0.0
        %3475 = vmatprep.subr.mxu0 0.0
        %3476 = vmatpush2.msra.mxu0 0.0
        %3477 = vmatprep.subr.mxu0 0.0
        %3478 = vmatpush2.msra.mxu0 0.0
        %3479 = vmatprep.subr.mxu0 0.0
        %3480 = vmatpush2.msra.mxu0 0.0
        %3481 = vmatprep.subr.mxu0 0.0
        %3482 = vmatpush2.msra.mxu0 0.0
        %3483 = vmatprep.subr.mxu0 0.0
        %3484 = vmatpush2.msra.mxu0 0.0
        %3485 = vmatprep.subr.mxu0 0.0
        %3486 = vmatpush2.msra.mxu0 0.0
        %3487 = vmatprep.subr.mxu0 0.0
        %3488 = vmatpush2.msra.mxu0 0.0
        %3489 = vmatprep.subr.mxu0 0.0
        %3490 = vmatpush2.msra.mxu0 0.0
        %3491 = vmatprep.subr.mxu0 0.0
        %3492 = vmatpush2.msra.mxu0 0.0
        %3493 = vmatprep.mubr.f32.mxu0 0.0
        %3494 = vmatmul.mubr.f32.gmra.mxu0 %v2934
        %v3495 = vpop.f32.mrf.mxu0
        %v3496 = vadd.f32 0.0, %v3495
        %v3497 = vpop.f32.mrf.mxu0
        %3498 = vmatprep.mubr.f32.mxu0 0.0
        %3499 = vmatmul.mubr.f32.gmra.mxu0 %v2937
        %v3500 = vpop.f32.mrf.mxu0
        %v3501 = vadd.f32 0.0, %v3500
        %v3502 = vpop.f32.mrf.mxu0
        %3503 = vmatprep.mubr.f32.mxu0 0.0
        %3504 = vmatmul.mubr.f32.gmra.mxu0 %v2940
        %v3505 = vpop.f32.mrf.mxu0
        %v3506 = vadd.f32 0.0, %v3505
        %v3507 = vpop.f32.mrf.mxu0
        %3508 = vmatprep.mubr.f32.mxu0 0.0
        %3509 = vmatmul.mubr.f32.gmra.mxu0 %v2943
        %v3510 = vpop.f32.mrf.mxu0
        %v3511 = vadd.f32 0.0, %v3510
        %v3512 = vpop.f32.mrf.mxu0
        %3513 = vmatprep.mubr.f32.mxu0 0.0
        %3514 = vmatmul.mubr.f32.gmra.mxu0 %v3064
        %v3515 = vpop.f32.mrf.mxu0
        %v3516 = vadd.f32 0.0, %v3515
        %v3517 = vpop.f32.mrf.mxu0
        %3518 = vmatprep.mubr.f32.mxu0 0.0
        %3519 = vmatmul.mubr.f32.gmra.mxu0 %v3185
        %v3520 = vpop.f32.mrf.mxu0
        %v3521 = vadd.f32 0.0, %v3520
        %v3522 = vpop.f32.mrf.mxu0
        %3523 = vmatprep.mubr.f32.mxu0 0.0
        %3524 = vmatmul.mubr.f32.gmra.mxu0 %v3306
        %v3525 = vpop.f32.mrf.mxu0
        %v3526 = vadd.f32 0.0, %v3525
        %v3527 = vpop.f32.mrf.mxu0
        %3528 = vmatprep.mubr.f32.mxu0 0.0
        %3529 = vmatmul.mubr.f32.gmra.mxu0 %v3427
        %v3530 = vpop.f32.mrf.mxu0
        %v3531 = vadd.f32 0.0, %v3530
        %v3532 = vpop.f32.mrf.mxu0
        %3533 = vdwg.mxu0
        %v3534 = vadd.f32 %v3413, %v3496
        %v3535 = vadd.f32 %v3414, %v3501
        %v3536 = vadd.f32 %v3415, %v3506
        %v3537 = vadd.f32 %v3416, %v3511
        %v3538 = vadd.f32 %v3417, %v3516
        %v3539 = vadd.f32 %v3418, %v3521
        %v3540 = vadd.f32 %v3419, %v3526
        %v3541 = vadd.f32 %v3420, %v3531
        %v3542 = vld [vmem:[#allocation2 + $0x2] sm:$0xff]
        %v3543 = vld [vmem:[#allocation2 + $0x12] sm:$0xff]
        %v3544 = vld [vmem:[#allocation2 + $0x22] sm:$0xff]
        %v3545 = vld [vmem:[#allocation2 + $0x32] sm:$0xff]
        %v3546 = vld [vmem:[#allocation2 + $0x42] sm:$0xff]
        %v3547 = vld [vmem:[#allocation2 + $0x52] sm:$0xff]
        %v3548 = vld [vmem:[#allocation2 + $0x62] sm:$0xff]
        %v3549 = vld [vmem:[#allocation2 + $0x72] sm:$0xff]
        %v3550 = vld [vmem:[#allocation2 + $0x82] sm:$0xff]
        %v3551 = vld [vmem:[#allocation2 + $0x92] sm:$0xff]
        %v3552 = vld [vmem:[#allocation2 + $0xa2] sm:$0xff]
        %v3553 = vld [vmem:[#allocation2 + $0xb2] sm:$0xff]
        %s3554 = scalar_lea.vmem [#allocation8], 64
        %v3555 = vld [vmem:[%s3554] sm:$0xff]
        %v3556 = vld [vmem:[%s3554 + $0x8] sm:$0xff]
        %v3557 = vld [vmem:[%s3554 + $0x10] sm:$0xff]
        %v3558 = vld [vmem:[%s3554 + $0x18] sm:$0xff]
        %v3560 = vsel %vm2257, %v3542, 0
        %v3563 = vsel %vm2257, %v3543, 0
        %v3566 = vsel %vm2257, %v3544, 0
        %v3569 = vsel %vm2257, %v3545, 0
        %v3572 = vsel %vm2257, %v3546, 0
        %v3575 = vsel %vm2257, %v3547, 0
        %v3578 = vsel %vm2257, %v3548, 0
        %v3581 = vsel %vm2257, %v3549, 0
        %3583 = vmatprep.subr.mxu0 0.0
        %3584 = vmatpush1.msra.mxu0 0.0
        %3585 = vmatprep.subr.mxu0 0.0
        %3586 = vmatpush1.msra.mxu0 0.0
        %3587 = vmatprep.subr.mxu0 0.0
        %3588 = vmatpush1.msra.mxu0 0.0
        %3589 = vmatprep.subr.mxu0 0.0
        %3590 = vmatpush1.msra.mxu0 0.0
        %3591 = vmatprep.subr.mxu0 0.0
        %3592 = vmatpush1.msra.mxu0 0.0
        %3593 = vmatprep.subr.mxu0 0.0
        %3594 = vmatpush1.msra.mxu0 0.0
        %3595 = vmatprep.subr.mxu0 0.0
        %3596 = vmatpush1.msra.mxu0 0.0
        %3597 = vmatprep.subr.mxu0 0.0
        %3598 = vmatpush1.msra.mxu0 0.0
        %3599 = vmatprep.subr.mxu0 0.0
        %3600 = vmatpush1.msra.mxu0 0.0
        %3601 = vmatprep.subr.mxu0 0.0
        %3602 = vmatpush1.msra.mxu0 0.0
        %3603 = vmatprep.subr.mxu0 0.0
        %3604 = vmatpush1.msra.mxu0 0.0
        %3605 = vmatprep.subr.mxu0 0.0
        %3606 = vmatpush1.msra.mxu0 0.0
        %3607 = vmatprep.subr.mxu0 0.0
        %3608 = vmatpush1.msra.mxu0 %v3558
        %3609 = vmatprep.subr.mxu0 0.0
        %3610 = vmatpush1.msra.mxu0 %v3557
        %3611 = vmatprep.subr.mxu0 0.0
        %3612 = vmatpush1.msra.mxu0 %v3556
        %3613 = vmatprep.subr.mxu0 0.0
        %3614 = vmatpush1.msra.mxu0 %v3555
        %3615 = vmatprep.subr.mxu0 0.0
        %3616 = vmatpush2.msra.mxu0 0.0
        %3617 = vmatprep.subr.mxu0 0.0
        %3618 = vmatpush2.msra.mxu0 0.0
        %3619 = vmatprep.subr.mxu0 0.0
        %3620 = vmatpush2.msra.mxu0 0.0
        %3621 = vmatprep.subr.mxu0 0.0
        %3622 = vmatpush2.msra.mxu0 0.0
        %3623 = vmatprep.subr.mxu0 0.0
        %3624 = vmatpush2.msra.mxu0 0.0
        %3625 = vmatprep.subr.mxu0 0.0
        %3626 = vmatpush2.msra.mxu0 0.0
        %3627 = vmatprep.subr.mxu0 0.0
        %3628 = vmatpush2.msra.mxu0 0.0
        %3629 = vmatprep.subr.mxu0 0.0
        %3630 = vmatpush2.msra.mxu0 0.0
        %3631 = vmatprep.subr.mxu0 0.0
        %3632 = vmatpush2.msra.mxu0 0.0
        %3633 = vmatprep.subr.mxu0 0.0
        %3634 = vmatpush2.msra.mxu0 0.0
        %3635 = vmatprep.subr.mxu0 0.0
        %3636 = vmatpush2.msra.mxu0 0.0
        %3637 = vmatprep.subr.mxu0 0.0
        %3638 = vmatpush2.msra.mxu0 0.0
        %3639 = vmatprep.subr.mxu0 0.0
        %3640 = vmatpush2.msra.mxu0 0.0
        %3641 = vmatprep.subr.mxu0 0.0
        %3642 = vmatpush2.msra.mxu0 0.0
        %3643 = vmatprep.subr.mxu0 0.0
        %3644 = vmatpush2.msra.mxu0 0.0
        %3645 = vmatprep.subr.mxu0 0.0
        %3646 = vmatpush2.msra.mxu0 0.0
        %3647 = vmatprep.mubr.f32.mxu0 0.0
        %3648 = vmatmul.mubr.f32.gmra.mxu0 %v3560
        %v3649 = vpop.f32.mrf.mxu0
        %v3650 = vadd.f32 0.0, %v3649
        %v3651 = vpop.f32.mrf.mxu0
        %3652 = vmatprep.mubr.f32.mxu0 0.0
        %3653 = vmatmul.mubr.f32.gmra.mxu0 %v3563
        %v3654 = vpop.f32.mrf.mxu0
        %v3655 = vadd.f32 0.0, %v3654
        %v3656 = vpop.f32.mrf.mxu0
        %3657 = vmatprep.mubr.f32.mxu0 0.0
        %3658 = vmatmul.mubr.f32.gmra.mxu0 %v3566
        %v3659 = vpop.f32.mrf.mxu0
        %v3660 = vadd.f32 0.0, %v3659
        %v3661 = vpop.f32.mrf.mxu0
        %3662 = vmatprep.mubr.f32.mxu0 0.0
        %3663 = vmatmul.mubr.f32.gmra.mxu0 %v3569
        %v3664 = vpop.f32.mrf.mxu0
        %v3665 = vadd.f32 0.0, %v3664
        %v3666 = vpop.f32.mrf.mxu0
        %3667 = vmatprep.mubr.f32.mxu0 0.0
        %3668 = vmatmul.mubr.f32.gmra.mxu0 %v3572
        %v3669 = vpop.f32.mrf.mxu0
        %v3670 = vadd.f32 0.0, %v3669
        %v3671 = vpop.f32.mrf.mxu0
        %3672 = vmatprep.mubr.f32.mxu0 0.0
        %3673 = vmatmul.mubr.f32.gmra.mxu0 %v3575
        %v3674 = vpop.f32.mrf.mxu0
        %v3675 = vadd.f32 0.0, %v3674
        %v3676 = vpop.f32.mrf.mxu0
        %3677 = vmatprep.mubr.f32.mxu0 0.0
        %3678 = vmatmul.mubr.f32.gmra.mxu0 %v3578
        %v3679 = vpop.f32.mrf.mxu0
        %v3680 = vadd.f32 0.0, %v3679
        %v3681 = vpop.f32.mrf.mxu0
        %3682 = vmatprep.mubr.f32.mxu0 0.0
        %3683 = vmatmul.mubr.f32.gmra.mxu0 %v3581
        %v3684 = vpop.f32.mrf.mxu0
        %v3685 = vadd.f32 0.0, %v3684
        %v3686 = vpop.f32.mrf.mxu0
        %3687 = vdwg.mxu0
        %v3688 = vadd.f32 %v3534, %v3650
        %v3689 = vadd.f32 %v3535, %v3655
        %v3690 = vadd.f32 %v3536, %v3660
        %v3691 = vadd.f32 %v3537, %v3665
        %v3692 = vadd.f32 %v3538, %v3670
        %v3693 = vadd.f32 %v3539, %v3675
        %v3694 = vadd.f32 %v3540, %v3680
        %v3695 = vadd.f32 %v3541, %v3685
        %s3696 = scalar_lea.vmem [#allocation8], 224
        %v3697 = vld [vmem:[%s3696] sm:$0xff]
        %v3698 = vld [vmem:[%s3696 + $0x8] sm:$0xff]
        %v3699 = vld [vmem:[%s3696 + $0x10] sm:$0xff]
        %v3700 = vld [vmem:[%s3696 + $0x18] sm:$0xff]
        %v3702 = vsel %vm2257, %v3550, 0
        %3704 = vmatprep.subr.mxu0 0.0
        %3705 = vmatpush1.msra.mxu0 0.0
        %3706 = vmatprep.subr.mxu0 0.0
        %3707 = vmatpush1.msra.mxu0 0.0
        %3708 = vmatprep.subr.mxu0 0.0
        %3709 = vmatpush1.msra.mxu0 0.0
        %3710 = vmatprep.subr.mxu0 0.0
        %3711 = vmatpush1.msra.mxu0 0.0
        %3712 = vmatprep.subr.mxu0 0.0
        %3713 = vmatpush1.msra.mxu0 0.0
        %3714 = vmatprep.subr.mxu0 0.0
        %3715 = vmatpush1.msra.mxu0 0.0
        %3716 = vmatprep.subr.mxu0 0.0
        %3717 = vmatpush1.msra.mxu0 0.0
        %3718 = vmatprep.subr.mxu0 0.0
        %3719 = vmatpush1.msra.mxu0 0.0
        %3720 = vmatprep.subr.mxu0 0.0
        %3721 = vmatpush1.msra.mxu0 0.0
        %3722 = vmatprep.subr.mxu0 0.0
        %3723 = vmatpush1.msra.mxu0 0.0
        %3724 = vmatprep.subr.mxu0 0.0
        %3725 = vmatpush1.msra.mxu0 0.0
        %3726 = vmatprep.subr.mxu0 0.0
        %3727 = vmatpush1.msra.mxu0 0.0
        %3728 = vmatprep.subr.mxu0 0.0
        %3729 = vmatpush1.msra.mxu0 %v3700
        %3730 = vmatprep.subr.mxu0 0.0
        %3731 = vmatpush1.msra.mxu0 %v3699
        %3732 = vmatprep.subr.mxu0 0.0
        %3733 = vmatpush1.msra.mxu0 %v3698
        %3734 = vmatprep.subr.mxu0 0.0
        %3735 = vmatpush1.msra.mxu0 %v3697
        %3736 = vmatprep.subr.mxu0 0.0
        %3737 = vmatpush2.msra.mxu0 0.0
        %3738 = vmatprep.subr.mxu0 0.0
        %3739 = vmatpush2.msra.mxu0 0.0
        %3740 = vmatprep.subr.mxu0 0.0
        %3741 = vmatpush2.msra.mxu0 0.0
        %3742 = vmatprep.subr.mxu0 0.0
        %3743 = vmatpush2.msra.mxu0 0.0
        %3744 = vmatprep.subr.mxu0 0.0
        %3745 = vmatpush2.msra.mxu0 0.0
        %3746 = vmatprep.subr.mxu0 0.0
        %3747 = vmatpush2.msra.mxu0 0.0
        %3748 = vmatprep.subr.mxu0 0.0
        %3749 = vmatpush2.msra.mxu0 0.0
        %3750 = vmatprep.subr.mxu0 0.0
        %3751 = vmatpush2.msra.mxu0 0.0
        %3752 = vmatprep.subr.mxu0 0.0
        %3753 = vmatpush2.msra.mxu0 0.0
        %3754 = vmatprep.subr.mxu0 0.0
        %3755 = vmatpush2.msra.mxu0 0.0
        %3756 = vmatprep.subr.mxu0 0.0
        %3757 = vmatpush2.msra.mxu0 0.0
        %3758 = vmatprep.subr.mxu0 0.0
        %3759 = vmatpush2.msra.mxu0 0.0
        %3760 = vmatprep.subr.mxu0 0.0
        %3761 = vmatpush2.msra.mxu0 0.0
        %3762 = vmatprep.subr.mxu0 0.0
        %3763 = vmatpush2.msra.mxu0 0.0
        %3764 = vmatprep.subr.mxu0 0.0
        %3765 = vmatpush2.msra.mxu0 0.0
        %3766 = vmatprep.subr.mxu0 0.0
        %3767 = vmatpush2.msra.mxu0 0.0
        %3768 = vmatprep.mubr.f32.mxu0 0.0
        %3769 = vmatmul.mubr.f32.gmra.mxu0 %v3563
        %v3770 = vpop.f32.mrf.mxu0
        %v3771 = vadd.f32 0.0, %v3770
        %v3772 = vpop.f32.mrf.mxu0
        %3773 = vmatprep.mubr.f32.mxu0 0.0
        %3774 = vmatmul.mubr.f32.gmra.mxu0 %v3566
        %v3775 = vpop.f32.mrf.mxu0
        %v3776 = vadd.f32 0.0, %v3775
        %v3777 = vpop.f32.mrf.mxu0
        %3778 = vmatprep.mubr.f32.mxu0 0.0
        %3779 = vmatmul.mubr.f32.gmra.mxu0 %v3569
        %v3780 = vpop.f32.mrf.mxu0
        %v3781 = vadd.f32 0.0, %v3780
        %v3782 = vpop.f32.mrf.mxu0
        %3783 = vmatprep.mubr.f32.mxu0 0.0
        %3784 = vmatmul.mubr.f32.gmra.mxu0 %v3572
        %v3785 = vpop.f32.mrf.mxu0
        %v3786 = vadd.f32 0.0, %v3785
        %v3787 = vpop.f32.mrf.mxu0
        %3788 = vmatprep.mubr.f32.mxu0 0.0
        %3789 = vmatmul.mubr.f32.gmra.mxu0 %v3575
        %v3790 = vpop.f32.mrf.mxu0
        %v3791 = vadd.f32 0.0, %v3790
        %v3792 = vpop.f32.mrf.mxu0
        %3793 = vmatprep.mubr.f32.mxu0 0.0
        %3794 = vmatmul.mubr.f32.gmra.mxu0 %v3578
        %v3795 = vpop.f32.mrf.mxu0
        %v3796 = vadd.f32 0.0, %v3795
        %v3797 = vpop.f32.mrf.mxu0
        %3798 = vmatprep.mubr.f32.mxu0 0.0
        %3799 = vmatmul.mubr.f32.gmra.mxu0 %v3581
        %v3800 = vpop.f32.mrf.mxu0
        %v3801 = vadd.f32 0.0, %v3800
        %v3802 = vpop.f32.mrf.mxu0
        %3803 = vmatprep.mubr.f32.mxu0 0.0
        %3804 = vmatmul.mubr.f32.gmra.mxu0 %v3702
        %v3805 = vpop.f32.mrf.mxu0
        %v3806 = vadd.f32 0.0, %v3805
        %v3807 = vpop.f32.mrf.mxu0
        %3808 = vdwg.mxu0
        %v3809 = vadd.f32 %v3688, %v3771
        %v3810 = vadd.f32 %v3689, %v3776
        %v3811 = vadd.f32 %v3690, %v3781
        %v3812 = vadd.f32 %v3691, %v3786
        %v3813 = vadd.f32 %v3692, %v3791
        %v3814 = vadd.f32 %v3693, %v3796
        %v3815 = vadd.f32 %v3694, %v3801
        %v3816 = vadd.f32 %v3695, %v3806
        %s3817 = scalar_lea.vmem [#allocation8], 384
        %v3818 = vld [vmem:[%s3817] sm:$0xff]
        %v3819 = vld [vmem:[%s3817 + $0x8] sm:$0xff]
        %v3820 = vld [vmem:[%s3817 + $0x10] sm:$0xff]
        %v3821 = vld [vmem:[%s3817 + $0x18] sm:$0xff]
        %v3823 = vsel %vm2257, %v3551, 0
        %3825 = vmatprep.subr.mxu0 0.0
        %3826 = vmatpush1.msra.mxu0 0.0
        %3827 = vmatprep.subr.mxu0 0.0
        %3828 = vmatpush1.msra.mxu0 0.0
        %3829 = vmatprep.subr.mxu0 0.0
        %3830 = vmatpush1.msra.mxu0 0.0
        %3831 = vmatprep.subr.mxu0 0.0
        %3832 = vmatpush1.msra.mxu0 0.0
        %3833 = vmatprep.subr.mxu0 0.0
        %3834 = vmatpush1.msra.mxu0 0.0
        %3835 = vmatprep.subr.mxu0 0.0
        %3836 = vmatpush1.msra.mxu0 0.0
        %3837 = vmatprep.subr.mxu0 0.0
        %3838 = vmatpush1.msra.mxu0 0.0
        %3839 = vmatprep.subr.mxu0 0.0
        %3840 = vmatpush1.msra.mxu0 0.0
        %3841 = vmatprep.subr.mxu0 0.0
        %3842 = vmatpush1.msra.mxu0 0.0
        %3843 = vmatprep.subr.mxu0 0.0
        %3844 = vmatpush1.msra.mxu0 0.0
        %3845 = vmatprep.subr.mxu0 0.0
        %3846 = vmatpush1.msra.mxu0 0.0
        %3847 = vmatprep.subr.mxu0 0.0
        %3848 = vmatpush1.msra.mxu0 0.0
        %3849 = vmatprep.subr.mxu0 0.0
        %3850 = vmatpush1.msra.mxu0 %v3821
        %3851 = vmatprep.subr.mxu0 0.0
        %3852 = vmatpush1.msra.mxu0 %v3820
        %3853 = vmatprep.subr.mxu0 0.0
        %3854 = vmatpush1.msra.mxu0 %v3819
        %3855 = vmatprep.subr.mxu0 0.0
        %3856 = vmatpush1.msra.mxu0 %v3818
        %3857 = vmatprep.subr.mxu0 0.0
        %3858 = vmatpush2.msra.mxu0 0.0
        %3859 = vmatprep.subr.mxu0 0.0
        %3860 = vmatpush2.msra.mxu0 0.0
        %3861 = vmatprep.subr.mxu0 0.0
        %3862 = vmatpush2.msra.mxu0 0.0
        %3863 = vmatprep.subr.mxu0 0.0
        %3864 = vmatpush2.msra.mxu0 0.0
        %3865 = vmatprep.subr.mxu0 0.0
        %3866 = vmatpush2.msra.mxu0 0.0
        %3867 = vmatprep.subr.mxu0 0.0
        %3868 = vmatpush2.msra.mxu0 0.0
        %3869 = vmatprep.subr.mxu0 0.0
        %3870 = vmatpush2.msra.mxu0 0.0
        %3871 = vmatprep.subr.mxu0 0.0
        %3872 = vmatpush2.msra.mxu0 0.0
        %3873 = vmatprep.subr.mxu0 0.0
        %3874 = vmatpush2.msra.mxu0 0.0
        %3875 = vmatprep.subr.mxu0 0.0
        %3876 = vmatpush2.msra.mxu0 0.0
        %3877 = vmatprep.subr.mxu0 0.0
        %3878 = vmatpush2.msra.mxu0 0.0
        %3879 = vmatprep.subr.mxu0 0.0
        %3880 = vmatpush2.msra.mxu0 0.0
        %3881 = vmatprep.subr.mxu0 0.0
        %3882 = vmatpush2.msra.mxu0 0.0
        %3883 = vmatprep.subr.mxu0 0.0
        %3884 = vmatpush2.msra.mxu0 0.0
        %3885 = vmatprep.subr.mxu0 0.0
        %3886 = vmatpush2.msra.mxu0 0.0
        %3887 = vmatprep.subr.mxu0 0.0
        %3888 = vmatpush2.msra.mxu0 0.0
        %3889 = vmatprep.mubr.f32.mxu0 0.0
        %3890 = vmatmul.mubr.f32.gmra.mxu0 %v3566
        %v3891 = vpop.f32.mrf.mxu0
        %v3892 = vadd.f32 0.0, %v3891
        %v3893 = vpop.f32.mrf.mxu0
        %3894 = vmatprep.mubr.f32.mxu0 0.0
        %3895 = vmatmul.mubr.f32.gmra.mxu0 %v3569
        %v3896 = vpop.f32.mrf.mxu0
        %v3897 = vadd.f32 0.0, %v3896
        %v3898 = vpop.f32.mrf.mxu0
        %3899 = vmatprep.mubr.f32.mxu0 0.0
        %3900 = vmatmul.mubr.f32.gmra.mxu0 %v3572
        %v3901 = vpop.f32.mrf.mxu0
        %v3902 = vadd.f32 0.0, %v3901
        %v3903 = vpop.f32.mrf.mxu0
        %3904 = vmatprep.mubr.f32.mxu0 0.0
        %3905 = vmatmul.mubr.f32.gmra.mxu0 %v3575
        %v3906 = vpop.f32.mrf.mxu0
        %v3907 = vadd.f32 0.0, %v3906
        %v3908 = vpop.f32.mrf.mxu0
        %3909 = vmatprep.mubr.f32.mxu0 0.0
        %3910 = vmatmul.mubr.f32.gmra.mxu0 %v3578
        %v3911 = vpop.f32.mrf.mxu0
        %v3912 = vadd.f32 0.0, %v3911
        %v3913 = vpop.f32.mrf.mxu0
        %3914 = vmatprep.mubr.f32.mxu0 0.0
        %3915 = vmatmul.mubr.f32.gmra.mxu0 %v3581
        %v3916 = vpop.f32.mrf.mxu0
        %v3917 = vadd.f32 0.0, %v3916
        %v3918 = vpop.f32.mrf.mxu0
        %3919 = vmatprep.mubr.f32.mxu0 0.0
        %3920 = vmatmul.mubr.f32.gmra.mxu0 %v3702
        %v3921 = vpop.f32.mrf.mxu0
        %v3922 = vadd.f32 0.0, %v3921
        %v3923 = vpop.f32.mrf.mxu0
        %3924 = vmatprep.mubr.f32.mxu0 0.0
        %3925 = vmatmul.mubr.f32.gmra.mxu0 %v3823
        %v3926 = vpop.f32.mrf.mxu0
        %v3927 = vadd.f32 0.0, %v3926
        %v3928 = vpop.f32.mrf.mxu0
        %3929 = vdwg.mxu0
        %v3930 = vadd.f32 %v3809, %v3892
        %v3931 = vadd.f32 %v3810, %v3897
        %v3932 = vadd.f32 %v3811, %v3902
        %v3933 = vadd.f32 %v3812, %v3907
        %v3934 = vadd.f32 %v3813, %v3912
        %v3935 = vadd.f32 %v3814, %v3917
        %v3936 = vadd.f32 %v3815, %v3922
        %v3937 = vadd.f32 %v3816, %v3927
        %s3938 = scalar_lea.vmem [#allocation8], 544
        %v3939 = vld [vmem:[%s3938] sm:$0xff]
        %v3940 = vld [vmem:[%s3938 + $0x8] sm:$0xff]
        %v3941 = vld [vmem:[%s3938 + $0x10] sm:$0xff]
        %v3942 = vld [vmem:[%s3938 + $0x18] sm:$0xff]
        %v3944 = vsel %vm2257, %v3552, 0
        %3946 = vmatprep.subr.mxu0 0.0
        %3947 = vmatpush1.msra.mxu0 0.0
        %3948 = vmatprep.subr.mxu0 0.0
        %3949 = vmatpush1.msra.mxu0 0.0
        %3950 = vmatprep.subr.mxu0 0.0
        %3951 = vmatpush1.msra.mxu0 0.0
        %3952 = vmatprep.subr.mxu0 0.0
        %3953 = vmatpush1.msra.mxu0 0.0
        %3954 = vmatprep.subr.mxu0 0.0
        %3955 = vmatpush1.msra.mxu0 0.0
        %3956 = vmatprep.subr.mxu0 0.0
        %3957 = vmatpush1.msra.mxu0 0.0
        %3958 = vmatprep.subr.mxu0 0.0
        %3959 = vmatpush1.msra.mxu0 0.0
        %3960 = vmatprep.subr.mxu0 0.0
        %3961 = vmatpush1.msra.mxu0 0.0
        %3962 = vmatprep.subr.mxu0 0.0
        %3963 = vmatpush1.msra.mxu0 0.0
        %3964 = vmatprep.subr.mxu0 0.0
        %3965 = vmatpush1.msra.mxu0 0.0
        %3966 = vmatprep.subr.mxu0 0.0
        %3967 = vmatpush1.msra.mxu0 0.0
        %3968 = vmatprep.subr.mxu0 0.0
        %3969 = vmatpush1.msra.mxu0 0.0
        %3970 = vmatprep.subr.mxu0 0.0
        %3971 = vmatpush1.msra.mxu0 %v3942
        %3972 = vmatprep.subr.mxu0 0.0
        %3973 = vmatpush1.msra.mxu0 %v3941
        %3974 = vmatprep.subr.mxu0 0.0
        %3975 = vmatpush1.msra.mxu0 %v3940
        %3976 = vmatprep.subr.mxu0 0.0
        %3977 = vmatpush1.msra.mxu0 %v3939
        %3978 = vmatprep.subr.mxu0 0.0
        %3979 = vmatpush2.msra.mxu0 0.0
        %3980 = vmatprep.subr.mxu0 0.0
        %3981 = vmatpush2.msra.mxu0 0.0
        %3982 = vmatprep.subr.mxu0 0.0
        %3983 = vmatpush2.msra.mxu0 0.0
        %3984 = vmatprep.subr.mxu0 0.0
        %3985 = vmatpush2.msra.mxu0 0.0
        %3986 = vmatprep.subr.mxu0 0.0
        %3987 = vmatpush2.msra.mxu0 0.0
        %3988 = vmatprep.subr.mxu0 0.0
        %3989 = vmatpush2.msra.mxu0 0.0
        %3990 = vmatprep.subr.mxu0 0.0
        %3991 = vmatpush2.msra.mxu0 0.0
        %3992 = vmatprep.subr.mxu0 0.0
        %3993 = vmatpush2.msra.mxu0 0.0
        %3994 = vmatprep.subr.mxu0 0.0
        %3995 = vmatpush2.msra.mxu0 0.0
        %3996 = vmatprep.subr.mxu0 0.0
        %3997 = vmatpush2.msra.mxu0 0.0
        %3998 = vmatprep.subr.mxu0 0.0
        %3999 = vmatpush2.msra.mxu0 0.0
        %4000 = vmatprep.subr.mxu0 0.0
        %4001 = vmatpush2.msra.mxu0 0.0
        %4002 = vmatprep.subr.mxu0 0.0
        %4003 = vmatpush2.msra.mxu0 0.0
        %4004 = vmatprep.subr.mxu0 0.0
        %4005 = vmatpush2.msra.mxu0 0.0
        %4006 = vmatprep.subr.mxu0 0.0
        %4007 = vmatpush2.msra.mxu0 0.0
        %4008 = vmatprep.subr.mxu0 0.0
        %4009 = vmatpush2.msra.mxu0 0.0
        %4010 = vmatprep.mubr.f32.mxu0 0.0
        %4011 = vmatmul.mubr.f32.gmra.mxu0 %v3569
        %v4012 = vpop.f32.mrf.mxu0
        %v4013 = vadd.f32 0.0, %v4012
        %v4014 = vpop.f32.mrf.mxu0
        %4015 = vmatprep.mubr.f32.mxu0 0.0
        %4016 = vmatmul.mubr.f32.gmra.mxu0 %v3572
        %v4017 = vpop.f32.mrf.mxu0
        %v4018 = vadd.f32 0.0, %v4017
        %v4019 = vpop.f32.mrf.mxu0
        %4020 = vmatprep.mubr.f32.mxu0 0.0
        %4021 = vmatmul.mubr.f32.gmra.mxu0 %v3575
        %v4022 = vpop.f32.mrf.mxu0
        %v4023 = vadd.f32 0.0, %v4022
        %v4024 = vpop.f32.mrf.mxu0
        %4025 = vmatprep.mubr.f32.mxu0 0.0
        %4026 = vmatmul.mubr.f32.gmra.mxu0 %v3578
        %v4027 = vpop.f32.mrf.mxu0
        %v4028 = vadd.f32 0.0, %v4027
        %v4029 = vpop.f32.mrf.mxu0
        %4030 = vmatprep.mubr.f32.mxu0 0.0
        %4031 = vmatmul.mubr.f32.gmra.mxu0 %v3581
        %v4032 = vpop.f32.mrf.mxu0
        %v4033 = vadd.f32 0.0, %v4032
        %v4034 = vpop.f32.mrf.mxu0
        %4035 = vmatprep.mubr.f32.mxu0 0.0
        %4036 = vmatmul.mubr.f32.gmra.mxu0 %v3702
        %v4037 = vpop.f32.mrf.mxu0
        %v4038 = vadd.f32 0.0, %v4037
        %v4039 = vpop.f32.mrf.mxu0
        %4040 = vmatprep.mubr.f32.mxu0 0.0
        %4041 = vmatmul.mubr.f32.gmra.mxu0 %v3823
        %v4042 = vpop.f32.mrf.mxu0
        %v4043 = vadd.f32 0.0, %v4042
        %v4044 = vpop.f32.mrf.mxu0
        %4045 = vmatprep.mubr.f32.mxu0 0.0
        %4046 = vmatmul.mubr.f32.gmra.mxu0 %v3944
        %v4047 = vpop.f32.mrf.mxu0
        %v4048 = vadd.f32 0.0, %v4047
        %v4049 = vpop.f32.mrf.mxu0
        %4050 = vdwg.mxu0
        %v4051 = vadd.f32 %v3930, %v4013
        %v4052 = vadd.f32 %v3931, %v4018
        %v4053 = vadd.f32 %v3932, %v4023
        %v4054 = vadd.f32 %v3933, %v4028
        %v4055 = vadd.f32 %v3934, %v4033
        %v4056 = vadd.f32 %v3935, %v4038
        %v4057 = vadd.f32 %v3936, %v4043
        %v4058 = vadd.f32 %v3937, %v4048
        %s4059 = scalar_lea.vmem [#allocation8], 704
        %v4060 = vld [vmem:[%s4059] sm:$0xff]
        %v4061 = vld [vmem:[%s4059 + $0x8] sm:$0xff]
        %v4062 = vld [vmem:[%s4059 + $0x10] sm:$0xff]
        %v4063 = vld [vmem:[%s4059 + $0x18] sm:$0xff]
        %v4065 = vsel %vm2257, %v3553, 0
        %4067 = vmatprep.subr.mxu0 0.0
        %4068 = vmatpush1.msra.mxu0 0.0
        %4069 = vmatprep.subr.mxu0 0.0
        %4070 = vmatpush1.msra.mxu0 0.0
        %4071 = vmatprep.subr.mxu0 0.0
        %4072 = vmatpush1.msra.mxu0 0.0
        %4073 = vmatprep.subr.mxu0 0.0
        %4074 = vmatpush1.msra.mxu0 0.0
        %4075 = vmatprep.subr.mxu0 0.0
        %4076 = vmatpush1.msra.mxu0 0.0
        %4077 = vmatprep.subr.mxu0 0.0
        %4078 = vmatpush1.msra.mxu0 0.0
        %4079 = vmatprep.subr.mxu0 0.0
        %4080 = vmatpush1.msra.mxu0 0.0
        %4081 = vmatprep.subr.mxu0 0.0
        %4082 = vmatpush1.msra.mxu0 0.0
        %4083 = vmatprep.subr.mxu0 0.0
        %4084 = vmatpush1.msra.mxu0 0.0
        %4085 = vmatprep.subr.mxu0 0.0
        %4086 = vmatpush1.msra.mxu0 0.0
        %4087 = vmatprep.subr.mxu0 0.0
        %4088 = vmatpush1.msra.mxu0 0.0
        %4089 = vmatprep.subr.mxu0 0.0
        %4090 = vmatpush1.msra.mxu0 0.0
        %4091 = vmatprep.subr.mxu0 0.0
        %4092 = vmatpush1.msra.mxu0 %v4063
        %4093 = vmatprep.subr.mxu0 0.0
        %4094 = vmatpush1.msra.mxu0 %v4062
        %4095 = vmatprep.subr.mxu0 0.0
        %4096 = vmatpush1.msra.mxu0 %v4061
        %4097 = vmatprep.subr.mxu0 0.0
        %4098 = vmatpush1.msra.mxu0 %v4060
        %4099 = vmatprep.subr.mxu0 0.0
        %4100 = vmatpush2.msra.mxu0 0.0
        %4101 = vmatprep.subr.mxu0 0.0
        %4102 = vmatpush2.msra.mxu0 0.0
        %4103 = vmatprep.subr.mxu0 0.0
        %4104 = vmatpush2.msra.mxu0 0.0
        %4105 = vmatprep.subr.mxu0 0.0
        %4106 = vmatpush2.msra.mxu0 0.0
        %4107 = vmatprep.subr.mxu0 0.0
        %4108 = vmatpush2.msra.mxu0 0.0
        %4109 = vmatprep.subr.mxu0 0.0
        %4110 = vmatpush2.msra.mxu0 0.0
        %4111 = vmatprep.subr.mxu0 0.0
        %4112 = vmatpush2.msra.mxu0 0.0
        %4113 = vmatprep.subr.mxu0 0.0
        %4114 = vmatpush2.msra.mxu0 0.0
        %4115 = vmatprep.subr.mxu0 0.0
        %4116 = vmatpush2.msra.mxu0 0.0
        %4117 = vmatprep.subr.mxu0 0.0
        %4118 = vmatpush2.msra.mxu0 0.0
        %4119 = vmatprep.subr.mxu0 0.0
        %4120 = vmatpush2.msra.mxu0 0.0
        %4121 = vmatprep.subr.mxu0 0.0
        %4122 = vmatpush2.msra.mxu0 0.0
        %4123 = vmatprep.subr.mxu0 0.0
        %4124 = vmatpush2.msra.mxu0 0.0
        %4125 = vmatprep.subr.mxu0 0.0
        %4126 = vmatpush2.msra.mxu0 0.0
        %4127 = vmatprep.subr.mxu0 0.0
        %4128 = vmatpush2.msra.mxu0 0.0
        %4129 = vmatprep.subr.mxu0 0.0
        %4130 = vmatpush2.msra.mxu0 0.0
        %4131 = vmatprep.mubr.f32.mxu0 0.0
        %4132 = vmatmul.mubr.f32.gmra.mxu0 %v3572
        %v4133 = vpop.f32.mrf.mxu0
        %v4134 = vadd.f32 0.0, %v4133
        %v4135 = vpop.f32.mrf.mxu0
        %4136 = vmatprep.mubr.f32.mxu0 0.0
        %4137 = vmatmul.mubr.f32.gmra.mxu0 %v3575
        %v4138 = vpop.f32.mrf.mxu0
        %v4139 = vadd.f32 0.0, %v4138
        %v4140 = vpop.f32.mrf.mxu0
        %4141 = vmatprep.mubr.f32.mxu0 0.0
        %4142 = vmatmul.mubr.f32.gmra.mxu0 %v3578
        %v4143 = vpop.f32.mrf.mxu0
        %v4144 = vadd.f32 0.0, %v4143
        %v4145 = vpop.f32.mrf.mxu0
        %4146 = vmatprep.mubr.f32.mxu0 0.0
        %4147 = vmatmul.mubr.f32.gmra.mxu0 %v3581
        %v4148 = vpop.f32.mrf.mxu0
        %v4149 = vadd.f32 0.0, %v4148
        %v4150 = vpop.f32.mrf.mxu0
        %4151 = vmatprep.mubr.f32.mxu0 0.0
        %4152 = vmatmul.mubr.f32.gmra.mxu0 %v3702
        %v4153 = vpop.f32.mrf.mxu0
        %v4154 = vadd.f32 0.0, %v4153
        %v4155 = vpop.f32.mrf.mxu0
        %4156 = vmatprep.mubr.f32.mxu0 0.0
        %4157 = vmatmul.mubr.f32.gmra.mxu0 %v3823
        %v4158 = vpop.f32.mrf.mxu0
        %v4159 = vadd.f32 0.0, %v4158
        %v4160 = vpop.f32.mrf.mxu0
        %4161 = vmatprep.mubr.f32.mxu0 0.0
        %4162 = vmatmul.mubr.f32.gmra.mxu0 %v3944
        %v4163 = vpop.f32.mrf.mxu0
        %v4164 = vadd.f32 0.0, %v4163
        %v4165 = vpop.f32.mrf.mxu0
        %4166 = vmatprep.mubr.f32.mxu0 0.0
        %4167 = vmatmul.mubr.f32.gmra.mxu0 %v4065
        %v4168 = vpop.f32.mrf.mxu0
        %v4169 = vadd.f32 0.0, %v4168
        %v4170 = vpop.f32.mrf.mxu0
        %4171 = vdwg.mxu0
        %v4172 = vadd.f32 %v4051, %v4134
        %v4173 = vadd.f32 %v4052, %v4139
        %v4174 = vadd.f32 %v4053, %v4144
        %v4175 = vadd.f32 %v4054, %v4149
        %v4176 = vadd.f32 %v4055, %v4154
        %v4177 = vadd.f32 %v4056, %v4159
        %v4178 = vadd.f32 %v4057, %v4164
        %v4179 = vadd.f32 %v4058, %v4169
        %v4180 = vld [vmem:[#allocation2 + $0x3] sm:$0xff]
        %v4181 = vld [vmem:[#allocation2 + $0x13] sm:$0xff]
        %v4182 = vld [vmem:[#allocation2 + $0x23] sm:$0xff]
        %v4183 = vld [vmem:[#allocation2 + $0x33] sm:$0xff]
        %v4184 = vld [vmem:[#allocation2 + $0x43] sm:$0xff]
        %v4185 = vld [vmem:[#allocation2 + $0x53] sm:$0xff]
        %v4186 = vld [vmem:[#allocation2 + $0x63] sm:$0xff]
        %v4187 = vld [vmem:[#allocation2 + $0x73] sm:$0xff]
        %v4188 = vld [vmem:[#allocation2 + $0x83] sm:$0xff]
        %v4189 = vld [vmem:[#allocation2 + $0x93] sm:$0xff]
        %v4190 = vld [vmem:[#allocation2 + $0xa3] sm:$0xff]
        %v4191 = vld [vmem:[#allocation2 + $0xb3] sm:$0xff]
        %s4192 = scalar_lea.vmem [#allocation8], 96
        %v4193 = vld [vmem:[%s4192] sm:$0xff]
        %v4194 = vld [vmem:[%s4192 + $0x8] sm:$0xff]
        %v4195 = vld [vmem:[%s4192 + $0x10] sm:$0xff]
        %v4196 = vld [vmem:[%s4192 + $0x18] sm:$0xff]
        %v4198 = vsel %vm2257, %v4180, 0
        %v4201 = vsel %vm2257, %v4181, 0
        %v4204 = vsel %vm2257, %v4182, 0
        %v4207 = vsel %vm2257, %v4183, 0
        %v4210 = vsel %vm2257, %v4184, 0
        %v4213 = vsel %vm2257, %v4185, 0
        %v4216 = vsel %vm2257, %v4186, 0
        %v4219 = vsel %vm2257, %v4187, 0
        %4221 = vmatprep.subr.mxu0 0.0
        %4222 = vmatpush1.msra.mxu0 0.0
        %4223 = vmatprep.subr.mxu0 0.0
        %4224 = vmatpush1.msra.mxu0 0.0
        %4225 = vmatprep.subr.mxu0 0.0
        %4226 = vmatpush1.msra.mxu0 0.0
        %4227 = vmatprep.subr.mxu0 0.0
        %4228 = vmatpush1.msra.mxu0 0.0
        %4229 = vmatprep.subr.mxu0 0.0
        %4230 = vmatpush1.msra.mxu0 0.0
        %4231 = vmatprep.subr.mxu0 0.0
        %4232 = vmatpush1.msra.mxu0 0.0
        %4233 = vmatprep.subr.mxu0 0.0
        %4234 = vmatpush1.msra.mxu0 0.0
        %4235 = vmatprep.subr.mxu0 0.0
        %4236 = vmatpush1.msra.mxu0 0.0
        %4237 = vmatprep.subr.mxu0 0.0
        %4238 = vmatpush1.msra.mxu0 0.0
        %4239 = vmatprep.subr.mxu0 0.0
        %4240 = vmatpush1.msra.mxu0 0.0
        %4241 = vmatprep.subr.mxu0 0.0
        %4242 = vmatpush1.msra.mxu0 0.0
        %4243 = vmatprep.subr.mxu0 0.0
        %4244 = vmatpush1.msra.mxu0 0.0
        %4245 = vmatprep.subr.mxu0 0.0
        %4246 = vmatpush1.msra.mxu0 %v4196
        %4247 = vmatprep.subr.mxu0 0.0
        %4248 = vmatpush1.msra.mxu0 %v4195
        %4249 = vmatprep.subr.mxu0 0.0
        %4250 = vmatpush1.msra.mxu0 %v4194
        %4251 = vmatprep.subr.mxu0 0.0
        %4252 = vmatpush1.msra.mxu0 %v4193
        %4253 = vmatprep.subr.mxu0 0.0
        %4254 = vmatpush2.msra.mxu0 0.0
        %4255 = vmatprep.subr.mxu0 0.0
        %4256 = vmatpush2.msra.mxu0 0.0
        %4257 = vmatprep.subr.mxu0 0.0
        %4258 = vmatpush2.msra.mxu0 0.0
        %4259 = vmatprep.subr.mxu0 0.0
        %4260 = vmatpush2.msra.mxu0 0.0
        %4261 = vmatprep.subr.mxu0 0.0
        %4262 = vmatpush2.msra.mxu0 0.0
        %4263 = vmatprep.subr.mxu0 0.0
        %4264 = vmatpush2.msra.mxu0 0.0
        %4265 = vmatprep.subr.mxu0 0.0
        %4266 = vmatpush2.msra.mxu0 0.0
        %4267 = vmatprep.subr.mxu0 0.0
        %4268 = vmatpush2.msra.mxu0 0.0
        %4269 = vmatprep.subr.mxu0 0.0
        %4270 = vmatpush2.msra.mxu0 0.0
        %4271 = vmatprep.subr.mxu0 0.0
        %4272 = vmatpush2.msra.mxu0 0.0
        %4273 = vmatprep.subr.mxu0 0.0
        %4274 = vmatpush2.msra.mxu0 0.0
        %4275 = vmatprep.subr.mxu0 0.0
        %4276 = vmatpush2.msra.mxu0 0.0
        %4277 = vmatprep.subr.mxu0 0.0
        %4278 = vmatpush2.msra.mxu0 0.0
        %4279 = vmatprep.subr.mxu0 0.0
        %4280 = vmatpush2.msra.mxu0 0.0
        %4281 = vmatprep.subr.mxu0 0.0
        %4282 = vmatpush2.msra.mxu0 0.0
        %4283 = vmatprep.subr.mxu0 0.0
        %4284 = vmatpush2.msra.mxu0 0.0
        %4285 = vmatprep.mubr.f32.mxu0 0.0
        %4286 = vmatmul.mubr.f32.gmra.mxu0 %v4198
        %v4287 = vpop.f32.mrf.mxu0
        %v4288 = vadd.f32 0.0, %v4287
        %v4289 = vpop.f32.mrf.mxu0
        %4290 = vmatprep.mubr.f32.mxu0 0.0
        %4291 = vmatmul.mubr.f32.gmra.mxu0 %v4201
        %v4292 = vpop.f32.mrf.mxu0
        %v4293 = vadd.f32 0.0, %v4292
        %v4294 = vpop.f32.mrf.mxu0
        %4295 = vmatprep.mubr.f32.mxu0 0.0
        %4296 = vmatmul.mubr.f32.gmra.mxu0 %v4204
        %v4297 = vpop.f32.mrf.mxu0
        %v4298 = vadd.f32 0.0, %v4297
        %v4299 = vpop.f32.mrf.mxu0
        %4300 = vmatprep.mubr.f32.mxu0 0.0
        %4301 = vmatmul.mubr.f32.gmra.mxu0 %v4207
        %v4302 = vpop.f32.mrf.mxu0
        %v4303 = vadd.f32 0.0, %v4302
        %v4304 = vpop.f32.mrf.mxu0
        %4305 = vmatprep.mubr.f32.mxu0 0.0
        %4306 = vmatmul.mubr.f32.gmra.mxu0 %v4210
        %v4307 = vpop.f32.mrf.mxu0
        %v4308 = vadd.f32 0.0, %v4307
        %v4309 = vpop.f32.mrf.mxu0
        %4310 = vmatprep.mubr.f32.mxu0 0.0
        %4311 = vmatmul.mubr.f32.gmra.mxu0 %v4213
        %v4312 = vpop.f32.mrf.mxu0
        %v4313 = vadd.f32 0.0, %v4312
        %v4314 = vpop.f32.mrf.mxu0
        %4315 = vmatprep.mubr.f32.mxu0 0.0
        %4316 = vmatmul.mubr.f32.gmra.mxu0 %v4216
        %v4317 = vpop.f32.mrf.mxu0
        %v4318 = vadd.f32 0.0, %v4317
        %v4319 = vpop.f32.mrf.mxu0
        %4320 = vmatprep.mubr.f32.mxu0 0.0
        %4321 = vmatmul.mubr.f32.gmra.mxu0 %v4219
        %v4322 = vpop.f32.mrf.mxu0
        %v4323 = vadd.f32 0.0, %v4322
        %v4324 = vpop.f32.mrf.mxu0
        %4325 = vdwg.mxu0
        %v4326 = vadd.f32 %v4172, %v4288
        %v4327 = vadd.f32 %v4173, %v4293
        %v4328 = vadd.f32 %v4174, %v4298
        %v4329 = vadd.f32 %v4175, %v4303
        %v4330 = vadd.f32 %v4176, %v4308
        %v4331 = vadd.f32 %v4177, %v4313
        %v4332 = vadd.f32 %v4178, %v4318
        %v4333 = vadd.f32 %v4179, %v4323
        %s4334 = scalar_lea.vmem [#allocation8], 256
        %v4335 = vld [vmem:[%s4334] sm:$0xff]
        %v4336 = vld [vmem:[%s4334 + $0x8] sm:$0xff]
        %v4337 = vld [vmem:[%s4334 + $0x10] sm:$0xff]
        %v4338 = vld [vmem:[%s4334 + $0x18] sm:$0xff]
        %v4340 = vsel %vm2257, %v4188, 0
        %4342 = vmatprep.subr.mxu0 0.0
        %4343 = vmatpush1.msra.mxu0 0.0
        %4344 = vmatprep.subr.mxu0 0.0
        %4345 = vmatpush1.msra.mxu0 0.0
        %4346 = vmatprep.subr.mxu0 0.0
        %4347 = vmatpush1.msra.mxu0 0.0
        %4348 = vmatprep.subr.mxu0 0.0
        %4349 = vmatpush1.msra.mxu0 0.0
        %4350 = vmatprep.subr.mxu0 0.0
        %4351 = vmatpush1.msra.mxu0 0.0
        %4352 = vmatprep.subr.mxu0 0.0
        %4353 = vmatpush1.msra.mxu0 0.0
        %4354 = vmatprep.subr.mxu0 0.0
        %4355 = vmatpush1.msra.mxu0 0.0
        %4356 = vmatprep.subr.mxu0 0.0
        %4357 = vmatpush1.msra.mxu0 0.0
        %4358 = vmatprep.subr.mxu0 0.0
        %4359 = vmatpush1.msra.mxu0 0.0
        %4360 = vmatprep.subr.mxu0 0.0
        %4361 = vmatpush1.msra.mxu0 0.0
        %4362 = vmatprep.subr.mxu0 0.0
        %4363 = vmatpush1.msra.mxu0 0.0
        %4364 = vmatprep.subr.mxu0 0.0
        %4365 = vmatpush1.msra.mxu0 0.0
        %4366 = vmatprep.subr.mxu0 0.0
        %4367 = vmatpush1.msra.mxu0 %v4338
        %4368 = vmatprep.subr.mxu0 0.0
        %4369 = vmatpush1.msra.mxu0 %v4337
        %4370 = vmatprep.subr.mxu0 0.0
        %4371 = vmatpush1.msra.mxu0 %v4336
        %4372 = vmatprep.subr.mxu0 0.0
        %4373 = vmatpush1.msra.mxu0 %v4335
        %4374 = vmatprep.subr.mxu0 0.0
        %4375 = vmatpush2.msra.mxu0 0.0
        %4376 = vmatprep.subr.mxu0 0.0
        %4377 = vmatpush2.msra.mxu0 0.0
        %4378 = vmatprep.subr.mxu0 0.0
        %4379 = vmatpush2.msra.mxu0 0.0
        %4380 = vmatprep.subr.mxu0 0.0
        %4381 = vmatpush2.msra.mxu0 0.0
        %4382 = vmatprep.subr.mxu0 0.0
        %4383 = vmatpush2.msra.mxu0 0.0
        %4384 = vmatprep.subr.mxu0 0.0
        %4385 = vmatpush2.msra.mxu0 0.0
        %4386 = vmatprep.subr.mxu0 0.0
        %4387 = vmatpush2.msra.mxu0 0.0
        %4388 = vmatprep.subr.mxu0 0.0
        %4389 = vmatpush2.msra.mxu0 0.0
        %4390 = vmatprep.subr.mxu0 0.0
        %4391 = vmatpush2.msra.mxu0 0.0
        %4392 = vmatprep.subr.mxu0 0.0
        %4393 = vmatpush2.msra.mxu0 0.0
        %4394 = vmatprep.subr.mxu0 0.0
        %4395 = vmatpush2.msra.mxu0 0.0
        %4396 = vmatprep.subr.mxu0 0.0
        %4397 = vmatpush2.msra.mxu0 0.0
        %4398 = vmatprep.subr.mxu0 0.0
        %4399 = vmatpush2.msra.mxu0 0.0
        %4400 = vmatprep.subr.mxu0 0.0
        %4401 = vmatpush2.msra.mxu0 0.0
        %4402 = vmatprep.subr.mxu0 0.0
        %4403 = vmatpush2.msra.mxu0 0.0
        %4404 = vmatprep.subr.mxu0 0.0
        %4405 = vmatpush2.msra.mxu0 0.0
        %4406 = vmatprep.mubr.f32.mxu0 0.0
        %4407 = vmatmul.mubr.f32.gmra.mxu0 %v4201
        %v4408 = vpop.f32.mrf.mxu0
        %v4409 = vadd.f32 0.0, %v4408
        %v4410 = vpop.f32.mrf.mxu0
        %4411 = vmatprep.mubr.f32.mxu0 0.0
        %4412 = vmatmul.mubr.f32.gmra.mxu0 %v4204
        %v4413 = vpop.f32.mrf.mxu0
        %v4414 = vadd.f32 0.0, %v4413
        %v4415 = vpop.f32.mrf.mxu0
        %4416 = vmatprep.mubr.f32.mxu0 0.0
        %4417 = vmatmul.mubr.f32.gmra.mxu0 %v4207
        %v4418 = vpop.f32.mrf.mxu0
        %v4419 = vadd.f32 0.0, %v4418
        %v4420 = vpop.f32.mrf.mxu0
        %4421 = vmatprep.mubr.f32.mxu0 0.0
        %4422 = vmatmul.mubr.f32.gmra.mxu0 %v4210
        %v4423 = vpop.f32.mrf.mxu0
        %v4424 = vadd.f32 0.0, %v4423
        %v4425 = vpop.f32.mrf.mxu0
        %4426 = vmatprep.mubr.f32.mxu0 0.0
        %4427 = vmatmul.mubr.f32.gmra.mxu0 %v4213
        %v4428 = vpop.f32.mrf.mxu0
        %v4429 = vadd.f32 0.0, %v4428
        %v4430 = vpop.f32.mrf.mxu0
        %4431 = vmatprep.mubr.f32.mxu0 0.0
        %4432 = vmatmul.mubr.f32.gmra.mxu0 %v4216
        %v4433 = vpop.f32.mrf.mxu0
        %v4434 = vadd.f32 0.0, %v4433
        %v4435 = vpop.f32.mrf.mxu0
        %4436 = vmatprep.mubr.f32.mxu0 0.0
        %4437 = vmatmul.mubr.f32.gmra.mxu0 %v4219
        %v4438 = vpop.f32.mrf.mxu0
        %v4439 = vadd.f32 0.0, %v4438
        %v4440 = vpop.f32.mrf.mxu0
        %4441 = vmatprep.mubr.f32.mxu0 0.0
        %4442 = vmatmul.mubr.f32.gmra.mxu0 %v4340
        %v4443 = vpop.f32.mrf.mxu0
        %v4444 = vadd.f32 0.0, %v4443
        %v4445 = vpop.f32.mrf.mxu0
        %4446 = vdwg.mxu0
        %v4447 = vadd.f32 %v4326, %v4409
        %v4448 = vadd.f32 %v4327, %v4414
        %v4449 = vadd.f32 %v4328, %v4419
        %v4450 = vadd.f32 %v4329, %v4424
        %v4451 = vadd.f32 %v4330, %v4429
        %v4452 = vadd.f32 %v4331, %v4434
        %v4453 = vadd.f32 %v4332, %v4439
        %v4454 = vadd.f32 %v4333, %v4444
        %s4455 = scalar_lea.vmem [#allocation8], 416
        %v4456 = vld [vmem:[%s4455] sm:$0xff]
        %v4457 = vld [vmem:[%s4455 + $0x8] sm:$0xff]
        %v4458 = vld [vmem:[%s4455 + $0x10] sm:$0xff]
        %v4459 = vld [vmem:[%s4455 + $0x18] sm:$0xff]
        %v4461 = vsel %vm2257, %v4189, 0
        %4463 = vmatprep.subr.mxu0 0.0
        %4464 = vmatpush1.msra.mxu0 0.0
        %4465 = vmatprep.subr.mxu0 0.0
        %4466 = vmatpush1.msra.mxu0 0.0
        %4467 = vmatprep.subr.mxu0 0.0
        %4468 = vmatpush1.msra.mxu0 0.0
        %4469 = vmatprep.subr.mxu0 0.0
        %4470 = vmatpush1.msra.mxu0 0.0
        %4471 = vmatprep.subr.mxu0 0.0
        %4472 = vmatpush1.msra.mxu0 0.0
        %4473 = vmatprep.subr.mxu0 0.0
        %4474 = vmatpush1.msra.mxu0 0.0
        %4475 = vmatprep.subr.mxu0 0.0
        %4476 = vmatpush1.msra.mxu0 0.0
        %4477 = vmatprep.subr.mxu0 0.0
        %4478 = vmatpush1.msra.mxu0 0.0
        %4479 = vmatprep.subr.mxu0 0.0
        %4480 = vmatpush1.msra.mxu0 0.0
        %4481 = vmatprep.subr.mxu0 0.0
        %4482 = vmatpush1.msra.mxu0 0.0
        %4483 = vmatprep.subr.mxu0 0.0
        %4484 = vmatpush1.msra.mxu0 0.0
        %4485 = vmatprep.subr.mxu0 0.0
        %4486 = vmatpush1.msra.mxu0 0.0
        %4487 = vmatprep.subr.mxu0 0.0
        %4488 = vmatpush1.msra.mxu0 %v4459
        %4489 = vmatprep.subr.mxu0 0.0
        %4490 = vmatpush1.msra.mxu0 %v4458
        %4491 = vmatprep.subr.mxu0 0.0
        %4492 = vmatpush1.msra.mxu0 %v4457
        %4493 = vmatprep.subr.mxu0 0.0
        %4494 = vmatpush1.msra.mxu0 %v4456
        %4495 = vmatprep.subr.mxu0 0.0
        %4496 = vmatpush2.msra.mxu0 0.0
        %4497 = vmatprep.subr.mxu0 0.0
        %4498 = vmatpush2.msra.mxu0 0.0
        %4499 = vmatprep.subr.mxu0 0.0
        %4500 = vmatpush2.msra.mxu0 0.0
        %4501 = vmatprep.subr.mxu0 0.0
        %4502 = vmatpush2.msra.mxu0 0.0
        %4503 = vmatprep.subr.mxu0 0.0
        %4504 = vmatpush2.msra.mxu0 0.0
        %4505 = vmatprep.subr.mxu0 0.0
        %4506 = vmatpush2.msra.mxu0 0.0
        %4507 = vmatprep.subr.mxu0 0.0
        %4508 = vmatpush2.msra.mxu0 0.0
        %4509 = vmatprep.subr.mxu0 0.0
        %4510 = vmatpush2.msra.mxu0 0.0
        %4511 = vmatprep.subr.mxu0 0.0
        %4512 = vmatpush2.msra.mxu0 0.0
        %4513 = vmatprep.subr.mxu0 0.0
        %4514 = vmatpush2.msra.mxu0 0.0
        %4515 = vmatprep.subr.mxu0 0.0
        %4516 = vmatpush2.msra.mxu0 0.0
        %4517 = vmatprep.subr.mxu0 0.0
        %4518 = vmatpush2.msra.mxu0 0.0
        %4519 = vmatprep.subr.mxu0 0.0
        %4520 = vmatpush2.msra.mxu0 0.0
        %4521 = vmatprep.subr.mxu0 0.0
        %4522 = vmatpush2.msra.mxu0 0.0
        %4523 = vmatprep.subr.mxu0 0.0
        %4524 = vmatpush2.msra.mxu0 0.0
        %4525 = vmatprep.subr.mxu0 0.0
        %4526 = vmatpush2.msra.mxu0 0.0
        %4527 = vmatprep.mubr.f32.mxu0 0.0
        %4528 = vmatmul.mubr.f32.gmra.mxu0 %v4204
        %v4529 = vpop.f32.mrf.mxu0
        %v4530 = vadd.f32 0.0, %v4529
        %v4531 = vpop.f32.mrf.mxu0
        %4532 = vmatprep.mubr.f32.mxu0 0.0
        %4533 = vmatmul.mubr.f32.gmra.mxu0 %v4207
        %v4534 = vpop.f32.mrf.mxu0
        %v4535 = vadd.f32 0.0, %v4534
        %v4536 = vpop.f32.mrf.mxu0
        %4537 = vmatprep.mubr.f32.mxu0 0.0
        %4538 = vmatmul.mubr.f32.gmra.mxu0 %v4210
        %v4539 = vpop.f32.mrf.mxu0
        %v4540 = vadd.f32 0.0, %v4539
        %v4541 = vpop.f32.mrf.mxu0
        %4542 = vmatprep.mubr.f32.mxu0 0.0
        %4543 = vmatmul.mubr.f32.gmra.mxu0 %v4213
        %v4544 = vpop.f32.mrf.mxu0
        %v4545 = vadd.f32 0.0, %v4544
        %v4546 = vpop.f32.mrf.mxu0
        %4547 = vmatprep.mubr.f32.mxu0 0.0
        %4548 = vmatmul.mubr.f32.gmra.mxu0 %v4216
        %v4549 = vpop.f32.mrf.mxu0
        %v4550 = vadd.f32 0.0, %v4549
        %v4551 = vpop.f32.mrf.mxu0
        %4552 = vmatprep.mubr.f32.mxu0 0.0
        %4553 = vmatmul.mubr.f32.gmra.mxu0 %v4219
        %v4554 = vpop.f32.mrf.mxu0
        %v4555 = vadd.f32 0.0, %v4554
        %v4556 = vpop.f32.mrf.mxu0
        %4557 = vmatprep.mubr.f32.mxu0 0.0
        %4558 = vmatmul.mubr.f32.gmra.mxu0 %v4340
        %v4559 = vpop.f32.mrf.mxu0
        %v4560 = vadd.f32 0.0, %v4559
        %v4561 = vpop.f32.mrf.mxu0
        %4562 = vmatprep.mubr.f32.mxu0 0.0
        %4563 = vmatmul.mubr.f32.gmra.mxu0 %v4461
        %v4564 = vpop.f32.mrf.mxu0
        %v4565 = vadd.f32 0.0, %v4564
        %v4566 = vpop.f32.mrf.mxu0
        %4567 = vdwg.mxu0
        %v4568 = vadd.f32 %v4447, %v4530
        %v4569 = vadd.f32 %v4448, %v4535
        %v4570 = vadd.f32 %v4449, %v4540
        %v4571 = vadd.f32 %v4450, %v4545
        %v4572 = vadd.f32 %v4451, %v4550
        %v4573 = vadd.f32 %v4452, %v4555
        %v4574 = vadd.f32 %v4453, %v4560
        %v4575 = vadd.f32 %v4454, %v4565
        %s4576 = scalar_lea.vmem [#allocation8], 576
        %v4577 = vld [vmem:[%s4576] sm:$0xff]
        %v4578 = vld [vmem:[%s4576 + $0x8] sm:$0xff]
        %v4579 = vld [vmem:[%s4576 + $0x10] sm:$0xff]
        %v4580 = vld [vmem:[%s4576 + $0x18] sm:$0xff]
        %v4582 = vsel %vm2257, %v4190, 0
        %4584 = vmatprep.subr.mxu0 0.0
        %4585 = vmatpush1.msra.mxu0 0.0
        %4586 = vmatprep.subr.mxu0 0.0
        %4587 = vmatpush1.msra.mxu0 0.0
        %4588 = vmatprep.subr.mxu0 0.0
        %4589 = vmatpush1.msra.mxu0 0.0
        %4590 = vmatprep.subr.mxu0 0.0
        %4591 = vmatpush1.msra.mxu0 0.0
        %4592 = vmatprep.subr.mxu0 0.0
        %4593 = vmatpush1.msra.mxu0 0.0
        %4594 = vmatprep.subr.mxu0 0.0
        %4595 = vmatpush1.msra.mxu0 0.0
        %4596 = vmatprep.subr.mxu0 0.0
        %4597 = vmatpush1.msra.mxu0 0.0
        %4598 = vmatprep.subr.mxu0 0.0
        %4599 = vmatpush1.msra.mxu0 0.0
        %4600 = vmatprep.subr.mxu0 0.0
        %4601 = vmatpush1.msra.mxu0 0.0
        %4602 = vmatprep.subr.mxu0 0.0
        %4603 = vmatpush1.msra.mxu0 0.0
        %4604 = vmatprep.subr.mxu0 0.0
        %4605 = vmatpush1.msra.mxu0 0.0
        %4606 = vmatprep.subr.mxu0 0.0
        %4607 = vmatpush1.msra.mxu0 0.0
        %4608 = vmatprep.subr.mxu0 0.0
        %4609 = vmatpush1.msra.mxu0 %v4580
        %4610 = vmatprep.subr.mxu0 0.0
        %4611 = vmatpush1.msra.mxu0 %v4579
        %4612 = vmatprep.subr.mxu0 0.0
        %4613 = vmatpush1.msra.mxu0 %v4578
        %4614 = vmatprep.subr.mxu0 0.0
        %4615 = vmatpush1.msra.mxu0 %v4577
        %4616 = vmatprep.subr.mxu0 0.0
        %4617 = vmatpush2.msra.mxu0 0.0
        %4618 = vmatprep.subr.mxu0 0.0
        %4619 = vmatpush2.msra.mxu0 0.0
        %4620 = vmatprep.subr.mxu0 0.0
        %4621 = vmatpush2.msra.mxu0 0.0
        %4622 = vmatprep.subr.mxu0 0.0
        %4623 = vmatpush2.msra.mxu0 0.0
        %4624 = vmatprep.subr.mxu0 0.0
        %4625 = vmatpush2.msra.mxu0 0.0
        %4626 = vmatprep.subr.mxu0 0.0
        %4627 = vmatpush2.msra.mxu0 0.0
        %4628 = vmatprep.subr.mxu0 0.0
        %4629 = vmatpush2.msra.mxu0 0.0
        %4630 = vmatprep.subr.mxu0 0.0
        %4631 = vmatpush2.msra.mxu0 0.0
        %4632 = vmatprep.subr.mxu0 0.0
        %4633 = vmatpush2.msra.mxu0 0.0
        %4634 = vmatprep.subr.mxu0 0.0
        %4635 = vmatpush2.msra.mxu0 0.0
        %4636 = vmatprep.subr.mxu0 0.0
        %4637 = vmatpush2.msra.mxu0 0.0
        %4638 = vmatprep.subr.mxu0 0.0
        %4639 = vmatpush2.msra.mxu0 0.0
        %4640 = vmatprep.subr.mxu0 0.0
        %4641 = vmatpush2.msra.mxu0 0.0
        %4642 = vmatprep.subr.mxu0 0.0
        %4643 = vmatpush2.msra.mxu0 0.0
        %4644 = vmatprep.subr.mxu0 0.0
        %4645 = vmatpush2.msra.mxu0 0.0
        %4646 = vmatprep.subr.mxu0 0.0
        %4647 = vmatpush2.msra.mxu0 0.0
        %4648 = vmatprep.mubr.f32.mxu0 0.0
        %4649 = vmatmul.mubr.f32.gmra.mxu0 %v4207
        %v4650 = vpop.f32.mrf.mxu0
        %v4651 = vadd.f32 0.0, %v4650
        %v4652 = vpop.f32.mrf.mxu0
        %4653 = vmatprep.mubr.f32.mxu0 0.0
        %4654 = vmatmul.mubr.f32.gmra.mxu0 %v4210
        %v4655 = vpop.f32.mrf.mxu0
        %v4656 = vadd.f32 0.0, %v4655
        %v4657 = vpop.f32.mrf.mxu0
        %4658 = vmatprep.mubr.f32.mxu0 0.0
        %4659 = vmatmul.mubr.f32.gmra.mxu0 %v4213
        %v4660 = vpop.f32.mrf.mxu0
        %v4661 = vadd.f32 0.0, %v4660
        %v4662 = vpop.f32.mrf.mxu0
        %4663 = vmatprep.mubr.f32.mxu0 0.0
        %4664 = vmatmul.mubr.f32.gmra.mxu0 %v4216
        %v4665 = vpop.f32.mrf.mxu0
        %v4666 = vadd.f32 0.0, %v4665
        %v4667 = vpop.f32.mrf.mxu0
        %4668 = vmatprep.mubr.f32.mxu0 0.0
        %4669 = vmatmul.mubr.f32.gmra.mxu0 %v4219
        %v4670 = vpop.f32.mrf.mxu0
        %v4671 = vadd.f32 0.0, %v4670
        %v4672 = vpop.f32.mrf.mxu0
        %4673 = vmatprep.mubr.f32.mxu0 0.0
        %4674 = vmatmul.mubr.f32.gmra.mxu0 %v4340
        %v4675 = vpop.f32.mrf.mxu0
        %v4676 = vadd.f32 0.0, %v4675
        %v4677 = vpop.f32.mrf.mxu0
        %4678 = vmatprep.mubr.f32.mxu0 0.0
        %4679 = vmatmul.mubr.f32.gmra.mxu0 %v4461
        %v4680 = vpop.f32.mrf.mxu0
        %v4681 = vadd.f32 0.0, %v4680
        %v4682 = vpop.f32.mrf.mxu0
        %4683 = vmatprep.mubr.f32.mxu0 0.0
        %4684 = vmatmul.mubr.f32.gmra.mxu0 %v4582
        %v4685 = vpop.f32.mrf.mxu0
        %v4686 = vadd.f32 0.0, %v4685
        %v4687 = vpop.f32.mrf.mxu0
        %4688 = vdwg.mxu0
        %v4689 = vadd.f32 %v4568, %v4651
        %v4690 = vadd.f32 %v4569, %v4656
        %v4691 = vadd.f32 %v4570, %v4661
        %v4692 = vadd.f32 %v4571, %v4666
        %v4693 = vadd.f32 %v4572, %v4671
        %v4694 = vadd.f32 %v4573, %v4676
        %v4695 = vadd.f32 %v4574, %v4681
        %v4696 = vadd.f32 %v4575, %v4686
        %s4697 = scalar_lea.vmem [#allocation8], 736
        %v4698 = vld [vmem:[%s4697] sm:$0xff]
        %v4699 = vld [vmem:[%s4697 + $0x8] sm:$0xff]
        %v4700 = vld [vmem:[%s4697 + $0x10] sm:$0xff]
        %v4701 = vld [vmem:[%s4697 + $0x18] sm:$0xff]
        %v4703 = vsel %vm2257, %v4191, 0
        %4705 = vmatprep.subr.mxu0 0.0
        %4706 = vmatpush1.msra.mxu0 0.0
        %4707 = vmatprep.subr.mxu0 0.0
        %4708 = vmatpush1.msra.mxu0 0.0
        %4709 = vmatprep.subr.mxu0 0.0
        %4710 = vmatpush1.msra.mxu0 0.0
        %4711 = vmatprep.subr.mxu0 0.0
        %4712 = vmatpush1.msra.mxu0 0.0
        %4713 = vmatprep.subr.mxu0 0.0
        %4714 = vmatpush1.msra.mxu0 0.0
        %4715 = vmatprep.subr.mxu0 0.0
        %4716 = vmatpush1.msra.mxu0 0.0
        %4717 = vmatprep.subr.mxu0 0.0
        %4718 = vmatpush1.msra.mxu0 0.0
        %4719 = vmatprep.subr.mxu0 0.0
        %4720 = vmatpush1.msra.mxu0 0.0
        %4721 = vmatprep.subr.mxu0 0.0
        %4722 = vmatpush1.msra.mxu0 0.0
        %4723 = vmatprep.subr.mxu0 0.0
        %4724 = vmatpush1.msra.mxu0 0.0
        %4725 = vmatprep.subr.mxu0 0.0
        %4726 = vmatpush1.msra.mxu0 0.0
        %4727 = vmatprep.subr.mxu0 0.0
        %4728 = vmatpush1.msra.mxu0 0.0
        %4729 = vmatprep.subr.mxu0 0.0
        %4730 = vmatpush1.msra.mxu0 %v4701
        %4731 = vmatprep.subr.mxu0 0.0
        %4732 = vmatpush1.msra.mxu0 %v4700
        %4733 = vmatprep.subr.mxu0 0.0
        %4734 = vmatpush1.msra.mxu0 %v4699
        %4735 = vmatprep.subr.mxu0 0.0
        %4736 = vmatpush1.msra.mxu0 %v4698
        %4737 = vmatprep.subr.mxu0 0.0
        %4738 = vmatpush2.msra.mxu0 0.0
        %4739 = vmatprep.subr.mxu0 0.0
        %4740 = vmatpush2.msra.mxu0 0.0
        %4741 = vmatprep.subr.mxu0 0.0
        %4742 = vmatpush2.msra.mxu0 0.0
        %4743 = vmatprep.subr.mxu0 0.0
        %4744 = vmatpush2.msra.mxu0 0.0
        %4745 = vmatprep.subr.mxu0 0.0
        %4746 = vmatpush2.msra.mxu0 0.0
        %4747 = vmatprep.subr.mxu0 0.0
        %4748 = vmatpush2.msra.mxu0 0.0
        %4749 = vmatprep.subr.mxu0 0.0
        %4750 = vmatpush2.msra.mxu0 0.0
        %4751 = vmatprep.subr.mxu0 0.0
        %4752 = vmatpush2.msra.mxu0 0.0
        %4753 = vmatprep.subr.mxu0 0.0
        %4754 = vmatpush2.msra.mxu0 0.0
        %4755 = vmatprep.subr.mxu0 0.0
        %4756 = vmatpush2.msra.mxu0 0.0
        %4757 = vmatprep.subr.mxu0 0.0
        %4758 = vmatpush2.msra.mxu0 0.0
        %4759 = vmatprep.subr.mxu0 0.0
        %4760 = vmatpush2.msra.mxu0 0.0
        %4761 = vmatprep.subr.mxu0 0.0
        %4762 = vmatpush2.msra.mxu0 0.0
        %4763 = vmatprep.subr.mxu0 0.0
        %4764 = vmatpush2.msra.mxu0 0.0
        %4765 = vmatprep.subr.mxu0 0.0
        %4766 = vmatpush2.msra.mxu0 0.0
        %4767 = vmatprep.subr.mxu0 0.0
        %4768 = vmatpush2.msra.mxu0 0.0
        %4769 = vmatprep.mubr.f32.mxu0 0.0
        %4770 = vmatmul.mubr.f32.gmra.mxu0 %v4210
        %v4771 = vpop.f32.mrf.mxu0
        %v4772 = vadd.f32 0.0, %v4771
        %v4773 = vpop.f32.mrf.mxu0
        %4774 = vmatprep.mubr.f32.mxu0 0.0
        %4775 = vmatmul.mubr.f32.gmra.mxu0 %v4213
        %v4776 = vpop.f32.mrf.mxu0
        %v4777 = vadd.f32 0.0, %v4776
        %v4778 = vpop.f32.mrf.mxu0
        %4779 = vmatprep.mubr.f32.mxu0 0.0
        %4780 = vmatmul.mubr.f32.gmra.mxu0 %v4216
        %v4781 = vpop.f32.mrf.mxu0
        %v4782 = vadd.f32 0.0, %v4781
        %v4783 = vpop.f32.mrf.mxu0
        %4784 = vmatprep.mubr.f32.mxu0 0.0
        %4785 = vmatmul.mubr.f32.gmra.mxu0 %v4219
        %v4786 = vpop.f32.mrf.mxu0
        %v4787 = vadd.f32 0.0, %v4786
        %v4788 = vpop.f32.mrf.mxu0
        %4789 = vmatprep.mubr.f32.mxu0 0.0
        %4790 = vmatmul.mubr.f32.gmra.mxu0 %v4340
        %v4791 = vpop.f32.mrf.mxu0
        %v4792 = vadd.f32 0.0, %v4791
        %v4793 = vpop.f32.mrf.mxu0
        %4794 = vmatprep.mubr.f32.mxu0 0.0
        %4795 = vmatmul.mubr.f32.gmra.mxu0 %v4461
        %v4796 = vpop.f32.mrf.mxu0
        %v4797 = vadd.f32 0.0, %v4796
        %v4798 = vpop.f32.mrf.mxu0
        %4799 = vmatprep.mubr.f32.mxu0 0.0
        %4800 = vmatmul.mubr.f32.gmra.mxu0 %v4582
        %v4801 = vpop.f32.mrf.mxu0
        %v4802 = vadd.f32 0.0, %v4801
        %v4803 = vpop.f32.mrf.mxu0
        %4804 = vmatprep.mubr.f32.mxu0 0.0
        %4805 = vmatmul.mubr.f32.gmra.mxu0 %v4703
        %v4806 = vpop.f32.mrf.mxu0
        %v4807 = vadd.f32 0.0, %v4806
        %v4808 = vpop.f32.mrf.mxu0
        %4809 = vdwg.mxu0
        %v4810 = vadd.f32 %v4689, %v4772
        %v4811 = vadd.f32 %v4690, %v4777
        %v4812 = vadd.f32 %v4691, %v4782
        %v4813 = vadd.f32 %v4692, %v4787
        %v4814 = vadd.f32 %v4693, %v4792
        %v4815 = vadd.f32 %v4694, %v4797
        %v4816 = vadd.f32 %v4695, %v4802
        %v4817 = vadd.f32 %v4696, %v4807
        %v4818 = vld [vmem:[#allocation2 + $0x4] sm:$0xff]
        %v4819 = vld [vmem:[#allocation2 + $0x14] sm:$0xff]
        %v4820 = vld [vmem:[#allocation2 + $0x24] sm:$0xff]
        %v4821 = vld [vmem:[#allocation2 + $0x34] sm:$0xff]
        %v4822 = vld [vmem:[#allocation2 + $0x44] sm:$0xff]
        %v4823 = vld [vmem:[#allocation2 + $0x54] sm:$0xff]
        %v4824 = vld [vmem:[#allocation2 + $0x64] sm:$0xff]
        %v4825 = vld [vmem:[#allocation2 + $0x74] sm:$0xff]
        %v4826 = vld [vmem:[#allocation2 + $0x84] sm:$0xff]
        %v4827 = vld [vmem:[#allocation2 + $0x94] sm:$0xff]
        %v4828 = vld [vmem:[#allocation2 + $0xa4] sm:$0xff]
        %v4829 = vld [vmem:[#allocation2 + $0xb4] sm:$0xff]
        %s4830 = scalar_lea.vmem [#allocation8], 128
        %v4831 = vld [vmem:[%s4830] sm:$0xff]
        %v4832 = vld [vmem:[%s4830 + $0x8] sm:$0xff]
        %v4833 = vld [vmem:[%s4830 + $0x10] sm:$0xff]
        %v4834 = vld [vmem:[%s4830 + $0x18] sm:$0xff]
        %v4836 = vsel %vm2257, %v4818, 0
        %v4839 = vsel %vm2257, %v4819, 0
        %v4842 = vsel %vm2257, %v4820, 0
        %v4845 = vsel %vm2257, %v4821, 0
        %v4848 = vsel %vm2257, %v4822, 0
        %v4851 = vsel %vm2257, %v4823, 0
        %v4854 = vsel %vm2257, %v4824, 0
        %v4857 = vsel %vm2257, %v4825, 0
        %4859 = vmatprep.subr.mxu0 0.0
        %4860 = vmatpush1.msra.mxu0 0.0
        %4861 = vmatprep.subr.mxu0 0.0
        %4862 = vmatpush1.msra.mxu0 0.0
        %4863 = vmatprep.subr.mxu0 0.0
        %4864 = vmatpush1.msra.mxu0 0.0
        %4865 = vmatprep.subr.mxu0 0.0
        %4866 = vmatpush1.msra.mxu0 0.0
        %4867 = vmatprep.subr.mxu0 0.0
        %4868 = vmatpush1.msra.mxu0 0.0
        %4869 = vmatprep.subr.mxu0 0.0
        %4870 = vmatpush1.msra.mxu0 0.0
        %4871 = vmatprep.subr.mxu0 0.0
        %4872 = vmatpush1.msra.mxu0 0.0
        %4873 = vmatprep.subr.mxu0 0.0
        %4874 = vmatpush1.msra.mxu0 0.0
        %4875 = vmatprep.subr.mxu0 0.0
        %4876 = vmatpush1.msra.mxu0 0.0
        %4877 = vmatprep.subr.mxu0 0.0
        %4878 = vmatpush1.msra.mxu0 0.0
        %4879 = vmatprep.subr.mxu0 0.0
        %4880 = vmatpush1.msra.mxu0 0.0
        %4881 = vmatprep.subr.mxu0 0.0
        %4882 = vmatpush1.msra.mxu0 0.0
        %4883 = vmatprep.subr.mxu0 0.0
        %4884 = vmatpush1.msra.mxu0 %v4834
        %4885 = vmatprep.subr.mxu0 0.0
        %4886 = vmatpush1.msra.mxu0 %v4833
        %4887 = vmatprep.subr.mxu0 0.0
        %4888 = vmatpush1.msra.mxu0 %v4832
        %4889 = vmatprep.subr.mxu0 0.0
        %4890 = vmatpush1.msra.mxu0 %v4831
        %4891 = vmatprep.subr.mxu0 0.0
        %4892 = vmatpush2.msra.mxu0 0.0
        %4893 = vmatprep.subr.mxu0 0.0
        %4894 = vmatpush2.msra.mxu0 0.0
        %4895 = vmatprep.subr.mxu0 0.0
        %4896 = vmatpush2.msra.mxu0 0.0
        %4897 = vmatprep.subr.mxu0 0.0
        %4898 = vmatpush2.msra.mxu0 0.0
        %4899 = vmatprep.subr.mxu0 0.0
        %4900 = vmatpush2.msra.mxu0 0.0
        %4901 = vmatprep.subr.mxu0 0.0
        %4902 = vmatpush2.msra.mxu0 0.0
        %4903 = vmatprep.subr.mxu0 0.0
        %4904 = vmatpush2.msra.mxu0 0.0
        %4905 = vmatprep.subr.mxu0 0.0
        %4906 = vmatpush2.msra.mxu0 0.0
        %4907 = vmatprep.subr.mxu0 0.0
        %4908 = vmatpush2.msra.mxu0 0.0
        %4909 = vmatprep.subr.mxu0 0.0
        %4910 = vmatpush2.msra.mxu0 0.0
        %4911 = vmatprep.subr.mxu0 0.0
        %4912 = vmatpush2.msra.mxu0 0.0
        %4913 = vmatprep.subr.mxu0 0.0
        %4914 = vmatpush2.msra.mxu0 0.0
        %4915 = vmatprep.subr.mxu0 0.0
        %4916 = vmatpush2.msra.mxu0 0.0
        %4917 = vmatprep.subr.mxu0 0.0
        %4918 = vmatpush2.msra.mxu0 0.0
        %4919 = vmatprep.subr.mxu0 0.0
        %4920 = vmatpush2.msra.mxu0 0.0
        %4921 = vmatprep.subr.mxu0 0.0
        %4922 = vmatpush2.msra.mxu0 0.0
        %4923 = vmatprep.mubr.f32.mxu0 0.0
        %4924 = vmatmul.mubr.f32.gmra.mxu0 %v4836
        %v4925 = vpop.f32.mrf.mxu0
        %v4926 = vadd.f32 0.0, %v4925
        %v4927 = vpop.f32.mrf.mxu0
        %4928 = vmatprep.mubr.f32.mxu0 0.0
        %4929 = vmatmul.mubr.f32.gmra.mxu0 %v4839
        %v4930 = vpop.f32.mrf.mxu0
        %v4931 = vadd.f32 0.0, %v4930
        %v4932 = vpop.f32.mrf.mxu0
        %4933 = vmatprep.mubr.f32.mxu0 0.0
        %4934 = vmatmul.mubr.f32.gmra.mxu0 %v4842
        %v4935 = vpop.f32.mrf.mxu0
        %v4936 = vadd.f32 0.0, %v4935
        %v4937 = vpop.f32.mrf.mxu0
        %4938 = vmatprep.mubr.f32.mxu0 0.0
        %4939 = vmatmul.mubr.f32.gmra.mxu0 %v4845
        %v4940 = vpop.f32.mrf.mxu0
        %v4941 = vadd.f32 0.0, %v4940
        %v4942 = vpop.f32.mrf.mxu0
        %4943 = vmatprep.mubr.f32.mxu0 0.0
        %4944 = vmatmul.mubr.f32.gmra.mxu0 %v4848
        %v4945 = vpop.f32.mrf.mxu0
        %v4946 = vadd.f32 0.0, %v4945
        %v4947 = vpop.f32.mrf.mxu0
        %4948 = vmatprep.mubr.f32.mxu0 0.0
        %4949 = vmatmul.mubr.f32.gmra.mxu0 %v4851
        %v4950 = vpop.f32.mrf.mxu0
        %v4951 = vadd.f32 0.0, %v4950
        %v4952 = vpop.f32.mrf.mxu0
        %4953 = vmatprep.mubr.f32.mxu0 0.0
        %4954 = vmatmul.mubr.f32.gmra.mxu0 %v4854
        %v4955 = vpop.f32.mrf.mxu0
        %v4956 = vadd.f32 0.0, %v4955
        %v4957 = vpop.f32.mrf.mxu0
        %4958 = vmatprep.mubr.f32.mxu0 0.0
        %4959 = vmatmul.mubr.f32.gmra.mxu0 %v4857
        %v4960 = vpop.f32.mrf.mxu0
        %v4961 = vadd.f32 0.0, %v4960
        %v4962 = vpop.f32.mrf.mxu0
        %4963 = vdwg.mxu0
        %v4964 = vadd.f32 %v4810, %v4926
        %v4965 = vadd.f32 %v4811, %v4931
        %v4966 = vadd.f32 %v4812, %v4936
        %v4967 = vadd.f32 %v4813, %v4941
        %v4968 = vadd.f32 %v4814, %v4946
        %v4969 = vadd.f32 %v4815, %v4951
        %v4970 = vadd.f32 %v4816, %v4956
        %v4971 = vadd.f32 %v4817, %v4961
        %s4972 = scalar_lea.vmem [#allocation8], 288
        %v4973 = vld [vmem:[%s4972] sm:$0xff]
        %v4974 = vld [vmem:[%s4972 + $0x8] sm:$0xff]
        %v4975 = vld [vmem:[%s4972 + $0x10] sm:$0xff]
        %v4976 = vld [vmem:[%s4972 + $0x18] sm:$0xff]
        %v4978 = vsel %vm2257, %v4826, 0
        %4980 = vmatprep.subr.mxu0 0.0
        %4981 = vmatpush1.msra.mxu0 0.0
        %4982 = vmatprep.subr.mxu0 0.0
        %4983 = vmatpush1.msra.mxu0 0.0
        %4984 = vmatprep.subr.mxu0 0.0
        %4985 = vmatpush1.msra.mxu0 0.0
        %4986 = vmatprep.subr.mxu0 0.0
        %4987 = vmatpush1.msra.mxu0 0.0
        %4988 = vmatprep.subr.mxu0 0.0
        %4989 = vmatpush1.msra.mxu0 0.0
        %4990 = vmatprep.subr.mxu0 0.0
        %4991 = vmatpush1.msra.mxu0 0.0
        %4992 = vmatprep.subr.mxu0 0.0
        %4993 = vmatpush1.msra.mxu0 0.0
        %4994 = vmatprep.subr.mxu0 0.0
        %4995 = vmatpush1.msra.mxu0 0.0
        %4996 = vmatprep.subr.mxu0 0.0
        %4997 = vmatpush1.msra.mxu0 0.0
        %4998 = vmatprep.subr.mxu0 0.0
        %4999 = vmatpush1.msra.mxu0 0.0
        %5000 = vmatprep.subr.mxu0 0.0
        %5001 = vmatpush1.msra.mxu0 0.0
        %5002 = vmatprep.subr.mxu0 0.0
        %5003 = vmatpush1.msra.mxu0 0.0
        %5004 = vmatprep.subr.mxu0 0.0
        %5005 = vmatpush1.msra.mxu0 %v4976
        %5006 = vmatprep.subr.mxu0 0.0
        %5007 = vmatpush1.msra.mxu0 %v4975
        %5008 = vmatprep.subr.mxu0 0.0
        %5009 = vmatpush1.msra.mxu0 %v4974
        %5010 = vmatprep.subr.mxu0 0.0
        %5011 = vmatpush1.msra.mxu0 %v4973
        %5012 = vmatprep.subr.mxu0 0.0
        %5013 = vmatpush2.msra.mxu0 0.0
        %5014 = vmatprep.subr.mxu0 0.0
        %5015 = vmatpush2.msra.mxu0 0.0
        %5016 = vmatprep.subr.mxu0 0.0
        %5017 = vmatpush2.msra.mxu0 0.0
        %5018 = vmatprep.subr.mxu0 0.0
        %5019 = vmatpush2.msra.mxu0 0.0
        %5020 = vmatprep.subr.mxu0 0.0
        %5021 = vmatpush2.msra.mxu0 0.0
        %5022 = vmatprep.subr.mxu0 0.0
        %5023 = vmatpush2.msra.mxu0 0.0
        %5024 = vmatprep.subr.mxu0 0.0
        %5025 = vmatpush2.msra.mxu0 0.0
        %5026 = vmatprep.subr.mxu0 0.0
        %5027 = vmatpush2.msra.mxu0 0.0
        %5028 = vmatprep.subr.mxu0 0.0
        %5029 = vmatpush2.msra.mxu0 0.0
        %5030 = vmatprep.subr.mxu0 0.0
        %5031 = vmatpush2.msra.mxu0 0.0
        %5032 = vmatprep.subr.mxu0 0.0
        %5033 = vmatpush2.msra.mxu0 0.0
        %5034 = vmatprep.subr.mxu0 0.0
        %5035 = vmatpush2.msra.mxu0 0.0
        %5036 = vmatprep.subr.mxu0 0.0
        %5037 = vmatpush2.msra.mxu0 0.0
        %5038 = vmatprep.subr.mxu0 0.0
        %5039 = vmatpush2.msra.mxu0 0.0
        %5040 = vmatprep.subr.mxu0 0.0
        %5041 = vmatpush2.msra.mxu0 0.0
        %5042 = vmatprep.subr.mxu0 0.0
        %5043 = vmatpush2.msra.mxu0 0.0
        %5044 = vmatprep.mubr.f32.mxu0 0.0
        %5045 = vmatmul.mubr.f32.gmra.mxu0 %v4839
        %v5046 = vpop.f32.mrf.mxu0
        %v5047 = vadd.f32 0.0, %v5046
        %v5048 = vpop.f32.mrf.mxu0
        %5049 = vmatprep.mubr.f32.mxu0 0.0
        %5050 = vmatmul.mubr.f32.gmra.mxu0 %v4842
        %v5051 = vpop.f32.mrf.mxu0
        %v5052 = vadd.f32 0.0, %v5051
        %v5053 = vpop.f32.mrf.mxu0
        %5054 = vmatprep.mubr.f32.mxu0 0.0
        %5055 = vmatmul.mubr.f32.gmra.mxu0 %v4845
        %v5056 = vpop.f32.mrf.mxu0
        %v5057 = vadd.f32 0.0, %v5056
        %v5058 = vpop.f32.mrf.mxu0
        %5059 = vmatprep.mubr.f32.mxu0 0.0
        %5060 = vmatmul.mubr.f32.gmra.mxu0 %v4848
        %v5061 = vpop.f32.mrf.mxu0
        %v5062 = vadd.f32 0.0, %v5061
        %v5063 = vpop.f32.mrf.mxu0
        %5064 = vmatprep.mubr.f32.mxu0 0.0
        %5065 = vmatmul.mubr.f32.gmra.mxu0 %v4851
        %v5066 = vpop.f32.mrf.mxu0
        %v5067 = vadd.f32 0.0, %v5066
        %v5068 = vpop.f32.mrf.mxu0
        %5069 = vmatprep.mubr.f32.mxu0 0.0
        %5070 = vmatmul.mubr.f32.gmra.mxu0 %v4854
        %v5071 = vpop.f32.mrf.mxu0
        %v5072 = vadd.f32 0.0, %v5071
        %v5073 = vpop.f32.mrf.mxu0
        %5074 = vmatprep.mubr.f32.mxu0 0.0
        %5075 = vmatmul.mubr.f32.gmra.mxu0 %v4857
        %v5076 = vpop.f32.mrf.mxu0
        %v5077 = vadd.f32 0.0, %v5076
        %v5078 = vpop.f32.mrf.mxu0
        %5079 = vmatprep.mubr.f32.mxu0 0.0
        %5080 = vmatmul.mubr.f32.gmra.mxu0 %v4978
        %v5081 = vpop.f32.mrf.mxu0
        %v5082 = vadd.f32 0.0, %v5081
        %v5083 = vpop.f32.mrf.mxu0
        %5084 = vdwg.mxu0
        %v5085 = vadd.f32 %v4964, %v5047
        %v5086 = vadd.f32 %v4965, %v5052
        %v5087 = vadd.f32 %v4966, %v5057
        %v5088 = vadd.f32 %v4967, %v5062
        %v5089 = vadd.f32 %v4968, %v5067
        %v5090 = vadd.f32 %v4969, %v5072
        %v5091 = vadd.f32 %v4970, %v5077
        %v5092 = vadd.f32 %v4971, %v5082
        %s5093 = scalar_lea.vmem [#allocation8], 448
        %v5094 = vld [vmem:[%s5093] sm:$0xff]
        %v5095 = vld [vmem:[%s5093 + $0x8] sm:$0xff]
        %v5096 = vld [vmem:[%s5093 + $0x10] sm:$0xff]
        %v5097 = vld [vmem:[%s5093 + $0x18] sm:$0xff]
        %v5099 = vsel %vm2257, %v4827, 0
        %5101 = vmatprep.subr.mxu0 0.0
        %5102 = vmatpush1.msra.mxu0 0.0
        %5103 = vmatprep.subr.mxu0 0.0
        %5104 = vmatpush1.msra.mxu0 0.0
        %5105 = vmatprep.subr.mxu0 0.0
        %5106 = vmatpush1.msra.mxu0 0.0
        %5107 = vmatprep.subr.mxu0 0.0
        %5108 = vmatpush1.msra.mxu0 0.0
        %5109 = vmatprep.subr.mxu0 0.0
        %5110 = vmatpush1.msra.mxu0 0.0
        %5111 = vmatprep.subr.mxu0 0.0
        %5112 = vmatpush1.msra.mxu0 0.0
        %5113 = vmatprep.subr.mxu0 0.0
        %5114 = vmatpush1.msra.mxu0 0.0
        %5115 = vmatprep.subr.mxu0 0.0
        %5116 = vmatpush1.msra.mxu0 0.0
        %5117 = vmatprep.subr.mxu0 0.0
        %5118 = vmatpush1.msra.mxu0 0.0
        %5119 = vmatprep.subr.mxu0 0.0
        %5120 = vmatpush1.msra.mxu0 0.0
        %5121 = vmatprep.subr.mxu0 0.0
        %5122 = vmatpush1.msra.mxu0 0.0
        %5123 = vmatprep.subr.mxu0 0.0
        %5124 = vmatpush1.msra.mxu0 0.0
        %5125 = vmatprep.subr.mxu0 0.0
        %5126 = vmatpush1.msra.mxu0 %v5097
        %5127 = vmatprep.subr.mxu0 0.0
        %5128 = vmatpush1.msra.mxu0 %v5096
        %5129 = vmatprep.subr.mxu0 0.0
        %5130 = vmatpush1.msra.mxu0 %v5095
        %5131 = vmatprep.subr.mxu0 0.0
        %5132 = vmatpush1.msra.mxu0 %v5094
        %5133 = vmatprep.subr.mxu0 0.0
        %5134 = vmatpush2.msra.mxu0 0.0
        %5135 = vmatprep.subr.mxu0 0.0
        %5136 = vmatpush2.msra.mxu0 0.0
        %5137 = vmatprep.subr.mxu0 0.0
        %5138 = vmatpush2.msra.mxu0 0.0
        %5139 = vmatprep.subr.mxu0 0.0
        %5140 = vmatpush2.msra.mxu0 0.0
        %5141 = vmatprep.subr.mxu0 0.0
        %5142 = vmatpush2.msra.mxu0 0.0
        %5143 = vmatprep.subr.mxu0 0.0
        %5144 = vmatpush2.msra.mxu0 0.0
        %5145 = vmatprep.subr.mxu0 0.0
        %5146 = vmatpush2.msra.mxu0 0.0
        %5147 = vmatprep.subr.mxu0 0.0
        %5148 = vmatpush2.msra.mxu0 0.0
        %5149 = vmatprep.subr.mxu0 0.0
        %5150 = vmatpush2.msra.mxu0 0.0
        %5151 = vmatprep.subr.mxu0 0.0
        %5152 = vmatpush2.msra.mxu0 0.0
        %5153 = vmatprep.subr.mxu0 0.0
        %5154 = vmatpush2.msra.mxu0 0.0
        %5155 = vmatprep.subr.mxu0 0.0
        %5156 = vmatpush2.msra.mxu0 0.0
        %5157 = vmatprep.subr.mxu0 0.0
        %5158 = vmatpush2.msra.mxu0 0.0
        %5159 = vmatprep.subr.mxu0 0.0
        %5160 = vmatpush2.msra.mxu0 0.0
        %5161 = vmatprep.subr.mxu0 0.0
        %5162 = vmatpush2.msra.mxu0 0.0
        %5163 = vmatprep.subr.mxu0 0.0
        %5164 = vmatpush2.msra.mxu0 0.0
        %5165 = vmatprep.mubr.f32.mxu0 0.0
        %5166 = vmatmul.mubr.f32.gmra.mxu0 %v4842
        %v5167 = vpop.f32.mrf.mxu0
        %v5168 = vadd.f32 0.0, %v5167
        %v5169 = vpop.f32.mrf.mxu0
        %5170 = vmatprep.mubr.f32.mxu0 0.0
        %5171 = vmatmul.mubr.f32.gmra.mxu0 %v4845
        %v5172 = vpop.f32.mrf.mxu0
        %v5173 = vadd.f32 0.0, %v5172
        %v5174 = vpop.f32.mrf.mxu0
        %5175 = vmatprep.mubr.f32.mxu0 0.0
        %5176 = vmatmul.mubr.f32.gmra.mxu0 %v4848
        %v5177 = vpop.f32.mrf.mxu0
        %v5178 = vadd.f32 0.0, %v5177
        %v5179 = vpop.f32.mrf.mxu0
        %5180 = vmatprep.mubr.f32.mxu0 0.0
        %5181 = vmatmul.mubr.f32.gmra.mxu0 %v4851
        %v5182 = vpop.f32.mrf.mxu0
        %v5183 = vadd.f32 0.0, %v5182
        %v5184 = vpop.f32.mrf.mxu0
        %5185 = vmatprep.mubr.f32.mxu0 0.0
        %5186 = vmatmul.mubr.f32.gmra.mxu0 %v4854
        %v5187 = vpop.f32.mrf.mxu0
        %v5188 = vadd.f32 0.0, %v5187
        %v5189 = vpop.f32.mrf.mxu0
        %5190 = vmatprep.mubr.f32.mxu0 0.0
        %5191 = vmatmul.mubr.f32.gmra.mxu0 %v4857
        %v5192 = vpop.f32.mrf.mxu0
        %v5193 = vadd.f32 0.0, %v5192
        %v5194 = vpop.f32.mrf.mxu0
        %5195 = vmatprep.mubr.f32.mxu0 0.0
        %5196 = vmatmul.mubr.f32.gmra.mxu0 %v4978
        %v5197 = vpop.f32.mrf.mxu0
        %v5198 = vadd.f32 0.0, %v5197
        %v5199 = vpop.f32.mrf.mxu0
        %5200 = vmatprep.mubr.f32.mxu0 0.0
        %5201 = vmatmul.mubr.f32.gmra.mxu0 %v5099
        %v5202 = vpop.f32.mrf.mxu0
        %v5203 = vadd.f32 0.0, %v5202
        %v5204 = vpop.f32.mrf.mxu0
        %5205 = vdwg.mxu0
        %v5206 = vadd.f32 %v5085, %v5168
        %v5207 = vadd.f32 %v5086, %v5173
        %v5208 = vadd.f32 %v5087, %v5178
        %v5209 = vadd.f32 %v5088, %v5183
        %v5210 = vadd.f32 %v5089, %v5188
        %v5211 = vadd.f32 %v5090, %v5193
        %v5212 = vadd.f32 %v5091, %v5198
        %v5213 = vadd.f32 %v5092, %v5203
        %s5214 = scalar_lea.vmem [#allocation8], 608
        %v5215 = vld [vmem:[%s5214] sm:$0xff]
        %v5216 = vld [vmem:[%s5214 + $0x8] sm:$0xff]
        %v5217 = vld [vmem:[%s5214 + $0x10] sm:$0xff]
        %v5218 = vld [vmem:[%s5214 + $0x18] sm:$0xff]
        %v5220 = vsel %vm2257, %v4828, 0
        %5222 = vmatprep.subr.mxu0 0.0
        %5223 = vmatpush1.msra.mxu0 0.0
        %5224 = vmatprep.subr.mxu0 0.0
        %5225 = vmatpush1.msra.mxu0 0.0
        %5226 = vmatprep.subr.mxu0 0.0
        %5227 = vmatpush1.msra.mxu0 0.0
        %5228 = vmatprep.subr.mxu0 0.0
        %5229 = vmatpush1.msra.mxu0 0.0
        %5230 = vmatprep.subr.mxu0 0.0
        %5231 = vmatpush1.msra.mxu0 0.0
        %5232 = vmatprep.subr.mxu0 0.0
        %5233 = vmatpush1.msra.mxu0 0.0
        %5234 = vmatprep.subr.mxu0 0.0
        %5235 = vmatpush1.msra.mxu0 0.0
        %5236 = vmatprep.subr.mxu0 0.0
        %5237 = vmatpush1.msra.mxu0 0.0
        %5238 = vmatprep.subr.mxu0 0.0
        %5239 = vmatpush1.msra.mxu0 0.0
        %5240 = vmatprep.subr.mxu0 0.0
        %5241 = vmatpush1.msra.mxu0 0.0
        %5242 = vmatprep.subr.mxu0 0.0
        %5243 = vmatpush1.msra.mxu0 0.0
        %5244 = vmatprep.subr.mxu0 0.0
        %5245 = vmatpush1.msra.mxu0 0.0
        %5246 = vmatprep.subr.mxu0 0.0
        %5247 = vmatpush1.msra.mxu0 %v5218
        %5248 = vmatprep.subr.mxu0 0.0
        %5249 = vmatpush1.msra.mxu0 %v5217
        %5250 = vmatprep.subr.mxu0 0.0
        %5251 = vmatpush1.msra.mxu0 %v5216
        %5252 = vmatprep.subr.mxu0 0.0
        %5253 = vmatpush1.msra.mxu0 %v5215
        %5254 = vmatprep.subr.mxu0 0.0
        %5255 = vmatpush2.msra.mxu0 0.0
        %5256 = vmatprep.subr.mxu0 0.0
        %5257 = vmatpush2.msra.mxu0 0.0
        %5258 = vmatprep.subr.mxu0 0.0
        %5259 = vmatpush2.msra.mxu0 0.0
        %5260 = vmatprep.subr.mxu0 0.0
        %5261 = vmatpush2.msra.mxu0 0.0
        %5262 = vmatprep.subr.mxu0 0.0
        %5263 = vmatpush2.msra.mxu0 0.0
        %5264 = vmatprep.subr.mxu0 0.0
        %5265 = vmatpush2.msra.mxu0 0.0
        %5266 = vmatprep.subr.mxu0 0.0
        %5267 = vmatpush2.msra.mxu0 0.0
        %5268 = vmatprep.subr.mxu0 0.0
        %5269 = vmatpush2.msra.mxu0 0.0
        %5270 = vmatprep.subr.mxu0 0.0
        %5271 = vmatpush2.msra.mxu0 0.0
        %5272 = vmatprep.subr.mxu0 0.0
        %5273 = vmatpush2.msra.mxu0 0.0
        %5274 = vmatprep.subr.mxu0 0.0
        %5275 = vmatpush2.msra.mxu0 0.0
        %5276 = vmatprep.subr.mxu0 0.0
        %5277 = vmatpush2.msra.mxu0 0.0
        %5278 = vmatprep.subr.mxu0 0.0
        %5279 = vmatpush2.msra.mxu0 0.0
        %5280 = vmatprep.subr.mxu0 0.0
        %5281 = vmatpush2.msra.mxu0 0.0
        %5282 = vmatprep.subr.mxu0 0.0
        %5283 = vmatpush2.msra.mxu0 0.0
        %5284 = vmatprep.subr.mxu0 0.0
        %5285 = vmatpush2.msra.mxu0 0.0
        %5286 = vmatprep.mubr.f32.mxu0 0.0
        %5287 = vmatmul.mubr.f32.gmra.mxu0 %v4845
        %v5288 = vpop.f32.mrf.mxu0
        %v5289 = vadd.f32 0.0, %v5288
        %v5290 = vpop.f32.mrf.mxu0
        %5291 = vmatprep.mubr.f32.mxu0 0.0
        %5292 = vmatmul.mubr.f32.gmra.mxu0 %v4848
        %v5293 = vpop.f32.mrf.mxu0
        %v5294 = vadd.f32 0.0, %v5293
        %v5295 = vpop.f32.mrf.mxu0
        %5296 = vmatprep.mubr.f32.mxu0 0.0
        %5297 = vmatmul.mubr.f32.gmra.mxu0 %v4851
        %v5298 = vpop.f32.mrf.mxu0
        %v5299 = vadd.f32 0.0, %v5298
        %v5300 = vpop.f32.mrf.mxu0
        %5301 = vmatprep.mubr.f32.mxu0 0.0
        %5302 = vmatmul.mubr.f32.gmra.mxu0 %v4854
        %v5303 = vpop.f32.mrf.mxu0
        %v5304 = vadd.f32 0.0, %v5303
        %v5305 = vpop.f32.mrf.mxu0
        %5306 = vmatprep.mubr.f32.mxu0 0.0
        %5307 = vmatmul.mubr.f32.gmra.mxu0 %v4857
        %v5308 = vpop.f32.mrf.mxu0
        %v5309 = vadd.f32 0.0, %v5308
        %v5310 = vpop.f32.mrf.mxu0
        %5311 = vmatprep.mubr.f32.mxu0 0.0
        %5312 = vmatmul.mubr.f32.gmra.mxu0 %v4978
        %v5313 = vpop.f32.mrf.mxu0
        %v5314 = vadd.f32 0.0, %v5313
        %v5315 = vpop.f32.mrf.mxu0
        %5316 = vmatprep.mubr.f32.mxu0 0.0
        %5317 = vmatmul.mubr.f32.gmra.mxu0 %v5099
        %v5318 = vpop.f32.mrf.mxu0
        %v5319 = vadd.f32 0.0, %v5318
        %v5320 = vpop.f32.mrf.mxu0
        %5321 = vmatprep.mubr.f32.mxu0 0.0
        %5322 = vmatmul.mubr.f32.gmra.mxu0 %v5220
        %v5323 = vpop.f32.mrf.mxu0
        %v5324 = vadd.f32 0.0, %v5323
        %v5325 = vpop.f32.mrf.mxu0
        %5326 = vdwg.mxu0
        %v5327 = vadd.f32 %v5206, %v5289
        %v5328 = vadd.f32 %v5207, %v5294
        %v5329 = vadd.f32 %v5208, %v5299
        %v5330 = vadd.f32 %v5209, %v5304
        %v5331 = vadd.f32 %v5210, %v5309
        %v5332 = vadd.f32 %v5211, %v5314
        %v5333 = vadd.f32 %v5212, %v5319
        %v5334 = vadd.f32 %v5213, %v5324
        %s5335 = scalar_lea.vmem [#allocation8], 768
        %v5336 = vld [vmem:[%s5335] sm:$0xff]
        %v5337 = vld [vmem:[%s5335 + $0x8] sm:$0xff]
        %v5338 = vld [vmem:[%s5335 + $0x10] sm:$0xff]
        %v5339 = vld [vmem:[%s5335 + $0x18] sm:$0xff]
        %v5341 = vsel %vm2257, %v4829, 0
        %5343 = vmatprep.subr.mxu0 0.0
        %5344 = vmatpush1.msra.mxu0 0.0
        %5345 = vmatprep.subr.mxu0 0.0
        %5346 = vmatpush1.msra.mxu0 0.0
        %5347 = vmatprep.subr.mxu0 0.0
        %5348 = vmatpush1.msra.mxu0 0.0
        %5349 = vmatprep.subr.mxu0 0.0
        %5350 = vmatpush1.msra.mxu0 0.0
        %5351 = vmatprep.subr.mxu0 0.0
        %5352 = vmatpush1.msra.mxu0 0.0
        %5353 = vmatprep.subr.mxu0 0.0
        %5354 = vmatpush1.msra.mxu0 0.0
        %5355 = vmatprep.subr.mxu0 0.0
        %5356 = vmatpush1.msra.mxu0 0.0
        %5357 = vmatprep.subr.mxu0 0.0
        %5358 = vmatpush1.msra.mxu0 0.0
        %5359 = vmatprep.subr.mxu0 0.0
        %5360 = vmatpush1.msra.mxu0 0.0
        %5361 = vmatprep.subr.mxu0 0.0
        %5362 = vmatpush1.msra.mxu0 0.0
        %5363 = vmatprep.subr.mxu0 0.0
        %5364 = vmatpush1.msra.mxu0 0.0
        %5365 = vmatprep.subr.mxu0 0.0
        %5366 = vmatpush1.msra.mxu0 0.0
        %5367 = vmatprep.subr.mxu0 0.0
        %5368 = vmatpush1.msra.mxu0 %v5339
        %5369 = vmatprep.subr.mxu0 0.0
        %5370 = vmatpush1.msra.mxu0 %v5338
        %5371 = vmatprep.subr.mxu0 0.0
        %5372 = vmatpush1.msra.mxu0 %v5337
        %5373 = vmatprep.subr.mxu0 0.0
        %5374 = vmatpush1.msra.mxu0 %v5336
        %5375 = vmatprep.subr.mxu0 0.0
        %5376 = vmatpush2.msra.mxu0 0.0
        %5377 = vmatprep.subr.mxu0 0.0
        %5378 = vmatpush2.msra.mxu0 0.0
        %5379 = vmatprep.subr.mxu0 0.0
        %5380 = vmatpush2.msra.mxu0 0.0
        %5381 = vmatprep.subr.mxu0 0.0
        %5382 = vmatpush2.msra.mxu0 0.0
        %5383 = vmatprep.subr.mxu0 0.0
        %5384 = vmatpush2.msra.mxu0 0.0
        %5385 = vmatprep.subr.mxu0 0.0
        %5386 = vmatpush2.msra.mxu0 0.0
        %5387 = vmatprep.subr.mxu0 0.0
        %5388 = vmatpush2.msra.mxu0 0.0
        %5389 = vmatprep.subr.mxu0 0.0
        %5390 = vmatpush2.msra.mxu0 0.0
        %5391 = vmatprep.subr.mxu0 0.0
        %5392 = vmatpush2.msra.mxu0 0.0
        %5393 = vmatprep.subr.mxu0 0.0
        %5394 = vmatpush2.msra.mxu0 0.0
        %5395 = vmatprep.subr.mxu0 0.0
        %5396 = vmatpush2.msra.mxu0 0.0
        %5397 = vmatprep.subr.mxu0 0.0
        %5398 = vmatpush2.msra.mxu0 0.0
        %5399 = vmatprep.subr.mxu0 0.0
        %5400 = vmatpush2.msra.mxu0 0.0
        %5401 = vmatprep.subr.mxu0 0.0
        %5402 = vmatpush2.msra.mxu0 0.0
        %5403 = vmatprep.subr.mxu0 0.0
        %5404 = vmatpush2.msra.mxu0 0.0
        %5405 = vmatprep.subr.mxu0 0.0
        %5406 = vmatpush2.msra.mxu0 0.0
        %5407 = vmatprep.mubr.f32.mxu0 0.0
        %5408 = vmatmul.mubr.f32.gmra.mxu0 %v4848
        %v5409 = vpop.f32.mrf.mxu0
        %v5410 = vadd.f32 0.0, %v5409
        %v5411 = vpop.f32.mrf.mxu0
        %5412 = vmatprep.mubr.f32.mxu0 0.0
        %5413 = vmatmul.mubr.f32.gmra.mxu0 %v4851
        %v5414 = vpop.f32.mrf.mxu0
        %v5415 = vadd.f32 0.0, %v5414
        %v5416 = vpop.f32.mrf.mxu0
        %5417 = vmatprep.mubr.f32.mxu0 0.0
        %5418 = vmatmul.mubr.f32.gmra.mxu0 %v4854
        %v5419 = vpop.f32.mrf.mxu0
        %v5420 = vadd.f32 0.0, %v5419
        %v5421 = vpop.f32.mrf.mxu0
        %5422 = vmatprep.mubr.f32.mxu0 0.0
        %5423 = vmatmul.mubr.f32.gmra.mxu0 %v4857
        %v5424 = vpop.f32.mrf.mxu0
        %v5425 = vadd.f32 0.0, %v5424
        %v5426 = vpop.f32.mrf.mxu0
        %5427 = vmatprep.mubr.f32.mxu0 0.0
        %5428 = vmatmul.mubr.f32.gmra.mxu0 %v4978
        %v5429 = vpop.f32.mrf.mxu0
        %v5430 = vadd.f32 0.0, %v5429
        %v5431 = vpop.f32.mrf.mxu0
        %5432 = vmatprep.mubr.f32.mxu0 0.0
        %5433 = vmatmul.mubr.f32.gmra.mxu0 %v5099
        %v5434 = vpop.f32.mrf.mxu0
        %v5435 = vadd.f32 0.0, %v5434
        %v5436 = vpop.f32.mrf.mxu0
        %5437 = vmatprep.mubr.f32.mxu0 0.0
        %5438 = vmatmul.mubr.f32.gmra.mxu0 %v5220
        %v5439 = vpop.f32.mrf.mxu0
        %v5440 = vadd.f32 0.0, %v5439
        %v5441 = vpop.f32.mrf.mxu0
        %5442 = vmatprep.mubr.f32.mxu0 0.0
        %5443 = vmatmul.mubr.f32.gmra.mxu0 %v5341
        %v5444 = vpop.f32.mrf.mxu0
        %v5445 = vadd.f32 0.0, %v5444
        %v5446 = vpop.f32.mrf.mxu0
        %5447 = vdwg.mxu0
        %v5448 = vadd.f32 %v5327, %v5410
        %v5449 = vadd.f32 %v5328, %v5415
        %v5450 = vadd.f32 %v5329, %v5420
        %v5451 = vadd.f32 %v5330, %v5425
        %v5452 = vadd.f32 %v5331, %v5430
        %v5453 = vadd.f32 %v5332, %v5435
        %v5454 = vadd.f32 %v5333, %v5440
        %v5455 = vadd.f32 %v5334, %v5445
        %v5456 = vld [vmem:[%s4] sm:$0x1]
        %v5458 = vlaneseq
        %v5459 = vshrl.u32 %v5458, 7
        %v5460 = vsub.s32 0, %v5459
        %v5461 = vrot.slane %v5456, %v5460
        %v5463 = vadd.f32 %v5448, %v5461
        %v5464 = vadd.f32 %v5449, %v5461
        %v5465 = vadd.f32 %v5450, %v5461
        %v5466 = vadd.f32 %v5451, %v5461
        %v5467 = vadd.f32 %v5452, %v5461
        %v5468 = vadd.f32 %v5453, %v5461
        %v5469 = vadd.f32 %v5454, %v5461
        %v5470 = vadd.f32 %v5455, %v5461
        %v5471 = vmax.f32 %v5463, 0.0
        %v5472 = vmax.f32 %v5464, 0.0
        %v5473 = vmax.f32 %v5465, 0.0
        %v5474 = vmax.f32 %v5466, 0.0
        %v5475 = vmax.f32 %v5467, 0.0
        %v5476 = vmax.f32 %v5468, 0.0
        %v5477 = vmax.f32 %v5469, 0.0
        %v5478 = vmax.f32 %v5470, 0.0
        %5479 = vst [vmem:[%s271] sm:$0xff] %v5471
        %5480 = vst [vmem:[%s271 + $0x8] sm:$0xff] %v5472
        %5481 = vst [vmem:[%s271 + $0x10] sm:$0xff] %v5473
        %5482 = vst [vmem:[%s271 + $0x18] sm:$0xff] %v5474
        %5483 = vst [vmem:[%s271 + $0x20] sm:$0xff] %v5475
        %5484 = vst [vmem:[%s271 + $0x28] sm:$0xff] %v5476
        %5485 = vst [vmem:[%s271 + $0x30] sm:$0xff] %v5477
        %5486 = vst [vmem:[%s271 + $0x38] sm:$0xff] %v5478
        %s5487 = sand.u32 %s141, 1
        %s5488 = scalar_lea.sflag [#allocation5], %s5487
        %s5489 = sand.u32 %s141, 1
        %s5490 = smul.addr %s5489, 64
        %s5491 = scalar_lea.vmem [#allocation9], %s5490
        // Predicated region
        $region53: #{tpu_custom_call.1} parent=39 // pred_check
          %p5492 = pneg %p151
        $region54: #{tpu_custom_call.1} parent=39 // pred_check_branch
          %5494 = sbr.rel (%p5492) target = $region56
        $region55: #{tpu_custom_call.1} parent=39 // pred_region
          %s5495 = smul.u32 8, %s23
          %s5497 = ssub.s32 1024, 1024
          %5498 = vsyncadd %s5488, %s5497
          %s5499 = smul.addr %s5495, 128
          %s5500 = scalar_lea.hbm %s5, %s5499
          %s5501 = sshll.u32 %s5491, 4
          %s5502 = int_to_ptr.vmem [resolvable:$true] %s5501
          %5507 = dma.vmem_to_hbm [thread:$0]  %s5502, 1024, %s5500, %s5488, 128, 128, 8
        $region56: #{tpu_custom_call.1} parent=39 // pred_fallthru
          _
      $region40: #{tpu_custom_call.1} parent=5 // pred_fallthru
        _
      %p5508 = scmp.le.s32.totalorder 2, %s18
      // Predicated region
      $region57: #{tpu_custom_call.1} parent=5 // pred_check
        %p5509 = pneg %p5508
      $region58: #{tpu_custom_call.1} parent=5 // pred_check_branch
        %5511 = sbr.rel (%p5509) target = $region60
      $region59: #{tpu_custom_call.1} parent=5 // pred_region
        %s5512 = ssub.s32 %s18, 2
        // Predicated region
        $region61: #{tpu_custom_call.1} parent=59 // pred_check
          %p5513 = pneg %p157
        $region62: #{tpu_custom_call.1} parent=59 // pred_check_branch
          %5515 = sbr.rel (%p5513) target = $region64
        $region63: #{tpu_custom_call.1} parent=59 // pred_region
          %s5516 = sand.u32 %s142, 1
          %s5517 = scalar_lea.sflag [#allocation5], %s5516
          %s5518 = sand.u32 %s142, 1
          %s5519 = smul.addr %s5518, 64
          %s5520 = scalar_lea.vmem [#allocation9], %s5519
          %5521 = dma.done %s5517, 1024
        $region64: #{tpu_custom_call.1} parent=59 // pred_fallthru
          _
      $region60: #{tpu_custom_call.1} parent=5 // pred_fallthru
        _
    $region6: #{tpu_custom_call.1} parent=1 // loop_footer
      %s22 = sadd.s32 1, %s18
    $region7: #{tpu_custom_call.1} parent=1 // loop_footer_branch
      %17 = sbr.rel target = $region3
    $region8: #{tpu_custom_call.1} parent=1 // loop_exit
      _
    %5522 = vsyncpa [#allocation4], 1
    %s5523 = scalar_lea.sflag [#allocation4], 1
    %5524 = vsyncpa %s5523, 1
    %5525 = vsyncpa [#allocation7], 1
    %5526 = vsyncpa [#allocation5], 1
    %s5527 = scalar_lea.sflag [#allocation5], 1
    %5528 = vsyncpa %s5527, 1

</llo_original>
